<compile_context>
chip_gen: v7x
topology: tpu7x:2x2x1
jax: 0.10.0
libtpu: 0.0.40
codegen_flags: <defaults>
</compile_context>

<pallas_src>
import jax
import jax.numpy as jnp
from jax import lax
from jax.experimental import pallas as pl
from jax.experimental.pallas import tpu as pltpu

LRELU_SLOPE = 0.1


def get_padding(kernel_size, dilation=1):
    return (kernel_size * dilation - dilation) // 2


def _round_up(v, m):
    return ((v + m - 1) // m) * m


def _const_spec(block_shape, single_buffer):
    """BlockSpec for a grid-constant operand; single-buffered when supported."""
    ndim = len(block_shape)
    index_map = lambda b, t: (0,) * ndim
    if single_buffer and hasattr(pl, "Buffered"):
        try:
            return pl.BlockSpec(block_shape, index_map,
                                pipeline_mode=pl.Buffered(1))
        except (TypeError, ValueError):   # older jax without pipeline_mode
            pass
    return pl.BlockSpec(block_shape, index_map)


def make_resblock1(channels, kernel_size, dilations, t_block,
                   lrelu_slope=LRELU_SLOPE, matmul_dtype=jnp.bfloat16,
                   vmem_limit_bytes=None):
    """Returns apply(x, w1, b1, w2, b2) implementing ResBlock1.forward.

    Expected parameter layouts (see prep in __main__):
      w1, w2: (3, K, C, C)  matmul_dtype, with w_prep[l, k, co, ci] == torch w[l, co, ci, k]
      b1, b2: (3, C, 1)     float32
      x:      (B, C, T)     float32, T % t_block == 0, t_block % 128 == 0
    """
    C, K, Tt = channels, kernel_size, t_block
    assert K % 2 == 1, "ResBlock1 'same' conv assumes an odd kernel size"
    assert Tt % 128 == 0, "t_block must be a multiple of 128 (lane-dense stores)"
    ndil = len(dilations)
    # Composed receptive-field radius of the 2*ndil chained convs (= 12 for
    # K=3, dilations (1,3,5)): the per-side halo each output tile needs.
    H = (K // 2) * (sum(dilations) + ndil)
    max_pad = get_padding(K, max(dilations))
    Wd = _round_up(Tt + 2 * H, 128)    # per-tile conv / matmul width (lane dense)
    ML = 128                           # left slab margin: keeps staging stores 128-aligned
    MR = 128                           # right slab margin (only max_pad cols ever read)
    Ws = ML + Wd + MR

    def kernel(x_ref, w1_ref, b1_ref, w2_ref, b2_ref, o_ref, pad_ref, res_ref):
        t = pl.program_id(1)
        t_last = pl.num_programs(1) - 1

        # Insurance (cheap, 2*max_pad columns): zero the margin columns read by
        # the off-centre taps once per step; staging never rewrites them.
        pad_ref[:, ML - max_pad:ML] = jnp.zeros((C, max_pad), pad_ref.dtype)
        pad_ref[:, ML + Wd:ML + Wd + max_pad] = jnp.zeros((C, max_pad),
                                                          pad_ref.dtype)

        def lrelu(v):
            return jnp.where(v > 0, v, lrelu_slope * v)

        def stage(v):
            # One full-width, 128-aligned bf16 staging store of the next conv input.
            pad_ref[:, ML:ML + Wd] = v.astype(pad_ref.dtype)

            # 'same' zero padding at the *sequence ends only*: interior tiles get
            # their halo from real neighbouring samples (no per-tile zero gaps).
            @pl.when(t == 0)
            def _():
                pad_ref[:, ML:ML + H] = jnp.zeros((C, H), pad_ref.dtype)

            @pl.when(t == t_last)
            def _():
                pad_ref[:, ML + H + Tt:ML + Wd] = jnp.zeros(
                    (C, Wd - H - Tt), pad_ref.dtype)

        def conv(w_ref, b_ref, layer, dil):
            # One conv = K accumulating MXU matmuls; no stacked-tap temporary.
            # The centre tap read is 128-aligned; the off-centre taps are small
            # lane-offset ref slices.
            # TODO(synk): replace the off-centre slices with one aligned slab
            # read + pltpu.roll(slab, +-dil, axis=-1) (XLU) once the rotate
            # direction is validated against np.roll on the target jax build.
            p = get_padding(K, dil)
            acc = None
            for k in range(K):
                off = ML + k * dil - p
                tap = pad_ref[:, off:off + Wd]                       # (C, Wd) bf16
                part = jnp.dot(w_ref[layer, k], tap,
                               preferred_element_type=jnp.float32)   # (C, Wd) f32
                acc = part if acc is None else acc + part
            return acc + b_ref[layer]          # bias added once, after accumulation

        # Residual lives in explicit f32 VMEM scratch for the whole 3-stage loop.
        res_ref[...] = x_ref[0, 0].astype(jnp.float32)
        for i in range(ndil):
            stage(lrelu(res_ref[...]))
            y = conv(w1_ref, b1_ref, i, dilations[i])
            stage(lrelu(y))
            y = conv(w2_ref, b2_ref, i, 1)
            res_ref[...] = y + res_ref[...]

        # Output tile = the centred Tt columns of the final residual.
        o_ref[0] = res_ref[:, H:H + Tt].astype(o_ref.dtype)

    def apply(x, w1, b1, w2, b2):
        B, Cx, T = x.shape
        assert Cx == C
        # TODO(synk): handle a ragged tail tile; for now pad T to a multiple of t_block.
        assert T % Tt == 0, "T must be a multiple of t_block"
        nT = T // Tt

        # Per-tile overlapping input windows (layout plumbing done once in XLA):
        # window t = padded columns [t*Tt, t*Tt + Wd); the pad supplies H zeros
        # left of the sequence and (Wd - Tt - H) zeros on the right.
        # TODO(synk): at production sizes, feed the halo via manual DMA from the
        # un-duplicated HBM array (memory_space=pl.ANY) instead of materialising
        # x_halo (duplication is only (Wd - Tt)/Tt ~ 6% at Tt=2048).
        x_pad = jnp.pad(x, ((0, 0), (0, 0), (H, Wd - Tt - H)))
        x_halo = jnp.stack(
            [x_pad[:, :, t * Tt:t * Tt + Wd] for t in range(nT)], axis=1)

        def in_specs(single_buffer_consts):
            return [
                pl.BlockSpec((1, 1, C, Wd), lambda b, t: (b, t, 0, 0)),
                _const_spec((ndil, K, C, C), single_buffer_consts),
                _const_spec((ndil, C, 1), single_buffer_consts),
                _const_spec((ndil, K, C, C), single_buffer_consts),
                _const_spec((ndil, C, 1), single_buffer_consts),
            ]

        def run(specs):
            return pl.pallas_call(
                kernel,
                out_shape=jax.ShapeDtypeStruct((B, C, T), x.dtype),
                grid=(B, nT),
                in_specs=specs,
                out_specs=pl.BlockSpec((1, C, Tt), lambda b, t: (b, 0, t)),
                scratch_shapes=[
                    pltpu.VMEM((C, Ws), matmul_dtype),   # bf16 staging slab
                    pltpu.VMEM((C, Wd), jnp.float32),    # f32 residual
                ],
                compiler_params=pltpu.CompilerParams(
                    dimension_semantics=("parallel", "parallel"),
                    vmem_limit_bytes=vmem_limit_bytes),
            )(x_halo, w1, b1, w2, b2)

        try:
            # Preferred: constant weights/biases single-buffered (VMEM saving).
            return run(in_specs(True))
        except Exception:
            # pl.Buffered(1) is a pure VMEM optimization; if this jax build
            # rejects pipeline_mode, fall back to default double-buffering.
            return run(in_specs(False))

    return apply


# ----------------------- pure-JAX reference (for checking) -----------------------
def _ref_conv1d(x, w, b, dilation, padding):
    # x: (B, C, T), w: (C_out, C_in, K), b: (C_out,)
    y = lax.conv_general_dilated(
        x, w, window_strides=(1,), padding=[(padding, padding)],
        rhs_dilation=(dilation,),
        dimension_numbers=("NCW", "OIW", "NCW"),
        precision=lax.Precision.HIGHEST)
    return y + b[None, :, None]


def resblock1_reference(x, w1, b1, w2, b2, kernel_size, dilations,
                        slope=LRELU_SLOPE):
    # w1/w2: (3, C, C, K) in PyTorch layout; b1/b2: (3, C)
    for i in range(3):
        xt = jnp.where(x > 0, x, slope * x)
        xt = _ref_conv1d(xt, w1[i], b1[i], dilations[i],
                         get_padding(kernel_size, dilations[i]))
        xt = jnp.where(xt > 0, xt, slope * xt)
        xt = _ref_conv1d(xt, w2[i], b2[i], 1, get_padding(kernel_size, 1))
        x = xt + x
    return x


if __name__ == "__main__":
    # Small shapes consistent with ResBlock1(channels, kernel_size, dilation).
    # T = 3 * t_block so the grid has an interior tile (pure halo path) and two
    # boundary tiles (sequence-end zero padding path).
    B, C, T = 2, 64, 384
    K = 3
    dilations = (1, 3, 5)
    Tt = 128

    key = jax.random.PRNGKey(0)
    kx, kw1, kb1, kw2, kb2 = jax.random.split(key, 5)

    x = jax.random.normal(kx, (B, C, T), dtype=jnp.float32)
    # weight_norm(Conv1d) right after init_weights is numerically identical to
    # the raw normal(0, 0.01) weights, so we use those directly.
    w1 = 0.01 * jax.random.normal(kw1, (3, C, C, K), dtype=jnp.float32)
    w2 = 0.01 * jax.random.normal(kw2, (3, C, C, K), dtype=jnp.float32)
    b1 = 0.02 * jax.random.normal(kb1, (3, C), dtype=jnp.float32)
    b2 = 0.02 * jax.random.normal(kb2, (3, C), dtype=jnp.float32)

    # Kernel-friendly layouts: per-tap weight matrices, cast to bf16 offline:
    # w_prep[l, k, co, ci] = w[l, co, ci, k].
    def prep_w(w):
        return jnp.transpose(w, (0, 3, 1, 2)).astype(jnp.bfloat16)

    w1_k, w2_k = prep_w(w1), prep_w(w2)
    b1_k, b2_k = b1[..., None], b2[..., None]        # (3, C, 1) f32

    resblock = make_resblock1(C, K, dilations, t_block=Tt,
                              vmem_limit_bytes=48 * 1024 * 1024)
    out = jax.block_until_ready(resblock(x, w1_k, b1_k, w2_k, b2_k))

    ref = resblock1_reference(x, w1, b1, w2, b2, K, dilations)
    assert out.shape == (B, C, T)
    err = float(jnp.max(jnp.abs(out - ref)))
    # bf16 MXU operands / bf16 staged activations vs an all-f32 reference.
    assert err < 2e-2, err

    print("KERNEL_OK")
</pallas_src>

<mosaic_0001>
module attributes {stable_mosaic.version = 11 : i64} {
  func.func @kernel(%arg0: i32, %arg1: i32, %arg2: memref<1x1x64x256xf32, #tpu.memory_space<vmem>>, %arg3: memref<3x3x64x64xbf16, #tpu.memory_space<vmem>>, %arg4: memref<3x64x1xf32, #tpu.memory_space<vmem>>, %arg5: memref<3x3x64x64xbf16, #tpu.memory_space<vmem>>, %arg6: memref<3x64x1xf32, #tpu.memory_space<vmem>>, %arg7: memref<1x64x128xf32, #tpu.memory_space<vmem>>, %arg8: memref<64x512xbf16, #tpu.memory_space<vmem>>, %arg9: memref<64x256xf32, #tpu.memory_space<vmem>>) attributes {dimension_semantics = [#tpu.dimension_semantics<parallel>, #tpu.dimension_semantics<parallel>], iteration_bounds = array<i64: 2, 3>, scalar_prefetch = 0 : i64, scratch_operands = 2 : i64, tpu.core_type = #tpu.core_type<tc>, window_params = [{transform_indices = @transform_0, window_bounds = array<i64: 1, 1, 64, 256>}, {pipeline_mode = #tpu.pipeline_mode<synchronous>, transform_indices = @transform_1, window_bounds = array<i64: 3, 3, 64, 64>}, {pipeline_mode = #tpu.pipeline_mode<synchronous>, transform_indices = @transform_2, window_bounds = array<i64: 3, 64, 1>}, {pipeline_mode = #tpu.pipeline_mode<synchronous>, transform_indices = @transform_3, window_bounds = array<i64: 3, 3, 64, 64>}, {pipeline_mode = #tpu.pipeline_mode<synchronous>, transform_indices = @transform_4, window_bounds = array<i64: 3, 64, 1>}, {transform_indices = @transform_5, window_bounds = array<i64: 1, 64, 128>}]} {
    %cst = arith.constant 0.000000e+00 : bf16
    %0 = vector.broadcast %cst : bf16 to vector<64x5xbf16>
    %c0 = arith.constant 0 : index
    %c123 = arith.constant 123 : index
    %1 = vector.load %arg8[%c0, %c123] : memref<64x512xbf16, #tpu.memory_space<vmem>>, vector<64x5xbf16>
    tpu.vector_store %arg8[%c0, %c123], %0 {strides = array<i32>} : memref<64x512xbf16, #tpu.memory_space<vmem>>, vector<64x5xbf16>,
    %cst_0 = arith.constant 0.000000e+00 : bf16
    %2 = vector.broadcast %cst_0 : bf16 to vector<64x5xbf16>
    %c0_1 = arith.constant 0 : index
    %c384 = arith.constant 384 : index
    %3 = vector.load %arg8[%c0_1, %c384] : memref<64x512xbf16, #tpu.memory_space<vmem>>, vector<64x5xbf16>
    tpu.vector_store %arg8[%c0_1, %c384], %2 {strides = array<i32>} : memref<64x512xbf16, #tpu.memory_space<vmem>>, vector<64x5xbf16>,
    %c0_2 = arith.constant 0 : index
    %c0_3 = arith.constant 0 : index
    %c0_4 = arith.constant 0 : index
    %c0_5 = arith.constant 0 : index
    %4 = vector.load %arg2[%c0_2, %c0_3, %c0_4, %c0_5] : memref<1x1x64x256xf32, #tpu.memory_space<vmem>>, vector<1x1x64x256xf32>
    %5 = vector.shape_cast %4 : vector<1x1x64x256xf32> to vector<64x256xf32>
    %c0_6 = arith.constant 0 : index
    %c0_7 = arith.constant 0 : index
    %6 = vector.load %arg9[%c0_6, %c0_7] : memref<64x256xf32, #tpu.memory_space<vmem>>, vector<64x256xf32>
    tpu.vector_store %arg9[%c0_6, %c0_7], %5 {strides = array<i32>} : memref<64x256xf32, #tpu.memory_space<vmem>>, vector<64x256xf32>,
    %c0_8 = arith.constant 0 : index
    %c0_9 = arith.constant 0 : index
    %7 = vector.load %arg9[%c0_8, %c0_9] : memref<64x256xf32, #tpu.memory_space<vmem>>, vector<64x256xf32>
    %cst_10 = arith.constant 0.000000e+00 : f32
    %8 = vector.broadcast %cst_10 : f32 to vector<64x256xf32>
    %9 = arith.cmpf ogt, %7, %8 : vector<64x256xf32>
    %cst_11 = arith.constant 1.000000e-01 : f32
    %10 = vector.broadcast %cst_11 : f32 to vector<64x256xf32>
    %11 = arith.mulf %10, %7 : vector<64x256xf32>
    %12 = arith.select %9, %7, %11 : vector<64x256xi1>, vector<64x256xf32>
    %13 = arith.truncf %12 : vector<64x256xf32> to vector<64x256xbf16>
    %c0_12 = arith.constant 0 : index
    %c128 = arith.constant 128 : index
    %14 = vector.load %arg8[%c0_12, %c128] : memref<64x512xbf16, #tpu.memory_space<vmem>>, vector<64x256xbf16>
    tpu.vector_store %arg8[%c0_12, %c128], %13 {strides = array<i32>} : memref<64x512xbf16, #tpu.memory_space<vmem>>, vector<64x256xbf16>,
    %c0_i32 = arith.constant 0 : i32
    %15 = arith.cmpi eq, %arg1, %c0_i32 : i32
    %16 = arith.extui %15 : i1 to i32
    %c0_i32_13 = arith.constant 0 : i32
    %17 = arith.cmpi ne, %16, %c0_i32_13 : i32
    scf.if %17 {
      %cst_212 = arith.constant 0.000000e+00 : bf16
      %209 = vector.broadcast %cst_212 : bf16 to vector<64x12xbf16>
      %c0_213 = arith.constant 0 : index
      %c128_214 = arith.constant 128 : index
      %210 = vector.load %arg8[%c0_213, %c128_214] : memref<64x512xbf16, #tpu.memory_space<vmem>>, vector<64x12xbf16>
      tpu.vector_store %arg8[%c0_213, %c128_214], %209 {strides = array<i32>} : memref<64x512xbf16, #tpu.memory_space<vmem>>, vector<64x12xbf16>,
    } else {
    }
    %c2_i32 = arith.constant 2 : i32
    %18 = arith.cmpi eq, %arg1, %c2_i32 : i32
    %19 = arith.extui %18 : i1 to i32
    %c0_i32_14 = arith.constant 0 : i32
    %20 = arith.cmpi ne, %19, %c0_i32_14 : i32
    scf.if %20 {
      %cst_212 = arith.constant 0.000000e+00 : bf16
      %209 = vector.broadcast %cst_212 : bf16 to vector<64x116xbf16>
      %c0_213 = arith.constant 0 : index
      %c268 = arith.constant 268 : index
      %210 = vector.load %arg8[%c0_213, %c268] : memref<64x512xbf16, #tpu.memory_space<vmem>>, vector<64x116xbf16>
      tpu.vector_store %arg8[%c0_213, %c268], %209 {strides = array<i32>} : memref<64x512xbf16, #tpu.memory_space<vmem>>, vector<64x116xbf16>,
    } else {
    }
    %c0_15 = arith.constant 0 : index
    %c127 = arith.constant 127 : index
    %21 = vector.load %arg8[%c0_15, %c127] : memref<64x512xbf16, #tpu.memory_space<vmem>>, vector<64x256xbf16>
    %c0_16 = arith.constant 0 : index
    %c0_17 = arith.constant 0 : index
    %c0_18 = arith.constant 0 : index
    %c0_19 = arith.constant 0 : index
    %22 = vector.load %arg3[%c0_16, %c0_17, %c0_18, %c0_19] : memref<3x3x64x64xbf16, #tpu.memory_space<vmem>>, vector<1x1x64x64xbf16>
    %23 = vector.shape_cast %22 : vector<1x1x64x64xbf16> to vector<64x64xbf16>
    %cst_20 = arith.constant dense<0.000000e+00> : vector<64x256xf32>
    %24 = tpu.matmul %23, %21, %cst_20 {dimension_numbers = #tpu.dot_dimension_numbers<[1], [0], [0], [1], [0, 0, 1, 1], [], []>} : vector<64x64xbf16>, vector<64x256xbf16>, vector<64x256xf32> -> vector<64x256xf32>
    %c0_21 = arith.constant 0 : index
    %c128_22 = arith.constant 128 : index
    %25 = vector.load %arg8[%c0_21, %c128_22] : memref<64x512xbf16, #tpu.memory_space<vmem>>, vector<64x256xbf16>
    %c0_23 = arith.constant 0 : index
    %c1 = arith.constant 1 : index
    %c0_24 = arith.constant 0 : index
    %c0_25 = arith.constant 0 : index
    %26 = vector.load %arg3[%c0_23, %c1, %c0_24, %c0_25] : memref<3x3x64x64xbf16, #tpu.memory_space<vmem>>, vector<1x1x64x64xbf16>
    %27 = vector.shape_cast %26 : vector<1x1x64x64xbf16> to vector<64x64xbf16>
    %cst_26 = arith.constant dense<0.000000e+00> : vector<64x256xf32>
    %28 = tpu.matmul %27, %25, %cst_26 {dimension_numbers = #tpu.dot_dimension_numbers<[1], [0], [0], [1], [0, 0, 1, 1], [], []>} : vector<64x64xbf16>, vector<64x256xbf16>, vector<64x256xf32> -> vector<64x256xf32>
    %29 = arith.addf %24, %28 : vector<64x256xf32>
    %c0_27 = arith.constant 0 : index
    %c129 = arith.constant 129 : index
    %30 = vector.load %arg8[%c0_27, %c129] : memref<64x512xbf16, #tpu.memory_space<vmem>>, vector<64x256xbf16>
    %c0_28 = arith.constant 0 : index
    %c2 = arith.constant 2 : index
    %c0_29 = arith.constant 0 : index
    %c0_30 = arith.constant 0 : index
    %31 = vector.load %arg3[%c0_28, %c2, %c0_29, %c0_30] : memref<3x3x64x64xbf16, #tpu.memory_space<vmem>>, vector<1x1x64x64xbf16>
    %32 = vector.shape_cast %31 : vector<1x1x64x64xbf16> to vector<64x64xbf16>
    %cst_31 = arith.constant dense<0.000000e+00> : vector<64x256xf32>
    %33 = tpu.matmul %32, %30, %cst_31 {dimension_numbers = #tpu.dot_dimension_numbers<[1], [0], [0], [1], [0, 0, 1, 1], [], []>} : vector<64x64xbf16>, vector<64x256xbf16>, vector<64x256xf32> -> vector<64x256xf32>
    %34 = arith.addf %29, %33 : vector<64x256xf32>
    %c0_32 = arith.constant 0 : index
    %c0_33 = arith.constant 0 : index
    %c0_34 = arith.constant 0 : index
    %35 = vector.load %arg4[%c0_32, %c0_33, %c0_34] : memref<3x64x1xf32, #tpu.memory_space<vmem>>, vector<1x64x1xf32>
    %36 = vector.shape_cast %35 : vector<1x64x1xf32> to vector<64x1xf32>
    %37 = vector.broadcast %36 : vector<64x1xf32> to vector<64x256xf32>
    %38 = arith.addf %34, %37 : vector<64x256xf32>
    %cst_35 = arith.constant 0.000000e+00 : f32
    %39 = vector.broadcast %cst_35 : f32 to vector<64x256xf32>
    %40 = arith.cmpf ogt, %38, %39 : vector<64x256xf32>
    %cst_36 = arith.constant 1.000000e-01 : f32
    %41 = vector.broadcast %cst_36 : f32 to vector<64x256xf32>
    %42 = arith.mulf %41, %38 : vector<64x256xf32>
    %43 = arith.select %40, %38, %42 : vector<64x256xi1>, vector<64x256xf32>
    %44 = arith.truncf %43 : vector<64x256xf32> to vector<64x256xbf16>
    %c0_37 = arith.constant 0 : index
    %c128_38 = arith.constant 128 : index
    %45 = vector.load %arg8[%c0_37, %c128_38] : memref<64x512xbf16, #tpu.memory_space<vmem>>, vector<64x256xbf16>
    tpu.vector_store %arg8[%c0_37, %c128_38], %44 {strides = array<i32>} : memref<64x512xbf16, #tpu.memory_space<vmem>>, vector<64x256xbf16>,
    %c0_i32_39 = arith.constant 0 : i32
    %46 = arith.cmpi eq, %arg1, %c0_i32_39 : i32
    %47 = arith.extui %46 : i1 to i32
    %c0_i32_40 = arith.constant 0 : i32
    %48 = arith.cmpi ne, %47, %c0_i32_40 : i32
    scf.if %48 {
      %cst_212 = arith.constant 0.000000e+00 : bf16
      %209 = vector.broadcast %cst_212 : bf16 to vector<64x12xbf16>
      %c0_213 = arith.constant 0 : index
      %c128_214 = arith.constant 128 : index
      %210 = vector.load %arg8[%c0_213, %c128_214] : memref<64x512xbf16, #tpu.memory_space<vmem>>, vector<64x12xbf16>
      tpu.vector_store %arg8[%c0_213, %c128_214], %209 {strides = array<i32>} : memref<64x512xbf16, #tpu.memory_space<vmem>>, vector<64x12xbf16>,
    } else {
    }
    %c2_i32_41 = arith.constant 2 : i32
    %49 = arith.cmpi eq, %arg1, %c2_i32_41 : i32
    %50 = arith.extui %49 : i1 to i32
    %c0_i32_42 = arith.constant 0 : i32
    %51 = arith.cmpi ne, %50, %c0_i32_42 : i32
    scf.if %51 {
      %cst_212 = arith.constant 0.000000e+00 : bf16
      %209 = vector.broadcast %cst_212 : bf16 to vector<64x116xbf16>
      %c0_213 = arith.constant 0 : index
      %c268 = arith.constant 268 : index
      %210 = vector.load %arg8[%c0_213, %c268] : memref<64x512xbf16, #tpu.memory_space<vmem>>, vector<64x116xbf16>
      tpu.vector_store %arg8[%c0_213, %c268], %209 {strides = array<i32>} : memref<64x512xbf16, #tpu.memory_space<vmem>>, vector<64x116xbf16>,
    } else {
    }
    %c0_43 = arith.constant 0 : index
    %c127_44 = arith.constant 127 : index
    %52 = vector.load %arg8[%c0_43, %c127_44] : memref<64x512xbf16, #tpu.memory_space<vmem>>, vector<64x256xbf16>
    %c0_45 = arith.constant 0 : index
    %c0_46 = arith.constant 0 : index
    %c0_47 = arith.constant 0 : index
    %c0_48 = arith.constant 0 : index
    %53 = vector.load %arg5[%c0_45, %c0_46, %c0_47, %c0_48] : memref<3x3x64x64xbf16, #tpu.memory_space<vmem>>, vector<1x1x64x64xbf16>
    %54 = vector.shape_cast %53 : vector<1x1x64x64xbf16> to vector<64x64xbf16>
    %cst_49 = arith.constant dense<0.000000e+00> : vector<64x256xf32>
    %55 = tpu.matmul %54, %52, %cst_49 {dimension_numbers = #tpu.dot_dimension_numbers<[1], [0], [0], [1], [0, 0, 1, 1], [], []>} : vector<64x64xbf16>, vector<64x256xbf16>, vector<64x256xf32> -> vector<64x256xf32>
    %c0_50 = arith.constant 0 : index
    %c128_51 = arith.constant 128 : index
    %56 = vector.load %arg8[%c0_50, %c128_51] : memref<64x512xbf16, #tpu.memory_space<vmem>>, vector<64x256xbf16>
    %c0_52 = arith.constant 0 : index
    %c1_53 = arith.constant 1 : index
    %c0_54 = arith.constant 0 : index
    %c0_55 = arith.constant 0 : index
    %57 = vector.load %arg5[%c0_52, %c1_53, %c0_54, %c0_55] : memref<3x3x64x64xbf16, #tpu.memory_space<vmem>>, vector<1x1x64x64xbf16>
    %58 = vector.shape_cast %57 : vector<1x1x64x64xbf16> to vector<64x64xbf16>
    %cst_56 = arith.constant dense<0.000000e+00> : vector<64x256xf32>
    %59 = tpu.matmul %58, %56, %cst_56 {dimension_numbers = #tpu.dot_dimension_numbers<[1], [0], [0], [1], [0, 0, 1, 1], [], []>} : vector<64x64xbf16>, vector<64x256xbf16>, vector<64x256xf32> -> vector<64x256xf32>
    %60 = arith.addf %55, %59 : vector<64x256xf32>
    %c0_57 = arith.constant 0 : index
    %c129_58 = arith.constant 129 : index
    %61 = vector.load %arg8[%c0_57, %c129_58] : memref<64x512xbf16, #tpu.memory_space<vmem>>, vector<64x256xbf16>
    %c0_59 = arith.constant 0 : index
    %c2_60 = arith.constant 2 : index
    %c0_61 = arith.constant 0 : index
    %c0_62 = arith.constant 0 : index
    %62 = vector.load %arg5[%c0_59, %c2_60, %c0_61, %c0_62] : memref<3x3x64x64xbf16, #tpu.memory_space<vmem>>, vector<1x1x64x64xbf16>
    %63 = vector.shape_cast %62 : vector<1x1x64x64xbf16> to vector<64x64xbf16>
    %cst_63 = arith.constant dense<0.000000e+00> : vector<64x256xf32>
    %64 = tpu.matmul %63, %61, %cst_63 {dimension_numbers = #tpu.dot_dimension_numbers<[1], [0], [0], [1], [0, 0, 1, 1], [], []>} : vector<64x64xbf16>, vector<64x256xbf16>, vector<64x256xf32> -> vector<64x256xf32>
    %65 = arith.addf %60, %64 : vector<64x256xf32>
    %c0_64 = arith.constant 0 : index
    %c0_65 = arith.constant 0 : index
    %c0_66 = arith.constant 0 : index
    %66 = vector.load %arg6[%c0_64, %c0_65, %c0_66] : memref<3x64x1xf32, #tpu.memory_space<vmem>>, vector<1x64x1xf32>
    %67 = vector.shape_cast %66 : vector<1x64x1xf32> to vector<64x1xf32>
    %68 = vector.broadcast %67 : vector<64x1xf32> to vector<64x256xf32>
    %69 = arith.addf %65, %68 : vector<64x256xf32>
    %c0_67 = arith.constant 0 : index
    %c0_68 = arith.constant 0 : index
    %70 = vector.load %arg9[%c0_67, %c0_68] : memref<64x256xf32, #tpu.memory_space<vmem>>, vector<64x256xf32>
    %71 = arith.addf %69, %70 : vector<64x256xf32>
    %c0_69 = arith.constant 0 : index
    %c0_70 = arith.constant 0 : index
    %72 = vector.load %arg9[%c0_69, %c0_70] : memref<64x256xf32, #tpu.memory_space<vmem>>, vector<64x256xf32>
    tpu.vector_store %arg9[%c0_69, %c0_70], %71 {strides = array<i32>} : memref<64x256xf32, #tpu.memory_space<vmem>>, vector<64x256xf32>,
    %c0_71 = arith.constant 0 : index
    %c0_72 = arith.constant 0 : index
    %73 = vector.load %arg9[%c0_71, %c0_72] : memref<64x256xf32, #tpu.memory_space<vmem>>, vector<64x256xf32>
    %cst_73 = arith.constant 0.000000e+00 : f32
    %74 = vector.broadcast %cst_73 : f32 to vector<64x256xf32>
    %75 = arith.cmpf ogt, %73, %74 : vector<64x256xf32>
    %cst_74 = arith.constant 1.000000e-01 : f32
    %76 = vector.broadcast %cst_74 : f32 to vector<64x256xf32>
    %77 = arith.mulf %76, %73 : vector<64x256xf32>
    %78 = arith.select %75, %73, %77 : vector<64x256xi1>, vector<64x256xf32>
    %79 = arith.truncf %78 : vector<64x256xf32> to vector<64x256xbf16>
    %c0_75 = arith.constant 0 : index
    %c128_76 = arith.constant 128 : index
    %80 = vector.load %arg8[%c0_75, %c128_76] : memref<64x512xbf16, #tpu.memory_space<vmem>>, vector<64x256xbf16>
    tpu.vector_store %arg8[%c0_75, %c128_76], %79 {strides = array<i32>} : memref<64x512xbf16, #tpu.memory_space<vmem>>, vector<64x256xbf16>,
    %c0_i32_77 = arith.constant 0 : i32
    %81 = arith.cmpi eq, %arg1, %c0_i32_77 : i32
    %82 = arith.extui %81 : i1 to i32
    %c0_i32_78 = arith.constant 0 : i32
    %83 = arith.cmpi ne, %82, %c0_i32_78 : i32
    scf.if %83 {
      %cst_212 = arith.constant 0.000000e+00 : bf16
      %209 = vector.broadcast %cst_212 : bf16 to vector<64x12xbf16>
      %c0_213 = arith.constant 0 : index
      %c128_214 = arith.constant 128 : index
      %210 = vector.load %arg8[%c0_213, %c128_214] : memref<64x512xbf16, #tpu.memory_space<vmem>>, vector<64x12xbf16>
      tpu.vector_store %arg8[%c0_213, %c128_214], %209 {strides = array<i32>} : memref<64x512xbf16, #tpu.memory_space<vmem>>, vector<64x12xbf16>,
    } else {
    }
    %c2_i32_79 = arith.constant 2 : i32
    %84 = arith.cmpi eq, %arg1, %c2_i32_79 : i32
    %85 = arith.extui %84 : i1 to i32
    %c0_i32_80 = arith.constant 0 : i32
    %86 = arith.cmpi ne, %85, %c0_i32_80 : i32
    scf.if %86 {
      %cst_212 = arith.constant 0.000000e+00 : bf16
      %209 = vector.broadcast %cst_212 : bf16 to vector<64x116xbf16>
      %c0_213 = arith.constant 0 : index
      %c268 = arith.constant 268 : index
      %210 = vector.load %arg8[%c0_213, %c268] : memref<64x512xbf16, #tpu.memory_space<vmem>>, vector<64x116xbf16>
      tpu.vector_store %arg8[%c0_213, %c268], %209 {strides = array<i32>} : memref<64x512xbf16, #tpu.memory_space<vmem>>, vector<64x116xbf16>,
    } else {
    }
    %c0_81 = arith.constant 0 : index
    %c125 = arith.constant 125 : index
    %87 = vector.load %arg8[%c0_81, %c125] : memref<64x512xbf16, #tpu.memory_space<vmem>>, vector<64x256xbf16>
    %c1_82 = arith.constant 1 : index
    %c0_83 = arith.constant 0 : index
    %c0_84 = arith.constant 0 : index
    %c0_85 = arith.constant 0 : index
    %88 = vector.load %arg3[%c1_82, %c0_83, %c0_84, %c0_85] : memref<3x3x64x64xbf16, #tpu.memory_space<vmem>>, vector<1x1x64x64xbf16>
    %89 = vector.shape_cast %88 : vector<1x1x64x64xbf16> to vector<64x64xbf16>
    %cst_86 = arith.constant dense<0.000000e+00> : vector<64x256xf32>
    %90 = tpu.matmul %89, %87, %cst_86 {dimension_numbers = #tpu.dot_dimension_numbers<[1], [0], [0], [1], [0, 0, 1, 1], [], []>} : vector<64x64xbf16>, vector<64x256xbf16>, vector<64x256xf32> -> vector<64x256xf32>
    %c0_87 = arith.constant 0 : index
    %c128_88 = arith.constant 128 : index
    %91 = vector.load %arg8[%c0_87, %c128_88] : memref<64x512xbf16, #tpu.memory_space<vmem>>, vector<64x256xbf16>
    %c1_89 = arith.constant 1 : index
    %c1_90 = arith.constant 1 : index
    %c0_91 = arith.constant 0 : index
    %c0_92 = arith.constant 0 : index
    %92 = vector.load %arg3[%c1_89, %c1_90, %c0_91, %c0_92] : memref<3x3x64x64xbf16, #tpu.memory_space<vmem>>, vector<1x1x64x64xbf16>
    %93 = vector.shape_cast %92 : vector<1x1x64x64xbf16> to vector<64x64xbf16>
    %cst_93 = arith.constant dense<0.000000e+00> : vector<64x256xf32>
    %94 = tpu.matmul %93, %91, %cst_93 {dimension_numbers = #tpu.dot_dimension_numbers<[1], [0], [0], [1], [0, 0, 1, 1], [], []>} : vector<64x64xbf16>, vector<64x256xbf16>, vector<64x256xf32> -> vector<64x256xf32>
    %95 = arith.addf %90, %94 : vector<64x256xf32>
    %c0_94 = arith.constant 0 : index
    %c131 = arith.constant 131 : index
    %96 = vector.load %arg8[%c0_94, %c131] : memref<64x512xbf16, #tpu.memory_space<vmem>>, vector<64x256xbf16>
    %c1_95 = arith.constant 1 : index
    %c2_96 = arith.constant 2 : index
    %c0_97 = arith.constant 0 : index
    %c0_98 = arith.constant 0 : index
    %97 = vector.load %arg3[%c1_95, %c2_96, %c0_97, %c0_98] : memref<3x3x64x64xbf16, #tpu.memory_space<vmem>>, vector<1x1x64x64xbf16>
    %98 = vector.shape_cast %97 : vector<1x1x64x64xbf16> to vector<64x64xbf16>
    %cst_99 = arith.constant dense<0.000000e+00> : vector<64x256xf32>
    %99 = tpu.matmul %98, %96, %cst_99 {dimension_numbers = #tpu.dot_dimension_numbers<[1], [0], [0], [1], [0, 0, 1, 1], [], []>} : vector<64x64xbf16>, vector<64x256xbf16>, vector<64x256xf32> -> vector<64x256xf32>
    %100 = arith.addf %95, %99 : vector<64x256xf32>
    %c1_100 = arith.constant 1 : index
    %c0_101 = arith.constant 0 : index
    %c0_102 = arith.constant 0 : index
    %101 = vector.load %arg4[%c1_100, %c0_101, %c0_102] : memref<3x64x1xf32, #tpu.memory_space<vmem>>, vector<1x64x1xf32>
    %102 = vector.shape_cast %101 : vector<1x64x1xf32> to vector<64x1xf32>
    %103 = vector.broadcast %102 : vector<64x1xf32> to vector<64x256xf32>
    %104 = arith.addf %100, %103 : vector<64x256xf32>
    %cst_103 = arith.constant 0.000000e+00 : f32
    %105 = vector.broadcast %cst_103 : f32 to vector<64x256xf32>
    %106 = arith.cmpf ogt, %104, %105 : vector<64x256xf32>
    %cst_104 = arith.constant 1.000000e-01 : f32
    %107 = vector.broadcast %cst_104 : f32 to vector<64x256xf32>
    %108 = arith.mulf %107, %104 : vector<64x256xf32>
    %109 = arith.select %106, %104, %108 : vector<64x256xi1>, vector<64x256xf32>
    %110 = arith.truncf %109 : vector<64x256xf32> to vector<64x256xbf16>
    %c0_105 = arith.constant 0 : index
    %c128_106 = arith.constant 128 : index
    %111 = vector.load %arg8[%c0_105, %c128_106] : memref<64x512xbf16, #tpu.memory_space<vmem>>, vector<64x256xbf16>
    tpu.vector_store %arg8[%c0_105, %c128_106], %110 {strides = array<i32>} : memref<64x512xbf16, #tpu.memory_space<vmem>>, vector<64x256xbf16>,
    %c0_i32_107 = arith.constant 0 : i32
    %112 = arith.cmpi eq, %arg1, %c0_i32_107 : i32
    %113 = arith.extui %112 : i1 to i32
    %c0_i32_108 = arith.constant 0 : i32
    %114 = arith.cmpi ne, %113, %c0_i32_108 : i32
    scf.if %114 {
      %cst_212 = arith.constant 0.000000e+00 : bf16
      %209 = vector.broadcast %cst_212 : bf16 to vector<64x12xbf16>
      %c0_213 = arith.constant 0 : index
      %c128_214 = arith.constant 128 : index
      %210 = vector.load %arg8[%c0_213, %c128_214] : memref<64x512xbf16, #tpu.memory_space<vmem>>, vector<64x12xbf16>
      tpu.vector_store %arg8[%c0_213, %c128_214], %209 {strides = array<i32>} : memref<64x512xbf16, #tpu.memory_space<vmem>>, vector<64x12xbf16>,
    } else {
    }
    %c2_i32_109 = arith.constant 2 : i32
    %115 = arith.cmpi eq, %arg1, %c2_i32_109 : i32
    %116 = arith.extui %115 : i1 to i32
    %c0_i32_110 = arith.constant 0 : i32
    %117 = arith.cmpi ne, %116, %c0_i32_110 : i32
    scf.if %117 {
      %cst_212 = arith.constant 0.000000e+00 : bf16
      %209 = vector.broadcast %cst_212 : bf16 to vector<64x116xbf16>
      %c0_213 = arith.constant 0 : index
      %c268 = arith.constant 268 : index
      %210 = vector.load %arg8[%c0_213, %c268] : memref<64x512xbf16, #tpu.memory_space<vmem>>, vector<64x116xbf16>
      tpu.vector_store %arg8[%c0_213, %c268], %209 {strides = array<i32>} : memref<64x512xbf16, #tpu.memory_space<vmem>>, vector<64x116xbf16>,
    } else {
    }
    %c0_111 = arith.constant 0 : index
    %c127_112 = arith.constant 127 : index
    %118 = vector.load %arg8[%c0_111, %c127_112] : memref<64x512xbf16, #tpu.memory_space<vmem>>, vector<64x256xbf16>
    %c1_113 = arith.constant 1 : index
    %c0_114 = arith.constant 0 : index
    %c0_115 = arith.constant 0 : index
    %c0_116 = arith.constant 0 : index
    %119 = vector.load %arg5[%c1_113, %c0_114, %c0_115, %c0_116] : memref<3x3x64x64xbf16, #tpu.memory_space<vmem>>, vector<1x1x64x64xbf16>
    %120 = vector.shape_cast %119 : vector<1x1x64x64xbf16> to vector<64x64xbf16>
    %cst_117 = arith.constant dense<0.000000e+00> : vector<64x256xf32>
    %121 = tpu.matmul %120, %118, %cst_117 {dimension_numbers = #tpu.dot_dimension_numbers<[1], [0], [0], [1], [0, 0, 1, 1], [], []>} : vector<64x64xbf16>, vector<64x256xbf16>, vector<64x256xf32> -> vector<64x256xf32>
    %c0_118 = arith.constant 0 : index
    %c128_119 = arith.constant 128 : index
    %122 = vector.load %arg8[%c0_118, %c128_119] : memref<64x512xbf16, #tpu.memory_space<vmem>>, vector<64x256xbf16>
    %c1_120 = arith.constant 1 : index
    %c1_121 = arith.constant 1 : index
    %c0_122 = arith.constant 0 : index
    %c0_123 = arith.constant 0 : index
    %123 = vector.load %arg5[%c1_120, %c1_121, %c0_122, %c0_123] : memref<3x3x64x64xbf16, #tpu.memory_space<vmem>>, vector<1x1x64x64xbf16>
    %124 = vector.shape_cast %123 : vector<1x1x64x64xbf16> to vector<64x64xbf16>
    %cst_124 = arith.constant dense<0.000000e+00> : vector<64x256xf32>
    %125 = tpu.matmul %124, %122, %cst_124 {dimension_numbers = #tpu.dot_dimension_numbers<[1], [0], [0], [1], [0, 0, 1, 1], [], []>} : vector<64x64xbf16>, vector<64x256xbf16>, vector<64x256xf32> -> vector<64x256xf32>
    %126 = arith.addf %121, %125 : vector<64x256xf32>
    %c0_125 = arith.constant 0 : index
    %c129_126 = arith.constant 129 : index
    %127 = vector.load %arg8[%c0_125, %c129_126] : memref<64x512xbf16, #tpu.memory_space<vmem>>, vector<64x256xbf16>
    %c1_127 = arith.constant 1 : index
    %c2_128 = arith.constant 2 : index
    %c0_129 = arith.constant 0 : index
    %c0_130 = arith.constant 0 : index
    %128 = vector.load %arg5[%c1_127, %c2_128, %c0_129, %c0_130] : memref<3x3x64x64xbf16, #tpu.memory_space<vmem>>, vector<1x1x64x64xbf16>
    %129 = vector.shape_cast %128 : vector<1x1x64x64xbf16> to vector<64x64xbf16>
    %cst_131 = arith.constant dense<0.000000e+00> : vector<64x256xf32>
    %130 = tpu.matmul %129, %127, %cst_131 {dimension_numbers = #tpu.dot_dimension_numbers<[1], [0], [0], [1], [0, 0, 1, 1], [], []>} : vector<64x64xbf16>, vector<64x256xbf16>, vector<64x256xf32> -> vector<64x256xf32>
    %131 = arith.addf %126, %130 : vector<64x256xf32>
    %c1_132 = arith.constant 1 : index
    %c0_133 = arith.constant 0 : index
    %c0_134 = arith.constant 0 : index
    %132 = vector.load %arg6[%c1_132, %c0_133, %c0_134] : memref<3x64x1xf32, #tpu.memory_space<vmem>>, vector<1x64x1xf32>
    %133 = vector.shape_cast %132 : vector<1x64x1xf32> to vector<64x1xf32>
    %134 = vector.broadcast %133 : vector<64x1xf32> to vector<64x256xf32>
    %135 = arith.addf %131, %134 : vector<64x256xf32>
    %c0_135 = arith.constant 0 : index
    %c0_136 = arith.constant 0 : index
    %136 = vector.load %arg9[%c0_135, %c0_136] : memref<64x256xf32, #tpu.memory_space<vmem>>, vector<64x256xf32>
    %137 = arith.addf %135, %136 : vector<64x256xf32>
    %c0_137 = arith.constant 0 : index
    %c0_138 = arith.constant 0 : index
    %138 = vector.load %arg9[%c0_137, %c0_138] : memref<64x256xf32, #tpu.memory_space<vmem>>, vector<64x256xf32>
    tpu.vector_store %arg9[%c0_137, %c0_138], %137 {strides = array<i32>} : memref<64x256xf32, #tpu.memory_space<vmem>>, vector<64x256xf32>,
    %c0_139 = arith.constant 0 : index
    %c0_140 = arith.constant 0 : index
    %139 = vector.load %arg9[%c0_139, %c0_140] : memref<64x256xf32, #tpu.memory_space<vmem>>, vector<64x256xf32>
    %cst_141 = arith.constant 0.000000e+00 : f32
    %140 = vector.broadcast %cst_141 : f32 to vector<64x256xf32>
    %141 = arith.cmpf ogt, %139, %140 : vector<64x256xf32>
    %cst_142 = arith.constant 1.000000e-01 : f32
    %142 = vector.broadcast %cst_142 : f32 to vector<64x256xf32>
    %143 = arith.mulf %142, %139 : vector<64x256xf32>
    %144 = arith.select %141, %139, %143 : vector<64x256xi1>, vector<64x256xf32>
    %145 = arith.truncf %144 : vector<64x256xf32> to vector<64x256xbf16>
    %c0_143 = arith.constant 0 : index
    %c128_144 = arith.constant 128 : index
    %146 = vector.load %arg8[%c0_143, %c128_144] : memref<64x512xbf16, #tpu.memory_space<vmem>>, vector<64x256xbf16>
    tpu.vector_store %arg8[%c0_143, %c128_144], %145 {strides = array<i32>} : memref<64x512xbf16, #tpu.memory_space<vmem>>, vector<64x256xbf16>,
    %c0_i32_145 = arith.constant 0 : i32
    %147 = arith.cmpi eq, %arg1, %c0_i32_145 : i32
    %148 = arith.extui %147 : i1 to i32
    %c0_i32_146 = arith.constant 0 : i32
    %149 = arith.cmpi ne, %148, %c0_i32_146 : i32
    scf.if %149 {
      %cst_212 = arith.constant 0.000000e+00 : bf16
      %209 = vector.broadcast %cst_212 : bf16 to vector<64x12xbf16>
      %c0_213 = arith.constant 0 : index
      %c128_214 = arith.constant 128 : index
      %210 = vector.load %arg8[%c0_213, %c128_214] : memref<64x512xbf16, #tpu.memory_space<vmem>>, vector<64x12xbf16>
      tpu.vector_store %arg8[%c0_213, %c128_214], %209 {strides = array<i32>} : memref<64x512xbf16, #tpu.memory_space<vmem>>, vector<64x12xbf16>,
    } else {
    }
    %c2_i32_147 = arith.constant 2 : i32
    %150 = arith.cmpi eq, %arg1, %c2_i32_147 : i32
    %151 = arith.extui %150 : i1 to i32
    %c0_i32_148 = arith.constant 0 : i32
    %152 = arith.cmpi ne, %151, %c0_i32_148 : i32
    scf.if %152 {
      %cst_212 = arith.constant 0.000000e+00 : bf16
      %209 = vector.broadcast %cst_212 : bf16 to vector<64x116xbf16>
      %c0_213 = arith.constant 0 : index
      %c268 = arith.constant 268 : index
      %210 = vector.load %arg8[%c0_213, %c268] : memref<64x512xbf16, #tpu.memory_space<vmem>>, vector<64x116xbf16>
      tpu.vector_store %arg8[%c0_213, %c268], %209 {strides = array<i32>} : memref<64x512xbf16, #tpu.memory_space<vmem>>, vector<64x116xbf16>,
    } else {
    }
    %c0_149 = arith.constant 0 : index
    %c123_150 = arith.constant 123 : index
    %153 = vector.load %arg8[%c0_149, %c123_150] : memref<64x512xbf16, #tpu.memory_space<vmem>>, vector<64x256xbf16>
    %c2_151 = arith.constant 2 : index
    %c0_152 = arith.constant 0 : index
    %c0_153 = arith.constant 0 : index
    %c0_154 = arith.constant 0 : index
    %154 = vector.load %arg3[%c2_151, %c0_152, %c0_153, %c0_154] : memref<3x3x64x64xbf16, #tpu.memory_space<vmem>>, vector<1x1x64x64xbf16>
    %155 = vector.shape_cast %154 : vector<1x1x64x64xbf16> to vector<64x64xbf16>
    %cst_155 = arith.constant dense<0.000000e+00> : vector<64x256xf32>
    %156 = tpu.matmul %155, %153, %cst_155 {dimension_numbers = #tpu.dot_dimension_numbers<[1], [0], [0], [1], [0, 0, 1, 1], [], []>} : vector<64x64xbf16>, vector<64x256xbf16>, vector<64x256xf32> -> vector<64x256xf32>
    %c0_156 = arith.constant 0 : index
    %c128_157 = arith.constant 128 : index
    %157 = vector.load %arg8[%c0_156, %c128_157] : memref<64x512xbf16, #tpu.memory_space<vmem>>, vector<64x256xbf16>
    %c2_158 = arith.constant 2 : index
    %c1_159 = arith.constant 1 : index
    %c0_160 = arith.constant 0 : index
    %c0_161 = arith.constant 0 : index
    %158 = vector.load %arg3[%c2_158, %c1_159, %c0_160, %c0_161] : memref<3x3x64x64xbf16, #tpu.memory_space<vmem>>, vector<1x1x64x64xbf16>
    %159 = vector.shape_cast %158 : vector<1x1x64x64xbf16> to vector<64x64xbf16>
    %cst_162 = arith.constant dense<0.000000e+00> : vector<64x256xf32>
    %160 = tpu.matmul %159, %157, %cst_162 {dimension_numbers = #tpu.dot_dimension_numbers<[1], [0], [0], [1], [0, 0, 1, 1], [], []>} : vector<64x64xbf16>, vector<64x256xbf16>, vector<64x256xf32> -> vector<64x256xf32>
    %161 = arith.addf %156, %160 : vector<64x256xf32>
    %c0_163 = arith.constant 0 : index
    %c133 = arith.constant 133 : index
    %162 = vector.load %arg8[%c0_163, %c133] : memref<64x512xbf16, #tpu.memory_space<vmem>>, vector<64x256xbf16>
    %c2_164 = arith.constant 2 : index
    %c2_165 = arith.constant 2 : index
    %c0_166 = arith.constant 0 : index
    %c0_167 = arith.constant 0 : index
    %163 = vector.load %arg3[%c2_164, %c2_165, %c0_166, %c0_167] : memref<3x3x64x64xbf16, #tpu.memory_space<vmem>>, vector<1x1x64x64xbf16>
    %164 = vector.shape_cast %163 : vector<1x1x64x64xbf16> to vector<64x64xbf16>
    %cst_168 = arith.constant dense<0.000000e+00> : vector<64x256xf32>
    %165 = tpu.matmul %164, %162, %cst_168 {dimension_numbers = #tpu.dot_dimension_numbers<[1], [0], [0], [1], [0, 0, 1, 1], [], []>} : vector<64x64xbf16>, vector<64x256xbf16>, vector<64x256xf32> -> vector<64x256xf32>
    %166 = arith.addf %161, %165 : vector<64x256xf32>
    %c2_169 = arith.constant 2 : index
    %c0_170 = arith.constant 0 : index
    %c0_171 = arith.constant 0 : index
    %167 = vector.load %arg4[%c2_169, %c0_170, %c0_171] : memref<3x64x1xf32, #tpu.memory_space<vmem>>, vector<1x64x1xf32>
    %168 = vector.shape_cast %167 : vector<1x64x1xf32> to vector<64x1xf32>
    %169 = vector.broadcast %168 : vector<64x1xf32> to vector<64x256xf32>
    %170 = arith.addf %166, %169 : vector<64x256xf32>
    %cst_172 = arith.constant 0.000000e+00 : f32
    %171 = vector.broadcast %cst_172 : f32 to vector<64x256xf32>
    %172 = arith.cmpf ogt, %170, %171 : vector<64x256xf32>
    %cst_173 = arith.constant 1.000000e-01 : f32
    %173 = vector.broadcast %cst_173 : f32 to vector<64x256xf32>
    %174 = arith.mulf %173, %170 : vector<64x256xf32>
    %175 = arith.select %172, %170, %174 : vector<64x256xi1>, vector<64x256xf32>
    %176 = arith.truncf %175 : vector<64x256xf32> to vector<64x256xbf16>
    %c0_174 = arith.constant 0 : index
    %c128_175 = arith.constant 128 : index
    %177 = vector.load %arg8[%c0_174, %c128_175] : memref<64x512xbf16, #tpu.memory_space<vmem>>, vector<64x256xbf16>
    tpu.vector_store %arg8[%c0_174, %c128_175], %176 {strides = array<i32>} : memref<64x512xbf16, #tpu.memory_space<vmem>>, vector<64x256xbf16>,
    %c0_i32_176 = arith.constant 0 : i32
    %178 = arith.cmpi eq, %arg1, %c0_i32_176 : i32
    %179 = arith.extui %178 : i1 to i32
    %c0_i32_177 = arith.constant 0 : i32
    %180 = arith.cmpi ne, %179, %c0_i32_177 : i32
    scf.if %180 {
      %cst_212 = arith.constant 0.000000e+00 : bf16
      %209 = vector.broadcast %cst_212 : bf16 to vector<64x12xbf16>
      %c0_213 = arith.constant 0 : index
      %c128_214 = arith.constant 128 : index
      %210 = vector.load %arg8[%c0_213, %c128_214] : memref<64x512xbf16, #tpu.memory_space<vmem>>, vector<64x12xbf16>
      tpu.vector_store %arg8[%c0_213, %c128_214], %209 {strides = array<i32>} : memref<64x512xbf16, #tpu.memory_space<vmem>>, vector<64x12xbf16>,
    } else {
    }
    %c2_i32_178 = arith.constant 2 : i32
    %181 = arith.cmpi eq, %arg1, %c2_i32_178 : i32
    %182 = arith.extui %181 : i1 to i32
    %c0_i32_179 = arith.constant 0 : i32
    %183 = arith.cmpi ne, %182, %c0_i32_179 : i32
    scf.if %183 {
      %cst_212 = arith.constant 0.000000e+00 : bf16
      %209 = vector.broadcast %cst_212 : bf16 to vector<64x116xbf16>
      %c0_213 = arith.constant 0 : index
      %c268 = arith.constant 268 : index
      %210 = vector.load %arg8[%c0_213, %c268] : memref<64x512xbf16, #tpu.memory_space<vmem>>, vector<64x116xbf16>
      tpu.vector_store %arg8[%c0_213, %c268], %209 {strides = array<i32>} : memref<64x512xbf16, #tpu.memory_space<vmem>>, vector<64x116xbf16>,
    } else {
    }
    %c0_180 = arith.constant 0 : index
    %c127_181 = arith.constant 127 : index
    %184 = vector.load %arg8[%c0_180, %c127_181] : memref<64x512xbf16, #tpu.memory_space<vmem>>, vector<64x256xbf16>
    %c2_182 = arith.constant 2 : index
    %c0_183 = arith.constant 0 : index
    %c0_184 = arith.constant 0 : index
    %c0_185 = arith.constant 0 : index
    %185 = vector.load %arg5[%c2_182, %c0_183, %c0_184, %c0_185] : memref<3x3x64x64xbf16, #tpu.memory_space<vmem>>, vector<1x1x64x64xbf16>
    %186 = vector.shape_cast %185 : vector<1x1x64x64xbf16> to vector<64x64xbf16>
    %cst_186 = arith.constant dense<0.000000e+00> : vector<64x256xf32>
    %187 = tpu.matmul %186, %184, %cst_186 {dimension_numbers = #tpu.dot_dimension_numbers<[1], [0], [0], [1], [0, 0, 1, 1], [], []>} : vector<64x64xbf16>, vector<64x256xbf16>, vector<64x256xf32> -> vector<64x256xf32>
    %c0_187 = arith.constant 0 : index
    %c128_188 = arith.constant 128 : index
    %188 = vector.load %arg8[%c0_187, %c128_188] : memref<64x512xbf16, #tpu.memory_space<vmem>>, vector<64x256xbf16>
    %c2_189 = arith.constant 2 : index
    %c1_190 = arith.constant 1 : index
    %c0_191 = arith.constant 0 : index
    %c0_192 = arith.constant 0 : index
    %189 = vector.load %arg5[%c2_189, %c1_190, %c0_191, %c0_192] : memref<3x3x64x64xbf16, #tpu.memory_space<vmem>>, vector<1x1x64x64xbf16>
    %190 = vector.shape_cast %189 : vector<1x1x64x64xbf16> to vector<64x64xbf16>
    %cst_193 = arith.constant dense<0.000000e+00> : vector<64x256xf32>
    %191 = tpu.matmul %190, %188, %cst_193 {dimension_numbers = #tpu.dot_dimension_numbers<[1], [0], [0], [1], [0, 0, 1, 1], [], []>} : vector<64x64xbf16>, vector<64x256xbf16>, vector<64x256xf32> -> vector<64x256xf32>
    %192 = arith.addf %187, %191 : vector<64x256xf32>
    %c0_194 = arith.constant 0 : index
    %c129_195 = arith.constant 129 : index
    %193 = vector.load %arg8[%c0_194, %c129_195] : memref<64x512xbf16, #tpu.memory_space<vmem>>, vector<64x256xbf16>
    %c2_196 = arith.constant 2 : index
    %c2_197 = arith.constant 2 : index
    %c0_198 = arith.constant 0 : index
    %c0_199 = arith.constant 0 : index
    %194 = vector.load %arg5[%c2_196, %c2_197, %c0_198, %c0_199] : memref<3x3x64x64xbf16, #tpu.memory_space<vmem>>, vector<1x1x64x64xbf16>
    %195 = vector.shape_cast %194 : vector<1x1x64x64xbf16> to vector<64x64xbf16>
    %cst_200 = arith.constant dense<0.000000e+00> : vector<64x256xf32>
    %196 = tpu.matmul %195, %193, %cst_200 {dimension_numbers = #tpu.dot_dimension_numbers<[1], [0], [0], [1], [0, 0, 1, 1], [], []>} : vector<64x64xbf16>, vector<64x256xbf16>, vector<64x256xf32> -> vector<64x256xf32>
    %197 = arith.addf %192, %196 : vector<64x256xf32>
    %c2_201 = arith.constant 2 : index
    %c0_202 = arith.constant 0 : index
    %c0_203 = arith.constant 0 : index
    %198 = vector.load %arg6[%c2_201, %c0_202, %c0_203] : memref<3x64x1xf32, #tpu.memory_space<vmem>>, vector<1x64x1xf32>
    %199 = vector.shape_cast %198 : vector<1x64x1xf32> to vector<64x1xf32>
    %200 = vector.broadcast %199 : vector<64x1xf32> to vector<64x256xf32>
    %201 = arith.addf %197, %200 : vector<64x256xf32>
    %c0_204 = arith.constant 0 : index
    %c0_205 = arith.constant 0 : index
    %202 = vector.load %arg9[%c0_204, %c0_205] : memref<64x256xf32, #tpu.memory_space<vmem>>, vector<64x256xf32>
    %203 = arith.addf %201, %202 : vector<64x256xf32>
    %c0_206 = arith.constant 0 : index
    %c0_207 = arith.constant 0 : index
    %204 = vector.load %arg9[%c0_206, %c0_207] : memref<64x256xf32, #tpu.memory_space<vmem>>, vector<64x256xf32>
    tpu.vector_store %arg9[%c0_206, %c0_207], %203 {strides = array<i32>} : memref<64x256xf32, #tpu.memory_space<vmem>>, vector<64x256xf32>,
    %c0_208 = arith.constant 0 : index
    %c12 = arith.constant 12 : index
    %205 = vector.load %arg9[%c0_208, %c12] : memref<64x256xf32, #tpu.memory_space<vmem>>, vector<64x128xf32>
    %c0_209 = arith.constant 0 : index
    %c0_210 = arith.constant 0 : index
    %c0_211 = arith.constant 0 : index
    %206 = vector.load %arg7[%c0_209, %c0_210, %c0_211] : memref<1x64x128xf32, #tpu.memory_space<vmem>>, vector<1x64x128xf32>
    %207 = vector.shape_cast %206 : vector<1x64x128xf32> to vector<64x128xf32>
    %208 = vector.shape_cast %205 : vector<64x128xf32> to vector<1x64x128xf32>
    tpu.vector_store %arg7[%c0_209, %c0_210, %c0_211], %208 {strides = array<i32>} : memref<1x64x128xf32, #tpu.memory_space<vmem>>, vector<1x64x128xf32>,
    return
  }
  func.func @transform_0(%arg0: i32, %arg1: i32) -> (i32, i32, i32, i32) {
    %c0_i32 = arith.constant 0 : i32
    %c0_i32_0 = arith.constant 0 : i32
    %c0_i32_1 = arith.constant 0 : i32
    return %arg0, %arg1, %c0_i32, %c0_i32_0 : i32, i32, i32, i32
  }
  func.func @transform_1(%arg0: i32, %arg1: i32) -> (i32, i32, i32, i32) {
    %c0_i32 = arith.constant 0 : i32
    %c0_i32_0 = arith.constant 0 : i32
    %c0_i32_1 = arith.constant 0 : i32
    %c0_i32_2 = arith.constant 0 : i32
    %c0_i32_3 = arith.constant 0 : i32
    return %c0_i32, %c0_i32_0, %c0_i32_1, %c0_i32_2 : i32, i32, i32, i32
  }
  func.func @transform_2(%arg0: i32, %arg1: i32) -> (i32, i32, i32) {
    %c0_i32 = arith.constant 0 : i32
    %c0_i32_0 = arith.constant 0 : i32
    %c0_i32_1 = arith.constant 0 : i32
    %c0_i32_2 = arith.constant 0 : i32
    return %c0_i32, %c0_i32_0, %c0_i32_1 : i32, i32, i32
  }
  func.func @transform_3(%arg0: i32, %arg1: i32) -> (i32, i32, i32, i32) {
    %c0_i32 = arith.constant 0 : i32
    %c0_i32_0 = arith.constant 0 : i32
    %c0_i32_1 = arith.constant 0 : i32
    %c0_i32_2 = arith.constant 0 : i32
    %c0_i32_3 = arith.constant 0 : i32
    return %c0_i32, %c0_i32_0, %c0_i32_1, %c0_i32_2 : i32, i32, i32, i32
  }
  func.func @transform_4(%arg0: i32, %arg1: i32) -> (i32, i32, i32) {
    %c0_i32 = arith.constant 0 : i32
    %c0_i32_0 = arith.constant 0 : i32
    %c0_i32_1 = arith.constant 0 : i32
    %c0_i32_2 = arith.constant 0 : i32
    return %c0_i32, %c0_i32_0, %c0_i32_1 : i32, i32, i32
  }
  func.func @transform_5(%arg0: i32, %arg1: i32) -> (i32, i32, i32) {
    %c0_i32 = arith.constant 0 : i32
    %c0_i32_0 = arith.constant 0 : i32
    return %arg0, %c0_i32, %arg1 : i32, i32, i32
  }
}

module attributes {stable_mosaic.version = 11 : i64} {
  func.func @kernel(%arg0: i32, %arg1: i32, %arg2: memref<1x1x64x256xf32, #tpu.memory_space<vmem>>, %arg3: memref<3x3x64x64xbf16, #tpu.memory_space<vmem>>, %arg4: memref<3x64x1xf32, #tpu.memory_space<vmem>>, %arg5: memref<3x3x64x64xbf16, #tpu.memory_space<vmem>>, %arg6: memref<3x64x1xf32, #tpu.memory_space<vmem>>, %arg7: memref<1x64x128xf32, #tpu.memory_space<vmem>>, %arg8: memref<64x512xbf16, #tpu.memory_space<vmem>>, %arg9: memref<64x256xf32, #tpu.memory_space<vmem>>) attributes {dimension_semantics = [#tpu.dimension_semantics<parallel>, #tpu.dimension_semantics<parallel>], iteration_bounds = array<i64: 2, 3>, scalar_prefetch = 0 : i64, scratch_operands = 2 : i64, tpu.core_type = #tpu.core_type<tc>, window_params = [{transform_indices = @transform_0, window_bounds = array<i64: 1, 1, 64, 256>}, {pipeline_mode = #tpu.pipeline_mode<synchronous>, transform_indices = @transform_1, window_bounds = array<i64: 3, 3, 64, 64>}, {pipeline_mode = #tpu.pipeline_mode<synchronous>, transform_indices = @transform_2, window_bounds = array<i64: 3, 64, 1>}, {pipeline_mode = #tpu.pipeline_mode<synchronous>, transform_indices = @transform_3, window_bounds = array<i64: 3, 3, 64, 64>}, {pipeline_mode = #tpu.pipeline_mode<synchronous>, transform_indices = @transform_4, window_bounds = array<i64: 3, 64, 1>}, {transform_indices = @transform_5, window_bounds = array<i64: 1, 64, 128>}]} {
    %cst = arith.constant 0.000000e+00 : bf16
    %0 = vector.broadcast %cst : bf16 to vector<64x5xbf16>
    %c0 = arith.constant 0 : index
    %c123 = arith.constant 123 : index
    %1 = vector.load %arg8[%c0, %c123] : memref<64x512xbf16, #tpu.memory_space<vmem>>, vector<64x5xbf16>
    tpu.vector_store %arg8[%c0, %c123], %0 {strides = array<i32>} : memref<64x512xbf16, #tpu.memory_space<vmem>>, vector<64x5xbf16>,
    %cst_0 = arith.constant 0.000000e+00 : bf16
    %2 = vector.broadcast %cst_0 : bf16 to vector<64x5xbf16>
    %c0_1 = arith.constant 0 : index
    %c384 = arith.constant 384 : index
    %3 = vector.load %arg8[%c0_1, %c384] : memref<64x512xbf16, #tpu.memory_space<vmem>>, vector<64x5xbf16>
    tpu.vector_store %arg8[%c0_1, %c384], %2 {strides = array<i32>} : memref<64x512xbf16, #tpu.memory_space<vmem>>, vector<64x5xbf16>,
    %c0_2 = arith.constant 0 : index
    %c0_3 = arith.constant 0 : index
    %c0_4 = arith.constant 0 : index
    %c0_5 = arith.constant 0 : index
    %4 = vector.load %arg2[%c0_2, %c0_3, %c0_4, %c0_5] : memref<1x1x64x256xf32, #tpu.memory_space<vmem>>, vector<1x1x64x256xf32>
    %5 = vector.shape_cast %4 : vector<1x1x64x256xf32> to vector<64x256xf32>
    %c0_6 = arith.constant 0 : index
    %c0_7 = arith.constant 0 : index
    %6 = vector.load %arg9[%c0_6, %c0_7] : memref<64x256xf32, #tpu.memory_space<vmem>>, vector<64x256xf32>
    tpu.vector_store %arg9[%c0_6, %c0_7], %5 {strides = array<i32>} : memref<64x256xf32, #tpu.memory_space<vmem>>, vector<64x256xf32>,
    %c0_8 = arith.constant 0 : index
    %c0_9 = arith.constant 0 : index
    %7 = vector.load %arg9[%c0_8, %c0_9] : memref<64x256xf32, #tpu.memory_space<vmem>>, vector<64x256xf32>
    %cst_10 = arith.constant 0.000000e+00 : f32
    %8 = vector.broadcast %cst_10 : f32 to vector<64x256xf32>
    %9 = arith.cmpf ogt, %7, %8 : vector<64x256xf32>
    %cst_11 = arith.constant 1.000000e-01 : f32
    %10 = vector.broadcast %cst_11 : f32 to vector<64x256xf32>
    %11 = arith.mulf %10, %7 : vector<64x256xf32>
    %12 = arith.select %9, %7, %11 : vector<64x256xi1>, vector<64x256xf32>
    %13 = arith.truncf %12 : vector<64x256xf32> to vector<64x256xbf16>
    %c0_12 = arith.constant 0 : index
    %c128 = arith.constant 128 : index
    %14 = vector.load %arg8[%c0_12, %c128] : memref<64x512xbf16, #tpu.memory_space<vmem>>, vector<64x256xbf16>
    tpu.vector_store %arg8[%c0_12, %c128], %13 {strides = array<i32>} : memref<64x512xbf16, #tpu.memory_space<vmem>>, vector<64x256xbf16>,
    %c0_i32 = arith.constant 0 : i32
    %15 = arith.cmpi eq, %arg1, %c0_i32 : i32
    %16 = arith.extui %15 : i1 to i32
    %c0_i32_13 = arith.constant 0 : i32
    %17 = arith.cmpi ne, %16, %c0_i32_13 : i32
    scf.if %17 {
      %cst_212 = arith.constant 0.000000e+00 : bf16
      %209 = vector.broadcast %cst_212 : bf16 to vector<64x12xbf16>
      %c0_213 = arith.constant 0 : index
      %c128_214 = arith.constant 128 : index
      %210 = vector.load %arg8[%c0_213, %c128_214] : memref<64x512xbf16, #tpu.memory_space<vmem>>, vector<64x12xbf16>
      tpu.vector_store %arg8[%c0_213, %c128_214], %209 {strides = array<i32>} : memref<64x512xbf16, #tpu.memory_space<vmem>>, vector<64x12xbf16>,
    } else {
    }
    %c2_i32 = arith.constant 2 : i32
    %18 = arith.cmpi eq, %arg1, %c2_i32 : i32
    %19 = arith.extui %18 : i1 to i32
    %c0_i32_14 = arith.constant 0 : i32
    %20 = arith.cmpi ne, %19, %c0_i32_14 : i32
    scf.if %20 {
      %cst_212 = arith.constant 0.000000e+00 : bf16
      %209 = vector.broadcast %cst_212 : bf16 to vector<64x116xbf16>
      %c0_213 = arith.constant 0 : index
      %c268 = arith.constant 268 : index
      %210 = vector.load %arg8[%c0_213, %c268] : memref<64x512xbf16, #tpu.memory_space<vmem>>, vector<64x116xbf16>
      tpu.vector_store %arg8[%c0_213, %c268], %209 {strides = array<i32>} : memref<64x512xbf16, #tpu.memory_space<vmem>>, vector<64x116xbf16>,
    } else {
    }
    %c0_15 = arith.constant 0 : index
    %c127 = arith.constant 127 : index
    %21 = vector.load %arg8[%c0_15, %c127] : memref<64x512xbf16, #tpu.memory_space<vmem>>, vector<64x256xbf16>
    %c0_16 = arith.constant 0 : index
    %c0_17 = arith.constant 0 : index
    %c0_18 = arith.constant 0 : index
    %c0_19 = arith.constant 0 : index
    %22 = vector.load %arg3[%c0_16, %c0_17, %c0_18, %c0_19] : memref<3x3x64x64xbf16, #tpu.memory_space<vmem>>, vector<1x1x64x64xbf16>
    %23 = vector.shape_cast %22 : vector<1x1x64x64xbf16> to vector<64x64xbf16>
    %cst_20 = arith.constant dense<0.000000e+00> : vector<64x256xf32>
    %24 = tpu.matmul %23, %21, %cst_20 {dimension_numbers = #tpu.dot_dimension_numbers<[1], [0], [0], [1], [0, 0, 1, 1], [], []>} : vector<64x64xbf16>, vector<64x256xbf16>, vector<64x256xf32> -> vector<64x256xf32>
    %c0_21 = arith.constant 0 : index
    %c128_22 = arith.constant 128 : index
    %25 = vector.load %arg8[%c0_21, %c128_22] : memref<64x512xbf16, #tpu.memory_space<vmem>>, vector<64x256xbf16>
    %c0_23 = arith.constant 0 : index
    %c1 = arith.constant 1 : index
    %c0_24 = arith.constant 0 : index
    %c0_25 = arith.constant 0 : index
    %26 = vector.load %arg3[%c0_23, %c1, %c0_24, %c0_25] : memref<3x3x64x64xbf16, #tpu.memory_space<vmem>>, vector<1x1x64x64xbf16>
    %27 = vector.shape_cast %26 : vector<1x1x64x64xbf16> to vector<64x64xbf16>
    %cst_26 = arith.constant dense<0.000000e+00> : vector<64x256xf32>
    %28 = tpu.matmul %27, %25, %cst_26 {dimension_numbers = #tpu.dot_dimension_numbers<[1], [0], [0], [1], [0, 0, 1, 1], [], []>} : vector<64x64xbf16>, vector<64x256xbf16>, vector<64x256xf32> -> vector<64x256xf32>
    %29 = arith.addf %24, %28 : vector<64x256xf32>
    %c0_27 = arith.constant 0 : index
    %c129 = arith.constant 129 : index
    %30 = vector.load %arg8[%c0_27, %c129] : memref<64x512xbf16, #tpu.memory_space<vmem>>, vector<64x256xbf16>
    %c0_28 = arith.constant 0 : index
    %c2 = arith.constant 2 : index
    %c0_29 = arith.constant 0 : index
    %c0_30 = arith.constant 0 : index
    %31 = vector.load %arg3[%c0_28, %c2, %c0_29, %c0_30] : memref<3x3x64x64xbf16, #tpu.memory_space<vmem>>, vector<1x1x64x64xbf16>
    %32 = vector.shape_cast %31 : vector<1x1x64x64xbf16> to vector<64x64xbf16>
    %cst_31 = arith.constant dense<0.000000e+00> : vector<64x256xf32>
    %33 = tpu.matmul %32, %30, %cst_31 {dimension_numbers = #tpu.dot_dimension_numbers<[1], [0], [0], [1], [0, 0, 1, 1], [], []>} : vector<64x64xbf16>, vector<64x256xbf16>, vector<64x256xf32> -> vector<64x256xf32>
    %34 = arith.addf %29, %33 : vector<64x256xf32>
    %c0_32 = arith.constant 0 : index
    %c0_33 = arith.constant 0 : index
    %c0_34 = arith.constant 0 : index
    %35 = vector.load %arg4[%c0_32, %c0_33, %c0_34] : memref<3x64x1xf32, #tpu.memory_space<vmem>>, vector<1x64x1xf32>
    %36 = vector.shape_cast %35 : vector<1x64x1xf32> to vector<64x1xf32>
    %37 = vector.broadcast %36 : vector<64x1xf32> to vector<64x256xf32>
    %38 = arith.addf %34, %37 : vector<64x256xf32>
    %cst_35 = arith.constant 0.000000e+00 : f32
    %39 = vector.broadcast %cst_35 : f32 to vector<64x256xf32>
    %40 = arith.cmpf ogt, %38, %39 : vector<64x256xf32>
    %cst_36 = arith.constant 1.000000e-01 : f32
    %41 = vector.broadcast %cst_36 : f32 to vector<64x256xf32>
    %42 = arith.mulf %41, %38 : vector<64x256xf32>
    %43 = arith.select %40, %38, %42 : vector<64x256xi1>, vector<64x256xf32>
    %44 = arith.truncf %43 : vector<64x256xf32> to vector<64x256xbf16>
    %c0_37 = arith.constant 0 : index
    %c128_38 = arith.constant 128 : index
    %45 = vector.load %arg8[%c0_37, %c128_38] : memref<64x512xbf16, #tpu.memory_space<vmem>>, vector<64x256xbf16>
    tpu.vector_store %arg8[%c0_37, %c128_38], %44 {strides = array<i32>} : memref<64x512xbf16, #tpu.memory_space<vmem>>, vector<64x256xbf16>,
    %c0_i32_39 = arith.constant 0 : i32
    %46 = arith.cmpi eq, %arg1, %c0_i32_39 : i32
    %47 = arith.extui %46 : i1 to i32
    %c0_i32_40 = arith.constant 0 : i32
    %48 = arith.cmpi ne, %47, %c0_i32_40 : i32
    scf.if %48 {
      %cst_212 = arith.constant 0.000000e+00 : bf16
      %209 = vector.broadcast %cst_212 : bf16 to vector<64x12xbf16>
      %c0_213 = arith.constant 0 : index
      %c128_214 = arith.constant 128 : index
      %210 = vector.load %arg8[%c0_213, %c128_214] : memref<64x512xbf16, #tpu.memory_space<vmem>>, vector<64x12xbf16>
      tpu.vector_store %arg8[%c0_213, %c128_214], %209 {strides = array<i32>} : memref<64x512xbf16, #tpu.memory_space<vmem>>, vector<64x12xbf16>,
    } else {
    }
    %c2_i32_41 = arith.constant 2 : i32
    %49 = arith.cmpi eq, %arg1, %c2_i32_41 : i32
    %50 = arith.extui %49 : i1 to i32
    %c0_i32_42 = arith.constant 0 : i32
    %51 = arith.cmpi ne, %50, %c0_i32_42 : i32
    scf.if %51 {
      %cst_212 = arith.constant 0.000000e+00 : bf16
      %209 = vector.broadcast %cst_212 : bf16 to vector<64x116xbf16>
      %c0_213 = arith.constant 0 : index
      %c268 = arith.constant 268 : index
      %210 = vector.load %arg8[%c0_213, %c268] : memref<64x512xbf16, #tpu.memory_space<vmem>>, vector<64x116xbf16>
      tpu.vector_store %arg8[%c0_213, %c268], %209 {strides = array<i32>} : memref<64x512xbf16, #tpu.memory_space<vmem>>, vector<64x116xbf16>,
    } else {
    }
    %c0_43 = arith.constant 0 : index
    %c127_44 = arith.constant 127 : index
    %52 = vector.load %arg8[%c0_43, %c127_44] : memref<64x512xbf16, #tpu.memory_space<vmem>>, vector<64x256xbf16>
    %c0_45 = arith.constant 0 : index
    %c0_46 = arith.constant 0 : index
    %c0_47 = arith.constant 0 : index
    %c0_48 = arith.constant 0 : index
    %53 = vector.load %arg5[%c0_45, %c0_46, %c0_47, %c0_48] : memref<3x3x64x64xbf16, #tpu.memory_space<vmem>>, vector<1x1x64x64xbf16>
    %54 = vector.shape_cast %53 : vector<1x1x64x64xbf16> to vector<64x64xbf16>
    %cst_49 = arith.constant dense<0.000000e+00> : vector<64x256xf32>
    %55 = tpu.matmul %54, %52, %cst_49 {dimension_numbers = #tpu.dot_dimension_numbers<[1], [0], [0], [1], [0, 0, 1, 1], [], []>} : vector<64x64xbf16>, vector<64x256xbf16>, vector<64x256xf32> -> vector<64x256xf32>
    %c0_50 = arith.constant 0 : index
    %c128_51 = arith.constant 128 : index
    %56 = vector.load %arg8[%c0_50, %c128_51] : memref<64x512xbf16, #tpu.memory_space<vmem>>, vector<64x256xbf16>
    %c0_52 = arith.constant 0 : index
    %c1_53 = arith.constant 1 : index
    %c0_54 = arith.constant 0 : index
    %c0_55 = arith.constant 0 : index
    %57 = vector.load %arg5[%c0_52, %c1_53, %c0_54, %c0_55] : memref<3x3x64x64xbf16, #tpu.memory_space<vmem>>, vector<1x1x64x64xbf16>
    %58 = vector.shape_cast %57 : vector<1x1x64x64xbf16> to vector<64x64xbf16>
    %cst_56 = arith.constant dense<0.000000e+00> : vector<64x256xf32>
    %59 = tpu.matmul %58, %56, %cst_56 {dimension_numbers = #tpu.dot_dimension_numbers<[1], [0], [0], [1], [0, 0, 1, 1], [], []>} : vector<64x64xbf16>, vector<64x256xbf16>, vector<64x256xf32> -> vector<64x256xf32>
    %60 = arith.addf %55, %59 : vector<64x256xf32>
    %c0_57 = arith.constant 0 : index
    %c129_58 = arith.constant 129 : index
    %61 = vector.load %arg8[%c0_57, %c129_58] : memref<64x512xbf16, #tpu.memory_space<vmem>>, vector<64x256xbf16>
    %c0_59 = arith.constant 0 : index
    %c2_60 = arith.constant 2 : index
    %c0_61 = arith.constant 0 : index
    %c0_62 = arith.constant 0 : index
    %62 = vector.load %arg5[%c0_59, %c2_60, %c0_61, %c0_62] : memref<3x3x64x64xbf16, #tpu.memory_space<vmem>>, vector<1x1x64x64xbf16>
    %63 = vector.shape_cast %62 : vector<1x1x64x64xbf16> to vector<64x64xbf16>
    %cst_63 = arith.constant dense<0.000000e+00> : vector<64x256xf32>
    %64 = tpu.matmul %63, %61, %cst_63 {dimension_numbers = #tpu.dot_dimension_numbers<[1], [0], [0], [1], [0, 0, 1, 1], [], []>} : vector<64x64xbf16>, vector<64x256xbf16>, vector<64x256xf32> -> vector<64x256xf32>
    %65 = arith.addf %60, %64 : vector<64x256xf32>
    %c0_64 = arith.constant 0 : index
    %c0_65 = arith.constant 0 : index
    %c0_66 = arith.constant 0 : index
    %66 = vector.load %arg6[%c0_64, %c0_65, %c0_66] : memref<3x64x1xf32, #tpu.memory_space<vmem>>, vector<1x64x1xf32>
    %67 = vector.shape_cast %66 : vector<1x64x1xf32> to vector<64x1xf32>
    %68 = vector.broadcast %67 : vector<64x1xf32> to vector<64x256xf32>
    %69 = arith.addf %65, %68 : vector<64x256xf32>
    %c0_67 = arith.constant 0 : index
    %c0_68 = arith.constant 0 : index
    %70 = vector.load %arg9[%c0_67, %c0_68] : memref<64x256xf32, #tpu.memory_space<vmem>>, vector<64x256xf32>
    %71 = arith.addf %69, %70 : vector<64x256xf32>
    %c0_69 = arith.constant 0 : index
    %c0_70 = arith.constant 0 : index
    %72 = vector.load %arg9[%c0_69, %c0_70] : memref<64x256xf32, #tpu.memory_space<vmem>>, vector<64x256xf32>
    tpu.vector_store %arg9[%c0_69, %c0_70], %71 {strides = array<i32>} : memref<64x256xf32, #tpu.memory_space<vmem>>, vector<64x256xf32>,
    %c0_71 = arith.constant 0 : index
    %c0_72 = arith.constant 0 : index
    %73 = vector.load %arg9[%c0_71, %c0_72] : memref<64x256xf32, #tpu.memory_space<vmem>>, vector<64x256xf32>
    %cst_73 = arith.constant 0.000000e+00 : f32
    %74 = vector.broadcast %cst_73 : f32 to vector<64x256xf32>
    %75 = arith.cmpf ogt, %73, %74 : vector<64x256xf32>
    %cst_74 = arith.constant 1.000000e-01 : f32
    %76 = vector.broadcast %cst_74 : f32 to vector<64x256xf32>
    %77 = arith.mulf %76, %73 : vector<64x256xf32>
    %78 = arith.select %75, %73, %77 : vector<64x256xi1>, vector<64x256xf32>
    %79 = arith.truncf %78 : vector<64x256xf32> to vector<64x256xbf16>
    %c0_75 = arith.constant 0 : index
    %c128_76 = arith.constant 128 : index
    %80 = vector.load %arg8[%c0_75, %c128_76] : memref<64x512xbf16, #tpu.memory_space<vmem>>, vector<64x256xbf16>
    tpu.vector_store %arg8[%c0_75, %c128_76], %79 {strides = array<i32>} : memref<64x512xbf16, #tpu.memory_space<vmem>>, vector<64x256xbf16>,
    %c0_i32_77 = arith.constant 0 : i32
    %81 = arith.cmpi eq, %arg1, %c0_i32_77 : i32
    %82 = arith.extui %81 : i1 to i32
    %c0_i32_78 = arith.constant 0 : i32
    %83 = arith.cmpi ne, %82, %c0_i32_78 : i32
    scf.if %83 {
      %cst_212 = arith.constant 0.000000e+00 : bf16
      %209 = vector.broadcast %cst_212 : bf16 to vector<64x12xbf16>
      %c0_213 = arith.constant 0 : index
      %c128_214 = arith.constant 128 : index
      %210 = vector.load %arg8[%c0_213, %c128_214] : memref<64x512xbf16, #tpu.memory_space<vmem>>, vector<64x12xbf16>
      tpu.vector_store %arg8[%c0_213, %c128_214], %209 {strides = array<i32>} : memref<64x512xbf16, #tpu.memory_space<vmem>>, vector<64x12xbf16>,
    } else {
    }
    %c2_i32_79 = arith.constant 2 : i32
    %84 = arith.cmpi eq, %arg1, %c2_i32_79 : i32
    %85 = arith.extui %84 : i1 to i32
    %c0_i32_80 = arith.constant 0 : i32
    %86 = arith.cmpi ne, %85, %c0_i32_80 : i32
    scf.if %86 {
      %cst_212 = arith.constant 0.000000e+00 : bf16
      %209 = vector.broadcast %cst_212 : bf16 to vector<64x116xbf16>
      %c0_213 = arith.constant 0 : index
      %c268 = arith.constant 268 : index
      %210 = vector.load %arg8[%c0_213, %c268] : memref<64x512xbf16, #tpu.memory_space<vmem>>, vector<64x116xbf16>
      tpu.vector_store %arg8[%c0_213, %c268], %209 {strides = array<i32>} : memref<64x512xbf16, #tpu.memory_space<vmem>>, vector<64x116xbf16>,
    } else {
    }
    %c0_81 = arith.constant 0 : index
    %c125 = arith.constant 125 : index
    %87 = vector.load %arg8[%c0_81, %c125] : memref<64x512xbf16, #tpu.memory_space<vmem>>, vector<64x256xbf16>
    %c1_82 = arith.constant 1 : index
    %c0_83 = arith.constant 0 : index
    %c0_84 = arith.constant 0 : index
    %c0_85 = arith.constant 0 : index
    %88 = vector.load %arg3[%c1_82, %c0_83, %c0_84, %c0_85] : memref<3x3x64x64xbf16, #tpu.memory_space<vmem>>, vector<1x1x64x64xbf16>
    %89 = vector.shape_cast %88 : vector<1x1x64x64xbf16> to vector<64x64xbf16>
    %cst_86 = arith.constant dense<0.000000e+00> : vector<64x256xf32>
    %90 = tpu.matmul %89, %87, %cst_86 {dimension_numbers = #tpu.dot_dimension_numbers<[1], [0], [0], [1], [0, 0, 1, 1], [], []>} : vector<64x64xbf16>, vector<64x256xbf16>, vector<64x256xf32> -> vector<64x256xf32>
    %c0_87 = arith.constant 0 : index
    %c128_88 = arith.constant 128 : index
    %91 = vector.load %arg8[%c0_87, %c128_88] : memref<64x512xbf16, #tpu.memory_space<vmem>>, vector<64x256xbf16>
    %c1_89 = arith.constant 1 : index
    %c1_90 = arith.constant 1 : index
    %c0_91 = arith.constant 0 : index
    %c0_92 = arith.constant 0 : index
    %92 = vector.load %arg3[%c1_89, %c1_90, %c0_91, %c0_92] : memref<3x3x64x64xbf16, #tpu.memory_space<vmem>>, vector<1x1x64x64xbf16>
    %93 = vector.shape_cast %92 : vector<1x1x64x64xbf16> to vector<64x64xbf16>
    %cst_93 = arith.constant dense<0.000000e+00> : vector<64x256xf32>
    %94 = tpu.matmul %93, %91, %cst_93 {dimension_numbers = #tpu.dot_dimension_numbers<[1], [0], [0], [1], [0, 0, 1, 1], [], []>} : vector<64x64xbf16>, vector<64x256xbf16>, vector<64x256xf32> -> vector<64x256xf32>
    %95 = arith.addf %90, %94 : vector<64x256xf32>
    %c0_94 = arith.constant 0 : index
    %c131 = arith.constant 131 : index
    %96 = vector.load %arg8[%c0_94, %c131] : memref<64x512xbf16, #tpu.memory_space<vmem>>, vector<64x256xbf16>
    %c1_95 = arith.constant 1 : index
    %c2_96 = arith.constant 2 : index
    %c0_97 = arith.constant 0 : index
    %c0_98 = arith.constant 0 : index
    %97 = vector.load %arg3[%c1_95, %c2_96, %c0_97, %c0_98] : memref<3x3x64x64xbf16, #tpu.memory_space<vmem>>, vector<1x1x64x64xbf16>
    %98 = vector.shape_cast %97 : vector<1x1x64x64xbf16> to vector<64x64xbf16>
    %cst_99 = arith.constant dense<0.000000e+00> : vector<64x256xf32>
    %99 = tpu.matmul %98, %96, %cst_99 {dimension_numbers = #tpu.dot_dimension_numbers<[1], [0], [0], [1], [0, 0, 1, 1], [], []>} : vector<64x64xbf16>, vector<64x256xbf16>, vector<64x256xf32> -> vector<64x256xf32>
    %100 = arith.addf %95, %99 : vector<64x256xf32>
    %c1_100 = arith.constant 1 : index
    %c0_101 = arith.constant 0 : index
    %c0_102 = arith.constant 0 : index
    %101 = vector.load %arg4[%c1_100, %c0_101, %c0_102] : memref<3x64x1xf32, #tpu.memory_space<vmem>>, vector<1x64x1xf32>
    %102 = vector.shape_cast %101 : vector<1x64x1xf32> to vector<64x1xf32>
    %103 = vector.broadcast %102 : vector<64x1xf32> to vector<64x256xf32>
    %104 = arith.addf %100, %103 : vector<64x256xf32>
    %cst_103 = arith.constant 0.000000e+00 : f32
    %105 = vector.broadcast %cst_103 : f32 to vector<64x256xf32>
    %106 = arith.cmpf ogt, %104, %105 : vector<64x256xf32>
    %cst_104 = arith.constant 1.000000e-01 : f32
    %107 = vector.broadcast %cst_104 : f32 to vector<64x256xf32>
    %108 = arith.mulf %107, %104 : vector<64x256xf32>
    %109 = arith.select %106, %104, %108 : vector<64x256xi1>, vector<64x256xf32>
    %110 = arith.truncf %109 : vector<64x256xf32> to vector<64x256xbf16>
    %c0_105 = arith.constant 0 : index
    %c128_106 = arith.constant 128 : index
    %111 = vector.load %arg8[%c0_105, %c128_106] : memref<64x512xbf16, #tpu.memory_space<vmem>>, vector<64x256xbf16>
    tpu.vector_store %arg8[%c0_105, %c128_106], %110 {strides = array<i32>} : memref<64x512xbf16, #tpu.memory_space<vmem>>, vector<64x256xbf16>,
    %c0_i32_107 = arith.constant 0 : i32
    %112 = arith.cmpi eq, %arg1, %c0_i32_107 : i32
    %113 = arith.extui %112 : i1 to i32
    %c0_i32_108 = arith.constant 0 : i32
    %114 = arith.cmpi ne, %113, %c0_i32_108 : i32
    scf.if %114 {
      %cst_212 = arith.constant 0.000000e+00 : bf16
      %209 = vector.broadcast %cst_212 : bf16 to vector<64x12xbf16>
      %c0_213 = arith.constant 0 : index
      %c128_214 = arith.constant 128 : index
      %210 = vector.load %arg8[%c0_213, %c128_214] : memref<64x512xbf16, #tpu.memory_space<vmem>>, vector<64x12xbf16>
      tpu.vector_store %arg8[%c0_213, %c128_214], %209 {strides = array<i32>} : memref<64x512xbf16, #tpu.memory_space<vmem>>, vector<64x12xbf16>,
    } else {
    }
    %c2_i32_109 = arith.constant 2 : i32
    %115 = arith.cmpi eq, %arg1, %c2_i32_109 : i32
    %116 = arith.extui %115 : i1 to i32
    %c0_i32_110 = arith.constant 0 : i32
    %117 = arith.cmpi ne, %116, %c0_i32_110 : i32
    scf.if %117 {
      %cst_212 = arith.constant 0.000000e+00 : bf16
      %209 = vector.broadcast %cst_212 : bf16 to vector<64x116xbf16>
      %c0_213 = arith.constant 0 : index
      %c268 = arith.constant 268 : index
      %210 = vector.load %arg8[%c0_213, %c268] : memref<64x512xbf16, #tpu.memory_space<vmem>>, vector<64x116xbf16>
      tpu.vector_store %arg8[%c0_213, %c268], %209 {strides = array<i32>} : memref<64x512xbf16, #tpu.memory_space<vmem>>, vector<64x116xbf16>,
    } else {
    }
    %c0_111 = arith.constant 0 : index
    %c127_112 = arith.constant 127 : index
    %118 = vector.load %arg8[%c0_111, %c127_112] : memref<64x512xbf16, #tpu.memory_space<vmem>>, vector<64x256xbf16>
    %c1_113 = arith.constant 1 : index
    %c0_114 = arith.constant 0 : index
    %c0_115 = arith.constant 0 : index
    %c0_116 = arith.constant 0 : index
    %119 = vector.load %arg5[%c1_113, %c0_114, %c0_115, %c0_116] : memref<3x3x64x64xbf16, #tpu.memory_space<vmem>>, vector<1x1x64x64xbf16>
    %120 = vector.shape_cast %119 : vector<1x1x64x64xbf16> to vector<64x64xbf16>
    %cst_117 = arith.constant dense<0.000000e+00> : vector<64x256xf32>
    %121 = tpu.matmul %120, %118, %cst_117 {dimension_numbers = #tpu.dot_dimension_numbers<[1], [0], [0], [1], [0, 0, 1, 1], [], []>} : vector<64x64xbf16>, vector<64x256xbf16>, vector<64x256xf32> -> vector<64x256xf32>
    %c0_118 = arith.constant 0 : index
    %c128_119 = arith.constant 128 : index
    %122 = vector.load %arg8[%c0_118, %c128_119] : memref<64x512xbf16, #tpu.memory_space<vmem>>, vector<64x256xbf16>
    %c1_120 = arith.constant 1 : index
    %c1_121 = arith.constant 1 : index
    %c0_122 = arith.constant 0 : index
    %c0_123 = arith.constant 0 : index
    %123 = vector.load %arg5[%c1_120, %c1_121, %c0_122, %c0_123] : memref<3x3x64x64xbf16, #tpu.memory_space<vmem>>, vector<1x1x64x64xbf16>
    %124 = vector.shape_cast %123 : vector<1x1x64x64xbf16> to vector<64x64xbf16>
    %cst_124 = arith.constant dense<0.000000e+00> : vector<64x256xf32>
    %125 = tpu.matmul %124, %122, %cst_124 {dimension_numbers = #tpu.dot_dimension_numbers<[1], [0], [0], [1], [0, 0, 1, 1], [], []>} : vector<64x64xbf16>, vector<64x256xbf16>, vector<64x256xf32> -> vector<64x256xf32>
    %126 = arith.addf %121, %125 : vector<64x256xf32>
    %c0_125 = arith.constant 0 : index
    %c129_126 = arith.constant 129 : index
    %127 = vector.load %arg8[%c0_125, %c129_126] : memref<64x512xbf16, #tpu.memory_space<vmem>>, vector<64x256xbf16>
    %c1_127 = arith.constant 1 : index
    %c2_128 = arith.constant 2 : index
    %c0_129 = arith.constant 0 : index
    %c0_130 = arith.constant 0 : index
    %128 = vector.load %arg5[%c1_127, %c2_128, %c0_129, %c0_130] : memref<3x3x64x64xbf16, #tpu.memory_space<vmem>>, vector<1x1x64x64xbf16>
    %129 = vector.shape_cast %128 : vector<1x1x64x64xbf16> to vector<64x64xbf16>
    %cst_131 = arith.constant dense<0.000000e+00> : vector<64x256xf32>
    %130 = tpu.matmul %129, %127, %cst_131 {dimension_numbers = #tpu.dot_dimension_numbers<[1], [0], [0], [1], [0, 0, 1, 1], [], []>} : vector<64x64xbf16>, vector<64x256xbf16>, vector<64x256xf32> -> vector<64x256xf32>
    %131 = arith.addf %126, %130 : vector<64x256xf32>
    %c1_132 = arith.constant 1 : index
    %c0_133 = arith.constant 0 : index
    %c0_134 = arith.constant 0 : index
    %132 = vector.load %arg6[%c1_132, %c0_133, %c0_134] : memref<3x64x1xf32, #tpu.memory_space<vmem>>, vector<1x64x1xf32>
    %133 = vector.shape_cast %132 : vector<1x64x1xf32> to vector<64x1xf32>
    %134 = vector.broadcast %133 : vector<64x1xf32> to vector<64x256xf32>
    %135 = arith.addf %131, %134 : vector<64x256xf32>
    %c0_135 = arith.constant 0 : index
    %c0_136 = arith.constant 0 : index
    %136 = vector.load %arg9[%c0_135, %c0_136] : memref<64x256xf32, #tpu.memory_space<vmem>>, vector<64x256xf32>
    %137 = arith.addf %135, %136 : vector<64x256xf32>
    %c0_137 = arith.constant 0 : index
    %c0_138 = arith.constant 0 : index
    %138 = vector.load %arg9[%c0_137, %c0_138] : memref<64x256xf32, #tpu.memory_space<vmem>>, vector<64x256xf32>
    tpu.vector_store %arg9[%c0_137, %c0_138], %137 {strides = array<i32>} : memref<64x256xf32, #tpu.memory_space<vmem>>, vector<64x256xf32>,
    %c0_139 = arith.constant 0 : index
    %c0_140 = arith.constant 0 : index
    %139 = vector.load %arg9[%c0_139, %c0_140] : memref<64x256xf32, #tpu.memory_space<vmem>>, vector<64x256xf32>
    %cst_141 = arith.constant 0.000000e+00 : f32
    %140 = vector.broadcast %cst_141 : f32 to vector<64x256xf32>
    %141 = arith.cmpf ogt, %139, %140 : vector<64x256xf32>
    %cst_142 = arith.constant 1.000000e-01 : f32
    %142 = vector.broadcast %cst_142 : f32 to vector<64x256xf32>
    %143 = arith.mulf %142, %139 : vector<64x256xf32>
    %144 = arith.select %141, %139, %143 : vector<64x256xi1>, vector<64x256xf32>
    %145 = arith.truncf %144 : vector<64x256xf32> to vector<64x256xbf16>
    %c0_143 = arith.constant 0 : index
    %c128_144 = arith.constant 128 : index
    %146 = vector.load %arg8[%c0_143, %c128_144] : memref<64x512xbf16, #tpu.memory_space<vmem>>, vector<64x256xbf16>
    tpu.vector_store %arg8[%c0_143, %c128_144], %145 {strides = array<i32>} : memref<64x512xbf16, #tpu.memory_space<vmem>>, vector<64x256xbf16>,
    %c0_i32_145 = arith.constant 0 : i32
    %147 = arith.cmpi eq, %arg1, %c0_i32_145 : i32
    %148 = arith.extui %147 : i1 to i32
    %c0_i32_146 = arith.constant 0 : i32
    %149 = arith.cmpi ne, %148, %c0_i32_146 : i32
    scf.if %149 {
      %cst_212 = arith.constant 0.000000e+00 : bf16
      %209 = vector.broadcast %cst_212 : bf16 to vector<64x12xbf16>
      %c0_213 = arith.constant 0 : index
      %c128_214 = arith.constant 128 : index
      %210 = vector.load %arg8[%c0_213, %c128_214] : memref<64x512xbf16, #tpu.memory_space<vmem>>, vector<64x12xbf16>
      tpu.vector_store %arg8[%c0_213, %c128_214], %209 {strides = array<i32>} : memref<64x512xbf16, #tpu.memory_space<vmem>>, vector<64x12xbf16>,
    } else {
    }
    %c2_i32_147 = arith.constant 2 : i32
    %150 = arith.cmpi eq, %arg1, %c2_i32_147 : i32
    %151 = arith.extui %150 : i1 to i32
    %c0_i32_148 = arith.constant 0 : i32
    %152 = arith.cmpi ne, %151, %c0_i32_148 : i32
    scf.if %152 {
      %cst_212 = arith.constant 0.000000e+00 : bf16
      %209 = vector.broadcast %cst_212 : bf16 to vector<64x116xbf16>
      %c0_213 = arith.constant 0 : index
      %c268 = arith.constant 268 : index
      %210 = vector.load %arg8[%c0_213, %c268] : memref<64x512xbf16, #tpu.memory_space<vmem>>, vector<64x116xbf16>
      tpu.vector_store %arg8[%c0_213, %c268], %209 {strides = array<i32>} : memref<64x512xbf16, #tpu.memory_space<vmem>>, vector<64x116xbf16>,
    } else {
    }
    %c0_149 = arith.constant 0 : index
    %c123_150 = arith.constant 123 : index
    %153 = vector.load %arg8[%c0_149, %c123_150] : memref<64x512xbf16, #tpu.memory_space<vmem>>, vector<64x256xbf16>
    %c2_151 = arith.constant 2 : index
    %c0_152 = arith.constant 0 : index
    %c0_153 = arith.constant 0 : index
    %c0_154 = arith.constant 0 : index
    %154 = vector.load %arg3[%c2_151, %c0_152, %c0_153, %c0_154] : memref<3x3x64x64xbf16, #tpu.memory_space<vmem>>, vector<1x1x64x64xbf16>
    %155 = vector.shape_cast %154 : vector<1x1x64x64xbf16> to vector<64x64xbf16>
    %cst_155 = arith.constant dense<0.000000e+00> : vector<64x256xf32>
    %156 = tpu.matmul %155, %153, %cst_155 {dimension_numbers = #tpu.dot_dimension_numbers<[1], [0], [0], [1], [0, 0, 1, 1], [], []>} : vector<64x64xbf16>, vector<64x256xbf16>, vector<64x256xf32> -> vector<64x256xf32>
    %c0_156 = arith.constant 0 : index
    %c128_157 = arith.constant 128 : index
    %157 = vector.load %arg8[%c0_156, %c128_157] : memref<64x512xbf16, #tpu.memory_space<vmem>>, vector<64x256xbf16>
    %c2_158 = arith.constant 2 : index
    %c1_159 = arith.constant 1 : index
    %c0_160 = arith.constant 0 : index
    %c0_161 = arith.constant 0 : index
    %158 = vector.load %arg3[%c2_158, %c1_159, %c0_160, %c0_161] : memref<3x3x64x64xbf16, #tpu.memory_space<vmem>>, vector<1x1x64x64xbf16>
    %159 = vector.shape_cast %158 : vector<1x1x64x64xbf16> to vector<64x64xbf16>
    %cst_162 = arith.constant dense<0.000000e+00> : vector<64x256xf32>
    %160 = tpu.matmul %159, %157, %cst_162 {dimension_numbers = #tpu.dot_dimension_numbers<[1], [0], [0], [1], [0, 0, 1, 1], [], []>} : vector<64x64xbf16>, vector<64x256xbf16>, vector<64x256xf32> -> vector<64x256xf32>
    %161 = arith.addf %156, %160 : vector<64x256xf32>
    %c0_163 = arith.constant 0 : index
    %c133 = arith.constant 133 : index
    %162 = vector.load %arg8[%c0_163, %c133] : memref<64x512xbf16, #tpu.memory_space<vmem>>, vector<64x256xbf16>
    %c2_164 = arith.constant 2 : index
    %c2_165 = arith.constant 2 : index
    %c0_166 = arith.constant 0 : index
    %c0_167 = arith.constant 0 : index
    %163 = vector.load %arg3[%c2_164, %c2_165, %c0_166, %c0_167] : memref<3x3x64x64xbf16, #tpu.memory_space<vmem>>, vector<1x1x64x64xbf16>
    %164 = vector.shape_cast %163 : vector<1x1x64x64xbf16> to vector<64x64xbf16>
    %cst_168 = arith.constant dense<0.000000e+00> : vector<64x256xf32>
    %165 = tpu.matmul %164, %162, %cst_168 {dimension_numbers = #tpu.dot_dimension_numbers<[1], [0], [0], [1], [0, 0, 1, 1], [], []>} : vector<64x64xbf16>, vector<64x256xbf16>, vector<64x256xf32> -> vector<64x256xf32>
    %166 = arith.addf %161, %165 : vector<64x256xf32>
    %c2_169 = arith.constant 2 : index
    %c0_170 = arith.constant 0 : index
    %c0_171 = arith.constant 0 : index
    %167 = vector.load %arg4[%c2_169, %c0_170, %c0_171] : memref<3x64x1xf32, #tpu.memory_space<vmem>>, vector<1x64x1xf32>
    %168 = vector.shape_cast %167 : vector<1x64x1xf32> to vector<64x1xf32>
    %169 = vector.broadcast %168 : vector<64x1xf32> to vector<64x256xf32>
    %170 = arith.addf %166, %169 : vector<64x256xf32>
    %cst_172 = arith.constant 0.000000e+00 : f32
    %171 = vector.broadcast %cst_172 : f32 to vector<64x256xf32>
    %172 = arith.cmpf ogt, %170, %171 : vector<64x256xf32>
    %cst_173 = arith.constant 1.000000e-01 : f32
    %173 = vector.broadcast %cst_173 : f32 to vector<64x256xf32>
    %174 = arith.mulf %173, %170 : vector<64x256xf32>
    %175 = arith.select %172, %170, %174 : vector<64x256xi1>, vector<64x256xf32>
    %176 = arith.truncf %175 : vector<64x256xf32> to vector<64x256xbf16>
    %c0_174 = arith.constant 0 : index
    %c128_175 = arith.constant 128 : index
    %177 = vector.load %arg8[%c0_174, %c128_175] : memref<64x512xbf16, #tpu.memory_space<vmem>>, vector<64x256xbf16>
    tpu.vector_store %arg8[%c0_174, %c128_175], %176 {strides = array<i32>} : memref<64x512xbf16, #tpu.memory_space<vmem>>, vector<64x256xbf16>,
    %c0_i32_176 = arith.constant 0 : i32
    %178 = arith.cmpi eq, %arg1, %c0_i32_176 : i32
    %179 = arith.extui %178 : i1 to i32
    %c0_i32_177 = arith.constant 0 : i32
    %180 = arith.cmpi ne, %179, %c0_i32_177 : i32
    scf.if %180 {
      %cst_212 = arith.constant 0.000000e+00 : bf16
      %209 = vector.broadcast %cst_212 : bf16 to vector<64x12xbf16>
      %c0_213 = arith.constant 0 : index
      %c128_214 = arith.constant 128 : index
      %210 = vector.load %arg8[%c0_213, %c128_214] : memref<64x512xbf16, #tpu.memory_space<vmem>>, vector<64x12xbf16>
      tpu.vector_store %arg8[%c0_213, %c128_214], %209 {strides = array<i32>} : memref<64x512xbf16, #tpu.memory_space<vmem>>, vector<64x12xbf16>,
    } else {
    }
    %c2_i32_178 = arith.constant 2 : i32
    %181 = arith.cmpi eq, %arg1, %c2_i32_178 : i32
    %182 = arith.extui %181 : i1 to i32
    %c0_i32_179 = arith.constant 0 : i32
    %183 = arith.cmpi ne, %182, %c0_i32_179 : i32
    scf.if %183 {
      %cst_212 = arith.constant 0.000000e+00 : bf16
      %209 = vector.broadcast %cst_212 : bf16 to vector<64x116xbf16>
      %c0_213 = arith.constant 0 : index
      %c268 = arith.constant 268 : index
      %210 = vector.load %arg8[%c0_213, %c268] : memref<64x512xbf16, #tpu.memory_space<vmem>>, vector<64x116xbf16>
      tpu.vector_store %arg8[%c0_213, %c268], %209 {strides = array<i32>} : memref<64x512xbf16, #tpu.memory_space<vmem>>, vector<64x116xbf16>,
    } else {
    }
    %c0_180 = arith.constant 0 : index
    %c127_181 = arith.constant 127 : index
    %184 = vector.load %arg8[%c0_180, %c127_181] : memref<64x512xbf16, #tpu.memory_space<vmem>>, vector<64x256xbf16>
    %c2_182 = arith.constant 2 : index
    %c0_183 = arith.constant 0 : index
    %c0_184 = arith.constant 0 : index
    %c0_185 = arith.constant 0 : index
    %185 = vector.load %arg5[%c2_182, %c0_183, %c0_184, %c0_185] : memref<3x3x64x64xbf16, #tpu.memory_space<vmem>>, vector<1x1x64x64xbf16>
    %186 = vector.shape_cast %185 : vector<1x1x64x64xbf16> to vector<64x64xbf16>
    %cst_186 = arith.constant dense<0.000000e+00> : vector<64x256xf32>
    %187 = tpu.matmul %186, %184, %cst_186 {dimension_numbers = #tpu.dot_dimension_numbers<[1], [0], [0], [1], [0, 0, 1, 1], [], []>} : vector<64x64xbf16>, vector<64x256xbf16>, vector<64x256xf32> -> vector<64x256xf32>
    %c0_187 = arith.constant 0 : index
    %c128_188 = arith.constant 128 : index
    %188 = vector.load %arg8[%c0_187, %c128_188] : memref<64x512xbf16, #tpu.memory_space<vmem>>, vector<64x256xbf16>
    %c2_189 = arith.constant 2 : index
    %c1_190 = arith.constant 1 : index
    %c0_191 = arith.constant 0 : index
    %c0_192 = arith.constant 0 : index
    %189 = vector.load %arg5[%c2_189, %c1_190, %c0_191, %c0_192] : memref<3x3x64x64xbf16, #tpu.memory_space<vmem>>, vector<1x1x64x64xbf16>
    %190 = vector.shape_cast %189 : vector<1x1x64x64xbf16> to vector<64x64xbf16>
    %cst_193 = arith.constant dense<0.000000e+00> : vector<64x256xf32>
    %191 = tpu.matmul %190, %188, %cst_193 {dimension_numbers = #tpu.dot_dimension_numbers<[1], [0], [0], [1], [0, 0, 1, 1], [], []>} : vector<64x64xbf16>, vector<64x256xbf16>, vector<64x256xf32> -> vector<64x256xf32>
    %192 = arith.addf %187, %191 : vector<64x256xf32>
    %c0_194 = arith.constant 0 : index
    %c129_195 = arith.constant 129 : index
    %193 = vector.load %arg8[%c0_194, %c129_195] : memref<64x512xbf16, #tpu.memory_space<vmem>>, vector<64x256xbf16>
    %c2_196 = arith.constant 2 : index
    %c2_197 = arith.constant 2 : index
    %c0_198 = arith.constant 0 : index
    %c0_199 = arith.constant 0 : index
    %194 = vector.load %arg5[%c2_196, %c2_197, %c0_198, %c0_199] : memref<3x3x64x64xbf16, #tpu.memory_space<vmem>>, vector<1x1x64x64xbf16>
    %195 = vector.shape_cast %194 : vector<1x1x64x64xbf16> to vector<64x64xbf16>
    %cst_200 = arith.constant dense<0.000000e+00> : vector<64x256xf32>
    %196 = tpu.matmul %195, %193, %cst_200 {dimension_numbers = #tpu.dot_dimension_numbers<[1], [0], [0], [1], [0, 0, 1, 1], [], []>} : vector<64x64xbf16>, vector<64x256xbf16>, vector<64x256xf32> -> vector<64x256xf32>
    %197 = arith.addf %192, %196 : vector<64x256xf32>
    %c2_201 = arith.constant 2 : index
    %c0_202 = arith.constant 0 : index
    %c0_203 = arith.constant 0 : index
    %198 = vector.load %arg6[%c2_201, %c0_202, %c0_203] : memref<3x64x1xf32, #tpu.memory_space<vmem>>, vector<1x64x1xf32>
    %199 = vector.shape_cast %198 : vector<1x64x1xf32> to vector<64x1xf32>
    %200 = vector.broadcast %199 : vector<64x1xf32> to vector<64x256xf32>
    %201 = arith.addf %197, %200 : vector<64x256xf32>
    %c0_204 = arith.constant 0 : index
    %c0_205 = arith.constant 0 : index
    %202 = vector.load %arg9[%c0_204, %c0_205] : memref<64x256xf32, #tpu.memory_space<vmem>>, vector<64x256xf32>
    %203 = arith.addf %201, %202 : vector<64x256xf32>
    %c0_206 = arith.constant 0 : index
    %c0_207 = arith.constant 0 : index
    %204 = vector.load %arg9[%c0_206, %c0_207] : memref<64x256xf32, #tpu.memory_space<vmem>>, vector<64x256xf32>
    tpu.vector_store %arg9[%c0_206, %c0_207], %203 {strides = array<i32>} : memref<64x256xf32, #tpu.memory_space<vmem>>, vector<64x256xf32>,
    %c0_208 = arith.constant 0 : index
    %c12 = arith.constant 12 : index
    %205 = vector.load %arg9[%c0_208, %c12] : memref<64x256xf32, #tpu.memory_space<vmem>>, vector<64x128xf32>
    %c0_209 = arith.constant 0 : index
    %c0_210 = arith.constant 0 : index
    %c0_211 = arith.constant 0 : index
    %206 = vector.load %arg7[%c0_209, %c0_210, %c0_211] : memref<1x64x128xf32, #tpu.memory_space<vmem>>, vector<1x64x128xf32>
    %207 = vector.shape_cast %206 : vector<1x64x128xf32> to vector<64x128xf32>
    %208 = vector.shape_cast %205 : vector<64x128xf32> to vector<1x64x128xf32>
    tpu.vector_store %arg7[%c0_209, %c0_210, %c0_211], %208 {strides = array<i32>} : memref<1x64x128xf32, #tpu.memory_space<vmem>>, vector<1x64x128xf32>,
    return
  }
  func.func @transform_0(%arg0: i32, %arg1: i32) -> (i32, i32, i32, i32) {
    %c0_i32 = arith.constant 0 : i32
    %c0_i32_0 = arith.constant 0 : i32
    %c0_i32_1 = arith.constant 0 : i32
    return %arg0, %arg1, %c0_i32, %c0_i32_0 : i32, i32, i32, i32
  }
  func.func @transform_1(%arg0: i32, %arg1: i32) -> (i32, i32, i32, i32) {
    %c0_i32 = arith.constant 0 : i32
    %c0_i32_0 = arith.constant 0 : i32
    %c0_i32_1 = arith.constant 0 : i32
    %c0_i32_2 = arith.constant 0 : i32
    %c0_i32_3 = arith.constant 0 : i32
    return %c0_i32, %c0_i32_0, %c0_i32_1, %c0_i32_2 : i32, i32, i32, i32
  }
  func.func @transform_2(%arg0: i32, %arg1: i32) -> (i32, i32, i32) {
    %c0_i32 = arith.constant 0 : i32
    %c0_i32_0 = arith.constant 0 : i32
    %c0_i32_1 = arith.constant 0 : i32
    %c0_i32_2 = arith.constant 0 : i32
    return %c0_i32, %c0_i32_0, %c0_i32_1 : i32, i32, i32
  }
  func.func @transform_3(%arg0: i32, %arg1: i32) -> (i32, i32, i32, i32) {
    %c0_i32 = arith.constant 0 : i32
    %c0_i32_0 = arith.constant 0 : i32
    %c0_i32_1 = arith.constant 0 : i32
    %c0_i32_2 = arith.constant 0 : i32
    %c0_i32_3 = arith.constant 0 : i32
    return %c0_i32, %c0_i32_0, %c0_i32_1, %c0_i32_2 : i32, i32, i32, i32
  }
  func.func @transform_4(%arg0: i32, %arg1: i32) -> (i32, i32, i32) {
    %c0_i32 = arith.constant 0 : i32
    %c0_i32_0 = arith.constant 0 : i32
    %c0_i32_1 = arith.constant 0 : i32
    %c0_i32_2 = arith.constant 0 : i32
    return %c0_i32, %c0_i32_0, %c0_i32_1 : i32, i32, i32
  }
  func.func @transform_5(%arg0: i32, %arg1: i32) -> (i32, i32, i32) {
    %c0_i32 = arith.constant 0 : i32
    %c0_i32_0 = arith.constant 0 : i32
    return %arg0, %c0_i32, %arg1 : i32, i32, i32
  }
}

</mosaic_0001>

<llo_original>
// kernel: tpu_custom_call.1
$region0: #{tpu_custom_call.1}
  #allocation0 [shape = 'u32[]', space=smem, size = 0x4, offset = 0x4, fixed_abs, tag = 'smem constant byte address 0x4 - core index']
  #allocation1 [shape = 'u32[144,128]{1,0:T(1,128)}', space=vmem, size = 0x12000, scoped, tag = 'internal scratch']
  #allocation2 [shape = 'bf16[64,512]{1,0:T(16,128)(2,1)}', space=vmem, size = 0x10000, scoped, tag = 'scratch operand']
  #allocation3 [shape = 'f32[64,256]{1,0:T(8,128)}', space=vmem, size = 0x10000, scoped, tag = 'scratch operand']
  %s0 = inlined_call_operand.hbm [shape: f32[2,3,64,256], index: 0, kind: input, shape index: {}]
  %s1 = inlined_call_operand.vmem [shape: bf16[3,3,64,64], index: 1, kind: input, shape index: {}]
  %s2 = inlined_call_operand.vmem [shape: f32[3,64,1], index: 2, kind: input, shape index: {}]
  %s3 = inlined_call_operand.hbm [shape: bf16[3,3,64,64], index: 3, kind: input, shape index: {}]
  %s4 = inlined_call_operand.vmem [shape: f32[3,64,1], index: 4, kind: input, shape index: {}]
  %s5 = inlined_call_operand.hbm [shape: f32[2,64,384], index: 5, kind: output, shape index: {}]
  %s6 = sld [smem:[#allocation0]]
  $region109: #{tpu_custom_call.1} parent=0
    _
  %s8 = ssub.s32 1, %s6
  %s9 = scalar_select 0, %s8, %s6
  $region1: #{tpu_custom_call.1} parent=0
    #allocation4 [shape = 'u8[131072]{0}', space=vmem, size = 0x20000, scoped, tag = 'input window, operand 0']
    #allocation5 [shape = 's32[2]{0}', space=sflag, size = 0x8, scoped, tag = 'scoped memory for tpu_custom_call.1']
    #allocation6 [shape = 's32[2]{0}', space=sflag, size = 0x8, scoped, tag = 'scoped memory for tpu_custom_call.1']
    #allocation7 [shape = 'u8[147456]{0}', space=vmem, size = 0x24000, scoped, tag = 'input window, operand 3, single buffered']
    #allocation8 [shape = 's32[1]{0}', space=sflag, size = 0x4, scoped, tag = 'scoped memory for tpu_custom_call.1']
    #allocation9 [shape = 'u8[65536]{0}', space=vmem, size = 0x10000, scoped, tag = 'output window, operand 0']
    %10 = vsyncpa [#allocation5], 0
    %s11 = scalar_lea.sflag [#allocation5], 1
    %12 = vsyncpa %s11, 0
    %13 = vsyncpa [#allocation8], 0
    %14 = vsyncpa [#allocation6], 0
    %s15 = scalar_lea.sflag [#allocation6], 1
    %16 = vsyncpa %s15, 0
    loop: start=0, step=1, limit=8
    $region2: #{tpu_custom_call.1} parent=1 // loop_pre_header
      _
    $region3: #{tpu_custom_call.1} parent=1 // loop_header
      %s18 = sphi 0, %s22
      %p19 = scmp.ge.s32.totalorder %s18, 8
      %s25 = sphi 0, %s37
      %s26 = sphi 0, %s33
      %s27 = sphi 0, %s25
      %s28 = sphi 0, %s26
      %s29 = sphi 0, %s27
      %s30 = sphi 0, %s28
      %s42 = sphi 0, %s44
      %s45 = sphi 0, %s42
      %s46 = sphi 0, %s45
      %s62 = sphi 0, %s46
      %s66 = sphi 0, %s66
      %s68 = sphi 0, %s66
      %s69 = sphi 0, %s68
      %s83 = sphi 0, %s69
      %s87 = sphi 0, %s87
      %s89 = sphi 0, %s87
      %s90 = sphi 0, %s89
      %s104 = sphi 0, %s90
      %s108 = sphi 0, %s108
      %s110 = sphi 0, %s108
      %s111 = sphi 0, %s110
      %s125 = sphi 0, %s111
      %s129 = sphi 0, %s129
      %s131 = sphi 0, %s129
      %s132 = sphi 0, %s131
      %s146 = sphi 0, %s132
      %s154 = sphi 0, %s156
      %s157 = sphi 0, %s154
      %s158 = sphi 0, %s157
      %s174 = sphi 0, %s158
    $region4: #{tpu_custom_call.1} parent=1 // loop_header_branch
      %21 = sbr.rel (%p19) target = $region8
    $region5: #{tpu_custom_call.1} parent=1 // loop_body
      %s23 = ssub.s32 %s18, 1
      %s24 = ssub.s32 %s18, 2
      %s31 = sadd.s32 1, %s26
      %p32 = scmp.ge.s32.totalorder %s31, 3
      %s33 = scalar_select %p32, 0, %s31
      %s34 = sadd.s32 1, %s25
      %s35 = scalar_select %p32, %s34, %s25
      %p36 = scmp.ge.s32.totalorder %s35, 2
      %s37 = scalar_select %p36, 0, %s35
      %s38 = ssub.s32 %s25, %s37
      %s39 = ssub.s32 %s26, %s33
      %s40 = sor.u32 %s38, %s39
      %p41 = scmp.eq.s32.totalorder %s40, 0
      %s43 = sadd.s32 %s42, 1
      %s44 = scalar_select %p41, %s42, %s43
      %p47 = pneg %p41
      %p48 = scmp.eq.s32.totalorder %s18, 5
      %p49 = por %p47, %p48
      %p50 = scmp.ne.s32.totalorder %s42, %s45
      %p51 = scmp.eq.s32.totalorder %s18, 0
      %p52 = por %p50, %p51
      %p53 = scmp.ne.s32.totalorder %s42, %s45
      %p54 = scmp.eq.s32.totalorder %s23, 5
      %p55 = por %p53, %p54
      %p56 = scmp.ne.s32.totalorder %s45, %s46
      %p57 = scmp.eq.s32.totalorder %s23, 0
      %p58 = por %p56, %p57
      %p59 = scmp.ne.s32.totalorder %s45, %s46
      %p60 = scmp.eq.s32.totalorder %s24, 5
      %p61 = por %p59, %p60
      %p63 = scmp.ne.s32.totalorder %s46, %s62
      %p64 = scmp.eq.s32.totalorder %s24, 0
      %p65 = por %p63, %p64
      %s67 = sadd.s32 %s66, 1
      %p70 = scmp.eq.s32.totalorder %s18, 5
      %p71 = scmp.ne.s32.totalorder %s66, %s68
      %p72 = scmp.eq.s32.totalorder %s18, 0
      %p73 = por %p71, %p72
      %p74 = scmp.ne.s32.totalorder %s66, %s68
      %p75 = scmp.eq.s32.totalorder %s23, 5
      %p76 = por %p74, %p75
      %p77 = scmp.ne.s32.totalorder %s68, %s69
      %p78 = scmp.eq.s32.totalorder %s23, 0
      %p79 = por %p77, %p78
      %p80 = scmp.ne.s32.totalorder %s68, %s69
      %p81 = scmp.eq.s32.totalorder %s24, 5
      %p82 = por %p80, %p81
      %p84 = scmp.ne.s32.totalorder %s69, %s83
      %p85 = scmp.eq.s32.totalorder %s24, 0
      %p86 = por %p84, %p85
      %s88 = sadd.s32 %s87, 1
      %p91 = scmp.eq.s32.totalorder %s18, 5
      %p92 = scmp.ne.s32.totalorder %s87, %s89
      %p93 = scmp.eq.s32.totalorder %s18, 0
      %p94 = por %p92, %p93
      %p95 = scmp.ne.s32.totalorder %s87, %s89
      %p96 = scmp.eq.s32.totalorder %s23, 5
      %p97 = por %p95, %p96
      %p98 = scmp.ne.s32.totalorder %s89, %s90
      %p99 = scmp.eq.s32.totalorder %s23, 0
      %p100 = por %p98, %p99
      %p101 = scmp.ne.s32.totalorder %s89, %s90
      %p102 = scmp.eq.s32.totalorder %s24, 5
      %p103 = por %p101, %p102
      %p105 = scmp.ne.s32.totalorder %s90, %s104
      %p106 = scmp.eq.s32.totalorder %s24, 0
      %p107 = por %p105, %p106
      %s109 = sadd.s32 %s108, 1
      %p112 = scmp.eq.s32.totalorder %s18, 5
      %p113 = scmp.ne.s32.totalorder %s108, %s110
      %p114 = scmp.eq.s32.totalorder %s18, 0
      %p115 = por %p113, %p114
      %p116 = scmp.ne.s32.totalorder %s108, %s110
      %p117 = scmp.eq.s32.totalorder %s23, 5
      %p118 = por %p116, %p117
      %p119 = scmp.ne.s32.totalorder %s110, %s111
      %p120 = scmp.eq.s32.totalorder %s23, 0
      %p121 = por %p119, %p120
      %p122 = scmp.ne.s32.totalorder %s110, %s111
      %p123 = scmp.eq.s32.totalorder %s24, 5
      %p124 = por %p122, %p123
      %p126 = scmp.ne.s32.totalorder %s111, %s125
      %p127 = scmp.eq.s32.totalorder %s24, 0
      %p128 = por %p126, %p127
      %s130 = sadd.s32 %s129, 1
      %p133 = scmp.eq.s32.totalorder %s18, 5
      %p134 = scmp.ne.s32.totalorder %s129, %s131
      %p135 = scmp.eq.s32.totalorder %s18, 0
      %p136 = por %p134, %p135
      %p137 = scmp.ne.s32.totalorder %s129, %s131
      %p138 = scmp.eq.s32.totalorder %s23, 5
      %p139 = por %p137, %p138
      %p140 = scmp.ne.s32.totalorder %s131, %s132
      %p141 = scmp.eq.s32.totalorder %s23, 0
      %p142 = por %p140, %p141
      %p143 = scmp.ne.s32.totalorder %s131, %s132
      %p144 = scmp.eq.s32.totalorder %s24, 5
      %p145 = por %p143, %p144
      %p147 = scmp.ne.s32.totalorder %s132, %s146
      %p148 = scmp.eq.s32.totalorder %s24, 0
      %p149 = por %p147, %p148
      %s150 = ssub.s32 %s25, %s37
      %s151 = ssub.s32 %s26, %s33
      %s152 = sor.u32 %s150, %s151
      %p153 = scmp.eq.s32.totalorder %s152, 0
      %s155 = sadd.s32 %s154, 1
      %s156 = scalar_select %p153, %s154, %s155
      %p159 = pneg %p153
      %p160 = scmp.eq.s32.totalorder %s18, 5
      %p161 = por %p159, %p160
      %p162 = scmp.ne.s32.totalorder %s154, %s157
      %p163 = scmp.eq.s32.totalorder %s18, 0
      %p164 = por %p162, %p163
      %p165 = scmp.ne.s32.totalorder %s154, %s157
      %p166 = scmp.eq.s32.totalorder %s23, 5
      %p167 = por %p165, %p166
      %p168 = scmp.ne.s32.totalorder %s157, %s158
      %p169 = scmp.eq.s32.totalorder %s23, 0
      %p170 = por %p168, %p169
      %p171 = scmp.ne.s32.totalorder %s157, %s158
      %p172 = scmp.eq.s32.totalorder %s24, 5
      %p173 = por %p171, %p172
      %p175 = scmp.ne.s32.totalorder %s158, %s174
      %p176 = scmp.eq.s32.totalorder %s24, 0
      %p177 = por %p175, %p176
      %p178 = scmp.le.s32.totalorder 1, %s18
      %p179 = scmp.lt.s32.totalorder %s18, 7
      %p180 = pnand %p178, %p179
      %p181 = pneg %p180
      // Predicated region
      $region9: #{tpu_custom_call.1} parent=5 // pred_check
        _
      $region10: #{tpu_custom_call.1} parent=5 // pred_check_branch
        %183 = sbr.rel (%p180) target = $region12
      $region11: #{tpu_custom_call.1} parent=5 // pred_region
        %s184 = ssub.s32 %s18, 1
        // Predicated region
        $region13: #{tpu_custom_call.1} parent=11 // pred_check
          %p185 = pneg %p79
        $region14: #{tpu_custom_call.1} parent=11 // pred_check_branch
          %187 = sbr.rel (%p185) target = $region16
        $region15: #{tpu_custom_call.1} parent=11 // pred_region
          _
        $region16: #{tpu_custom_call.1} parent=11 // pred_fallthru
          _
        // Predicated region
        $region17: #{tpu_custom_call.1} parent=11 // pred_check
          %p188 = pneg %p100
        $region18: #{tpu_custom_call.1} parent=11 // pred_check_branch
          %190 = sbr.rel (%p188) target = $region20
        $region19: #{tpu_custom_call.1} parent=11 // pred_region
          _
        $region20: #{tpu_custom_call.1} parent=11 // pred_fallthru
          _
        // Predicated region
        $region21: #{tpu_custom_call.1} parent=11 // pred_check
          %p191 = pneg %p121
        $region22: #{tpu_custom_call.1} parent=11 // pred_check_branch
          %193 = sbr.rel (%p191) target = $region24
        $region23: #{tpu_custom_call.1} parent=11 // pred_region
          %s195 = ssub.s32 4608, 4608
          %196 = vsyncadd [#allocation8], %s195
          %s197 = sshll.u32 [#allocation7], 4
          %s198 = int_to_ptr.vmem [resolvable:$true] %s197
          %203 = dma.hbm_to_vmem [thread:$0]  %s3, 4608, %s198, [#allocation8], 64, 64, 4
        $region24: #{tpu_custom_call.1} parent=11 // pred_fallthru
          _
        // Predicated region
        $region25: #{tpu_custom_call.1} parent=11 // pred_check
          %p204 = pneg %p142
        $region26: #{tpu_custom_call.1} parent=11 // pred_check_branch
          %206 = sbr.rel (%p204) target = $region28
        $region27: #{tpu_custom_call.1} parent=11 // pred_region
          _
        $region28: #{tpu_custom_call.1} parent=11 // pred_fallthru
          _
      $region12: #{tpu_custom_call.1} parent=5 // pred_fallthru
        _
      %p207 = scmp.lt.s32.totalorder %s18, 6
      // Predicated region
      $region29: #{tpu_custom_call.1} parent=5 // pred_check
        %p208 = pneg %p207
      $region30: #{tpu_custom_call.1} parent=5 // pred_check_branch
        %210 = sbr.rel (%p208) target = $region32
      $region31: #{tpu_custom_call.1} parent=5 // pred_region
        // Predicated region
        $region33: #{tpu_custom_call.1} parent=31 // pred_check
          %p211 = pneg %p52
        $region34: #{tpu_custom_call.1} parent=31 // pred_check_branch
          %213 = sbr.rel (%p211) target = $region36
        $region35: #{tpu_custom_call.1} parent=31 // pred_region
          %s214 = sand.u32 %s42, 1
          %s215 = scalar_lea.sflag [#allocation5], %s214
          %s216 = sand.u32 %s42, 1
          %s217 = smul.addr %s216, 128
          %s218 = scalar_lea.vmem [#allocation4], %s217
          %s220 = ssub.s32 2048, 2048
          %221 = vsyncadd %s215, %s220
          %s222 = smul.addr %s26, 16
          %s223 = smul.addr %s25, 48
          %s224 = sadd.s32 %s222, %s223
          %s225 = smul.addr %s224, 128
          %s226 = scalar_lea.hbm %s0, %s225
          %s227 = sshll.u32 %s218, 4
          %s228 = int_to_ptr.vmem [resolvable:$true] %s227
          %233 = dma.hbm_to_vmem [thread:$0]  %s226, 2048, %s228, %s215, 256, 256, 16
        $region36: #{tpu_custom_call.1} parent=31 // pred_fallthru
          _
      $region32: #{tpu_custom_call.1} parent=5 // pred_fallthru
        _
      %p234 = scmp.le.s32.totalorder 1, %s18
      %p235 = scmp.lt.s32.totalorder %s18, 7
      %p236 = pnand %p234, %p235
      %p237 = pneg %p236
      // Predicated region
      $region37: #{tpu_custom_call.1} parent=5 // pred_check
        _
      $region38: #{tpu_custom_call.1} parent=5 // pred_check_branch
        %239 = sbr.rel (%p236) target = $region40
      $region39: #{tpu_custom_call.1} parent=5 // pred_region
        %s240 = ssub.s32 %s18, 1
        %s241 = sand.u32 %s45, 1
        %s242 = scalar_lea.sflag [#allocation5], %s241
        %s243 = sand.u32 %s45, 1
        %s244 = smul.addr %s243, 128
        %s245 = scalar_lea.vmem [#allocation4], %s244
        // Predicated region
        $region41: #{tpu_custom_call.1} parent=39 // pred_check
          %p246 = pneg %p58
        $region42: #{tpu_custom_call.1} parent=39 // pred_check_branch
          %248 = sbr.rel (%p246) target = $region44
        $region43: #{tpu_custom_call.1} parent=39 // pred_region
          %249 = dma.done %s242, 2048
        $region44: #{tpu_custom_call.1} parent=39 // pred_fallthru
          _
        // Predicated region
        $region45: #{tpu_custom_call.1} parent=39 // pred_check
          %p250 = pneg %p121
        $region46: #{tpu_custom_call.1} parent=39 // pred_check_branch
          %252 = sbr.rel (%p250) target = $region48
        $region47: #{tpu_custom_call.1} parent=39 // pred_region
          %253 = dma.done [#allocation8], 4608
        $region48: #{tpu_custom_call.1} parent=39 // pred_fallthru
          _
        %s254 = sand.u32 %s45, 1
        %s255 = scalar_lea.sflag [#allocation5], %s254
        %s256 = sand.u32 %s45, 1
        %s257 = smul.addr %s256, 128
        %s258 = scalar_lea.vmem [#allocation4], %s257
        %p259 = pneg %p58
        %p260 = pneg %p55
        %p261 = pneg %p79
        %p262 = pneg %p76
        %p263 = pneg %p100
        %p264 = pneg %p97
        %p265 = pneg %p121
        %p266 = pneg %p118
        %p267 = pneg %p142
        %p268 = pneg %p139
        %p269 = pneg %p170
        %p270 = pneg %p167
        %s271 = sand.u32 %s157, 1
        %s272 = scalar_lea.sflag [#allocation6], %s271
        %s273 = sand.u32 %s157, 1
        %s274 = smul.addr %s273, 64
        %s275 = scalar_lea.vmem [#allocation9], %s274
        %vm277 = vcmask 1048536
        %278 = vst.msk [vmem:[#allocation2] sm:$0xff] %vm277, 0
        %279 = vst.msk [vmem:[#allocation2 + $0x20] sm:$0xff] %vm277, 0
        %280 = vst.msk [vmem:[#allocation2 + $0x40] sm:$0xff] %vm277, 0
        %281 = vst.msk [vmem:[#allocation2 + $0x60] sm:$0xff] %vm277, 0
        %vm282 = vcmask 39936
        %283 = vst.msk [vmem:[#allocation2 + $0x18] sm:$0xff] %vm282, 0
        %284 = vst.msk [vmem:[#allocation2 + $0x38] sm:$0xff] %vm282, 0
        %285 = vst.msk [vmem:[#allocation2 + $0x58] sm:$0xff] %vm282, 0
        %286 = vst.msk [vmem:[#allocation2 + $0x78] sm:$0xff] %vm282, 0
        %v287 = vld [vmem:[%s245] sm:$0xff]
        %v288 = vld [vmem:[%s245 + $0x8] sm:$0xff]
        %v289 = vld [vmem:[%s245 + $0x10] sm:$0xff]
        %v290 = vld [vmem:[%s245 + $0x18] sm:$0xff]
        %v291 = vld [vmem:[%s245 + $0x20] sm:$0xff]
        %v292 = vld [vmem:[%s245 + $0x28] sm:$0xff]
        %v293 = vld [vmem:[%s245 + $0x30] sm:$0xff]
        %v294 = vld [vmem:[%s245 + $0x38] sm:$0xff]
        %v295 = vld [vmem:[%s245 + $0x40] sm:$0xff]
        %v296 = vld [vmem:[%s245 + $0x48] sm:$0xff]
        %v297 = vld [vmem:[%s245 + $0x50] sm:$0xff]
        %v298 = vld [vmem:[%s245 + $0x58] sm:$0xff]
        %v299 = vld [vmem:[%s245 + $0x60] sm:$0xff]
        %v300 = vld [vmem:[%s245 + $0x68] sm:$0xff]
        %v301 = vld [vmem:[%s245 + $0x70] sm:$0xff]
        %v302 = vld [vmem:[%s245 + $0x78] sm:$0xff]
        %303 = vst [vmem:[#allocation3] sm:$0xff] %v287
        %304 = vst [vmem:[#allocation3 + $0x8] sm:$0xff] %v288
        %305 = vst [vmem:[#allocation3 + $0x10] sm:$0xff] %v289
        %306 = vst [vmem:[#allocation3 + $0x18] sm:$0xff] %v290
        %307 = vst [vmem:[#allocation3 + $0x20] sm:$0xff] %v291
        %308 = vst [vmem:[#allocation3 + $0x28] sm:$0xff] %v292
        %309 = vst [vmem:[#allocation3 + $0x30] sm:$0xff] %v293
        %310 = vst [vmem:[#allocation3 + $0x38] sm:$0xff] %v294
        %311 = vst [vmem:[#allocation3 + $0x40] sm:$0xff] %v295
        %312 = vst [vmem:[#allocation3 + $0x48] sm:$0xff] %v296
        %313 = vst [vmem:[#allocation3 + $0x50] sm:$0xff] %v297
        %314 = vst [vmem:[#allocation3 + $0x58] sm:$0xff] %v298
        %315 = vst [vmem:[#allocation3 + $0x60] sm:$0xff] %v299
        %316 = vst [vmem:[#allocation3 + $0x68] sm:$0xff] %v300
        %317 = vst [vmem:[#allocation3 + $0x70] sm:$0xff] %v301
        %318 = vst [vmem:[#allocation3 + $0x78] sm:$0xff] %v302
        %v319 = vld [vmem:[#allocation3] sm:$0xff]
        %v320 = vld [vmem:[#allocation3 + $0x8] sm:$0xff]
        %v321 = vld [vmem:[#allocation3 + $0x10] sm:$0xff]
        %v322 = vld [vmem:[#allocation3 + $0x18] sm:$0xff]
        %v323 = vld [vmem:[#allocation3 + $0x20] sm:$0xff]
        %v324 = vld [vmem:[#allocation3 + $0x28] sm:$0xff]
        %v325 = vld [vmem:[#allocation3 + $0x30] sm:$0xff]
        %v326 = vld [vmem:[#allocation3 + $0x38] sm:$0xff]
        %v327 = vld [vmem:[#allocation3 + $0x40] sm:$0xff]
        %v328 = vld [vmem:[#allocation3 + $0x48] sm:$0xff]
        %v329 = vld [vmem:[#allocation3 + $0x50] sm:$0xff]
        %v330 = vld [vmem:[#allocation3 + $0x58] sm:$0xff]
        %v331 = vld [vmem:[#allocation3 + $0x60] sm:$0xff]
        %v332 = vld [vmem:[#allocation3 + $0x68] sm:$0xff]
        %v333 = vld [vmem:[#allocation3 + $0x70] sm:$0xff]
        %v334 = vld [vmem:[#allocation3 + $0x78] sm:$0xff]
        %vm335 = vcmp.gt.f32.partialorder %v319, 0.0
        %vm336 = vcmp.gt.f32.partialorder %v320, 0.0
        %vm337 = vcmp.gt.f32.partialorder %v321, 0.0
        %vm338 = vcmp.gt.f32.partialorder %v322, 0.0
        %vm339 = vcmp.gt.f32.partialorder %v323, 0.0
        %vm340 = vcmp.gt.f32.partialorder %v324, 0.0
        %vm341 = vcmp.gt.f32.partialorder %v325, 0.0
        %vm342 = vcmp.gt.f32.partialorder %v326, 0.0
        %vm343 = vcmp.gt.f32.partialorder %v327, 0.0
        %vm344 = vcmp.gt.f32.partialorder %v328, 0.0
        %vm345 = vcmp.gt.f32.partialorder %v329, 0.0
        %vm346 = vcmp.gt.f32.partialorder %v330, 0.0
        %vm347 = vcmp.gt.f32.partialorder %v331, 0.0
        %vm348 = vcmp.gt.f32.partialorder %v332, 0.0
        %vm349 = vcmp.gt.f32.partialorder %v333, 0.0
        %vm350 = vcmp.gt.f32.partialorder %v334, 0.0
        %v351 = vmul.f32 %v319, 0.1
        %v352 = vmul.f32 %v320, 0.1
        %v353 = vmul.f32 %v321, 0.1
        %v354 = vmul.f32 %v322, 0.1
        %v355 = vmul.f32 %v323, 0.1
        %v356 = vmul.f32 %v324, 0.1
        %v357 = vmul.f32 %v325, 0.1
        %v358 = vmul.f32 %v326, 0.1
        %v359 = vmul.f32 %v327, 0.1
        %v360 = vmul.f32 %v328, 0.1
        %v361 = vmul.f32 %v329, 0.1
        %v362 = vmul.f32 %v330, 0.1
        %v363 = vmul.f32 %v331, 0.1
        %v364 = vmul.f32 %v332, 0.1
        %v365 = vmul.f32 %v333, 0.1
        %v366 = vmul.f32 %v334, 0.1
        %v367 = vsel %vm335, %v319, %v351
        %v368 = vsel %vm336, %v320, %v352
        %v369 = vsel %vm337, %v321, %v353
        %v370 = vsel %vm338, %v322, %v354
        %v371 = vsel %vm339, %v323, %v355
        %v372 = vsel %vm340, %v324, %v356
        %v373 = vsel %vm341, %v325, %v357
        %v374 = vsel %vm342, %v326, %v358
        %v375 = vsel %vm343, %v327, %v359
        %v376 = vsel %vm344, %v328, %v360
        %v377 = vsel %vm345, %v329, %v361
        %v378 = vsel %vm346, %v330, %v362
        %v379 = vsel %vm347, %v331, %v363
        %v380 = vsel %vm348, %v332, %v364
        %v381 = vsel %vm349, %v333, %v365
        %v382 = vsel %vm350, %v334, %v366
        %v383 = vpack.c.bf16 %v369, %v367
        %v384 = vpack.c.bf16 %v370, %v368
        %v385 = vpack.c.bf16 %v373, %v371
        %v386 = vpack.c.bf16 %v374, %v372
        %v387 = vpack.c.bf16 %v377, %v375
        %v388 = vpack.c.bf16 %v378, %v376
        %v389 = vpack.c.bf16 %v381, %v379
        %v390 = vpack.c.bf16 %v382, %v380
        %391 = vst [vmem:[#allocation2 + $0x8] sm:$0xff] %v383
        %392 = vst [vmem:[#allocation2 + $0x10] sm:$0xff] %v384
        %393 = vst [vmem:[#allocation2 + $0x28] sm:$0xff] %v385
        %394 = vst [vmem:[#allocation2 + $0x30] sm:$0xff] %v386
        %395 = vst [vmem:[#allocation2 + $0x48] sm:$0xff] %v387
        %396 = vst [vmem:[#allocation2 + $0x50] sm:$0xff] %v388
        %397 = vst [vmem:[#allocation2 + $0x68] sm:$0xff] %v389
        %398 = vst [vmem:[#allocation2 + $0x70] sm:$0xff] %v390
        %p399 = scmp.eq.s32.totalorder %s28, 0
        // Predicated region
        $region49: #{tpu_custom_call.1} parent=39 // pred_check
          %p400 = pneg %p399
        $region50: #{tpu_custom_call.1} parent=39 // pred_check_branch
          %402 = sbr.rel (%p400) target = $region52
        $region51: #{tpu_custom_call.1} parent=39 // pred_region
          %vm403 = vcmask 97280
          %404 = vst.msk [vmem:[#allocation2 + $0x8] sm:$0xff] %vm403, 0
          %405 = vst.msk [vmem:[#allocation2 + $0x28] sm:$0xff] %vm403, 0
          %406 = vst.msk [vmem:[#allocation2 + $0x48] sm:$0xff] %vm403, 0
          %407 = vst.msk [vmem:[#allocation2 + $0x68] sm:$0xff] %vm403, 0
        $region52: #{tpu_custom_call.1} parent=39 // pred_fallthru
          _
        %p408 = scmp.eq.s32.totalorder %s28, 2
        // Predicated region
        $region53: #{tpu_custom_call.1} parent=39 // pred_check
          %p409 = pneg %p408
        $region54: #{tpu_custom_call.1} parent=39 // pred_check_branch
          %411 = sbr.rel (%p409) target = $region56
        $region55: #{tpu_custom_call.1} parent=39 // pred_region
          %vm412 = vcmask 1047648
          %413 = vst.msk [vmem:[#allocation2 + $0x10] sm:$0xff] %vm412, 0
          %414 = vst.msk [vmem:[#allocation2 + $0x30] sm:$0xff] %vm412, 0
          %415 = vst.msk [vmem:[#allocation2 + $0x50] sm:$0xff] %vm412, 0
          %416 = vst.msk [vmem:[#allocation2 + $0x70] sm:$0xff] %vm412, 0
        $region56: #{tpu_custom_call.1} parent=39 // pred_fallthru
          _
        %v417 = vld [vmem:[#allocation2] sm:$0xff]
        %v418 = vld [vmem:[#allocation2 + $0x8] sm:$0xff]
        %v419 = vld [vmem:[#allocation2 + $0x10] sm:$0xff]
        %v420 = vld [vmem:[#allocation2 + $0x20] sm:$0xff]
        %v421 = vld [vmem:[#allocation2 + $0x28] sm:$0xff]
        %v422 = vld [vmem:[#allocation2 + $0x30] sm:$0xff]
        %v423 = vld [vmem:[#allocation2 + $0x40] sm:$0xff]
        %v424 = vld [vmem:[#allocation2 + $0x48] sm:$0xff]
        %v425 = vld [vmem:[#allocation2 + $0x50] sm:$0xff]
        %v426 = vld [vmem:[#allocation2 + $0x60] sm:$0xff]
        %v427 = vld [vmem:[#allocation2 + $0x68] sm:$0xff]
        %v428 = vld [vmem:[#allocation2 + $0x70] sm:$0xff]
        %v429 = vld [vmem:[%s1] sm:$0xf]
        %v430 = vld [vmem:[%s1 + $0x4] sm:$0xf]
        %v431 = vld [vmem:[%s1 + $0x8] sm:$0xf]
        %v432 = vld [vmem:[%s1 + $0xc] sm:$0xf]
        %v433 = vld [vmem:[%s1 + $0x10] sm:$0xf]
        %v434 = vld [vmem:[%s1 + $0x14] sm:$0xf]
        %v435 = vld [vmem:[%s1 + $0x18] sm:$0xf]
        %v436 = vld [vmem:[%s1 + $0x1c] sm:$0xf]
        %s437 = scalar_lea.vmem %s1, 32
        %v438 = vld [vmem:[%s437] sm:$0xf]
        %v439 = vld [vmem:[%s437 + $0x4] sm:$0xf]
        %v440 = vld [vmem:[%s437 + $0x8] sm:$0xf]
        %v441 = vld [vmem:[%s437 + $0xc] sm:$0xf]
        %v442 = vld [vmem:[%s437 + $0x10] sm:$0xf]
        %v443 = vld [vmem:[%s437 + $0x14] sm:$0xf]
        %v444 = vld [vmem:[%s437 + $0x18] sm:$0xf]
        %v445 = vld [vmem:[%s437 + $0x1c] sm:$0xf]
        %v454 = vunpack.c.l.b16 %v438
        %v455 = vunpack.c.l.b16 %v439
        %v456 = vunpack.c.l.b16 %v440
        %v457 = vunpack.c.l.b16 %v441
        %v458 = vunpack.c.l.b16 %v442
        %v459 = vunpack.c.l.b16 %v443
        %v460 = vunpack.c.l.b16 %v444
        %v461 = vunpack.c.l.b16 %v445
        %v462 = vpack.c.b16 %v455, %v454
        %v463 = vpack.c.b16 %v457, %v456
        %v464 = vpack.c.b16 %v459, %v458
        %v465 = vpack.c.b16 %v461, %v460
        %vm466 = vcmask 523264
        %v468 = vsel %vm466, %v462, 0
        %v471 = vsel %vm466, %v463, 0
        %v474 = vsel %vm466, %v464, 0
        %v477 = vsel %vm466, %v465, 0
        %479 = vmatprep.subr.bf16.mxu0 %v419
        %480 = vmatpush1.bf16.msra.mxu0 %v418
        %481 = vmatprep.subr.bf16.mxu0 %v422
        %482 = vmatpush1.bf16.msra.mxu0 %v421
        %483 = vmatprep.subr.bf16.mxu0 %v425
        %484 = vmatpush1.bf16.msra.mxu0 %v424
        %485 = vmatprep.subr.bf16.mxu0 %v428
        %486 = vmatpush1.bf16.msra.mxu0 %v427
        %487 = vmatprep.subr.bf16.mxu0 0
        %488 = vmatpush1.bf16.msra.mxu0 0
        %489 = vmatprep.subr.bf16.mxu0 0
        %490 = vmatpush1.bf16.msra.mxu0 0
        %491 = vmatprep.subr.bf16.mxu0 0
        %492 = vmatpush1.bf16.msra.mxu0 0
        %493 = vmatprep.subr.bf16.mxu0 0
        %494 = vmatpush1.bf16.msra.mxu0 0
        %495 = vmatprep.subr.bf16.mxu0 0
        %496 = vmatpush1.bf16.msra.mxu0 0
        %497 = vmatprep.subr.bf16.mxu0 0
        %498 = vmatpush1.bf16.msra.mxu0 0
        %499 = vmatprep.subr.bf16.mxu0 0
        %500 = vmatpush1.bf16.msra.mxu0 0
        %501 = vmatprep.subr.bf16.mxu0 0
        %502 = vmatpush1.bf16.msra.mxu0 0
        %503 = vmatprep.subr.bf16.mxu0 0
        %504 = vmatpush1.bf16.msra.mxu0 0
        %505 = vmatprep.subr.bf16.mxu0 0
        %506 = vmatpush1.bf16.msra.mxu0 0
        %507 = vmatprep.subr.bf16.mxu0 0
        %508 = vmatpush1.bf16.msra.mxu0 0
        %509 = vmatprep.subr.bf16.mxu0 0
        %510 = vmatpush1.bf16.msra.mxu0 0
        %511 = vmatprep.mubr.bf16.mxu0 0
        %512 = vmatmul.mubr.bf16.gmra.mrb[0].mxu0 %v468
        %v513 = vpop.f32.mrb[0].mxu0
        %v514 = vadd.f32 0.0, %v513
        %v515 = vpop.f32.mrb[0].mxu0
        %v516 = vadd.f32 0.0, %v515
        %v517 = vpop.f32.mrb[0].mxu0
        %v518 = vadd.f32 0.0, %v517
        %v519 = vpop.f32.mrb[0].mxu0
        %v520 = vadd.f32 0.0, %v519
        %521 = vmatprep.mubr.bf16.mxu0 0
        %522 = vmatmul.mubr.bf16.gmra.mrb[0].mxu0 %v471
        %v523 = vpop.f32.mrb[0].mxu0
        %v524 = vadd.f32 0.0, %v523
        %v525 = vpop.f32.mrb[0].mxu0
        %v526 = vadd.f32 0.0, %v525
        %v527 = vpop.f32.mrb[0].mxu0
        %v528 = vadd.f32 0.0, %v527
        %v529 = vpop.f32.mrb[0].mxu0
        %v530 = vadd.f32 0.0, %v529
        %531 = vmatprep.mubr.bf16.mxu0 0
        %532 = vmatmul.mubr.bf16.gmra.mrb[0].mxu0 %v474
        %v533 = vpop.f32.mrb[0].mxu0
        %v534 = vadd.f32 0.0, %v533
        %v535 = vpop.f32.mrb[0].mxu0
        %v536 = vadd.f32 0.0, %v535
        %v537 = vpop.f32.mrb[0].mxu0
        %v538 = vadd.f32 0.0, %v537
        %v539 = vpop.f32.mrb[0].mxu0
        %v540 = vadd.f32 0.0, %v539
        %541 = vmatprep.mubr.bf16.mxu0 0
        %542 = vmatmul.mubr.bf16.gmra.mrb[0].mxu0 %v477
        %v543 = vpop.f32.mrb[0].mxu0
        %v544 = vadd.f32 0.0, %v543
        %v545 = vpop.f32.mrb[0].mxu0
        %v546 = vadd.f32 0.0, %v545
        %v547 = vpop.f32.mrb[0].mxu0
        %v548 = vadd.f32 0.0, %v547
        %v549 = vpop.f32.mrb[0].mxu0
        %v550 = vadd.f32 0.0, %v549
        %551 = vdwg.mxu0
        %v560 = vunpack.c.l.b16 %v429
        %v561 = vunpack.c.l.b16 %v430
        %v562 = vunpack.c.l.b16 %v431
        %v563 = vunpack.c.l.b16 %v432
        %v564 = vunpack.c.l.b16 %v433
        %v565 = vunpack.c.l.b16 %v434
        %v566 = vunpack.c.l.b16 %v435
        %v567 = vunpack.c.l.b16 %v436
        %v568 = vpack.c.b16 %v561, %v560
        %v569 = vpack.c.b16 %v563, %v562
        %v570 = vpack.c.b16 %v565, %v564
        %v571 = vpack.c.b16 %v567, %v566
        %584 = vrot.lane.b32.xlu0 %v417, 1
        %v585 = vpop.permute.xlu0 %584
        %586 = vrot.lane.b32.xlu0 %v418, 1
        %v587 = vpop.permute.xlu0 %586
        %588 = vrot.lane.b32.xlu0 %v419, 1
        %v589 = vpop.permute.xlu0 %588
        %590 = vrot.lane.b32.xlu0 %v420, 1
        %v591 = vpop.permute.xlu0 %590
        %592 = vrot.lane.b32.xlu0 %v421, 1
        %v593 = vpop.permute.xlu0 %592
        %594 = vrot.lane.b32.xlu0 %v422, 1
        %v595 = vpop.permute.xlu0 %594
        %596 = vrot.lane.b32.xlu0 %v423, 1
        %v597 = vpop.permute.xlu0 %596
        %598 = vrot.lane.b32.xlu0 %v424, 1
        %v599 = vpop.permute.xlu0 %598
        %600 = vrot.lane.b32.xlu0 %v425, 1
        %v601 = vpop.permute.xlu0 %600
        %602 = vrot.lane.b32.xlu0 %v426, 1
        %v603 = vpop.permute.xlu0 %602
        %604 = vrot.lane.b32.xlu0 %v427, 1
        %v605 = vpop.permute.xlu0 %604
        %606 = vrot.lane.b32.xlu0 %v428, 1
        %v607 = vpop.permute.xlu0 %606
        %vm608 = vcmask 7168
        %v609 = vsel %vm608, %v585, %v587
        %v610 = vsel %vm608, %v587, %v589
        %v611 = vsel %vm608, %v591, %v593
        %v612 = vsel %vm608, %v593, %v595
        %v613 = vsel %vm608, %v597, %v599
        %v614 = vsel %vm608, %v599, %v601
        %v615 = vsel %vm608, %v603, %v605
        %v616 = vsel %vm608, %v605, %v607
        %v626 = vsel %vm466, %v568, 0
        %v629 = vsel %vm466, %v569, 0
        %v632 = vsel %vm466, %v570, 0
        %v635 = vsel %vm466, %v571, 0
        %637 = vmatprep.subr.bf16.mxu0 %v610
        %638 = vmatpush1.bf16.msra.mxu0 %v609
        %639 = vmatprep.subr.bf16.mxu0 %v612
        %640 = vmatpush1.bf16.msra.mxu0 %v611
        %641 = vmatprep.subr.bf16.mxu0 %v614
        %642 = vmatpush1.bf16.msra.mxu0 %v613
        %643 = vmatprep.subr.bf16.mxu0 %v616
        %644 = vmatpush1.bf16.msra.mxu0 %v615
        %645 = vmatprep.subr.bf16.mxu0 0
        %646 = vmatpush1.bf16.msra.mxu0 0
        %647 = vmatprep.subr.bf16.mxu0 0
        %648 = vmatpush1.bf16.msra.mxu0 0
        %649 = vmatprep.subr.bf16.mxu0 0
        %650 = vmatpush1.bf16.msra.mxu0 0
        %651 = vmatprep.subr.bf16.mxu0 0
        %652 = vmatpush1.bf16.msra.mxu0 0
        %653 = vmatprep.subr.bf16.mxu0 0
        %654 = vmatpush1.bf16.msra.mxu0 0
        %655 = vmatprep.subr.bf16.mxu0 0
        %656 = vmatpush1.bf16.msra.mxu0 0
        %657 = vmatprep.subr.bf16.mxu0 0
        %658 = vmatpush1.bf16.msra.mxu0 0
        %659 = vmatprep.subr.bf16.mxu0 0
        %660 = vmatpush1.bf16.msra.mxu0 0
        %661 = vmatprep.subr.bf16.mxu0 0
        %662 = vmatpush1.bf16.msra.mxu0 0
        %663 = vmatprep.subr.bf16.mxu0 0
        %664 = vmatpush1.bf16.msra.mxu0 0
        %665 = vmatprep.subr.bf16.mxu0 0
        %666 = vmatpush1.bf16.msra.mxu0 0
        %667 = vmatprep.subr.bf16.mxu0 0
        %668 = vmatpush1.bf16.msra.mxu0 0
        %669 = vmatprep.mubr.bf16.mxu0 0
        %670 = vmatmul.mubr.bf16.gmra.mrb[0].mxu0 %v626
        %v671 = vpop.f32.mrb[0].mxu0
        %v672 = vadd.f32 %v514, %v671
        %v673 = vpop.f32.mrb[0].mxu0
        %v674 = vadd.f32 %v516, %v673
        %v675 = vpop.f32.mrb[0].mxu0
        %v676 = vadd.f32 %v518, %v675
        %v677 = vpop.f32.mrb[0].mxu0
        %v678 = vadd.f32 %v520, %v677
        %679 = vmatprep.mubr.bf16.mxu0 0
        %680 = vmatmul.mubr.bf16.gmra.mrb[0].mxu0 %v629
        %v681 = vpop.f32.mrb[0].mxu0
        %v682 = vadd.f32 %v524, %v681
        %v683 = vpop.f32.mrb[0].mxu0
        %v684 = vadd.f32 %v526, %v683
        %v685 = vpop.f32.mrb[0].mxu0
        %v686 = vadd.f32 %v528, %v685
        %v687 = vpop.f32.mrb[0].mxu0
        %v688 = vadd.f32 %v530, %v687
        %689 = vmatprep.mubr.bf16.mxu0 0
        %690 = vmatmul.mubr.bf16.gmra.mrb[0].mxu0 %v632
        %v691 = vpop.f32.mrb[0].mxu0
        %v692 = vadd.f32 %v534, %v691
        %v693 = vpop.f32.mrb[0].mxu0
        %v694 = vadd.f32 %v536, %v693
        %v695 = vpop.f32.mrb[0].mxu0
        %v696 = vadd.f32 %v538, %v695
        %v697 = vpop.f32.mrb[0].mxu0
        %v698 = vadd.f32 %v540, %v697
        %699 = vmatprep.mubr.bf16.mxu0 0
        %700 = vmatmul.mubr.bf16.gmra.mrb[0].mxu0 %v635
        %v701 = vpop.f32.mrb[0].mxu0
        %v702 = vadd.f32 %v544, %v701
        %v703 = vpop.f32.mrb[0].mxu0
        %v704 = vadd.f32 %v546, %v703
        %v705 = vpop.f32.mrb[0].mxu0
        %v706 = vadd.f32 %v548, %v705
        %v707 = vpop.f32.mrb[0].mxu0
        %v708 = vadd.f32 %v550, %v707
        %709 = vdwg.mxu0
        %v710 = vld [vmem:[#allocation2 + $0x8] sm:$0xff]
        %v711 = vld [vmem:[#allocation2 + $0x10] sm:$0xff]
        %v712 = vld [vmem:[#allocation2 + $0x18] sm:$0xff]
        %v713 = vld [vmem:[#allocation2 + $0x28] sm:$0xff]
        %v714 = vld [vmem:[#allocation2 + $0x30] sm:$0xff]
        %v715 = vld [vmem:[#allocation2 + $0x38] sm:$0xff]
        %v716 = vld [vmem:[#allocation2 + $0x48] sm:$0xff]
        %v717 = vld [vmem:[#allocation2 + $0x50] sm:$0xff]
        %v718 = vld [vmem:[#allocation2 + $0x58] sm:$0xff]
        %v719 = vld [vmem:[#allocation2 + $0x68] sm:$0xff]
        %v720 = vld [vmem:[#allocation2 + $0x70] sm:$0xff]
        %v721 = vld [vmem:[#allocation2 + $0x78] sm:$0xff]
        %s722 = scalar_lea.vmem %s1, 64
        %v723 = vld [vmem:[%s722] sm:$0xf]
        %v724 = vld [vmem:[%s722 + $0x4] sm:$0xf]
        %v725 = vld [vmem:[%s722 + $0x8] sm:$0xf]
        %v726 = vld [vmem:[%s722 + $0xc] sm:$0xf]
        %v727 = vld [vmem:[%s722 + $0x10] sm:$0xf]
        %v728 = vld [vmem:[%s722 + $0x14] sm:$0xf]
        %v729 = vld [vmem:[%s722 + $0x18] sm:$0xf]
        %v730 = vld [vmem:[%s722 + $0x1c] sm:$0xf]
        %v739 = vunpack.c.l.b16 %v723
        %v740 = vunpack.c.l.b16 %v724
        %v741 = vunpack.c.l.b16 %v725
        %v742 = vunpack.c.l.b16 %v726
        %v743 = vunpack.c.l.b16 %v727
        %v744 = vunpack.c.l.b16 %v728
        %v745 = vunpack.c.l.b16 %v729
        %v746 = vunpack.c.l.b16 %v730
        %v747 = vpack.c.b16 %v740, %v739
        %v748 = vpack.c.b16 %v742, %v741
        %v749 = vpack.c.b16 %v744, %v743
        %v750 = vpack.c.b16 %v746, %v745
        %763 = vrot.lane.b32.xlu0 %v710, 127
        %v764 = vpop.permute.xlu0 %763
        %765 = vrot.lane.b32.xlu0 %v711, 127
        %v766 = vpop.permute.xlu0 %765
        %767 = vrot.lane.b32.xlu0 %v712, 127
        %v768 = vpop.permute.xlu0 %767
        %769 = vrot.lane.b32.xlu0 %v713, 127
        %v770 = vpop.permute.xlu0 %769
        %771 = vrot.lane.b32.xlu0 %v714, 127
        %v772 = vpop.permute.xlu0 %771
        %773 = vrot.lane.b32.xlu0 %v715, 127
        %v774 = vpop.permute.xlu0 %773
        %775 = vrot.lane.b32.xlu0 %v716, 127
        %v776 = vpop.permute.xlu0 %775
        %777 = vrot.lane.b32.xlu0 %v717, 127
        %v778 = vpop.permute.xlu0 %777
        %779 = vrot.lane.b32.xlu0 %v718, 127
        %v780 = vpop.permute.xlu0 %779
        %781 = vrot.lane.b32.xlu0 %v719, 127
        %v782 = vpop.permute.xlu0 %781
        %783 = vrot.lane.b32.xlu0 %v720, 127
        %v784 = vpop.permute.xlu0 %783
        %785 = vrot.lane.b32.xlu0 %v721, 127
        %v786 = vpop.permute.xlu0 %785
        %vm787 = vcmask 1039360
        %v788 = vsel %vm787, %v764, %v766
        %v789 = vsel %vm787, %v766, %v768
        %v790 = vsel %vm787, %v770, %v772
        %v791 = vsel %vm787, %v772, %v774
        %v792 = vsel %vm787, %v776, %v778
        %v793 = vsel %vm787, %v778, %v780
        %v794 = vsel %vm787, %v782, %v784
        %v795 = vsel %vm787, %v784, %v786
        %v805 = vsel %vm466, %v747, 0
        %v808 = vsel %vm466, %v748, 0
        %v811 = vsel %vm466, %v749, 0
        %v814 = vsel %vm466, %v750, 0
        %816 = vmatprep.subr.bf16.mxu0 %v789
        %817 = vmatpush1.bf16.msra.mxu0 %v788
        %818 = vmatprep.subr.bf16.mxu0 %v791
        %819 = vmatpush1.bf16.msra.mxu0 %v790
        %820 = vmatprep.subr.bf16.mxu0 %v793
        %821 = vmatpush1.bf16.msra.mxu0 %v792
        %822 = vmatprep.subr.bf16.mxu0 %v795
        %823 = vmatpush1.bf16.msra.mxu0 %v794
        %824 = vmatprep.subr.bf16.mxu0 0
        %825 = vmatpush1.bf16.msra.mxu0 0
        %826 = vmatprep.subr.bf16.mxu0 0
        %827 = vmatpush1.bf16.msra.mxu0 0
        %828 = vmatprep.subr.bf16.mxu0 0
        %829 = vmatpush1.bf16.msra.mxu0 0
        %830 = vmatprep.subr.bf16.mxu0 0
        %831 = vmatpush1.bf16.msra.mxu0 0
        %832 = vmatprep.subr.bf16.mxu0 0
        %833 = vmatpush1.bf16.msra.mxu0 0
        %834 = vmatprep.subr.bf16.mxu0 0
        %835 = vmatpush1.bf16.msra.mxu0 0
        %836 = vmatprep.subr.bf16.mxu0 0
        %837 = vmatpush1.bf16.msra.mxu0 0
        %838 = vmatprep.subr.bf16.mxu0 0
        %839 = vmatpush1.bf16.msra.mxu0 0
        %840 = vmatprep.subr.bf16.mxu0 0
        %841 = vmatpush1.bf16.msra.mxu0 0
        %842 = vmatprep.subr.bf16.mxu0 0
        %843 = vmatpush1.bf16.msra.mxu0 0
        %844 = vmatprep.subr.bf16.mxu0 0
        %845 = vmatpush1.bf16.msra.mxu0 0
        %846 = vmatprep.subr.bf16.mxu0 0
        %847 = vmatpush1.bf16.msra.mxu0 0
        %848 = vmatprep.mubr.bf16.mxu0 0
        %849 = vmatmul.mubr.bf16.gmra.mrb[0].mxu0 %v805
        %v850 = vpop.f32.mrb[0].mxu0
        %v851 = vadd.f32 0.0, %v850
        %v852 = vpop.f32.mrb[0].mxu0
        %v853 = vadd.f32 0.0, %v852
        %v854 = vpop.f32.mrb[0].mxu0
        %v855 = vadd.f32 0.0, %v854
        %v856 = vpop.f32.mrb[0].mxu0
        %v857 = vadd.f32 0.0, %v856
        %858 = vmatprep.mubr.bf16.mxu0 0
        %859 = vmatmul.mubr.bf16.gmra.mrb[0].mxu0 %v808
        %v860 = vpop.f32.mrb[0].mxu0
        %v861 = vadd.f32 0.0, %v860
        %v862 = vpop.f32.mrb[0].mxu0
        %v863 = vadd.f32 0.0, %v862
        %v864 = vpop.f32.mrb[0].mxu0
        %v865 = vadd.f32 0.0, %v864
        %v866 = vpop.f32.mrb[0].mxu0
        %v867 = vadd.f32 0.0, %v866
        %868 = vmatprep.mubr.bf16.mxu0 0
        %869 = vmatmul.mubr.bf16.gmra.mrb[0].mxu0 %v811
        %v870 = vpop.f32.mrb[0].mxu0
        %v871 = vadd.f32 0.0, %v870
        %v872 = vpop.f32.mrb[0].mxu0
        %v873 = vadd.f32 0.0, %v872
        %v874 = vpop.f32.mrb[0].mxu0
        %v875 = vadd.f32 0.0, %v874
        %v876 = vpop.f32.mrb[0].mxu0
        %v877 = vadd.f32 0.0, %v876
        %878 = vmatprep.mubr.bf16.mxu0 0
        %879 = vmatmul.mubr.bf16.gmra.mrb[0].mxu0 %v814
        %v880 = vpop.f32.mrb[0].mxu0
        %v881 = vadd.f32 0.0, %v880
        %v882 = vpop.f32.mrb[0].mxu0
        %v883 = vadd.f32 0.0, %v882
        %v884 = vpop.f32.mrb[0].mxu0
        %v885 = vadd.f32 0.0, %v884
        %v886 = vpop.f32.mrb[0].mxu0
        %v887 = vadd.f32 0.0, %v886
        %888 = vdwg.mxu0
        %v889 = vadd.f32 %v672, %v851
        %v890 = vadd.f32 %v674, %v853
        %v891 = vadd.f32 %v676, %v855
        %v892 = vadd.f32 %v678, %v857
        %v893 = vadd.f32 %v682, %v861
        %v894 = vadd.f32 %v684, %v863
        %v895 = vadd.f32 %v686, %v865
        %v896 = vadd.f32 %v688, %v867
        %v897 = vadd.f32 %v692, %v871
        %v898 = vadd.f32 %v694, %v873
        %v899 = vadd.f32 %v696, %v875
        %v900 = vadd.f32 %v698, %v877
        %v901 = vadd.f32 %v702, %v881
        %v902 = vadd.f32 %v704, %v883
        %v903 = vadd.f32 %v706, %v885
        %v904 = vadd.f32 %v708, %v887
        %v905 = vld [vmem:[%s2] sm:$0xff]
        %v906 = vld [vmem:[%s2 + $0x8] sm:$0xff]
        %v907 = vld [vmem:[%s2 + $0x10] sm:$0xff]
        %v908 = vld [vmem:[%s2 + $0x18] sm:$0xff]
        %v909 = vld [vmem:[%s2 + $0x20] sm:$0xff]
        %v910 = vld [vmem:[%s2 + $0x28] sm:$0xff]
        %v911 = vld [vmem:[%s2 + $0x30] sm:$0xff]
        %v912 = vld [vmem:[%s2 + $0x38] sm:$0xff]
        %914 = vset.pattern.permute.xlu0 0
        %915 = vperm.xlu0 %914, %v905
        %v916 = vpop.permute.xlu0 %915
        %919 = vset.pattern.permute.xlu0 0
        %920 = vperm.xlu0 %919, %v906
        %v921 = vpop.permute.xlu0 %920
        %924 = vset.pattern.permute.xlu0 0
        %925 = vperm.xlu0 %924, %v907
        %v926 = vpop.permute.xlu0 %925
        %929 = vset.pattern.permute.xlu0 0
        %930 = vperm.xlu0 %929, %v908
        %v931 = vpop.permute.xlu0 %930
        %934 = vset.pattern.permute.xlu0 0
        %935 = vperm.xlu0 %934, %v909
        %v936 = vpop.permute.xlu0 %935
        %939 = vset.pattern.permute.xlu0 0
        %940 = vperm.xlu0 %939, %v910
        %v941 = vpop.permute.xlu0 %940
        %944 = vset.pattern.permute.xlu0 0
        %945 = vperm.xlu0 %944, %v911
        %v946 = vpop.permute.xlu0 %945
        %949 = vset.pattern.permute.xlu0 0
        %950 = vperm.xlu0 %949, %v912
        %v951 = vpop.permute.xlu0 %950
        %v953 = vadd.f32 %v889, %v916
        %v954 = vadd.f32 %v890, %v916
        %v955 = vadd.f32 %v891, %v921
        %v956 = vadd.f32 %v892, %v921
        %v957 = vadd.f32 %v893, %v926
        %v958 = vadd.f32 %v894, %v926
        %v959 = vadd.f32 %v895, %v931
        %v960 = vadd.f32 %v896, %v931
        %v961 = vadd.f32 %v897, %v936
        %v962 = vadd.f32 %v898, %v936
        %v963 = vadd.f32 %v899, %v941
        %v964 = vadd.f32 %v900, %v941
        %v965 = vadd.f32 %v901, %v946
        %v966 = vadd.f32 %v902, %v946
        %v967 = vadd.f32 %v903, %v951
        %v968 = vadd.f32 %v904, %v951
        %vm969 = vcmp.gt.f32.partialorder %v953, 0.0
        %vm970 = vcmp.gt.f32.partialorder %v954, 0.0
        %vm971 = vcmp.gt.f32.partialorder %v955, 0.0
        %vm972 = vcmp.gt.f32.partialorder %v956, 0.0
        %vm973 = vcmp.gt.f32.partialorder %v957, 0.0
        %vm974 = vcmp.gt.f32.partialorder %v958, 0.0
        %vm975 = vcmp.gt.f32.partialorder %v959, 0.0
        %vm976 = vcmp.gt.f32.partialorder %v960, 0.0
        %vm977 = vcmp.gt.f32.partialorder %v961, 0.0
        %vm978 = vcmp.gt.f32.partialorder %v962, 0.0
        %vm979 = vcmp.gt.f32.partialorder %v963, 0.0
        %vm980 = vcmp.gt.f32.partialorder %v964, 0.0
        %vm981 = vcmp.gt.f32.partialorder %v965, 0.0
        %vm982 = vcmp.gt.f32.partialorder %v966, 0.0
        %vm983 = vcmp.gt.f32.partialorder %v967, 0.0
        %vm984 = vcmp.gt.f32.partialorder %v968, 0.0
        %v985 = vmul.f32 %v953, 0.1
        %v986 = vmul.f32 %v954, 0.1
        %v987 = vmul.f32 %v955, 0.1
        %v988 = vmul.f32 %v956, 0.1
        %v989 = vmul.f32 %v957, 0.1
        %v990 = vmul.f32 %v958, 0.1
        %v991 = vmul.f32 %v959, 0.1
        %v992 = vmul.f32 %v960, 0.1
        %v993 = vmul.f32 %v961, 0.1
        %v994 = vmul.f32 %v962, 0.1
        %v995 = vmul.f32 %v963, 0.1
        %v996 = vmul.f32 %v964, 0.1
        %v997 = vmul.f32 %v965, 0.1
        %v998 = vmul.f32 %v966, 0.1
        %v999 = vmul.f32 %v967, 0.1
        %v1000 = vmul.f32 %v968, 0.1
        %v1001 = vsel %vm969, %v953, %v985
        %v1002 = vsel %vm970, %v954, %v986
        %v1003 = vsel %vm971, %v955, %v987
        %v1004 = vsel %vm972, %v956, %v988
        %v1005 = vsel %vm973, %v957, %v989
        %v1006 = vsel %vm974, %v958, %v990
        %v1007 = vsel %vm975, %v959, %v991
        %v1008 = vsel %vm976, %v960, %v992
        %v1009 = vsel %vm977, %v961, %v993
        %v1010 = vsel %vm978, %v962, %v994
        %v1011 = vsel %vm979, %v963, %v995
        %v1012 = vsel %vm980, %v964, %v996
        %v1013 = vsel %vm981, %v965, %v997
        %v1014 = vsel %vm982, %v966, %v998
        %v1015 = vsel %vm983, %v967, %v999
        %v1016 = vsel %vm984, %v968, %v1000
        %v1017 = vpack.c.bf16 %v1003, %v1001
        %v1018 = vpack.c.bf16 %v1004, %v1002
        %v1019 = vpack.c.bf16 %v1007, %v1005
        %v1020 = vpack.c.bf16 %v1008, %v1006
        %v1021 = vpack.c.bf16 %v1011, %v1009
        %v1022 = vpack.c.bf16 %v1012, %v1010
        %v1023 = vpack.c.bf16 %v1015, %v1013
        %v1024 = vpack.c.bf16 %v1016, %v1014
        %1025 = vst [vmem:[#allocation2 + $0x8] sm:$0xff] %v1017
        %1026 = vst [vmem:[#allocation2 + $0x10] sm:$0xff] %v1018
        %1027 = vst [vmem:[#allocation2 + $0x28] sm:$0xff] %v1019
        %1028 = vst [vmem:[#allocation2 + $0x30] sm:$0xff] %v1020
        %1029 = vst [vmem:[#allocation2 + $0x48] sm:$0xff] %v1021
        %1030 = vst [vmem:[#allocation2 + $0x50] sm:$0xff] %v1022
        %1031 = vst [vmem:[#allocation2 + $0x68] sm:$0xff] %v1023
        %1032 = vst [vmem:[#allocation2 + $0x70] sm:$0xff] %v1024
        // Predicated region
        $region57: #{tpu_custom_call.1} parent=39 // pred_check
          %p1033 = pneg %p399
        $region58: #{tpu_custom_call.1} parent=39 // pred_check_branch
          %1035 = sbr.rel (%p1033) target = $region60
        $region59: #{tpu_custom_call.1} parent=39 // pred_region
          %vm1036 = vcmask 97280
          %1037 = vst.msk [vmem:[#allocation2 + $0x8] sm:$0xff] %vm1036, 0
          %1038 = vst.msk [vmem:[#allocation2 + $0x28] sm:$0xff] %vm1036, 0
          %1039 = vst.msk [vmem:[#allocation2 + $0x48] sm:$0xff] %vm1036, 0
          %1040 = vst.msk [vmem:[#allocation2 + $0x68] sm:$0xff] %vm1036, 0
        $region60: #{tpu_custom_call.1} parent=39 // pred_fallthru
          _
        // Predicated region
        $region61: #{tpu_custom_call.1} parent=39 // pred_check
          %p1041 = pneg %p408
        $region62: #{tpu_custom_call.1} parent=39 // pred_check_branch
          %1043 = sbr.rel (%p1041) target = $region64
        $region63: #{tpu_custom_call.1} parent=39 // pred_region
          %vm1044 = vcmask 1047648
          %1045 = vst.msk [vmem:[#allocation2 + $0x10] sm:$0xff] %vm1044, 0
          %1046 = vst.msk [vmem:[#allocation2 + $0x30] sm:$0xff] %vm1044, 0
          %1047 = vst.msk [vmem:[#allocation2 + $0x50] sm:$0xff] %vm1044, 0
          %1048 = vst.msk [vmem:[#allocation2 + $0x70] sm:$0xff] %vm1044, 0
        $region64: #{tpu_custom_call.1} parent=39 // pred_fallthru
          _
        %v1049 = vld [vmem:[#allocation2] sm:$0xff]
        %v1050 = vld [vmem:[#allocation2 + $0x8] sm:$0xff]
        %v1051 = vld [vmem:[#allocation2 + $0x10] sm:$0xff]
        %v1052 = vld [vmem:[#allocation2 + $0x20] sm:$0xff]
        %v1053 = vld [vmem:[#allocation2 + $0x28] sm:$0xff]
        %v1054 = vld [vmem:[#allocation2 + $0x30] sm:$0xff]
        %v1055 = vld [vmem:[#allocation2 + $0x40] sm:$0xff]
        %v1056 = vld [vmem:[#allocation2 + $0x48] sm:$0xff]
        %v1057 = vld [vmem:[#allocation2 + $0x50] sm:$0xff]
        %v1058 = vld [vmem:[#allocation2 + $0x60] sm:$0xff]
        %v1059 = vld [vmem:[#allocation2 + $0x68] sm:$0xff]
        %v1060 = vld [vmem:[#allocation2 + $0x70] sm:$0xff]
        %v1061 = vld [vmem:[#allocation7] sm:$0xf]
        %v1062 = vld [vmem:[#allocation7 + $0x4] sm:$0xf]
        %v1063 = vld [vmem:[#allocation7 + $0x8] sm:$0xf]
        %v1064 = vld [vmem:[#allocation7 + $0xc] sm:$0xf]
        %v1065 = vld [vmem:[#allocation7 + $0x10] sm:$0xf]
        %v1066 = vld [vmem:[#allocation7 + $0x14] sm:$0xf]
        %v1067 = vld [vmem:[#allocation7 + $0x18] sm:$0xf]
        %v1068 = vld [vmem:[#allocation7 + $0x1c] sm:$0xf]
        %s1069 = scalar_lea.vmem [#allocation7], 32
        %v1070 = vld [vmem:[%s1069] sm:$0xf]
        %v1071 = vld [vmem:[%s1069 + $0x4] sm:$0xf]
        %v1072 = vld [vmem:[%s1069 + $0x8] sm:$0xf]
        %v1073 = vld [vmem:[%s1069 + $0xc] sm:$0xf]
        %v1074 = vld [vmem:[%s1069 + $0x10] sm:$0xf]
        %v1075 = vld [vmem:[%s1069 + $0x14] sm:$0xf]
        %v1076 = vld [vmem:[%s1069 + $0x18] sm:$0xf]
        %v1077 = vld [vmem:[%s1069 + $0x1c] sm:$0xf]
        %v1086 = vunpack.c.l.b16 %v1070
        %v1087 = vunpack.c.l.b16 %v1071
        %v1088 = vunpack.c.l.b16 %v1072
        %v1089 = vunpack.c.l.b16 %v1073
        %v1090 = vunpack.c.l.b16 %v1074
        %v1091 = vunpack.c.l.b16 %v1075
        %v1092 = vunpack.c.l.b16 %v1076
        %v1093 = vunpack.c.l.b16 %v1077
        %v1094 = vpack.c.b16 %v1087, %v1086
        %v1095 = vpack.c.b16 %v1089, %v1088
        %v1096 = vpack.c.b16 %v1091, %v1090
        %v1097 = vpack.c.b16 %v1093, %v1092
        %v1099 = vsel %vm466, %v1094, 0
        %v1102 = vsel %vm466, %v1095, 0
        %v1105 = vsel %vm466, %v1096, 0
        %v1108 = vsel %vm466, %v1097, 0
        %1110 = vmatprep.subr.bf16.mxu0 %v1051
        %1111 = vmatpush1.bf16.msra.mxu0 %v1050
        %1112 = vmatprep.subr.bf16.mxu0 %v1054
        %1113 = vmatpush1.bf16.msra.mxu0 %v1053
        %1114 = vmatprep.subr.bf16.mxu0 %v1057
        %1115 = vmatpush1.bf16.msra.mxu0 %v1056
        %1116 = vmatprep.subr.bf16.mxu0 %v1060
        %1117 = vmatpush1.bf16.msra.mxu0 %v1059
        %1118 = vmatprep.subr.bf16.mxu0 0
        %1119 = vmatpush1.bf16.msra.mxu0 0
        %1120 = vmatprep.subr.bf16.mxu0 0
        %1121 = vmatpush1.bf16.msra.mxu0 0
        %1122 = vmatprep.subr.bf16.mxu0 0
        %1123 = vmatpush1.bf16.msra.mxu0 0
        %1124 = vmatprep.subr.bf16.mxu0 0
        %1125 = vmatpush1.bf16.msra.mxu0 0
        %1126 = vmatprep.subr.bf16.mxu0 0
        %1127 = vmatpush1.bf16.msra.mxu0 0
        %1128 = vmatprep.subr.bf16.mxu0 0
        %1129 = vmatpush1.bf16.msra.mxu0 0
        %1130 = vmatprep.subr.bf16.mxu0 0
        %1131 = vmatpush1.bf16.msra.mxu0 0
        %1132 = vmatprep.subr.bf16.mxu0 0
        %1133 = vmatpush1.bf16.msra.mxu0 0
        %1134 = vmatprep.subr.bf16.mxu0 0
        %1135 = vmatpush1.bf16.msra.mxu0 0
        %1136 = vmatprep.subr.bf16.mxu0 0
        %1137 = vmatpush1.bf16.msra.mxu0 0
        %1138 = vmatprep.subr.bf16.mxu0 0
        %1139 = vmatpush1.bf16.msra.mxu0 0
        %1140 = vmatprep.subr.bf16.mxu0 0
        %1141 = vmatpush1.bf16.msra.mxu0 0
        %1142 = vmatprep.mubr.bf16.mxu0 0
        %1143 = vmatmul.mubr.bf16.gmra.mrb[0].mxu0 %v1099
        %v1144 = vpop.f32.mrb[0].mxu0
        %v1145 = vadd.f32 0.0, %v1144
        %v1146 = vpop.f32.mrb[0].mxu0
        %v1147 = vadd.f32 0.0, %v1146
        %v1148 = vpop.f32.mrb[0].mxu0
        %v1149 = vadd.f32 0.0, %v1148
        %v1150 = vpop.f32.mrb[0].mxu0
        %v1151 = vadd.f32 0.0, %v1150
        %1152 = vmatprep.mubr.bf16.mxu0 0
        %1153 = vmatmul.mubr.bf16.gmra.mrb[0].mxu0 %v1102
        %v1154 = vpop.f32.mrb[0].mxu0
        %v1155 = vadd.f32 0.0, %v1154
        %v1156 = vpop.f32.mrb[0].mxu0
        %v1157 = vadd.f32 0.0, %v1156
        %v1158 = vpop.f32.mrb[0].mxu0
        %v1159 = vadd.f32 0.0, %v1158
        %v1160 = vpop.f32.mrb[0].mxu0
        %v1161 = vadd.f32 0.0, %v1160
        %1162 = vmatprep.mubr.bf16.mxu0 0
        %1163 = vmatmul.mubr.bf16.gmra.mrb[0].mxu0 %v1105
        %v1164 = vpop.f32.mrb[0].mxu0
        %v1165 = vadd.f32 0.0, %v1164
        %v1166 = vpop.f32.mrb[0].mxu0
        %v1167 = vadd.f32 0.0, %v1166
        %v1168 = vpop.f32.mrb[0].mxu0
        %v1169 = vadd.f32 0.0, %v1168
        %v1170 = vpop.f32.mrb[0].mxu0
        %v1171 = vadd.f32 0.0, %v1170
        %1172 = vmatprep.mubr.bf16.mxu0 0
        %1173 = vmatmul.mubr.bf16.gmra.mrb[0].mxu0 %v1108
        %v1174 = vpop.f32.mrb[0].mxu0
        %v1175 = vadd.f32 0.0, %v1174
        %v1176 = vpop.f32.mrb[0].mxu0
        %v1177 = vadd.f32 0.0, %v1176
        %v1178 = vpop.f32.mrb[0].mxu0
        %v1179 = vadd.f32 0.0, %v1178
        %v1180 = vpop.f32.mrb[0].mxu0
        %v1181 = vadd.f32 0.0, %v1180
        %1182 = vdwg.mxu0
        %v1191 = vunpack.c.l.b16 %v1061
        %v1192 = vunpack.c.l.b16 %v1062
        %v1193 = vunpack.c.l.b16 %v1063
        %v1194 = vunpack.c.l.b16 %v1064
        %v1195 = vunpack.c.l.b16 %v1065
        %v1196 = vunpack.c.l.b16 %v1066
        %v1197 = vunpack.c.l.b16 %v1067
        %v1198 = vunpack.c.l.b16 %v1068
        %v1199 = vpack.c.b16 %v1192, %v1191
        %v1200 = vpack.c.b16 %v1194, %v1193
        %v1201 = vpack.c.b16 %v1196, %v1195
        %v1202 = vpack.c.b16 %v1198, %v1197
        %1215 = vrot.lane.b32.xlu0 %v1049, 1
        %v1216 = vpop.permute.xlu0 %1215
        %1217 = vrot.lane.b32.xlu0 %v1050, 1
        %v1218 = vpop.permute.xlu0 %1217
        %1219 = vrot.lane.b32.xlu0 %v1051, 1
        %v1220 = vpop.permute.xlu0 %1219
        %1221 = vrot.lane.b32.xlu0 %v1052, 1
        %v1222 = vpop.permute.xlu0 %1221
        %1223 = vrot.lane.b32.xlu0 %v1053, 1
        %v1224 = vpop.permute.xlu0 %1223
        %1225 = vrot.lane.b32.xlu0 %v1054, 1
        %v1226 = vpop.permute.xlu0 %1225
        %1227 = vrot.lane.b32.xlu0 %v1055, 1
        %v1228 = vpop.permute.xlu0 %1227
        %1229 = vrot.lane.b32.xlu0 %v1056, 1
        %v1230 = vpop.permute.xlu0 %1229
        %1231 = vrot.lane.b32.xlu0 %v1057, 1
        %v1232 = vpop.permute.xlu0 %1231
        %1233 = vrot.lane.b32.xlu0 %v1058, 1
        %v1234 = vpop.permute.xlu0 %1233
        %1235 = vrot.lane.b32.xlu0 %v1059, 1
        %v1236 = vpop.permute.xlu0 %1235
        %1237 = vrot.lane.b32.xlu0 %v1060, 1
        %v1238 = vpop.permute.xlu0 %1237
        %v1239 = vsel %vm608, %v1216, %v1218
        %v1240 = vsel %vm608, %v1218, %v1220
        %v1241 = vsel %vm608, %v1222, %v1224
        %v1242 = vsel %vm608, %v1224, %v1226
        %v1243 = vsel %vm608, %v1228, %v1230
        %v1244 = vsel %vm608, %v1230, %v1232
        %v1245 = vsel %vm608, %v1234, %v1236
        %v1246 = vsel %vm608, %v1236, %v1238
        %v1256 = vsel %vm466, %v1199, 0
        %v1259 = vsel %vm466, %v1200, 0
        %v1262 = vsel %vm466, %v1201, 0
        %v1265 = vsel %vm466, %v1202, 0
        %1267 = vmatprep.subr.bf16.mxu0 %v1240
        %1268 = vmatpush1.bf16.msra.mxu0 %v1239
        %1269 = vmatprep.subr.bf16.mxu0 %v1242
        %1270 = vmatpush1.bf16.msra.mxu0 %v1241
        %1271 = vmatprep.subr.bf16.mxu0 %v1244
        %1272 = vmatpush1.bf16.msra.mxu0 %v1243
        %1273 = vmatprep.subr.bf16.mxu0 %v1246
        %1274 = vmatpush1.bf16.msra.mxu0 %v1245
        %1275 = vmatprep.subr.bf16.mxu0 0
        %1276 = vmatpush1.bf16.msra.mxu0 0
        %1277 = vmatprep.subr.bf16.mxu0 0
        %1278 = vmatpush1.bf16.msra.mxu0 0
        %1279 = vmatprep.subr.bf16.mxu0 0
        %1280 = vmatpush1.bf16.msra.mxu0 0
        %1281 = vmatprep.subr.bf16.mxu0 0
        %1282 = vmatpush1.bf16.msra.mxu0 0
        %1283 = vmatprep.subr.bf16.mxu0 0
        %1284 = vmatpush1.bf16.msra.mxu0 0
        %1285 = vmatprep.subr.bf16.mxu0 0
        %1286 = vmatpush1.bf16.msra.mxu0 0
        %1287 = vmatprep.subr.bf16.mxu0 0
        %1288 = vmatpush1.bf16.msra.mxu0 0
        %1289 = vmatprep.subr.bf16.mxu0 0
        %1290 = vmatpush1.bf16.msra.mxu0 0
        %1291 = vmatprep.subr.bf16.mxu0 0
        %1292 = vmatpush1.bf16.msra.mxu0 0
        %1293 = vmatprep.subr.bf16.mxu0 0
        %1294 = vmatpush1.bf16.msra.mxu0 0
        %1295 = vmatprep.subr.bf16.mxu0 0
        %1296 = vmatpush1.bf16.msra.mxu0 0
        %1297 = vmatprep.subr.bf16.mxu0 0
        %1298 = vmatpush1.bf16.msra.mxu0 0
        %1299 = vmatprep.mubr.bf16.mxu0 0
        %1300 = vmatmul.mubr.bf16.gmra.mrb[0].mxu0 %v1256
        %v1301 = vpop.f32.mrb[0].mxu0
        %v1302 = vadd.f32 %v1145, %v1301
        %v1303 = vpop.f32.mrb[0].mxu0
        %v1304 = vadd.f32 %v1147, %v1303
        %v1305 = vpop.f32.mrb[0].mxu0
        %v1306 = vadd.f32 %v1149, %v1305
        %v1307 = vpop.f32.mrb[0].mxu0
        %v1308 = vadd.f32 %v1151, %v1307
        %1309 = vmatprep.mubr.bf16.mxu0 0
        %1310 = vmatmul.mubr.bf16.gmra.mrb[0].mxu0 %v1259
        %v1311 = vpop.f32.mrb[0].mxu0
        %v1312 = vadd.f32 %v1155, %v1311
        %v1313 = vpop.f32.mrb[0].mxu0
        %v1314 = vadd.f32 %v1157, %v1313
        %v1315 = vpop.f32.mrb[0].mxu0
        %v1316 = vadd.f32 %v1159, %v1315
        %v1317 = vpop.f32.mrb[0].mxu0
        %v1318 = vadd.f32 %v1161, %v1317
        %1319 = vmatprep.mubr.bf16.mxu0 0
        %1320 = vmatmul.mubr.bf16.gmra.mrb[0].mxu0 %v1262
        %v1321 = vpop.f32.mrb[0].mxu0
        %v1322 = vadd.f32 %v1165, %v1321
        %v1323 = vpop.f32.mrb[0].mxu0
        %v1324 = vadd.f32 %v1167, %v1323
        %v1325 = vpop.f32.mrb[0].mxu0
        %v1326 = vadd.f32 %v1169, %v1325
        %v1327 = vpop.f32.mrb[0].mxu0
        %v1328 = vadd.f32 %v1171, %v1327
        %1329 = vmatprep.mubr.bf16.mxu0 0
        %1330 = vmatmul.mubr.bf16.gmra.mrb[0].mxu0 %v1265
        %v1331 = vpop.f32.mrb[0].mxu0
        %v1332 = vadd.f32 %v1175, %v1331
        %v1333 = vpop.f32.mrb[0].mxu0
        %v1334 = vadd.f32 %v1177, %v1333
        %v1335 = vpop.f32.mrb[0].mxu0
        %v1336 = vadd.f32 %v1179, %v1335
        %v1337 = vpop.f32.mrb[0].mxu0
        %v1338 = vadd.f32 %v1181, %v1337
        %1339 = vdwg.mxu0
        %v1340 = vld [vmem:[#allocation2 + $0x8] sm:$0xff]
        %v1341 = vld [vmem:[#allocation2 + $0x10] sm:$0xff]
        %v1342 = vld [vmem:[#allocation2 + $0x18] sm:$0xff]
        %v1343 = vld [vmem:[#allocation2 + $0x28] sm:$0xff]
        %v1344 = vld [vmem:[#allocation2 + $0x30] sm:$0xff]
        %v1345 = vld [vmem:[#allocation2 + $0x38] sm:$0xff]
        %v1346 = vld [vmem:[#allocation2 + $0x48] sm:$0xff]
        %v1347 = vld [vmem:[#allocation2 + $0x50] sm:$0xff]
        %v1348 = vld [vmem:[#allocation2 + $0x58] sm:$0xff]
        %v1349 = vld [vmem:[#allocation2 + $0x68] sm:$0xff]
        %v1350 = vld [vmem:[#allocation2 + $0x70] sm:$0xff]
        %v1351 = vld [vmem:[#allocation2 + $0x78] sm:$0xff]
        %s1352 = scalar_lea.vmem [#allocation7], 64
        %v1353 = vld [vmem:[%s1352] sm:$0xf]
        %v1354 = vld [vmem:[%s1352 + $0x4] sm:$0xf]
        %v1355 = vld [vmem:[%s1352 + $0x8] sm:$0xf]
        %v1356 = vld [vmem:[%s1352 + $0xc] sm:$0xf]
        %v1357 = vld [vmem:[%s1352 + $0x10] sm:$0xf]
        %v1358 = vld [vmem:[%s1352 + $0x14] sm:$0xf]
        %v1359 = vld [vmem:[%s1352 + $0x18] sm:$0xf]
        %v1360 = vld [vmem:[%s1352 + $0x1c] sm:$0xf]
        %v1369 = vunpack.c.l.b16 %v1353
        %v1370 = vunpack.c.l.b16 %v1354
        %v1371 = vunpack.c.l.b16 %v1355
        %v1372 = vunpack.c.l.b16 %v1356
        %v1373 = vunpack.c.l.b16 %v1357
        %v1374 = vunpack.c.l.b16 %v1358
        %v1375 = vunpack.c.l.b16 %v1359
        %v1376 = vunpack.c.l.b16 %v1360
        %v1377 = vpack.c.b16 %v1370, %v1369
        %v1378 = vpack.c.b16 %v1372, %v1371
        %v1379 = vpack.c.b16 %v1374, %v1373
        %v1380 = vpack.c.b16 %v1376, %v1375
        %1393 = vrot.lane.b32.xlu0 %v1340, 127
        %v1394 = vpop.permute.xlu0 %1393
        %1395 = vrot.lane.b32.xlu0 %v1341, 127
        %v1396 = vpop.permute.xlu0 %1395
        %1397 = vrot.lane.b32.xlu0 %v1342, 127
        %v1398 = vpop.permute.xlu0 %1397
        %1399 = vrot.lane.b32.xlu0 %v1343, 127
        %v1400 = vpop.permute.xlu0 %1399
        %1401 = vrot.lane.b32.xlu0 %v1344, 127
        %v1402 = vpop.permute.xlu0 %1401
        %1403 = vrot.lane.b32.xlu0 %v1345, 127
        %v1404 = vpop.permute.xlu0 %1403
        %1405 = vrot.lane.b32.xlu0 %v1346, 127
        %v1406 = vpop.permute.xlu0 %1405
        %1407 = vrot.lane.b32.xlu0 %v1347, 127
        %v1408 = vpop.permute.xlu0 %1407
        %1409 = vrot.lane.b32.xlu0 %v1348, 127
        %v1410 = vpop.permute.xlu0 %1409
        %1411 = vrot.lane.b32.xlu0 %v1349, 127
        %v1412 = vpop.permute.xlu0 %1411
        %1413 = vrot.lane.b32.xlu0 %v1350, 127
        %v1414 = vpop.permute.xlu0 %1413
        %1415 = vrot.lane.b32.xlu0 %v1351, 127
        %v1416 = vpop.permute.xlu0 %1415
        %v1417 = vsel %vm787, %v1394, %v1396
        %v1418 = vsel %vm787, %v1396, %v1398
        %v1419 = vsel %vm787, %v1400, %v1402
        %v1420 = vsel %vm787, %v1402, %v1404
        %v1421 = vsel %vm787, %v1406, %v1408
        %v1422 = vsel %vm787, %v1408, %v1410
        %v1423 = vsel %vm787, %v1412, %v1414
        %v1424 = vsel %vm787, %v1414, %v1416
        %v1434 = vsel %vm466, %v1377, 0
        %v1437 = vsel %vm466, %v1378, 0
        %v1440 = vsel %vm466, %v1379, 0
        %v1443 = vsel %vm466, %v1380, 0
        %1445 = vmatprep.subr.bf16.mxu0 %v1418
        %1446 = vmatpush1.bf16.msra.mxu0 %v1417
        %1447 = vmatprep.subr.bf16.mxu0 %v1420
        %1448 = vmatpush1.bf16.msra.mxu0 %v1419
        %1449 = vmatprep.subr.bf16.mxu0 %v1422
        %1450 = vmatpush1.bf16.msra.mxu0 %v1421
        %1451 = vmatprep.subr.bf16.mxu0 %v1424
        %1452 = vmatpush1.bf16.msra.mxu0 %v1423
        %1453 = vmatprep.subr.bf16.mxu0 0
        %1454 = vmatpush1.bf16.msra.mxu0 0
        %1455 = vmatprep.subr.bf16.mxu0 0
        %1456 = vmatpush1.bf16.msra.mxu0 0
        %1457 = vmatprep.subr.bf16.mxu0 0
        %1458 = vmatpush1.bf16.msra.mxu0 0
        %1459 = vmatprep.subr.bf16.mxu0 0
        %1460 = vmatpush1.bf16.msra.mxu0 0
        %1461 = vmatprep.subr.bf16.mxu0 0
        %1462 = vmatpush1.bf16.msra.mxu0 0
        %1463 = vmatprep.subr.bf16.mxu0 0
        %1464 = vmatpush1.bf16.msra.mxu0 0
        %1465 = vmatprep.subr.bf16.mxu0 0
        %1466 = vmatpush1.bf16.msra.mxu0 0
        %1467 = vmatprep.subr.bf16.mxu0 0
        %1468 = vmatpush1.bf16.msra.mxu0 0
        %1469 = vmatprep.subr.bf16.mxu0 0
        %1470 = vmatpush1.bf16.msra.mxu0 0
        %1471 = vmatprep.subr.bf16.mxu0 0
        %1472 = vmatpush1.bf16.msra.mxu0 0
        %1473 = vmatprep.subr.bf16.mxu0 0
        %1474 = vmatpush1.bf16.msra.mxu0 0
        %1475 = vmatprep.subr.bf16.mxu0 0
        %1476 = vmatpush1.bf16.msra.mxu0 0
        %1477 = vmatprep.mubr.bf16.mxu0 0
        %1478 = vmatmul.mubr.bf16.gmra.mrb[0].mxu0 %v1434
        %v1479 = vpop.f32.mrb[0].mxu0
        %v1480 = vadd.f32 0.0, %v1479
        %v1481 = vpop.f32.mrb[0].mxu0
        %v1482 = vadd.f32 0.0, %v1481
        %v1483 = vpop.f32.mrb[0].mxu0
        %v1484 = vadd.f32 0.0, %v1483
        %v1485 = vpop.f32.mrb[0].mxu0
        %v1486 = vadd.f32 0.0, %v1485
        %1487 = vmatprep.mubr.bf16.mxu0 0
        %1488 = vmatmul.mubr.bf16.gmra.mrb[0].mxu0 %v1437
        %v1489 = vpop.f32.mrb[0].mxu0
        %v1490 = vadd.f32 0.0, %v1489
        %v1491 = vpop.f32.mrb[0].mxu0
        %v1492 = vadd.f32 0.0, %v1491
        %v1493 = vpop.f32.mrb[0].mxu0
        %v1494 = vadd.f32 0.0, %v1493
        %v1495 = vpop.f32.mrb[0].mxu0
        %v1496 = vadd.f32 0.0, %v1495
        %1497 = vmatprep.mubr.bf16.mxu0 0
        %1498 = vmatmul.mubr.bf16.gmra.mrb[0].mxu0 %v1440
        %v1499 = vpop.f32.mrb[0].mxu0
        %v1500 = vadd.f32 0.0, %v1499
        %v1501 = vpop.f32.mrb[0].mxu0
        %v1502 = vadd.f32 0.0, %v1501
        %v1503 = vpop.f32.mrb[0].mxu0
        %v1504 = vadd.f32 0.0, %v1503
        %v1505 = vpop.f32.mrb[0].mxu0
        %v1506 = vadd.f32 0.0, %v1505
        %1507 = vmatprep.mubr.bf16.mxu0 0
        %1508 = vmatmul.mubr.bf16.gmra.mrb[0].mxu0 %v1443
        %v1509 = vpop.f32.mrb[0].mxu0
        %v1510 = vadd.f32 0.0, %v1509
        %v1511 = vpop.f32.mrb[0].mxu0
        %v1512 = vadd.f32 0.0, %v1511
        %v1513 = vpop.f32.mrb[0].mxu0
        %v1514 = vadd.f32 0.0, %v1513
        %v1515 = vpop.f32.mrb[0].mxu0
        %v1516 = vadd.f32 0.0, %v1515
        %1517 = vdwg.mxu0
        %v1518 = vadd.f32 %v1302, %v1480
        %v1519 = vadd.f32 %v1304, %v1482
        %v1520 = vadd.f32 %v1306, %v1484
        %v1521 = vadd.f32 %v1308, %v1486
        %v1522 = vadd.f32 %v1312, %v1490
        %v1523 = vadd.f32 %v1314, %v1492
        %v1524 = vadd.f32 %v1316, %v1494
        %v1525 = vadd.f32 %v1318, %v1496
        %v1526 = vadd.f32 %v1322, %v1500
        %v1527 = vadd.f32 %v1324, %v1502
        %v1528 = vadd.f32 %v1326, %v1504
        %v1529 = vadd.f32 %v1328, %v1506
        %v1530 = vadd.f32 %v1332, %v1510
        %v1531 = vadd.f32 %v1334, %v1512
        %v1532 = vadd.f32 %v1336, %v1514
        %v1533 = vadd.f32 %v1338, %v1516
        %v1534 = vld [vmem:[%s4] sm:$0xff]
        %v1535 = vld [vmem:[%s4 + $0x8] sm:$0xff]
        %v1536 = vld [vmem:[%s4 + $0x10] sm:$0xff]
        %v1537 = vld [vmem:[%s4 + $0x18] sm:$0xff]
        %v1538 = vld [vmem:[%s4 + $0x20] sm:$0xff]
        %v1539 = vld [vmem:[%s4 + $0x28] sm:$0xff]
        %v1540 = vld [vmem:[%s4 + $0x30] sm:$0xff]
        %v1541 = vld [vmem:[%s4 + $0x38] sm:$0xff]
        %1543 = vset.pattern.permute.xlu0 0
        %1544 = vperm.xlu0 %1543, %v1534
        %v1545 = vpop.permute.xlu0 %1544
        %1548 = vset.pattern.permute.xlu0 0
        %1549 = vperm.xlu0 %1548, %v1535
        %v1550 = vpop.permute.xlu0 %1549
        %1553 = vset.pattern.permute.xlu0 0
        %1554 = vperm.xlu0 %1553, %v1536
        %v1555 = vpop.permute.xlu0 %1554
        %1558 = vset.pattern.permute.xlu0 0
        %1559 = vperm.xlu0 %1558, %v1537
        %v1560 = vpop.permute.xlu0 %1559
        %1563 = vset.pattern.permute.xlu0 0
        %1564 = vperm.xlu0 %1563, %v1538
        %v1565 = vpop.permute.xlu0 %1564
        %1568 = vset.pattern.permute.xlu0 0
        %1569 = vperm.xlu0 %1568, %v1539
        %v1570 = vpop.permute.xlu0 %1569
        %1573 = vset.pattern.permute.xlu0 0
        %1574 = vperm.xlu0 %1573, %v1540
        %v1575 = vpop.permute.xlu0 %1574
        %1578 = vset.pattern.permute.xlu0 0
        %1579 = vperm.xlu0 %1578, %v1541
        %v1580 = vpop.permute.xlu0 %1579
        %v1582 = vadd.f32 %v1518, %v1545
        %v1583 = vadd.f32 %v1519, %v1545
        %v1584 = vadd.f32 %v1520, %v1550
        %v1585 = vadd.f32 %v1521, %v1550
        %v1586 = vadd.f32 %v1522, %v1555
        %v1587 = vadd.f32 %v1523, %v1555
        %v1588 = vadd.f32 %v1524, %v1560
        %v1589 = vadd.f32 %v1525, %v1560
        %v1590 = vadd.f32 %v1526, %v1565
        %v1591 = vadd.f32 %v1527, %v1565
        %v1592 = vadd.f32 %v1528, %v1570
        %v1593 = vadd.f32 %v1529, %v1570
        %v1594 = vadd.f32 %v1530, %v1575
        %v1595 = vadd.f32 %v1531, %v1575
        %v1596 = vadd.f32 %v1532, %v1580
        %v1597 = vadd.f32 %v1533, %v1580
        %v1598 = vld [vmem:[#allocation3] sm:$0xff]
        %v1599 = vld [vmem:[#allocation3 + $0x8] sm:$0xff]
        %v1600 = vld [vmem:[#allocation3 + $0x10] sm:$0xff]
        %v1601 = vld [vmem:[#allocation3 + $0x18] sm:$0xff]
        %v1602 = vld [vmem:[#allocation3 + $0x20] sm:$0xff]
        %v1603 = vld [vmem:[#allocation3 + $0x28] sm:$0xff]
        %v1604 = vld [vmem:[#allocation3 + $0x30] sm:$0xff]
        %v1605 = vld [vmem:[#allocation3 + $0x38] sm:$0xff]
        %v1606 = vld [vmem:[#allocation3 + $0x40] sm:$0xff]
        %v1607 = vld [vmem:[#allocation3 + $0x48] sm:$0xff]
        %v1608 = vld [vmem:[#allocation3 + $0x50] sm:$0xff]
        %v1609 = vld [vmem:[#allocation3 + $0x58] sm:$0xff]
        %v1610 = vld [vmem:[#allocation3 + $0x60] sm:$0xff]
        %v1611 = vld [vmem:[#allocation3 + $0x68] sm:$0xff]
        %v1612 = vld [vmem:[#allocation3 + $0x70] sm:$0xff]
        %v1613 = vld [vmem:[#allocation3 + $0x78] sm:$0xff]
        %v1614 = vadd.f32 %v1582, %v1598
        %v1615 = vadd.f32 %v1583, %v1599
        %v1616 = vadd.f32 %v1584, %v1600
        %v1617 = vadd.f32 %v1585, %v1601
        %v1618 = vadd.f32 %v1586, %v1602
        %v1619 = vadd.f32 %v1587, %v1603
        %v1620 = vadd.f32 %v1588, %v1604
        %v1621 = vadd.f32 %v1589, %v1605
        %v1622 = vadd.f32 %v1590, %v1606
        %v1623 = vadd.f32 %v1591, %v1607
        %v1624 = vadd.f32 %v1592, %v1608
        %v1625 = vadd.f32 %v1593, %v1609
        %v1626 = vadd.f32 %v1594, %v1610
        %v1627 = vadd.f32 %v1595, %v1611
        %v1628 = vadd.f32 %v1596, %v1612
        %v1629 = vadd.f32 %v1597, %v1613
        %1630 = vst [vmem:[#allocation3] sm:$0xff] %v1614
        %1631 = vst [vmem:[#allocation3 + $0x8] sm:$0xff] %v1615
        %1632 = vst [vmem:[#allocation3 + $0x10] sm:$0xff] %v1616
        %1633 = vst [vmem:[#allocation3 + $0x18] sm:$0xff] %v1617
        %1634 = vst [vmem:[#allocation3 + $0x20] sm:$0xff] %v1618
        %1635 = vst [vmem:[#allocation3 + $0x28] sm:$0xff] %v1619
        %1636 = vst [vmem:[#allocation3 + $0x30] sm:$0xff] %v1620
        %1637 = vst [vmem:[#allocation3 + $0x38] sm:$0xff] %v1621
        %1638 = vst [vmem:[#allocation3 + $0x40] sm:$0xff] %v1622
        %1639 = vst [vmem:[#allocation3 + $0x48] sm:$0xff] %v1623
        %1640 = vst [vmem:[#allocation3 + $0x50] sm:$0xff] %v1624
        %1641 = vst [vmem:[#allocation3 + $0x58] sm:$0xff] %v1625
        %1642 = vst [vmem:[#allocation3 + $0x60] sm:$0xff] %v1626
        %1643 = vst [vmem:[#allocation3 + $0x68] sm:$0xff] %v1627
        %1644 = vst [vmem:[#allocation3 + $0x70] sm:$0xff] %v1628
        %1645 = vst [vmem:[#allocation3 + $0x78] sm:$0xff] %v1629
        %v1646 = vld [vmem:[#allocation3] sm:$0xff]
        %v1647 = vld [vmem:[#allocation3 + $0x8] sm:$0xff]
        %v1648 = vld [vmem:[#allocation3 + $0x10] sm:$0xff]
        %v1649 = vld [vmem:[#allocation3 + $0x18] sm:$0xff]
        %v1650 = vld [vmem:[#allocation3 + $0x20] sm:$0xff]
        %v1651 = vld [vmem:[#allocation3 + $0x28] sm:$0xff]
        %v1652 = vld [vmem:[#allocation3 + $0x30] sm:$0xff]
        %v1653 = vld [vmem:[#allocation3 + $0x38] sm:$0xff]
        %v1654 = vld [vmem:[#allocation3 + $0x40] sm:$0xff]
        %v1655 = vld [vmem:[#allocation3 + $0x48] sm:$0xff]
        %v1656 = vld [vmem:[#allocation3 + $0x50] sm:$0xff]
        %v1657 = vld [vmem:[#allocation3 + $0x58] sm:$0xff]
        %v1658 = vld [vmem:[#allocation3 + $0x60] sm:$0xff]
        %v1659 = vld [vmem:[#allocation3 + $0x68] sm:$0xff]
        %v1660 = vld [vmem:[#allocation3 + $0x70] sm:$0xff]
        %v1661 = vld [vmem:[#allocation3 + $0x78] sm:$0xff]
        %vm1662 = vcmp.gt.f32.partialorder %v1646, 0.0
        %vm1663 = vcmp.gt.f32.partialorder %v1647, 0.0
        %vm1664 = vcmp.gt.f32.partialorder %v1648, 0.0
        %vm1665 = vcmp.gt.f32.partialorder %v1649, 0.0
        %vm1666 = vcmp.gt.f32.partialorder %v1650, 0.0
        %vm1667 = vcmp.gt.f32.partialorder %v1651, 0.0
        %vm1668 = vcmp.gt.f32.partialorder %v1652, 0.0
        %vm1669 = vcmp.gt.f32.partialorder %v1653, 0.0
        %vm1670 = vcmp.gt.f32.partialorder %v1654, 0.0
        %vm1671 = vcmp.gt.f32.partialorder %v1655, 0.0
        %vm1672 = vcmp.gt.f32.partialorder %v1656, 0.0
        %vm1673 = vcmp.gt.f32.partialorder %v1657, 0.0
        %vm1674 = vcmp.gt.f32.partialorder %v1658, 0.0
        %vm1675 = vcmp.gt.f32.partialorder %v1659, 0.0
        %vm1676 = vcmp.gt.f32.partialorder %v1660, 0.0
        %vm1677 = vcmp.gt.f32.partialorder %v1661, 0.0
        %v1678 = vmul.f32 %v1646, 0.1
        %v1679 = vmul.f32 %v1647, 0.1
        %v1680 = vmul.f32 %v1648, 0.1
        %v1681 = vmul.f32 %v1649, 0.1
        %v1682 = vmul.f32 %v1650, 0.1
        %v1683 = vmul.f32 %v1651, 0.1
        %v1684 = vmul.f32 %v1652, 0.1
        %v1685 = vmul.f32 %v1653, 0.1
        %v1686 = vmul.f32 %v1654, 0.1
        %v1687 = vmul.f32 %v1655, 0.1
        %v1688 = vmul.f32 %v1656, 0.1
        %v1689 = vmul.f32 %v1657, 0.1
        %v1690 = vmul.f32 %v1658, 0.1
        %v1691 = vmul.f32 %v1659, 0.1
        %v1692 = vmul.f32 %v1660, 0.1
        %v1693 = vmul.f32 %v1661, 0.1
        %v1694 = vsel %vm1662, %v1646, %v1678
        %v1695 = vsel %vm1663, %v1647, %v1679
        %v1696 = vsel %vm1664, %v1648, %v1680
        %v1697 = vsel %vm1665, %v1649, %v1681
        %v1698 = vsel %vm1666, %v1650, %v1682
        %v1699 = vsel %vm1667, %v1651, %v1683
        %v1700 = vsel %vm1668, %v1652, %v1684
        %v1701 = vsel %vm1669, %v1653, %v1685
        %v1702 = vsel %vm1670, %v1654, %v1686
        %v1703 = vsel %vm1671, %v1655, %v1687
        %v1704 = vsel %vm1672, %v1656, %v1688
        %v1705 = vsel %vm1673, %v1657, %v1689
        %v1706 = vsel %vm1674, %v1658, %v1690
        %v1707 = vsel %vm1675, %v1659, %v1691
        %v1708 = vsel %vm1676, %v1660, %v1692
        %v1709 = vsel %vm1677, %v1661, %v1693
        %v1710 = vpack.c.bf16 %v1696, %v1694
        %v1711 = vpack.c.bf16 %v1697, %v1695
        %v1712 = vpack.c.bf16 %v1700, %v1698
        %v1713 = vpack.c.bf16 %v1701, %v1699
        %v1714 = vpack.c.bf16 %v1704, %v1702
        %v1715 = vpack.c.bf16 %v1705, %v1703
        %v1716 = vpack.c.bf16 %v1708, %v1706
        %v1717 = vpack.c.bf16 %v1709, %v1707
        %1718 = vst [vmem:[#allocation2 + $0x8] sm:$0xff] %v1710
        %1719 = vst [vmem:[#allocation2 + $0x10] sm:$0xff] %v1711
        %1720 = vst [vmem:[#allocation2 + $0x28] sm:$0xff] %v1712
        %1721 = vst [vmem:[#allocation2 + $0x30] sm:$0xff] %v1713
        %1722 = vst [vmem:[#allocation2 + $0x48] sm:$0xff] %v1714
        %1723 = vst [vmem:[#allocation2 + $0x50] sm:$0xff] %v1715
        %1724 = vst [vmem:[#allocation2 + $0x68] sm:$0xff] %v1716
        %1725 = vst [vmem:[#allocation2 + $0x70] sm:$0xff] %v1717
        // Predicated region
        $region65: #{tpu_custom_call.1} parent=39 // pred_check
          %p1726 = pneg %p399
        $region66: #{tpu_custom_call.1} parent=39 // pred_check_branch
          %1728 = sbr.rel (%p1726) target = $region68
        $region67: #{tpu_custom_call.1} parent=39 // pred_region
          %vm1729 = vcmask 97280
          %1730 = vst.msk [vmem:[#allocation2 + $0x8] sm:$0xff] %vm1729, 0
          %1731 = vst.msk [vmem:[#allocation2 + $0x28] sm:$0xff] %vm1729, 0
          %1732 = vst.msk [vmem:[#allocation2 + $0x48] sm:$0xff] %vm1729, 0
          %1733 = vst.msk [vmem:[#allocation2 + $0x68] sm:$0xff] %vm1729, 0
        $region68: #{tpu_custom_call.1} parent=39 // pred_fallthru
          _
        // Predicated region
        $region69: #{tpu_custom_call.1} parent=39 // pred_check
          %p1734 = pneg %p408
        $region70: #{tpu_custom_call.1} parent=39 // pred_check_branch
          %1736 = sbr.rel (%p1734) target = $region72
        $region71: #{tpu_custom_call.1} parent=39 // pred_region
          %vm1737 = vcmask 1047648
          %1738 = vst.msk [vmem:[#allocation2 + $0x10] sm:$0xff] %vm1737, 0
          %1739 = vst.msk [vmem:[#allocation2 + $0x30] sm:$0xff] %vm1737, 0
          %1740 = vst.msk [vmem:[#allocation2 + $0x50] sm:$0xff] %vm1737, 0
          %1741 = vst.msk [vmem:[#allocation2 + $0x70] sm:$0xff] %vm1737, 0
        $region72: #{tpu_custom_call.1} parent=39 // pred_fallthru
          _
        %v1742 = vld [vmem:[#allocation2] sm:$0xff]
        %v1743 = vld [vmem:[#allocation2 + $0x8] sm:$0xff]
        %v1744 = vld [vmem:[#allocation2 + $0x10] sm:$0xff]
        %v1745 = vld [vmem:[#allocation2 + $0x20] sm:$0xff]
        %v1746 = vld [vmem:[#allocation2 + $0x28] sm:$0xff]
        %v1747 = vld [vmem:[#allocation2 + $0x30] sm:$0xff]
        %v1748 = vld [vmem:[#allocation2 + $0x40] sm:$0xff]
        %v1749 = vld [vmem:[#allocation2 + $0x48] sm:$0xff]
        %v1750 = vld [vmem:[#allocation2 + $0x50] sm:$0xff]
        %v1751 = vld [vmem:[#allocation2 + $0x60] sm:$0xff]
        %v1752 = vld [vmem:[#allocation2 + $0x68] sm:$0xff]
        %v1753 = vld [vmem:[#allocation2 + $0x70] sm:$0xff]
        %s1754 = scalar_lea.vmem %s1, 96
        %v1755 = vld [vmem:[%s1754] sm:$0xf]
        %v1756 = vld [vmem:[%s1754 + $0x4] sm:$0xf]
        %v1757 = vld [vmem:[%s1754 + $0x8] sm:$0xf]
        %v1758 = vld [vmem:[%s1754 + $0xc] sm:$0xf]
        %v1759 = vld [vmem:[%s1754 + $0x10] sm:$0xf]
        %v1760 = vld [vmem:[%s1754 + $0x14] sm:$0xf]
        %v1761 = vld [vmem:[%s1754 + $0x18] sm:$0xf]
        %v1762 = vld [vmem:[%s1754 + $0x1c] sm:$0xf]
        %s1763 = scalar_lea.vmem %s1, 128
        %v1764 = vld [vmem:[%s1763] sm:$0xf]
        %v1765 = vld [vmem:[%s1763 + $0x4] sm:$0xf]
        %v1766 = vld [vmem:[%s1763 + $0x8] sm:$0xf]
        %v1767 = vld [vmem:[%s1763 + $0xc] sm:$0xf]
        %v1768 = vld [vmem:[%s1763 + $0x10] sm:$0xf]
        %v1769 = vld [vmem:[%s1763 + $0x14] sm:$0xf]
        %v1770 = vld [vmem:[%s1763 + $0x18] sm:$0xf]
        %v1771 = vld [vmem:[%s1763 + $0x1c] sm:$0xf]
        %v1780 = vunpack.c.l.b16 %v1764
        %v1781 = vunpack.c.l.b16 %v1765
        %v1782 = vunpack.c.l.b16 %v1766
        %v1783 = vunpack.c.l.b16 %v1767
        %v1784 = vunpack.c.l.b16 %v1768
        %v1785 = vunpack.c.l.b16 %v1769
        %v1786 = vunpack.c.l.b16 %v1770
        %v1787 = vunpack.c.l.b16 %v1771
        %v1788 = vpack.c.b16 %v1781, %v1780
        %v1789 = vpack.c.b16 %v1783, %v1782
        %v1790 = vpack.c.b16 %v1785, %v1784
        %v1791 = vpack.c.b16 %v1787, %v1786
        %v1793 = vsel %vm466, %v1788, 0
        %v1796 = vsel %vm466, %v1789, 0
        %v1799 = vsel %vm466, %v1790, 0
        %v1802 = vsel %vm466, %v1791, 0
        %1804 = vmatprep.subr.bf16.mxu0 %v1744
        %1805 = vmatpush1.bf16.msra.mxu0 %v1743
        %1806 = vmatprep.subr.bf16.mxu0 %v1747
        %1807 = vmatpush1.bf16.msra.mxu0 %v1746
        %1808 = vmatprep.subr.bf16.mxu0 %v1750
        %1809 = vmatpush1.bf16.msra.mxu0 %v1749
        %1810 = vmatprep.subr.bf16.mxu0 %v1753
        %1811 = vmatpush1.bf16.msra.mxu0 %v1752
        %1812 = vmatprep.subr.bf16.mxu0 0
        %1813 = vmatpush1.bf16.msra.mxu0 0
        %1814 = vmatprep.subr.bf16.mxu0 0
        %1815 = vmatpush1.bf16.msra.mxu0 0
        %1816 = vmatprep.subr.bf16.mxu0 0
        %1817 = vmatpush1.bf16.msra.mxu0 0
        %1818 = vmatprep.subr.bf16.mxu0 0
        %1819 = vmatpush1.bf16.msra.mxu0 0
        %1820 = vmatprep.subr.bf16.mxu0 0
        %1821 = vmatpush1.bf16.msra.mxu0 0
        %1822 = vmatprep.subr.bf16.mxu0 0
        %1823 = vmatpush1.bf16.msra.mxu0 0
        %1824 = vmatprep.subr.bf16.mxu0 0
        %1825 = vmatpush1.bf16.msra.mxu0 0
        %1826 = vmatprep.subr.bf16.mxu0 0
        %1827 = vmatpush1.bf16.msra.mxu0 0
        %1828 = vmatprep.subr.bf16.mxu0 0
        %1829 = vmatpush1.bf16.msra.mxu0 0
        %1830 = vmatprep.subr.bf16.mxu0 0
        %1831 = vmatpush1.bf16.msra.mxu0 0
        %1832 = vmatprep.subr.bf16.mxu0 0
        %1833 = vmatpush1.bf16.msra.mxu0 0
        %1834 = vmatprep.subr.bf16.mxu0 0
        %1835 = vmatpush1.bf16.msra.mxu0 0
        %1836 = vmatprep.mubr.bf16.mxu0 0
        %1837 = vmatmul.mubr.bf16.gmra.mrb[0].mxu0 %v1793
        %v1838 = vpop.f32.mrb[0].mxu0
        %v1839 = vadd.f32 0.0, %v1838
        %v1840 = vpop.f32.mrb[0].mxu0
        %v1841 = vadd.f32 0.0, %v1840
        %v1842 = vpop.f32.mrb[0].mxu0
        %v1843 = vadd.f32 0.0, %v1842
        %v1844 = vpop.f32.mrb[0].mxu0
        %v1845 = vadd.f32 0.0, %v1844
        %1846 = vmatprep.mubr.bf16.mxu0 0
        %1847 = vmatmul.mubr.bf16.gmra.mrb[0].mxu0 %v1796
        %v1848 = vpop.f32.mrb[0].mxu0
        %v1849 = vadd.f32 0.0, %v1848
        %v1850 = vpop.f32.mrb[0].mxu0
        %v1851 = vadd.f32 0.0, %v1850
        %v1852 = vpop.f32.mrb[0].mxu0
        %v1853 = vadd.f32 0.0, %v1852
        %v1854 = vpop.f32.mrb[0].mxu0
        %v1855 = vadd.f32 0.0, %v1854
        %1856 = vmatprep.mubr.bf16.mxu0 0
        %1857 = vmatmul.mubr.bf16.gmra.mrb[0].mxu0 %v1799
        %v1858 = vpop.f32.mrb[0].mxu0
        %v1859 = vadd.f32 0.0, %v1858
        %v1860 = vpop.f32.mrb[0].mxu0
        %v1861 = vadd.f32 0.0, %v1860
        %v1862 = vpop.f32.mrb[0].mxu0
        %v1863 = vadd.f32 0.0, %v1862
        %v1864 = vpop.f32.mrb[0].mxu0
        %v1865 = vadd.f32 0.0, %v1864
        %1866 = vmatprep.mubr.bf16.mxu0 0
        %1867 = vmatmul.mubr.bf16.gmra.mrb[0].mxu0 %v1802
        %v1868 = vpop.f32.mrb[0].mxu0
        %v1869 = vadd.f32 0.0, %v1868
        %v1870 = vpop.f32.mrb[0].mxu0
        %v1871 = vadd.f32 0.0, %v1870
        %v1872 = vpop.f32.mrb[0].mxu0
        %v1873 = vadd.f32 0.0, %v1872
        %v1874 = vpop.f32.mrb[0].mxu0
        %v1875 = vadd.f32 0.0, %v1874
        %1876 = vdwg.mxu0
        %v1885 = vunpack.c.l.b16 %v1755
        %v1886 = vunpack.c.l.b16 %v1756
        %v1887 = vunpack.c.l.b16 %v1757
        %v1888 = vunpack.c.l.b16 %v1758
        %v1889 = vunpack.c.l.b16 %v1759
        %v1890 = vunpack.c.l.b16 %v1760
        %v1891 = vunpack.c.l.b16 %v1761
        %v1892 = vunpack.c.l.b16 %v1762
        %v1893 = vpack.c.b16 %v1886, %v1885
        %v1894 = vpack.c.b16 %v1888, %v1887
        %v1895 = vpack.c.b16 %v1890, %v1889
        %v1896 = vpack.c.b16 %v1892, %v1891
        %1909 = vrot.lane.b32.xlu0 %v1742, 3
        %v1910 = vpop.permute.xlu0 %1909
        %1911 = vrot.lane.b32.xlu0 %v1743, 3
        %v1912 = vpop.permute.xlu0 %1911
        %1913 = vrot.lane.b32.xlu0 %v1744, 3
        %v1914 = vpop.permute.xlu0 %1913
        %1915 = vrot.lane.b32.xlu0 %v1745, 3
        %v1916 = vpop.permute.xlu0 %1915
        %1917 = vrot.lane.b32.xlu0 %v1746, 3
        %v1918 = vpop.permute.xlu0 %1917
        %1919 = vrot.lane.b32.xlu0 %v1747, 3
        %v1920 = vpop.permute.xlu0 %1919
        %1921 = vrot.lane.b32.xlu0 %v1748, 3
        %v1922 = vpop.permute.xlu0 %1921
        %1923 = vrot.lane.b32.xlu0 %v1749, 3
        %v1924 = vpop.permute.xlu0 %1923
        %1925 = vrot.lane.b32.xlu0 %v1750, 3
        %v1926 = vpop.permute.xlu0 %1925
        %1927 = vrot.lane.b32.xlu0 %v1751, 3
        %v1928 = vpop.permute.xlu0 %1927
        %1929 = vrot.lane.b32.xlu0 %v1752, 3
        %v1930 = vpop.permute.xlu0 %1929
        %1931 = vrot.lane.b32.xlu0 %v1753, 3
        %v1932 = vpop.permute.xlu0 %1931
        %vm1933 = vcmask 23552
        %v1934 = vsel %vm1933, %v1910, %v1912
        %v1935 = vsel %vm1933, %v1912, %v1914
        %v1936 = vsel %vm1933, %v1916, %v1918
        %v1937 = vsel %vm1933, %v1918, %v1920
        %v1938 = vsel %vm1933, %v1922, %v1924
        %v1939 = vsel %vm1933, %v1924, %v1926
        %v1940 = vsel %vm1933, %v1928, %v1930
        %v1941 = vsel %vm1933, %v1930, %v1932
        %v1951 = vsel %vm466, %v1893, 0
        %v1954 = vsel %vm466, %v1894, 0
        %v1957 = vsel %vm466, %v1895, 0
        %v1960 = vsel %vm466, %v1896, 0
        %1962 = vmatprep.subr.bf16.mxu0 %v1935
        %1963 = vmatpush1.bf16.msra.mxu0 %v1934
        %1964 = vmatprep.subr.bf16.mxu0 %v1937
        %1965 = vmatpush1.bf16.msra.mxu0 %v1936
        %1966 = vmatprep.subr.bf16.mxu0 %v1939
        %1967 = vmatpush1.bf16.msra.mxu0 %v1938
        %1968 = vmatprep.subr.bf16.mxu0 %v1941
        %1969 = vmatpush1.bf16.msra.mxu0 %v1940
        %1970 = vmatprep.subr.bf16.mxu0 0
        %1971 = vmatpush1.bf16.msra.mxu0 0
        %1972 = vmatprep.subr.bf16.mxu0 0
        %1973 = vmatpush1.bf16.msra.mxu0 0
        %1974 = vmatprep.subr.bf16.mxu0 0
        %1975 = vmatpush1.bf16.msra.mxu0 0
        %1976 = vmatprep.subr.bf16.mxu0 0
        %1977 = vmatpush1.bf16.msra.mxu0 0
        %1978 = vmatprep.subr.bf16.mxu0 0
        %1979 = vmatpush1.bf16.msra.mxu0 0
        %1980 = vmatprep.subr.bf16.mxu0 0
        %1981 = vmatpush1.bf16.msra.mxu0 0
        %1982 = vmatprep.subr.bf16.mxu0 0
        %1983 = vmatpush1.bf16.msra.mxu0 0
        %1984 = vmatprep.subr.bf16.mxu0 0
        %1985 = vmatpush1.bf16.msra.mxu0 0
        %1986 = vmatprep.subr.bf16.mxu0 0
        %1987 = vmatpush1.bf16.msra.mxu0 0
        %1988 = vmatprep.subr.bf16.mxu0 0
        %1989 = vmatpush1.bf16.msra.mxu0 0
        %1990 = vmatprep.subr.bf16.mxu0 0
        %1991 = vmatpush1.bf16.msra.mxu0 0
        %1992 = vmatprep.subr.bf16.mxu0 0
        %1993 = vmatpush1.bf16.msra.mxu0 0
        %1994 = vmatprep.mubr.bf16.mxu0 0
        %1995 = vmatmul.mubr.bf16.gmra.mrb[0].mxu0 %v1951
        %v1996 = vpop.f32.mrb[0].mxu0
        %v1997 = vadd.f32 %v1839, %v1996
        %v1998 = vpop.f32.mrb[0].mxu0
        %v1999 = vadd.f32 %v1841, %v1998
        %v2000 = vpop.f32.mrb[0].mxu0
        %v2001 = vadd.f32 %v1843, %v2000
        %v2002 = vpop.f32.mrb[0].mxu0
        %v2003 = vadd.f32 %v1845, %v2002
        %2004 = vmatprep.mubr.bf16.mxu0 0
        %2005 = vmatmul.mubr.bf16.gmra.mrb[0].mxu0 %v1954
        %v2006 = vpop.f32.mrb[0].mxu0
        %v2007 = vadd.f32 %v1849, %v2006
        %v2008 = vpop.f32.mrb[0].mxu0
        %v2009 = vadd.f32 %v1851, %v2008
        %v2010 = vpop.f32.mrb[0].mxu0
        %v2011 = vadd.f32 %v1853, %v2010
        %v2012 = vpop.f32.mrb[0].mxu0
        %v2013 = vadd.f32 %v1855, %v2012
        %2014 = vmatprep.mubr.bf16.mxu0 0
        %2015 = vmatmul.mubr.bf16.gmra.mrb[0].mxu0 %v1957
        %v2016 = vpop.f32.mrb[0].mxu0
        %v2017 = vadd.f32 %v1859, %v2016
        %v2018 = vpop.f32.mrb[0].mxu0
        %v2019 = vadd.f32 %v1861, %v2018
        %v2020 = vpop.f32.mrb[0].mxu0
        %v2021 = vadd.f32 %v1863, %v2020
        %v2022 = vpop.f32.mrb[0].mxu0
        %v2023 = vadd.f32 %v1865, %v2022
        %2024 = vmatprep.mubr.bf16.mxu0 0
        %2025 = vmatmul.mubr.bf16.gmra.mrb[0].mxu0 %v1960
        %v2026 = vpop.f32.mrb[0].mxu0
        %v2027 = vadd.f32 %v1869, %v2026
        %v2028 = vpop.f32.mrb[0].mxu0
        %v2029 = vadd.f32 %v1871, %v2028
        %v2030 = vpop.f32.mrb[0].mxu0
        %v2031 = vadd.f32 %v1873, %v2030
        %v2032 = vpop.f32.mrb[0].mxu0
        %v2033 = vadd.f32 %v1875, %v2032
        %2034 = vdwg.mxu0
        %v2035 = vld [vmem:[#allocation2 + $0x8] sm:$0xff]
        %v2036 = vld [vmem:[#allocation2 + $0x10] sm:$0xff]
        %v2037 = vld [vmem:[#allocation2 + $0x18] sm:$0xff]
        %v2038 = vld [vmem:[#allocation2 + $0x28] sm:$0xff]
        %v2039 = vld [vmem:[#allocation2 + $0x30] sm:$0xff]
        %v2040 = vld [vmem:[#allocation2 + $0x38] sm:$0xff]
        %v2041 = vld [vmem:[#allocation2 + $0x48] sm:$0xff]
        %v2042 = vld [vmem:[#allocation2 + $0x50] sm:$0xff]
        %v2043 = vld [vmem:[#allocation2 + $0x58] sm:$0xff]
        %v2044 = vld [vmem:[#allocation2 + $0x68] sm:$0xff]
        %v2045 = vld [vmem:[#allocation2 + $0x70] sm:$0xff]
        %v2046 = vld [vmem:[#allocation2 + $0x78] sm:$0xff]
        %s2047 = scalar_lea.vmem %s1, 160
        %v2048 = vld [vmem:[%s2047] sm:$0xf]
        %v2049 = vld [vmem:[%s2047 + $0x4] sm:$0xf]
        %v2050 = vld [vmem:[%s2047 + $0x8] sm:$0xf]
        %v2051 = vld [vmem:[%s2047 + $0xc] sm:$0xf]
        %v2052 = vld [vmem:[%s2047 + $0x10] sm:$0xf]
        %v2053 = vld [vmem:[%s2047 + $0x14] sm:$0xf]
        %v2054 = vld [vmem:[%s2047 + $0x18] sm:$0xf]
        %v2055 = vld [vmem:[%s2047 + $0x1c] sm:$0xf]
        %v2064 = vunpack.c.l.b16 %v2048
        %v2065 = vunpack.c.l.b16 %v2049
        %v2066 = vunpack.c.l.b16 %v2050
        %v2067 = vunpack.c.l.b16 %v2051
        %v2068 = vunpack.c.l.b16 %v2052
        %v2069 = vunpack.c.l.b16 %v2053
        %v2070 = vunpack.c.l.b16 %v2054
        %v2071 = vunpack.c.l.b16 %v2055
        %v2072 = vpack.c.b16 %v2065, %v2064
        %v2073 = vpack.c.b16 %v2067, %v2066
        %v2074 = vpack.c.b16 %v2069, %v2068
        %v2075 = vpack.c.b16 %v2071, %v2070
        %2088 = vrot.lane.b32.xlu0 %v2035, 125
        %v2089 = vpop.permute.xlu0 %2088
        %2090 = vrot.lane.b32.xlu0 %v2036, 125
        %v2091 = vpop.permute.xlu0 %2090
        %2092 = vrot.lane.b32.xlu0 %v2037, 125
        %v2093 = vpop.permute.xlu0 %2092
        %2094 = vrot.lane.b32.xlu0 %v2038, 125
        %v2095 = vpop.permute.xlu0 %2094
        %2096 = vrot.lane.b32.xlu0 %v2039, 125
        %v2097 = vpop.permute.xlu0 %2096
        %2098 = vrot.lane.b32.xlu0 %v2040, 125
        %v2099 = vpop.permute.xlu0 %2098
        %2100 = vrot.lane.b32.xlu0 %v2041, 125
        %v2101 = vpop.permute.xlu0 %2100
        %2102 = vrot.lane.b32.xlu0 %v2042, 125
        %v2103 = vpop.permute.xlu0 %2102
        %2104 = vrot.lane.b32.xlu0 %v2043, 125
        %v2105 = vpop.permute.xlu0 %2104
        %2106 = vrot.lane.b32.xlu0 %v2044, 125
        %v2107 = vpop.permute.xlu0 %2106
        %2108 = vrot.lane.b32.xlu0 %v2045, 125
        %v2109 = vpop.permute.xlu0 %2108
        %2110 = vrot.lane.b32.xlu0 %v2046, 125
        %v2111 = vpop.permute.xlu0 %2110
        %vm2112 = vcmask 1022976
        %v2113 = vsel %vm2112, %v2089, %v2091
        %v2114 = vsel %vm2112, %v2091, %v2093
        %v2115 = vsel %vm2112, %v2095, %v2097
        %v2116 = vsel %vm2112, %v2097, %v2099
        %v2117 = vsel %vm2112, %v2101, %v2103
        %v2118 = vsel %vm2112, %v2103, %v2105
        %v2119 = vsel %vm2112, %v2107, %v2109
        %v2120 = vsel %vm2112, %v2109, %v2111
        %v2130 = vsel %vm466, %v2072, 0
        %v2133 = vsel %vm466, %v2073, 0
        %v2136 = vsel %vm466, %v2074, 0
        %v2139 = vsel %vm466, %v2075, 0
        %2141 = vmatprep.subr.bf16.mxu0 %v2114
        %2142 = vmatpush1.bf16.msra.mxu0 %v2113
        %2143 = vmatprep.subr.bf16.mxu0 %v2116
        %2144 = vmatpush1.bf16.msra.mxu0 %v2115
        %2145 = vmatprep.subr.bf16.mxu0 %v2118
        %2146 = vmatpush1.bf16.msra.mxu0 %v2117
        %2147 = vmatprep.subr.bf16.mxu0 %v2120
        %2148 = vmatpush1.bf16.msra.mxu0 %v2119
        %2149 = vmatprep.subr.bf16.mxu0 0
        %2150 = vmatpush1.bf16.msra.mxu0 0
        %2151 = vmatprep.subr.bf16.mxu0 0
        %2152 = vmatpush1.bf16.msra.mxu0 0
        %2153 = vmatprep.subr.bf16.mxu0 0
        %2154 = vmatpush1.bf16.msra.mxu0 0
        %2155 = vmatprep.subr.bf16.mxu0 0
        %2156 = vmatpush1.bf16.msra.mxu0 0
        %2157 = vmatprep.subr.bf16.mxu0 0
        %2158 = vmatpush1.bf16.msra.mxu0 0
        %2159 = vmatprep.subr.bf16.mxu0 0
        %2160 = vmatpush1.bf16.msra.mxu0 0
        %2161 = vmatprep.subr.bf16.mxu0 0
        %2162 = vmatpush1.bf16.msra.mxu0 0
        %2163 = vmatprep.subr.bf16.mxu0 0
        %2164 = vmatpush1.bf16.msra.mxu0 0
        %2165 = vmatprep.subr.bf16.mxu0 0
        %2166 = vmatpush1.bf16.msra.mxu0 0
        %2167 = vmatprep.subr.bf16.mxu0 0
        %2168 = vmatpush1.bf16.msra.mxu0 0
        %2169 = vmatprep.subr.bf16.mxu0 0
        %2170 = vmatpush1.bf16.msra.mxu0 0
        %2171 = vmatprep.subr.bf16.mxu0 0
        %2172 = vmatpush1.bf16.msra.mxu0 0
        %2173 = vmatprep.mubr.bf16.mxu0 0
        %2174 = vmatmul.mubr.bf16.gmra.mrb[0].mxu0 %v2130
        %v2175 = vpop.f32.mrb[0].mxu0
        %v2176 = vadd.f32 0.0, %v2175
        %v2177 = vpop.f32.mrb[0].mxu0
        %v2178 = vadd.f32 0.0, %v2177
        %v2179 = vpop.f32.mrb[0].mxu0
        %v2180 = vadd.f32 0.0, %v2179
        %v2181 = vpop.f32.mrb[0].mxu0
        %v2182 = vadd.f32 0.0, %v2181
        %2183 = vmatprep.mubr.bf16.mxu0 0
        %2184 = vmatmul.mubr.bf16.gmra.mrb[0].mxu0 %v2133
        %v2185 = vpop.f32.mrb[0].mxu0
        %v2186 = vadd.f32 0.0, %v2185
        %v2187 = vpop.f32.mrb[0].mxu0
        %v2188 = vadd.f32 0.0, %v2187
        %v2189 = vpop.f32.mrb[0].mxu0
        %v2190 = vadd.f32 0.0, %v2189
        %v2191 = vpop.f32.mrb[0].mxu0
        %v2192 = vadd.f32 0.0, %v2191
        %2193 = vmatprep.mubr.bf16.mxu0 0
        %2194 = vmatmul.mubr.bf16.gmra.mrb[0].mxu0 %v2136
        %v2195 = vpop.f32.mrb[0].mxu0
        %v2196 = vadd.f32 0.0, %v2195
        %v2197 = vpop.f32.mrb[0].mxu0
        %v2198 = vadd.f32 0.0, %v2197
        %v2199 = vpop.f32.mrb[0].mxu0
        %v2200 = vadd.f32 0.0, %v2199
        %v2201 = vpop.f32.mrb[0].mxu0
        %v2202 = vadd.f32 0.0, %v2201
        %2203 = vmatprep.mubr.bf16.mxu0 0
        %2204 = vmatmul.mubr.bf16.gmra.mrb[0].mxu0 %v2139
        %v2205 = vpop.f32.mrb[0].mxu0
        %v2206 = vadd.f32 0.0, %v2205
        %v2207 = vpop.f32.mrb[0].mxu0
        %v2208 = vadd.f32 0.0, %v2207
        %v2209 = vpop.f32.mrb[0].mxu0
        %v2210 = vadd.f32 0.0, %v2209
        %v2211 = vpop.f32.mrb[0].mxu0
        %v2212 = vadd.f32 0.0, %v2211
        %2213 = vdwg.mxu0
        %v2214 = vadd.f32 %v1997, %v2176
        %v2215 = vadd.f32 %v1999, %v2178
        %v2216 = vadd.f32 %v2001, %v2180
        %v2217 = vadd.f32 %v2003, %v2182
        %v2218 = vadd.f32 %v2007, %v2186
        %v2219 = vadd.f32 %v2009, %v2188
        %v2220 = vadd.f32 %v2011, %v2190
        %v2221 = vadd.f32 %v2013, %v2192
        %v2222 = vadd.f32 %v2017, %v2196
        %v2223 = vadd.f32 %v2019, %v2198
        %v2224 = vadd.f32 %v2021, %v2200
        %v2225 = vadd.f32 %v2023, %v2202
        %v2226 = vadd.f32 %v2027, %v2206
        %v2227 = vadd.f32 %v2029, %v2208
        %v2228 = vadd.f32 %v2031, %v2210
        %v2229 = vadd.f32 %v2033, %v2212
        %s2230 = scalar_lea.vmem %s2, 64
        %v2231 = vld [vmem:[%s2230] sm:$0xff]
        %v2232 = vld [vmem:[%s2230 + $0x8] sm:$0xff]
        %v2233 = vld [vmem:[%s2230 + $0x10] sm:$0xff]
        %v2234 = vld [vmem:[%s2230 + $0x18] sm:$0xff]
        %v2235 = vld [vmem:[%s2230 + $0x20] sm:$0xff]
        %v2236 = vld [vmem:[%s2230 + $0x28] sm:$0xff]
        %v2237 = vld [vmem:[%s2230 + $0x30] sm:$0xff]
        %v2238 = vld [vmem:[%s2230 + $0x38] sm:$0xff]
        %2240 = vset.pattern.permute.xlu0 0
        %2241 = vperm.xlu0 %2240, %v2231
        %v2242 = vpop.permute.xlu0 %2241
        %2245 = vset.pattern.permute.xlu0 0
        %2246 = vperm.xlu0 %2245, %v2232
        %v2247 = vpop.permute.xlu0 %2246
        %2250 = vset.pattern.permute.xlu0 0
        %2251 = vperm.xlu0 %2250, %v2233
        %v2252 = vpop.permute.xlu0 %2251
        %2255 = vset.pattern.permute.xlu0 0
        %2256 = vperm.xlu0 %2255, %v2234
        %v2257 = vpop.permute.xlu0 %2256
        %2260 = vset.pattern.permute.xlu0 0
        %2261 = vperm.xlu0 %2260, %v2235
        %v2262 = vpop.permute.xlu0 %2261
        %2265 = vset.pattern.permute.xlu0 0
        %2266 = vperm.xlu0 %2265, %v2236
        %v2267 = vpop.permute.xlu0 %2266
        %2270 = vset.pattern.permute.xlu0 0
        %2271 = vperm.xlu0 %2270, %v2237
        %v2272 = vpop.permute.xlu0 %2271
        %2275 = vset.pattern.permute.xlu0 0
        %2276 = vperm.xlu0 %2275, %v2238
        %v2277 = vpop.permute.xlu0 %2276
        %v2279 = vadd.f32 %v2214, %v2242
        %v2280 = vadd.f32 %v2215, %v2242
        %v2281 = vadd.f32 %v2216, %v2247
        %v2282 = vadd.f32 %v2217, %v2247
        %v2283 = vadd.f32 %v2218, %v2252
        %v2284 = vadd.f32 %v2219, %v2252
        %v2285 = vadd.f32 %v2220, %v2257
        %v2286 = vadd.f32 %v2221, %v2257
        %v2287 = vadd.f32 %v2222, %v2262
        %v2288 = vadd.f32 %v2223, %v2262
        %v2289 = vadd.f32 %v2224, %v2267
        %v2290 = vadd.f32 %v2225, %v2267
        %v2291 = vadd.f32 %v2226, %v2272
        %v2292 = vadd.f32 %v2227, %v2272
        %v2293 = vadd.f32 %v2228, %v2277
        %v2294 = vadd.f32 %v2229, %v2277
        %vm2295 = vcmp.gt.f32.partialorder %v2279, 0.0
        %vm2296 = vcmp.gt.f32.partialorder %v2280, 0.0
        %vm2297 = vcmp.gt.f32.partialorder %v2281, 0.0
        %vm2298 = vcmp.gt.f32.partialorder %v2282, 0.0
        %vm2299 = vcmp.gt.f32.partialorder %v2283, 0.0
        %vm2300 = vcmp.gt.f32.partialorder %v2284, 0.0
        %vm2301 = vcmp.gt.f32.partialorder %v2285, 0.0
        %vm2302 = vcmp.gt.f32.partialorder %v2286, 0.0
        %vm2303 = vcmp.gt.f32.partialorder %v2287, 0.0
        %vm2304 = vcmp.gt.f32.partialorder %v2288, 0.0
        %vm2305 = vcmp.gt.f32.partialorder %v2289, 0.0
        %vm2306 = vcmp.gt.f32.partialorder %v2290, 0.0
        %vm2307 = vcmp.gt.f32.partialorder %v2291, 0.0
        %vm2308 = vcmp.gt.f32.partialorder %v2292, 0.0
        %vm2309 = vcmp.gt.f32.partialorder %v2293, 0.0
        %vm2310 = vcmp.gt.f32.partialorder %v2294, 0.0
        %v2311 = vmul.f32 %v2279, 0.1
        %v2312 = vmul.f32 %v2280, 0.1
        %v2313 = vmul.f32 %v2281, 0.1
        %v2314 = vmul.f32 %v2282, 0.1
        %v2315 = vmul.f32 %v2283, 0.1
        %v2316 = vmul.f32 %v2284, 0.1
        %v2317 = vmul.f32 %v2285, 0.1
        %v2318 = vmul.f32 %v2286, 0.1
        %v2319 = vmul.f32 %v2287, 0.1
        %v2320 = vmul.f32 %v2288, 0.1
        %v2321 = vmul.f32 %v2289, 0.1
        %v2322 = vmul.f32 %v2290, 0.1
        %v2323 = vmul.f32 %v2291, 0.1
        %v2324 = vmul.f32 %v2292, 0.1
        %v2325 = vmul.f32 %v2293, 0.1
        %v2326 = vmul.f32 %v2294, 0.1
        %v2327 = vsel %vm2295, %v2279, %v2311
        %v2328 = vsel %vm2296, %v2280, %v2312
        %v2329 = vsel %vm2297, %v2281, %v2313
        %v2330 = vsel %vm2298, %v2282, %v2314
        %v2331 = vsel %vm2299, %v2283, %v2315
        %v2332 = vsel %vm2300, %v2284, %v2316
        %v2333 = vsel %vm2301, %v2285, %v2317
        %v2334 = vsel %vm2302, %v2286, %v2318
        %v2335 = vsel %vm2303, %v2287, %v2319
        %v2336 = vsel %vm2304, %v2288, %v2320
        %v2337 = vsel %vm2305, %v2289, %v2321
        %v2338 = vsel %vm2306, %v2290, %v2322
        %v2339 = vsel %vm2307, %v2291, %v2323
        %v2340 = vsel %vm2308, %v2292, %v2324
        %v2341 = vsel %vm2309, %v2293, %v2325
        %v2342 = vsel %vm2310, %v2294, %v2326
        %v2343 = vpack.c.bf16 %v2329, %v2327
        %v2344 = vpack.c.bf16 %v2330, %v2328
        %v2345 = vpack.c.bf16 %v2333, %v2331
        %v2346 = vpack.c.bf16 %v2334, %v2332
        %v2347 = vpack.c.bf16 %v2337, %v2335
        %v2348 = vpack.c.bf16 %v2338, %v2336
        %v2349 = vpack.c.bf16 %v2341, %v2339
        %v2350 = vpack.c.bf16 %v2342, %v2340
        %2351 = vst [vmem:[#allocation2 + $0x8] sm:$0xff] %v2343
        %2352 = vst [vmem:[#allocation2 + $0x10] sm:$0xff] %v2344
        %2353 = vst [vmem:[#allocation2 + $0x28] sm:$0xff] %v2345
        %2354 = vst [vmem:[#allocation2 + $0x30] sm:$0xff] %v2346
        %2355 = vst [vmem:[#allocation2 + $0x48] sm:$0xff] %v2347
        %2356 = vst [vmem:[#allocation2 + $0x50] sm:$0xff] %v2348
        %2357 = vst [vmem:[#allocation2 + $0x68] sm:$0xff] %v2349
        %2358 = vst [vmem:[#allocation2 + $0x70] sm:$0xff] %v2350
        // Predicated region
        $region73: #{tpu_custom_call.1} parent=39 // pred_check
          %p2359 = pneg %p399
        $region74: #{tpu_custom_call.1} parent=39 // pred_check_branch
          %2361 = sbr.rel (%p2359) target = $region76
        $region75: #{tpu_custom_call.1} parent=39 // pred_region
          %vm2362 = vcmask 97280
          %2363 = vst.msk [vmem:[#allocation2 + $0x8] sm:$0xff] %vm2362, 0
          %2364 = vst.msk [vmem:[#allocation2 + $0x28] sm:$0xff] %vm2362, 0
          %2365 = vst.msk [vmem:[#allocation2 + $0x48] sm:$0xff] %vm2362, 0
          %2366 = vst.msk [vmem:[#allocation2 + $0x68] sm:$0xff] %vm2362, 0
        $region76: #{tpu_custom_call.1} parent=39 // pred_fallthru
          _
        // Predicated region
        $region77: #{tpu_custom_call.1} parent=39 // pred_check
          %p2367 = pneg %p408
        $region78: #{tpu_custom_call.1} parent=39 // pred_check_branch
          %2369 = sbr.rel (%p2367) target = $region80
        $region79: #{tpu_custom_call.1} parent=39 // pred_region
          %vm2370 = vcmask 1047648
          %2371 = vst.msk [vmem:[#allocation2 + $0x10] sm:$0xff] %vm2370, 0
          %2372 = vst.msk [vmem:[#allocation2 + $0x30] sm:$0xff] %vm2370, 0
          %2373 = vst.msk [vmem:[#allocation2 + $0x50] sm:$0xff] %vm2370, 0
          %2374 = vst.msk [vmem:[#allocation2 + $0x70] sm:$0xff] %vm2370, 0
        $region80: #{tpu_custom_call.1} parent=39 // pred_fallthru
          _
        %v2375 = vld [vmem:[#allocation2] sm:$0xff]
        %v2376 = vld [vmem:[#allocation2 + $0x8] sm:$0xff]
        %v2377 = vld [vmem:[#allocation2 + $0x10] sm:$0xff]
        %v2378 = vld [vmem:[#allocation2 + $0x20] sm:$0xff]
        %v2379 = vld [vmem:[#allocation2 + $0x28] sm:$0xff]
        %v2380 = vld [vmem:[#allocation2 + $0x30] sm:$0xff]
        %v2381 = vld [vmem:[#allocation2 + $0x40] sm:$0xff]
        %v2382 = vld [vmem:[#allocation2 + $0x48] sm:$0xff]
        %v2383 = vld [vmem:[#allocation2 + $0x50] sm:$0xff]
        %v2384 = vld [vmem:[#allocation2 + $0x60] sm:$0xff]
        %v2385 = vld [vmem:[#allocation2 + $0x68] sm:$0xff]
        %v2386 = vld [vmem:[#allocation2 + $0x70] sm:$0xff]
        %s2387 = scalar_lea.vmem [#allocation7], 96
        %v2388 = vld [vmem:[%s2387] sm:$0xf]
        %v2389 = vld [vmem:[%s2387 + $0x4] sm:$0xf]
        %v2390 = vld [vmem:[%s2387 + $0x8] sm:$0xf]
        %v2391 = vld [vmem:[%s2387 + $0xc] sm:$0xf]
        %v2392 = vld [vmem:[%s2387 + $0x10] sm:$0xf]
        %v2393 = vld [vmem:[%s2387 + $0x14] sm:$0xf]
        %v2394 = vld [vmem:[%s2387 + $0x18] sm:$0xf]
        %v2395 = vld [vmem:[%s2387 + $0x1c] sm:$0xf]
        %s2396 = scalar_lea.vmem [#allocation7], 128
        %v2397 = vld [vmem:[%s2396] sm:$0xf]
        %v2398 = vld [vmem:[%s2396 + $0x4] sm:$0xf]
        %v2399 = vld [vmem:[%s2396 + $0x8] sm:$0xf]
        %v2400 = vld [vmem:[%s2396 + $0xc] sm:$0xf]
        %v2401 = vld [vmem:[%s2396 + $0x10] sm:$0xf]
        %v2402 = vld [vmem:[%s2396 + $0x14] sm:$0xf]
        %v2403 = vld [vmem:[%s2396 + $0x18] sm:$0xf]
        %v2404 = vld [vmem:[%s2396 + $0x1c] sm:$0xf]
        %v2413 = vunpack.c.l.b16 %v2397
        %v2414 = vunpack.c.l.b16 %v2398
        %v2415 = vunpack.c.l.b16 %v2399
        %v2416 = vunpack.c.l.b16 %v2400
        %v2417 = vunpack.c.l.b16 %v2401
        %v2418 = vunpack.c.l.b16 %v2402
        %v2419 = vunpack.c.l.b16 %v2403
        %v2420 = vunpack.c.l.b16 %v2404
        %v2421 = vpack.c.b16 %v2414, %v2413
        %v2422 = vpack.c.b16 %v2416, %v2415
        %v2423 = vpack.c.b16 %v2418, %v2417
        %v2424 = vpack.c.b16 %v2420, %v2419
        %v2426 = vsel %vm466, %v2421, 0
        %v2429 = vsel %vm466, %v2422, 0
        %v2432 = vsel %vm466, %v2423, 0
        %v2435 = vsel %vm466, %v2424, 0
        %2437 = vmatprep.subr.bf16.mxu0 %v2377
        %2438 = vmatpush1.bf16.msra.mxu0 %v2376
        %2439 = vmatprep.subr.bf16.mxu0 %v2380
        %2440 = vmatpush1.bf16.msra.mxu0 %v2379
        %2441 = vmatprep.subr.bf16.mxu0 %v2383
        %2442 = vmatpush1.bf16.msra.mxu0 %v2382
        %2443 = vmatprep.subr.bf16.mxu0 %v2386
        %2444 = vmatpush1.bf16.msra.mxu0 %v2385
        %2445 = vmatprep.subr.bf16.mxu0 0
        %2446 = vmatpush1.bf16.msra.mxu0 0
        %2447 = vmatprep.subr.bf16.mxu0 0
        %2448 = vmatpush1.bf16.msra.mxu0 0
        %2449 = vmatprep.subr.bf16.mxu0 0
        %2450 = vmatpush1.bf16.msra.mxu0 0
        %2451 = vmatprep.subr.bf16.mxu0 0
        %2452 = vmatpush1.bf16.msra.mxu0 0
        %2453 = vmatprep.subr.bf16.mxu0 0
        %2454 = vmatpush1.bf16.msra.mxu0 0
        %2455 = vmatprep.subr.bf16.mxu0 0
        %2456 = vmatpush1.bf16.msra.mxu0 0
        %2457 = vmatprep.subr.bf16.mxu0 0
        %2458 = vmatpush1.bf16.msra.mxu0 0
        %2459 = vmatprep.subr.bf16.mxu0 0
        %2460 = vmatpush1.bf16.msra.mxu0 0
        %2461 = vmatprep.subr.bf16.mxu0 0
        %2462 = vmatpush1.bf16.msra.mxu0 0
        %2463 = vmatprep.subr.bf16.mxu0 0
        %2464 = vmatpush1.bf16.msra.mxu0 0
        %2465 = vmatprep.subr.bf16.mxu0 0
        %2466 = vmatpush1.bf16.msra.mxu0 0
        %2467 = vmatprep.subr.bf16.mxu0 0
        %2468 = vmatpush1.bf16.msra.mxu0 0
        %2469 = vmatprep.mubr.bf16.mxu0 0
        %2470 = vmatmul.mubr.bf16.gmra.mrb[0].mxu0 %v2426
        %v2471 = vpop.f32.mrb[0].mxu0
        %v2472 = vadd.f32 0.0, %v2471
        %v2473 = vpop.f32.mrb[0].mxu0
        %v2474 = vadd.f32 0.0, %v2473
        %v2475 = vpop.f32.mrb[0].mxu0
        %v2476 = vadd.f32 0.0, %v2475
        %v2477 = vpop.f32.mrb[0].mxu0
        %v2478 = vadd.f32 0.0, %v2477
        %2479 = vmatprep.mubr.bf16.mxu0 0
        %2480 = vmatmul.mubr.bf16.gmra.mrb[0].mxu0 %v2429
        %v2481 = vpop.f32.mrb[0].mxu0
        %v2482 = vadd.f32 0.0, %v2481
        %v2483 = vpop.f32.mrb[0].mxu0
        %v2484 = vadd.f32 0.0, %v2483
        %v2485 = vpop.f32.mrb[0].mxu0
        %v2486 = vadd.f32 0.0, %v2485
        %v2487 = vpop.f32.mrb[0].mxu0
        %v2488 = vadd.f32 0.0, %v2487
        %2489 = vmatprep.mubr.bf16.mxu0 0
        %2490 = vmatmul.mubr.bf16.gmra.mrb[0].mxu0 %v2432
        %v2491 = vpop.f32.mrb[0].mxu0
        %v2492 = vadd.f32 0.0, %v2491
        %v2493 = vpop.f32.mrb[0].mxu0
        %v2494 = vadd.f32 0.0, %v2493
        %v2495 = vpop.f32.mrb[0].mxu0
        %v2496 = vadd.f32 0.0, %v2495
        %v2497 = vpop.f32.mrb[0].mxu0
        %v2498 = vadd.f32 0.0, %v2497
        %2499 = vmatprep.mubr.bf16.mxu0 0
        %2500 = vmatmul.mubr.bf16.gmra.mrb[0].mxu0 %v2435
        %v2501 = vpop.f32.mrb[0].mxu0
        %v2502 = vadd.f32 0.0, %v2501
        %v2503 = vpop.f32.mrb[0].mxu0
        %v2504 = vadd.f32 0.0, %v2503
        %v2505 = vpop.f32.mrb[0].mxu0
        %v2506 = vadd.f32 0.0, %v2505
        %v2507 = vpop.f32.mrb[0].mxu0
        %v2508 = vadd.f32 0.0, %v2507
        %2509 = vdwg.mxu0
        %v2518 = vunpack.c.l.b16 %v2388
        %v2519 = vunpack.c.l.b16 %v2389
        %v2520 = vunpack.c.l.b16 %v2390
        %v2521 = vunpack.c.l.b16 %v2391
        %v2522 = vunpack.c.l.b16 %v2392
        %v2523 = vunpack.c.l.b16 %v2393
        %v2524 = vunpack.c.l.b16 %v2394
        %v2525 = vunpack.c.l.b16 %v2395
        %v2526 = vpack.c.b16 %v2519, %v2518
        %v2527 = vpack.c.b16 %v2521, %v2520
        %v2528 = vpack.c.b16 %v2523, %v2522
        %v2529 = vpack.c.b16 %v2525, %v2524
        %2542 = vrot.lane.b32.xlu0 %v2375, 1
        %v2543 = vpop.permute.xlu0 %2542
        %2544 = vrot.lane.b32.xlu0 %v2376, 1
        %v2545 = vpop.permute.xlu0 %2544
        %2546 = vrot.lane.b32.xlu0 %v2377, 1
        %v2547 = vpop.permute.xlu0 %2546
        %2548 = vrot.lane.b32.xlu0 %v2378, 1
        %v2549 = vpop.permute.xlu0 %2548
        %2550 = vrot.lane.b32.xlu0 %v2379, 1
        %v2551 = vpop.permute.xlu0 %2550
        %2552 = vrot.lane.b32.xlu0 %v2380, 1
        %v2553 = vpop.permute.xlu0 %2552
        %2554 = vrot.lane.b32.xlu0 %v2381, 1
        %v2555 = vpop.permute.xlu0 %2554
        %2556 = vrot.lane.b32.xlu0 %v2382, 1
        %v2557 = vpop.permute.xlu0 %2556
        %2558 = vrot.lane.b32.xlu0 %v2383, 1
        %v2559 = vpop.permute.xlu0 %2558
        %2560 = vrot.lane.b32.xlu0 %v2384, 1
        %v2561 = vpop.permute.xlu0 %2560
        %2562 = vrot.lane.b32.xlu0 %v2385, 1
        %v2563 = vpop.permute.xlu0 %2562
        %2564 = vrot.lane.b32.xlu0 %v2386, 1
        %v2565 = vpop.permute.xlu0 %2564
        %v2566 = vsel %vm608, %v2543, %v2545
        %v2567 = vsel %vm608, %v2545, %v2547
        %v2568 = vsel %vm608, %v2549, %v2551
        %v2569 = vsel %vm608, %v2551, %v2553
        %v2570 = vsel %vm608, %v2555, %v2557
        %v2571 = vsel %vm608, %v2557, %v2559
        %v2572 = vsel %vm608, %v2561, %v2563
        %v2573 = vsel %vm608, %v2563, %v2565
        %v2583 = vsel %vm466, %v2526, 0
        %v2586 = vsel %vm466, %v2527, 0
        %v2589 = vsel %vm466, %v2528, 0
        %v2592 = vsel %vm466, %v2529, 0
        %2594 = vmatprep.subr.bf16.mxu0 %v2567
        %2595 = vmatpush1.bf16.msra.mxu0 %v2566
        %2596 = vmatprep.subr.bf16.mxu0 %v2569
        %2597 = vmatpush1.bf16.msra.mxu0 %v2568
        %2598 = vmatprep.subr.bf16.mxu0 %v2571
        %2599 = vmatpush1.bf16.msra.mxu0 %v2570
        %2600 = vmatprep.subr.bf16.mxu0 %v2573
        %2601 = vmatpush1.bf16.msra.mxu0 %v2572
        %2602 = vmatprep.subr.bf16.mxu0 0
        %2603 = vmatpush1.bf16.msra.mxu0 0
        %2604 = vmatprep.subr.bf16.mxu0 0
        %2605 = vmatpush1.bf16.msra.mxu0 0
        %2606 = vmatprep.subr.bf16.mxu0 0
        %2607 = vmatpush1.bf16.msra.mxu0 0
        %2608 = vmatprep.subr.bf16.mxu0 0
        %2609 = vmatpush1.bf16.msra.mxu0 0
        %2610 = vmatprep.subr.bf16.mxu0 0
        %2611 = vmatpush1.bf16.msra.mxu0 0
        %2612 = vmatprep.subr.bf16.mxu0 0
        %2613 = vmatpush1.bf16.msra.mxu0 0
        %2614 = vmatprep.subr.bf16.mxu0 0
        %2615 = vmatpush1.bf16.msra.mxu0 0
        %2616 = vmatprep.subr.bf16.mxu0 0
        %2617 = vmatpush1.bf16.msra.mxu0 0
        %2618 = vmatprep.subr.bf16.mxu0 0
        %2619 = vmatpush1.bf16.msra.mxu0 0
        %2620 = vmatprep.subr.bf16.mxu0 0
        %2621 = vmatpush1.bf16.msra.mxu0 0
        %2622 = vmatprep.subr.bf16.mxu0 0
        %2623 = vmatpush1.bf16.msra.mxu0 0
        %2624 = vmatprep.subr.bf16.mxu0 0
        %2625 = vmatpush1.bf16.msra.mxu0 0
        %2626 = vmatprep.mubr.bf16.mxu0 0
        %2627 = vmatmul.mubr.bf16.gmra.mrb[0].mxu0 %v2583
        %v2628 = vpop.f32.mrb[0].mxu0
        %v2629 = vadd.f32 %v2472, %v2628
        %v2630 = vpop.f32.mrb[0].mxu0
        %v2631 = vadd.f32 %v2474, %v2630
        %v2632 = vpop.f32.mrb[0].mxu0
        %v2633 = vadd.f32 %v2476, %v2632
        %v2634 = vpop.f32.mrb[0].mxu0
        %v2635 = vadd.f32 %v2478, %v2634
        %2636 = vmatprep.mubr.bf16.mxu0 0
        %2637 = vmatmul.mubr.bf16.gmra.mrb[0].mxu0 %v2586
        %v2638 = vpop.f32.mrb[0].mxu0
        %v2639 = vadd.f32 %v2482, %v2638
        %v2640 = vpop.f32.mrb[0].mxu0
        %v2641 = vadd.f32 %v2484, %v2640
        %v2642 = vpop.f32.mrb[0].mxu0
        %v2643 = vadd.f32 %v2486, %v2642
        %v2644 = vpop.f32.mrb[0].mxu0
        %v2645 = vadd.f32 %v2488, %v2644
        %2646 = vmatprep.mubr.bf16.mxu0 0
        %2647 = vmatmul.mubr.bf16.gmra.mrb[0].mxu0 %v2589
        %v2648 = vpop.f32.mrb[0].mxu0
        %v2649 = vadd.f32 %v2492, %v2648
        %v2650 = vpop.f32.mrb[0].mxu0
        %v2651 = vadd.f32 %v2494, %v2650
        %v2652 = vpop.f32.mrb[0].mxu0
        %v2653 = vadd.f32 %v2496, %v2652
        %v2654 = vpop.f32.mrb[0].mxu0
        %v2655 = vadd.f32 %v2498, %v2654
        %2656 = vmatprep.mubr.bf16.mxu0 0
        %2657 = vmatmul.mubr.bf16.gmra.mrb[0].mxu0 %v2592
        %v2658 = vpop.f32.mrb[0].mxu0
        %v2659 = vadd.f32 %v2502, %v2658
        %v2660 = vpop.f32.mrb[0].mxu0
        %v2661 = vadd.f32 %v2504, %v2660
        %v2662 = vpop.f32.mrb[0].mxu0
        %v2663 = vadd.f32 %v2506, %v2662
        %v2664 = vpop.f32.mrb[0].mxu0
        %v2665 = vadd.f32 %v2508, %v2664
        %2666 = vdwg.mxu0
        %v2667 = vld [vmem:[#allocation2 + $0x8] sm:$0xff]
        %v2668 = vld [vmem:[#allocation2 + $0x10] sm:$0xff]
        %v2669 = vld [vmem:[#allocation2 + $0x18] sm:$0xff]
        %v2670 = vld [vmem:[#allocation2 + $0x28] sm:$0xff]
        %v2671 = vld [vmem:[#allocation2 + $0x30] sm:$0xff]
        %v2672 = vld [vmem:[#allocation2 + $0x38] sm:$0xff]
        %v2673 = vld [vmem:[#allocation2 + $0x48] sm:$0xff]
        %v2674 = vld [vmem:[#allocation2 + $0x50] sm:$0xff]
        %v2675 = vld [vmem:[#allocation2 + $0x58] sm:$0xff]
        %v2676 = vld [vmem:[#allocation2 + $0x68] sm:$0xff]
        %v2677 = vld [vmem:[#allocation2 + $0x70] sm:$0xff]
        %v2678 = vld [vmem:[#allocation2 + $0x78] sm:$0xff]
        %s2679 = scalar_lea.vmem [#allocation7], 160
        %v2680 = vld [vmem:[%s2679] sm:$0xf]
        %v2681 = vld [vmem:[%s2679 + $0x4] sm:$0xf]
        %v2682 = vld [vmem:[%s2679 + $0x8] sm:$0xf]
        %v2683 = vld [vmem:[%s2679 + $0xc] sm:$0xf]
        %v2684 = vld [vmem:[%s2679 + $0x10] sm:$0xf]
        %v2685 = vld [vmem:[%s2679 + $0x14] sm:$0xf]
        %v2686 = vld [vmem:[%s2679 + $0x18] sm:$0xf]
        %v2687 = vld [vmem:[%s2679 + $0x1c] sm:$0xf]
        %v2696 = vunpack.c.l.b16 %v2680
        %v2697 = vunpack.c.l.b16 %v2681
        %v2698 = vunpack.c.l.b16 %v2682
        %v2699 = vunpack.c.l.b16 %v2683
        %v2700 = vunpack.c.l.b16 %v2684
        %v2701 = vunpack.c.l.b16 %v2685
        %v2702 = vunpack.c.l.b16 %v2686
        %v2703 = vunpack.c.l.b16 %v2687
        %v2704 = vpack.c.b16 %v2697, %v2696
        %v2705 = vpack.c.b16 %v2699, %v2698
        %v2706 = vpack.c.b16 %v2701, %v2700
        %v2707 = vpack.c.b16 %v2703, %v2702
        %2720 = vrot.lane.b32.xlu0 %v2667, 127
        %v2721 = vpop.permute.xlu0 %2720
        %2722 = vrot.lane.b32.xlu0 %v2668, 127
        %v2723 = vpop.permute.xlu0 %2722
        %2724 = vrot.lane.b32.xlu0 %v2669, 127
        %v2725 = vpop.permute.xlu0 %2724
        %2726 = vrot.lane.b32.xlu0 %v2670, 127
        %v2727 = vpop.permute.xlu0 %2726
        %2728 = vrot.lane.b32.xlu0 %v2671, 127
        %v2729 = vpop.permute.xlu0 %2728
        %2730 = vrot.lane.b32.xlu0 %v2672, 127
        %v2731 = vpop.permute.xlu0 %2730
        %2732 = vrot.lane.b32.xlu0 %v2673, 127
        %v2733 = vpop.permute.xlu0 %2732
        %2734 = vrot.lane.b32.xlu0 %v2674, 127
        %v2735 = vpop.permute.xlu0 %2734
        %2736 = vrot.lane.b32.xlu0 %v2675, 127
        %v2737 = vpop.permute.xlu0 %2736
        %2738 = vrot.lane.b32.xlu0 %v2676, 127
        %v2739 = vpop.permute.xlu0 %2738
        %2740 = vrot.lane.b32.xlu0 %v2677, 127
        %v2741 = vpop.permute.xlu0 %2740
        %2742 = vrot.lane.b32.xlu0 %v2678, 127
        %v2743 = vpop.permute.xlu0 %2742
        %v2744 = vsel %vm787, %v2721, %v2723
        %v2745 = vsel %vm787, %v2723, %v2725
        %v2746 = vsel %vm787, %v2727, %v2729
        %v2747 = vsel %vm787, %v2729, %v2731
        %v2748 = vsel %vm787, %v2733, %v2735
        %v2749 = vsel %vm787, %v2735, %v2737
        %v2750 = vsel %vm787, %v2739, %v2741
        %v2751 = vsel %vm787, %v2741, %v2743
        %v2761 = vsel %vm466, %v2704, 0
        %v2764 = vsel %vm466, %v2705, 0
        %v2767 = vsel %vm466, %v2706, 0
        %v2770 = vsel %vm466, %v2707, 0
        %2772 = vmatprep.subr.bf16.mxu0 %v2745
        %2773 = vmatpush1.bf16.msra.mxu0 %v2744
        %2774 = vmatprep.subr.bf16.mxu0 %v2747
        %2775 = vmatpush1.bf16.msra.mxu0 %v2746
        %2776 = vmatprep.subr.bf16.mxu0 %v2749
        %2777 = vmatpush1.bf16.msra.mxu0 %v2748
        %2778 = vmatprep.subr.bf16.mxu0 %v2751
        %2779 = vmatpush1.bf16.msra.mxu0 %v2750
        %2780 = vmatprep.subr.bf16.mxu0 0
        %2781 = vmatpush1.bf16.msra.mxu0 0
        %2782 = vmatprep.subr.bf16.mxu0 0
        %2783 = vmatpush1.bf16.msra.mxu0 0
        %2784 = vmatprep.subr.bf16.mxu0 0
        %2785 = vmatpush1.bf16.msra.mxu0 0
        %2786 = vmatprep.subr.bf16.mxu0 0
        %2787 = vmatpush1.bf16.msra.mxu0 0
        %2788 = vmatprep.subr.bf16.mxu0 0
        %2789 = vmatpush1.bf16.msra.mxu0 0
        %2790 = vmatprep.subr.bf16.mxu0 0
        %2791 = vmatpush1.bf16.msra.mxu0 0
        %2792 = vmatprep.subr.bf16.mxu0 0
        %2793 = vmatpush1.bf16.msra.mxu0 0
        %2794 = vmatprep.subr.bf16.mxu0 0
        %2795 = vmatpush1.bf16.msra.mxu0 0
        %2796 = vmatprep.subr.bf16.mxu0 0
        %2797 = vmatpush1.bf16.msra.mxu0 0
        %2798 = vmatprep.subr.bf16.mxu0 0
        %2799 = vmatpush1.bf16.msra.mxu0 0
        %2800 = vmatprep.subr.bf16.mxu0 0
        %2801 = vmatpush1.bf16.msra.mxu0 0
        %2802 = vmatprep.subr.bf16.mxu0 0
        %2803 = vmatpush1.bf16.msra.mxu0 0
        %2804 = vmatprep.mubr.bf16.mxu0 0
        %2805 = vmatmul.mubr.bf16.gmra.mrb[0].mxu0 %v2761
        %v2806 = vpop.f32.mrb[0].mxu0
        %v2807 = vadd.f32 0.0, %v2806
        %v2808 = vpop.f32.mrb[0].mxu0
        %v2809 = vadd.f32 0.0, %v2808
        %v2810 = vpop.f32.mrb[0].mxu0
        %v2811 = vadd.f32 0.0, %v2810
        %v2812 = vpop.f32.mrb[0].mxu0
        %v2813 = vadd.f32 0.0, %v2812
        %2814 = vmatprep.mubr.bf16.mxu0 0
        %2815 = vmatmul.mubr.bf16.gmra.mrb[0].mxu0 %v2764
        %v2816 = vpop.f32.mrb[0].mxu0
        %v2817 = vadd.f32 0.0, %v2816
        %v2818 = vpop.f32.mrb[0].mxu0
        %v2819 = vadd.f32 0.0, %v2818
        %v2820 = vpop.f32.mrb[0].mxu0
        %v2821 = vadd.f32 0.0, %v2820
        %v2822 = vpop.f32.mrb[0].mxu0
        %v2823 = vadd.f32 0.0, %v2822
        %2824 = vmatprep.mubr.bf16.mxu0 0
        %2825 = vmatmul.mubr.bf16.gmra.mrb[0].mxu0 %v2767
        %v2826 = vpop.f32.mrb[0].mxu0
        %v2827 = vadd.f32 0.0, %v2826
        %v2828 = vpop.f32.mrb[0].mxu0
        %v2829 = vadd.f32 0.0, %v2828
        %v2830 = vpop.f32.mrb[0].mxu0
        %v2831 = vadd.f32 0.0, %v2830
        %v2832 = vpop.f32.mrb[0].mxu0
        %v2833 = vadd.f32 0.0, %v2832
        %2834 = vmatprep.mubr.bf16.mxu0 0
        %2835 = vmatmul.mubr.bf16.gmra.mrb[0].mxu0 %v2770
        %v2836 = vpop.f32.mrb[0].mxu0
        %v2837 = vadd.f32 0.0, %v2836
        %v2838 = vpop.f32.mrb[0].mxu0
        %v2839 = vadd.f32 0.0, %v2838
        %v2840 = vpop.f32.mrb[0].mxu0
        %v2841 = vadd.f32 0.0, %v2840
        %v2842 = vpop.f32.mrb[0].mxu0
        %v2843 = vadd.f32 0.0, %v2842
        %2844 = vdwg.mxu0
        %v2845 = vadd.f32 %v2629, %v2807
        %v2846 = vadd.f32 %v2631, %v2809
        %v2847 = vadd.f32 %v2633, %v2811
        %v2848 = vadd.f32 %v2635, %v2813
        %v2849 = vadd.f32 %v2639, %v2817
        %v2850 = vadd.f32 %v2641, %v2819
        %v2851 = vadd.f32 %v2643, %v2821
        %v2852 = vadd.f32 %v2645, %v2823
        %v2853 = vadd.f32 %v2649, %v2827
        %v2854 = vadd.f32 %v2651, %v2829
        %v2855 = vadd.f32 %v2653, %v2831
        %v2856 = vadd.f32 %v2655, %v2833
        %v2857 = vadd.f32 %v2659, %v2837
        %v2858 = vadd.f32 %v2661, %v2839
        %v2859 = vadd.f32 %v2663, %v2841
        %v2860 = vadd.f32 %v2665, %v2843
        %s2861 = scalar_lea.vmem %s4, 64
        %v2862 = vld [vmem:[%s2861] sm:$0xff]
        %v2863 = vld [vmem:[%s2861 + $0x8] sm:$0xff]
        %v2864 = vld [vmem:[%s2861 + $0x10] sm:$0xff]
        %v2865 = vld [vmem:[%s2861 + $0x18] sm:$0xff]
        %v2866 = vld [vmem:[%s2861 + $0x20] sm:$0xff]
        %v2867 = vld [vmem:[%s2861 + $0x28] sm:$0xff]
        %v2868 = vld [vmem:[%s2861 + $0x30] sm:$0xff]
        %v2869 = vld [vmem:[%s2861 + $0x38] sm:$0xff]
        %2871 = vset.pattern.permute.xlu0 0
        %2872 = vperm.xlu0 %2871, %v2862
        %v2873 = vpop.permute.xlu0 %2872
        %2876 = vset.pattern.permute.xlu0 0
        %2877 = vperm.xlu0 %2876, %v2863
        %v2878 = vpop.permute.xlu0 %2877
        %2881 = vset.pattern.permute.xlu0 0
        %2882 = vperm.xlu0 %2881, %v2864
        %v2883 = vpop.permute.xlu0 %2882
        %2886 = vset.pattern.permute.xlu0 0
        %2887 = vperm.xlu0 %2886, %v2865
        %v2888 = vpop.permute.xlu0 %2887
        %2891 = vset.pattern.permute.xlu0 0
        %2892 = vperm.xlu0 %2891, %v2866
        %v2893 = vpop.permute.xlu0 %2892
        %2896 = vset.pattern.permute.xlu0 0
        %2897 = vperm.xlu0 %2896, %v2867
        %v2898 = vpop.permute.xlu0 %2897
        %2901 = vset.pattern.permute.xlu0 0
        %2902 = vperm.xlu0 %2901, %v2868
        %v2903 = vpop.permute.xlu0 %2902
        %2906 = vset.pattern.permute.xlu0 0
        %2907 = vperm.xlu0 %2906, %v2869
        %v2908 = vpop.permute.xlu0 %2907
        %v2910 = vadd.f32 %v2845, %v2873
        %v2911 = vadd.f32 %v2846, %v2873
        %v2912 = vadd.f32 %v2847, %v2878
        %v2913 = vadd.f32 %v2848, %v2878
        %v2914 = vadd.f32 %v2849, %v2883
        %v2915 = vadd.f32 %v2850, %v2883
        %v2916 = vadd.f32 %v2851, %v2888
        %v2917 = vadd.f32 %v2852, %v2888
        %v2918 = vadd.f32 %v2853, %v2893
        %v2919 = vadd.f32 %v2854, %v2893
        %v2920 = vadd.f32 %v2855, %v2898
        %v2921 = vadd.f32 %v2856, %v2898
        %v2922 = vadd.f32 %v2857, %v2903
        %v2923 = vadd.f32 %v2858, %v2903
        %v2924 = vadd.f32 %v2859, %v2908
        %v2925 = vadd.f32 %v2860, %v2908
        %v2926 = vld [vmem:[#allocation3] sm:$0xff]
        %v2927 = vld [vmem:[#allocation3 + $0x8] sm:$0xff]
        %v2928 = vld [vmem:[#allocation3 + $0x10] sm:$0xff]
        %v2929 = vld [vmem:[#allocation3 + $0x18] sm:$0xff]
        %v2930 = vld [vmem:[#allocation3 + $0x20] sm:$0xff]
        %v2931 = vld [vmem:[#allocation3 + $0x28] sm:$0xff]
        %v2932 = vld [vmem:[#allocation3 + $0x30] sm:$0xff]
        %v2933 = vld [vmem:[#allocation3 + $0x38] sm:$0xff]
        %v2934 = vld [vmem:[#allocation3 + $0x40] sm:$0xff]
        %v2935 = vld [vmem:[#allocation3 + $0x48] sm:$0xff]
        %v2936 = vld [vmem:[#allocation3 + $0x50] sm:$0xff]
        %v2937 = vld [vmem:[#allocation3 + $0x58] sm:$0xff]
        %v2938 = vld [vmem:[#allocation3 + $0x60] sm:$0xff]
        %v2939 = vld [vmem:[#allocation3 + $0x68] sm:$0xff]
        %v2940 = vld [vmem:[#allocation3 + $0x70] sm:$0xff]
        %v2941 = vld [vmem:[#allocation3 + $0x78] sm:$0xff]
        %v2942 = vadd.f32 %v2910, %v2926
        %v2943 = vadd.f32 %v2911, %v2927
        %v2944 = vadd.f32 %v2912, %v2928
        %v2945 = vadd.f32 %v2913, %v2929
        %v2946 = vadd.f32 %v2914, %v2930
        %v2947 = vadd.f32 %v2915, %v2931
        %v2948 = vadd.f32 %v2916, %v2932
        %v2949 = vadd.f32 %v2917, %v2933
        %v2950 = vadd.f32 %v2918, %v2934
        %v2951 = vadd.f32 %v2919, %v2935
        %v2952 = vadd.f32 %v2920, %v2936
        %v2953 = vadd.f32 %v2921, %v2937
        %v2954 = vadd.f32 %v2922, %v2938
        %v2955 = vadd.f32 %v2923, %v2939
        %v2956 = vadd.f32 %v2924, %v2940
        %v2957 = vadd.f32 %v2925, %v2941
        %2958 = vst [vmem:[#allocation3] sm:$0xff] %v2942
        %2959 = vst [vmem:[#allocation3 + $0x8] sm:$0xff] %v2943
        %2960 = vst [vmem:[#allocation3 + $0x10] sm:$0xff] %v2944
        %2961 = vst [vmem:[#allocation3 + $0x18] sm:$0xff] %v2945
        %2962 = vst [vmem:[#allocation3 + $0x20] sm:$0xff] %v2946
        %2963 = vst [vmem:[#allocation3 + $0x28] sm:$0xff] %v2947
        %2964 = vst [vmem:[#allocation3 + $0x30] sm:$0xff] %v2948
        %2965 = vst [vmem:[#allocation3 + $0x38] sm:$0xff] %v2949
        %2966 = vst [vmem:[#allocation3 + $0x40] sm:$0xff] %v2950
        %2967 = vst [vmem:[#allocation3 + $0x48] sm:$0xff] %v2951
        %2968 = vst [vmem:[#allocation3 + $0x50] sm:$0xff] %v2952
        %2969 = vst [vmem:[#allocation3 + $0x58] sm:$0xff] %v2953
        %2970 = vst [vmem:[#allocation3 + $0x60] sm:$0xff] %v2954
        %2971 = vst [vmem:[#allocation3 + $0x68] sm:$0xff] %v2955
        %2972 = vst [vmem:[#allocation3 + $0x70] sm:$0xff] %v2956
        %2973 = vst [vmem:[#allocation3 + $0x78] sm:$0xff] %v2957
        %v2974 = vld [vmem:[#allocation3] sm:$0xff]
        %v2975 = vld [vmem:[#allocation3 + $0x8] sm:$0xff]
        %v2976 = vld [vmem:[#allocation3 + $0x10] sm:$0xff]
        %v2977 = vld [vmem:[#allocation3 + $0x18] sm:$0xff]
        %v2978 = vld [vmem:[#allocation3 + $0x20] sm:$0xff]
        %v2979 = vld [vmem:[#allocation3 + $0x28] sm:$0xff]
        %v2980 = vld [vmem:[#allocation3 + $0x30] sm:$0xff]
        %v2981 = vld [vmem:[#allocation3 + $0x38] sm:$0xff]
        %v2982 = vld [vmem:[#allocation3 + $0x40] sm:$0xff]
        %v2983 = vld [vmem:[#allocation3 + $0x48] sm:$0xff]
        %v2984 = vld [vmem:[#allocation3 + $0x50] sm:$0xff]
        %v2985 = vld [vmem:[#allocation3 + $0x58] sm:$0xff]
        %v2986 = vld [vmem:[#allocation3 + $0x60] sm:$0xff]
        %v2987 = vld [vmem:[#allocation3 + $0x68] sm:$0xff]
        %v2988 = vld [vmem:[#allocation3 + $0x70] sm:$0xff]
        %v2989 = vld [vmem:[#allocation3 + $0x78] sm:$0xff]
        %vm2990 = vcmp.gt.f32.partialorder %v2974, 0.0
        %vm2991 = vcmp.gt.f32.partialorder %v2975, 0.0
        %vm2992 = vcmp.gt.f32.partialorder %v2976, 0.0
        %vm2993 = vcmp.gt.f32.partialorder %v2977, 0.0
        %vm2994 = vcmp.gt.f32.partialorder %v2978, 0.0
        %vm2995 = vcmp.gt.f32.partialorder %v2979, 0.0
        %vm2996 = vcmp.gt.f32.partialorder %v2980, 0.0
        %vm2997 = vcmp.gt.f32.partialorder %v2981, 0.0
        %vm2998 = vcmp.gt.f32.partialorder %v2982, 0.0
        %vm2999 = vcmp.gt.f32.partialorder %v2983, 0.0
        %vm3000 = vcmp.gt.f32.partialorder %v2984, 0.0
        %vm3001 = vcmp.gt.f32.partialorder %v2985, 0.0
        %vm3002 = vcmp.gt.f32.partialorder %v2986, 0.0
        %vm3003 = vcmp.gt.f32.partialorder %v2987, 0.0
        %vm3004 = vcmp.gt.f32.partialorder %v2988, 0.0
        %vm3005 = vcmp.gt.f32.partialorder %v2989, 0.0
        %v3006 = vmul.f32 %v2974, 0.1
        %v3007 = vmul.f32 %v2975, 0.1
        %v3008 = vmul.f32 %v2976, 0.1
        %v3009 = vmul.f32 %v2977, 0.1
        %v3010 = vmul.f32 %v2978, 0.1
        %v3011 = vmul.f32 %v2979, 0.1
        %v3012 = vmul.f32 %v2980, 0.1
        %v3013 = vmul.f32 %v2981, 0.1
        %v3014 = vmul.f32 %v2982, 0.1
        %v3015 = vmul.f32 %v2983, 0.1
        %v3016 = vmul.f32 %v2984, 0.1
        %v3017 = vmul.f32 %v2985, 0.1
        %v3018 = vmul.f32 %v2986, 0.1
        %v3019 = vmul.f32 %v2987, 0.1
        %v3020 = vmul.f32 %v2988, 0.1
        %v3021 = vmul.f32 %v2989, 0.1
        %v3022 = vsel %vm2990, %v2974, %v3006
        %v3023 = vsel %vm2991, %v2975, %v3007
        %v3024 = vsel %vm2992, %v2976, %v3008
        %v3025 = vsel %vm2993, %v2977, %v3009
        %v3026 = vsel %vm2994, %v2978, %v3010
        %v3027 = vsel %vm2995, %v2979, %v3011
        %v3028 = vsel %vm2996, %v2980, %v3012
        %v3029 = vsel %vm2997, %v2981, %v3013
        %v3030 = vsel %vm2998, %v2982, %v3014
        %v3031 = vsel %vm2999, %v2983, %v3015
        %v3032 = vsel %vm3000, %v2984, %v3016
        %v3033 = vsel %vm3001, %v2985, %v3017
        %v3034 = vsel %vm3002, %v2986, %v3018
        %v3035 = vsel %vm3003, %v2987, %v3019
        %v3036 = vsel %vm3004, %v2988, %v3020
        %v3037 = vsel %vm3005, %v2989, %v3021
        %v3038 = vpack.c.bf16 %v3024, %v3022
        %v3039 = vpack.c.bf16 %v3025, %v3023
        %v3040 = vpack.c.bf16 %v3028, %v3026
        %v3041 = vpack.c.bf16 %v3029, %v3027
        %v3042 = vpack.c.bf16 %v3032, %v3030
        %v3043 = vpack.c.bf16 %v3033, %v3031
        %v3044 = vpack.c.bf16 %v3036, %v3034
        %v3045 = vpack.c.bf16 %v3037, %v3035
        %3046 = vst [vmem:[#allocation2 + $0x8] sm:$0xff] %v3038
        %3047 = vst [vmem:[#allocation2 + $0x10] sm:$0xff] %v3039
        %3048 = vst [vmem:[#allocation2 + $0x28] sm:$0xff] %v3040
        %3049 = vst [vmem:[#allocation2 + $0x30] sm:$0xff] %v3041
        %3050 = vst [vmem:[#allocation2 + $0x48] sm:$0xff] %v3042
        %3051 = vst [vmem:[#allocation2 + $0x50] sm:$0xff] %v3043
        %3052 = vst [vmem:[#allocation2 + $0x68] sm:$0xff] %v3044
        %3053 = vst [vmem:[#allocation2 + $0x70] sm:$0xff] %v3045
        // Predicated region
        $region81: #{tpu_custom_call.1} parent=39 // pred_check
          %p3054 = pneg %p399
        $region82: #{tpu_custom_call.1} parent=39 // pred_check_branch
          %3056 = sbr.rel (%p3054) target = $region84
        $region83: #{tpu_custom_call.1} parent=39 // pred_region
          %vm3057 = vcmask 97280
          %3058 = vst.msk [vmem:[#allocation2 + $0x8] sm:$0xff] %vm3057, 0
          %3059 = vst.msk [vmem:[#allocation2 + $0x28] sm:$0xff] %vm3057, 0
          %3060 = vst.msk [vmem:[#allocation2 + $0x48] sm:$0xff] %vm3057, 0
          %3061 = vst.msk [vmem:[#allocation2 + $0x68] sm:$0xff] %vm3057, 0
        $region84: #{tpu_custom_call.1} parent=39 // pred_fallthru
          _
        // Predicated region
        $region85: #{tpu_custom_call.1} parent=39 // pred_check
          %p3062 = pneg %p408
        $region86: #{tpu_custom_call.1} parent=39 // pred_check_branch
          %3064 = sbr.rel (%p3062) target = $region88
        $region87: #{tpu_custom_call.1} parent=39 // pred_region
          %vm3065 = vcmask 1047648
          %3066 = vst.msk [vmem:[#allocation2 + $0x10] sm:$0xff] %vm3065, 0
          %3067 = vst.msk [vmem:[#allocation2 + $0x30] sm:$0xff] %vm3065, 0
          %3068 = vst.msk [vmem:[#allocation2 + $0x50] sm:$0xff] %vm3065, 0
          %3069 = vst.msk [vmem:[#allocation2 + $0x70] sm:$0xff] %vm3065, 0
        $region88: #{tpu_custom_call.1} parent=39 // pred_fallthru
          _
        %v3070 = vld [vmem:[#allocation2] sm:$0xff]
        %v3071 = vld [vmem:[#allocation2 + $0x8] sm:$0xff]
        %v3072 = vld [vmem:[#allocation2 + $0x10] sm:$0xff]
        %v3073 = vld [vmem:[#allocation2 + $0x20] sm:$0xff]
        %v3074 = vld [vmem:[#allocation2 + $0x28] sm:$0xff]
        %v3075 = vld [vmem:[#allocation2 + $0x30] sm:$0xff]
        %v3076 = vld [vmem:[#allocation2 + $0x40] sm:$0xff]
        %v3077 = vld [vmem:[#allocation2 + $0x48] sm:$0xff]
        %v3078 = vld [vmem:[#allocation2 + $0x50] sm:$0xff]
        %v3079 = vld [vmem:[#allocation2 + $0x60] sm:$0xff]
        %v3080 = vld [vmem:[#allocation2 + $0x68] sm:$0xff]
        %v3081 = vld [vmem:[#allocation2 + $0x70] sm:$0xff]
        %s3082 = scalar_lea.vmem %s1, 192
        %v3083 = vld [vmem:[%s3082] sm:$0xf]
        %v3084 = vld [vmem:[%s3082 + $0x4] sm:$0xf]
        %v3085 = vld [vmem:[%s3082 + $0x8] sm:$0xf]
        %v3086 = vld [vmem:[%s3082 + $0xc] sm:$0xf]
        %v3087 = vld [vmem:[%s3082 + $0x10] sm:$0xf]
        %v3088 = vld [vmem:[%s3082 + $0x14] sm:$0xf]
        %v3089 = vld [vmem:[%s3082 + $0x18] sm:$0xf]
        %v3090 = vld [vmem:[%s3082 + $0x1c] sm:$0xf]
        %s3091 = scalar_lea.vmem %s1, 224
        %v3092 = vld [vmem:[%s3091] sm:$0xf]
        %v3093 = vld [vmem:[%s3091 + $0x4] sm:$0xf]
        %v3094 = vld [vmem:[%s3091 + $0x8] sm:$0xf]
        %v3095 = vld [vmem:[%s3091 + $0xc] sm:$0xf]
        %v3096 = vld [vmem:[%s3091 + $0x10] sm:$0xf]
        %v3097 = vld [vmem:[%s3091 + $0x14] sm:$0xf]
        %v3098 = vld [vmem:[%s3091 + $0x18] sm:$0xf]
        %v3099 = vld [vmem:[%s3091 + $0x1c] sm:$0xf]
        %v3108 = vunpack.c.l.b16 %v3092
        %v3109 = vunpack.c.l.b16 %v3093
        %v3110 = vunpack.c.l.b16 %v3094
        %v3111 = vunpack.c.l.b16 %v3095
        %v3112 = vunpack.c.l.b16 %v3096
        %v3113 = vunpack.c.l.b16 %v3097
        %v3114 = vunpack.c.l.b16 %v3098
        %v3115 = vunpack.c.l.b16 %v3099
        %v3116 = vpack.c.b16 %v3109, %v3108
        %v3117 = vpack.c.b16 %v3111, %v3110
        %v3118 = vpack.c.b16 %v3113, %v3112
        %v3119 = vpack.c.b16 %v3115, %v3114
        %v3121 = vsel %vm466, %v3116, 0
        %v3124 = vsel %vm466, %v3117, 0
        %v3127 = vsel %vm466, %v3118, 0
        %v3130 = vsel %vm466, %v3119, 0
        %3132 = vmatprep.subr.bf16.mxu0 %v3072
        %3133 = vmatpush1.bf16.msra.mxu0 %v3071
        %3134 = vmatprep.subr.bf16.mxu0 %v3075
        %3135 = vmatpush1.bf16.msra.mxu0 %v3074
        %3136 = vmatprep.subr.bf16.mxu0 %v3078
        %3137 = vmatpush1.bf16.msra.mxu0 %v3077
        %3138 = vmatprep.subr.bf16.mxu0 %v3081
        %3139 = vmatpush1.bf16.msra.mxu0 %v3080
        %3140 = vmatprep.subr.bf16.mxu0 0
        %3141 = vmatpush1.bf16.msra.mxu0 0
        %3142 = vmatprep.subr.bf16.mxu0 0
        %3143 = vmatpush1.bf16.msra.mxu0 0
        %3144 = vmatprep.subr.bf16.mxu0 0
        %3145 = vmatpush1.bf16.msra.mxu0 0
        %3146 = vmatprep.subr.bf16.mxu0 0
        %3147 = vmatpush1.bf16.msra.mxu0 0
        %3148 = vmatprep.subr.bf16.mxu0 0
        %3149 = vmatpush1.bf16.msra.mxu0 0
        %3150 = vmatprep.subr.bf16.mxu0 0
        %3151 = vmatpush1.bf16.msra.mxu0 0
        %3152 = vmatprep.subr.bf16.mxu0 0
        %3153 = vmatpush1.bf16.msra.mxu0 0
        %3154 = vmatprep.subr.bf16.mxu0 0
        %3155 = vmatpush1.bf16.msra.mxu0 0
        %3156 = vmatprep.subr.bf16.mxu0 0
        %3157 = vmatpush1.bf16.msra.mxu0 0
        %3158 = vmatprep.subr.bf16.mxu0 0
        %3159 = vmatpush1.bf16.msra.mxu0 0
        %3160 = vmatprep.subr.bf16.mxu0 0
        %3161 = vmatpush1.bf16.msra.mxu0 0
        %3162 = vmatprep.subr.bf16.mxu0 0
        %3163 = vmatpush1.bf16.msra.mxu0 0
        %3164 = vmatprep.mubr.bf16.mxu0 0
        %3165 = vmatmul.mubr.bf16.gmra.mrb[0].mxu0 %v3121
        %v3166 = vpop.f32.mrb[0].mxu0
        %v3167 = vadd.f32 0.0, %v3166
        %v3168 = vpop.f32.mrb[0].mxu0
        %v3169 = vadd.f32 0.0, %v3168
        %v3170 = vpop.f32.mrb[0].mxu0
        %v3171 = vadd.f32 0.0, %v3170
        %v3172 = vpop.f32.mrb[0].mxu0
        %v3173 = vadd.f32 0.0, %v3172
        %3174 = vmatprep.mubr.bf16.mxu0 0
        %3175 = vmatmul.mubr.bf16.gmra.mrb[0].mxu0 %v3124
        %v3176 = vpop.f32.mrb[0].mxu0
        %v3177 = vadd.f32 0.0, %v3176
        %v3178 = vpop.f32.mrb[0].mxu0
        %v3179 = vadd.f32 0.0, %v3178
        %v3180 = vpop.f32.mrb[0].mxu0
        %v3181 = vadd.f32 0.0, %v3180
        %v3182 = vpop.f32.mrb[0].mxu0
        %v3183 = vadd.f32 0.0, %v3182
        %3184 = vmatprep.mubr.bf16.mxu0 0
        %3185 = vmatmul.mubr.bf16.gmra.mrb[0].mxu0 %v3127
        %v3186 = vpop.f32.mrb[0].mxu0
        %v3187 = vadd.f32 0.0, %v3186
        %v3188 = vpop.f32.mrb[0].mxu0
        %v3189 = vadd.f32 0.0, %v3188
        %v3190 = vpop.f32.mrb[0].mxu0
        %v3191 = vadd.f32 0.0, %v3190
        %v3192 = vpop.f32.mrb[0].mxu0
        %v3193 = vadd.f32 0.0, %v3192
        %3194 = vmatprep.mubr.bf16.mxu0 0
        %3195 = vmatmul.mubr.bf16.gmra.mrb[0].mxu0 %v3130
        %v3196 = vpop.f32.mrb[0].mxu0
        %v3197 = vadd.f32 0.0, %v3196
        %v3198 = vpop.f32.mrb[0].mxu0
        %v3199 = vadd.f32 0.0, %v3198
        %v3200 = vpop.f32.mrb[0].mxu0
        %v3201 = vadd.f32 0.0, %v3200
        %v3202 = vpop.f32.mrb[0].mxu0
        %v3203 = vadd.f32 0.0, %v3202
        %3204 = vdwg.mxu0
        %v3213 = vunpack.c.l.b16 %v3083
        %v3214 = vunpack.c.l.b16 %v3084
        %v3215 = vunpack.c.l.b16 %v3085
        %v3216 = vunpack.c.l.b16 %v3086
        %v3217 = vunpack.c.l.b16 %v3087
        %v3218 = vunpack.c.l.b16 %v3088
        %v3219 = vunpack.c.l.b16 %v3089
        %v3220 = vunpack.c.l.b16 %v3090
        %v3221 = vpack.c.b16 %v3214, %v3213
        %v3222 = vpack.c.b16 %v3216, %v3215
        %v3223 = vpack.c.b16 %v3218, %v3217
        %v3224 = vpack.c.b16 %v3220, %v3219
        %3237 = vrot.lane.b32.xlu0 %v3070, 5
        %v3238 = vpop.permute.xlu0 %3237
        %3239 = vrot.lane.b32.xlu0 %v3071, 5
        %v3240 = vpop.permute.xlu0 %3239
        %3241 = vrot.lane.b32.xlu0 %v3072, 5
        %v3242 = vpop.permute.xlu0 %3241
        %3243 = vrot.lane.b32.xlu0 %v3073, 5
        %v3244 = vpop.permute.xlu0 %3243
        %3245 = vrot.lane.b32.xlu0 %v3074, 5
        %v3246 = vpop.permute.xlu0 %3245
        %3247 = vrot.lane.b32.xlu0 %v3075, 5
        %v3248 = vpop.permute.xlu0 %3247
        %3249 = vrot.lane.b32.xlu0 %v3076, 5
        %v3250 = vpop.permute.xlu0 %3249
        %3251 = vrot.lane.b32.xlu0 %v3077, 5
        %v3252 = vpop.permute.xlu0 %3251
        %3253 = vrot.lane.b32.xlu0 %v3078, 5
        %v3254 = vpop.permute.xlu0 %3253
        %3255 = vrot.lane.b32.xlu0 %v3079, 5
        %v3256 = vpop.permute.xlu0 %3255
        %3257 = vrot.lane.b32.xlu0 %v3080, 5
        %v3258 = vpop.permute.xlu0 %3257
        %3259 = vrot.lane.b32.xlu0 %v3081, 5
        %v3260 = vpop.permute.xlu0 %3259
        %vm3261 = vcmask 39936
        %v3262 = vsel %vm3261, %v3238, %v3240
        %v3263 = vsel %vm3261, %v3240, %v3242
        %v3264 = vsel %vm3261, %v3244, %v3246
        %v3265 = vsel %vm3261, %v3246, %v3248
        %v3266 = vsel %vm3261, %v3250, %v3252
        %v3267 = vsel %vm3261, %v3252, %v3254
        %v3268 = vsel %vm3261, %v3256, %v3258
        %v3269 = vsel %vm3261, %v3258, %v3260
        %v3279 = vsel %vm466, %v3221, 0
        %v3282 = vsel %vm466, %v3222, 0
        %v3285 = vsel %vm466, %v3223, 0
        %v3288 = vsel %vm466, %v3224, 0
        %3290 = vmatprep.subr.bf16.mxu0 %v3263
        %3291 = vmatpush1.bf16.msra.mxu0 %v3262
        %3292 = vmatprep.subr.bf16.mxu0 %v3265
        %3293 = vmatpush1.bf16.msra.mxu0 %v3264
        %3294 = vmatprep.subr.bf16.mxu0 %v3267
        %3295 = vmatpush1.bf16.msra.mxu0 %v3266
        %3296 = vmatprep.subr.bf16.mxu0 %v3269
        %3297 = vmatpush1.bf16.msra.mxu0 %v3268
        %3298 = vmatprep.subr.bf16.mxu0 0
        %3299 = vmatpush1.bf16.msra.mxu0 0
        %3300 = vmatprep.subr.bf16.mxu0 0
        %3301 = vmatpush1.bf16.msra.mxu0 0
        %3302 = vmatprep.subr.bf16.mxu0 0
        %3303 = vmatpush1.bf16.msra.mxu0 0
        %3304 = vmatprep.subr.bf16.mxu0 0
        %3305 = vmatpush1.bf16.msra.mxu0 0
        %3306 = vmatprep.subr.bf16.mxu0 0
        %3307 = vmatpush1.bf16.msra.mxu0 0
        %3308 = vmatprep.subr.bf16.mxu0 0
        %3309 = vmatpush1.bf16.msra.mxu0 0
        %3310 = vmatprep.subr.bf16.mxu0 0
        %3311 = vmatpush1.bf16.msra.mxu0 0
        %3312 = vmatprep.subr.bf16.mxu0 0
        %3313 = vmatpush1.bf16.msra.mxu0 0
        %3314 = vmatprep.subr.bf16.mxu0 0
        %3315 = vmatpush1.bf16.msra.mxu0 0
        %3316 = vmatprep.subr.bf16.mxu0 0
        %3317 = vmatpush1.bf16.msra.mxu0 0
        %3318 = vmatprep.subr.bf16.mxu0 0
        %3319 = vmatpush1.bf16.msra.mxu0 0
        %3320 = vmatprep.subr.bf16.mxu0 0
        %3321 = vmatpush1.bf16.msra.mxu0 0
        %3322 = vmatprep.mubr.bf16.mxu0 0
        %3323 = vmatmul.mubr.bf16.gmra.mrb[0].mxu0 %v3279
        %v3324 = vpop.f32.mrb[0].mxu0
        %v3325 = vadd.f32 %v3167, %v3324
        %v3326 = vpop.f32.mrb[0].mxu0
        %v3327 = vadd.f32 %v3169, %v3326
        %v3328 = vpop.f32.mrb[0].mxu0
        %v3329 = vadd.f32 %v3171, %v3328
        %v3330 = vpop.f32.mrb[0].mxu0
        %v3331 = vadd.f32 %v3173, %v3330
        %3332 = vmatprep.mubr.bf16.mxu0 0
        %3333 = vmatmul.mubr.bf16.gmra.mrb[0].mxu0 %v3282
        %v3334 = vpop.f32.mrb[0].mxu0
        %v3335 = vadd.f32 %v3177, %v3334
        %v3336 = vpop.f32.mrb[0].mxu0
        %v3337 = vadd.f32 %v3179, %v3336
        %v3338 = vpop.f32.mrb[0].mxu0
        %v3339 = vadd.f32 %v3181, %v3338
        %v3340 = vpop.f32.mrb[0].mxu0
        %v3341 = vadd.f32 %v3183, %v3340
        %3342 = vmatprep.mubr.bf16.mxu0 0
        %3343 = vmatmul.mubr.bf16.gmra.mrb[0].mxu0 %v3285
        %v3344 = vpop.f32.mrb[0].mxu0
        %v3345 = vadd.f32 %v3187, %v3344
        %v3346 = vpop.f32.mrb[0].mxu0
        %v3347 = vadd.f32 %v3189, %v3346
        %v3348 = vpop.f32.mrb[0].mxu0
        %v3349 = vadd.f32 %v3191, %v3348
        %v3350 = vpop.f32.mrb[0].mxu0
        %v3351 = vadd.f32 %v3193, %v3350
        %3352 = vmatprep.mubr.bf16.mxu0 0
        %3353 = vmatmul.mubr.bf16.gmra.mrb[0].mxu0 %v3288
        %v3354 = vpop.f32.mrb[0].mxu0
        %v3355 = vadd.f32 %v3197, %v3354
        %v3356 = vpop.f32.mrb[0].mxu0
        %v3357 = vadd.f32 %v3199, %v3356
        %v3358 = vpop.f32.mrb[0].mxu0
        %v3359 = vadd.f32 %v3201, %v3358
        %v3360 = vpop.f32.mrb[0].mxu0
        %v3361 = vadd.f32 %v3203, %v3360
        %3362 = vdwg.mxu0
        %v3363 = vld [vmem:[#allocation2 + $0x8] sm:$0xff]
        %v3364 = vld [vmem:[#allocation2 + $0x10] sm:$0xff]
        %v3365 = vld [vmem:[#allocation2 + $0x18] sm:$0xff]
        %v3366 = vld [vmem:[#allocation2 + $0x28] sm:$0xff]
        %v3367 = vld [vmem:[#allocation2 + $0x30] sm:$0xff]
        %v3368 = vld [vmem:[#allocation2 + $0x38] sm:$0xff]
        %v3369 = vld [vmem:[#allocation2 + $0x48] sm:$0xff]
        %v3370 = vld [vmem:[#allocation2 + $0x50] sm:$0xff]
        %v3371 = vld [vmem:[#allocation2 + $0x58] sm:$0xff]
        %v3372 = vld [vmem:[#allocation2 + $0x68] sm:$0xff]
        %v3373 = vld [vmem:[#allocation2 + $0x70] sm:$0xff]
        %v3374 = vld [vmem:[#allocation2 + $0x78] sm:$0xff]
        %s3375 = scalar_lea.vmem %s1, 256
        %v3376 = vld [vmem:[%s3375] sm:$0xf]
        %v3377 = vld [vmem:[%s3375 + $0x4] sm:$0xf]
        %v3378 = vld [vmem:[%s3375 + $0x8] sm:$0xf]
        %v3379 = vld [vmem:[%s3375 + $0xc] sm:$0xf]
        %v3380 = vld [vmem:[%s3375 + $0x10] sm:$0xf]
        %v3381 = vld [vmem:[%s3375 + $0x14] sm:$0xf]
        %v3382 = vld [vmem:[%s3375 + $0x18] sm:$0xf]
        %v3383 = vld [vmem:[%s3375 + $0x1c] sm:$0xf]
        %v3392 = vunpack.c.l.b16 %v3376
        %v3393 = vunpack.c.l.b16 %v3377
        %v3394 = vunpack.c.l.b16 %v3378
        %v3395 = vunpack.c.l.b16 %v3379
        %v3396 = vunpack.c.l.b16 %v3380
        %v3397 = vunpack.c.l.b16 %v3381
        %v3398 = vunpack.c.l.b16 %v3382
        %v3399 = vunpack.c.l.b16 %v3383
        %v3400 = vpack.c.b16 %v3393, %v3392
        %v3401 = vpack.c.b16 %v3395, %v3394
        %v3402 = vpack.c.b16 %v3397, %v3396
        %v3403 = vpack.c.b16 %v3399, %v3398
        %3416 = vrot.lane.b32.xlu0 %v3363, 123
        %v3417 = vpop.permute.xlu0 %3416
        %3418 = vrot.lane.b32.xlu0 %v3364, 123
        %v3419 = vpop.permute.xlu0 %3418
        %3420 = vrot.lane.b32.xlu0 %v3365, 123
        %v3421 = vpop.permute.xlu0 %3420
        %3422 = vrot.lane.b32.xlu0 %v3366, 123
        %v3423 = vpop.permute.xlu0 %3422
        %3424 = vrot.lane.b32.xlu0 %v3367, 123
        %v3425 = vpop.permute.xlu0 %3424
        %3426 = vrot.lane.b32.xlu0 %v3368, 123
        %v3427 = vpop.permute.xlu0 %3426
        %3428 = vrot.lane.b32.xlu0 %v3369, 123
        %v3429 = vpop.permute.xlu0 %3428
        %3430 = vrot.lane.b32.xlu0 %v3370, 123
        %v3431 = vpop.permute.xlu0 %3430
        %3432 = vrot.lane.b32.xlu0 %v3371, 123
        %v3433 = vpop.permute.xlu0 %3432
        %3434 = vrot.lane.b32.xlu0 %v3372, 123
        %v3435 = vpop.permute.xlu0 %3434
        %3436 = vrot.lane.b32.xlu0 %v3373, 123
        %v3437 = vpop.permute.xlu0 %3436
        %3438 = vrot.lane.b32.xlu0 %v3374, 123
        %v3439 = vpop.permute.xlu0 %3438
        %vm3440 = vcmask 1006592
        %v3441 = vsel %vm3440, %v3417, %v3419
        %v3442 = vsel %vm3440, %v3419, %v3421
        %v3443 = vsel %vm3440, %v3423, %v3425
        %v3444 = vsel %vm3440, %v3425, %v3427
        %v3445 = vsel %vm3440, %v3429, %v3431
        %v3446 = vsel %vm3440, %v3431, %v3433
        %v3447 = vsel %vm3440, %v3435, %v3437
        %v3448 = vsel %vm3440, %v3437, %v3439
        %v3458 = vsel %vm466, %v3400, 0
        %v3461 = vsel %vm466, %v3401, 0
        %v3464 = vsel %vm466, %v3402, 0
        %v3467 = vsel %vm466, %v3403, 0
        %3469 = vmatprep.subr.bf16.mxu0 %v3442
        %3470 = vmatpush1.bf16.msra.mxu0 %v3441
        %3471 = vmatprep.subr.bf16.mxu0 %v3444
        %3472 = vmatpush1.bf16.msra.mxu0 %v3443
        %3473 = vmatprep.subr.bf16.mxu0 %v3446
        %3474 = vmatpush1.bf16.msra.mxu0 %v3445
        %3475 = vmatprep.subr.bf16.mxu0 %v3448
        %3476 = vmatpush1.bf16.msra.mxu0 %v3447
        %3477 = vmatprep.subr.bf16.mxu0 0
        %3478 = vmatpush1.bf16.msra.mxu0 0
        %3479 = vmatprep.subr.bf16.mxu0 0
        %3480 = vmatpush1.bf16.msra.mxu0 0
        %3481 = vmatprep.subr.bf16.mxu0 0
        %3482 = vmatpush1.bf16.msra.mxu0 0
        %3483 = vmatprep.subr.bf16.mxu0 0
        %3484 = vmatpush1.bf16.msra.mxu0 0
        %3485 = vmatprep.subr.bf16.mxu0 0
        %3486 = vmatpush1.bf16.msra.mxu0 0
        %3487 = vmatprep.subr.bf16.mxu0 0
        %3488 = vmatpush1.bf16.msra.mxu0 0
        %3489 = vmatprep.subr.bf16.mxu0 0
        %3490 = vmatpush1.bf16.msra.mxu0 0
        %3491 = vmatprep.subr.bf16.mxu0 0
        %3492 = vmatpush1.bf16.msra.mxu0 0
        %3493 = vmatprep.subr.bf16.mxu0 0
        %3494 = vmatpush1.bf16.msra.mxu0 0
        %3495 = vmatprep.subr.bf16.mxu0 0
        %3496 = vmatpush1.bf16.msra.mxu0 0
        %3497 = vmatprep.subr.bf16.mxu0 0
        %3498 = vmatpush1.bf16.msra.mxu0 0
        %3499 = vmatprep.subr.bf16.mxu0 0
        %3500 = vmatpush1.bf16.msra.mxu0 0
        %3501 = vmatprep.mubr.bf16.mxu0 0
        %3502 = vmatmul.mubr.bf16.gmra.mrb[0].mxu0 %v3458
        %v3503 = vpop.f32.mrb[0].mxu0
        %v3504 = vadd.f32 0.0, %v3503
        %v3505 = vpop.f32.mrb[0].mxu0
        %v3506 = vadd.f32 0.0, %v3505
        %v3507 = vpop.f32.mrb[0].mxu0
        %v3508 = vadd.f32 0.0, %v3507
        %v3509 = vpop.f32.mrb[0].mxu0
        %v3510 = vadd.f32 0.0, %v3509
        %3511 = vmatprep.mubr.bf16.mxu0 0
        %3512 = vmatmul.mubr.bf16.gmra.mrb[0].mxu0 %v3461
        %v3513 = vpop.f32.mrb[0].mxu0
        %v3514 = vadd.f32 0.0, %v3513
        %v3515 = vpop.f32.mrb[0].mxu0
        %v3516 = vadd.f32 0.0, %v3515
        %v3517 = vpop.f32.mrb[0].mxu0
        %v3518 = vadd.f32 0.0, %v3517
        %v3519 = vpop.f32.mrb[0].mxu0
        %v3520 = vadd.f32 0.0, %v3519
        %3521 = vmatprep.mubr.bf16.mxu0 0
        %3522 = vmatmul.mubr.bf16.gmra.mrb[0].mxu0 %v3464
        %v3523 = vpop.f32.mrb[0].mxu0
        %v3524 = vadd.f32 0.0, %v3523
        %v3525 = vpop.f32.mrb[0].mxu0
        %v3526 = vadd.f32 0.0, %v3525
        %v3527 = vpop.f32.mrb[0].mxu0
        %v3528 = vadd.f32 0.0, %v3527
        %v3529 = vpop.f32.mrb[0].mxu0
        %v3530 = vadd.f32 0.0, %v3529
        %3531 = vmatprep.mubr.bf16.mxu0 0
        %3532 = vmatmul.mubr.bf16.gmra.mrb[0].mxu0 %v3467
        %v3533 = vpop.f32.mrb[0].mxu0
        %v3534 = vadd.f32 0.0, %v3533
        %v3535 = vpop.f32.mrb[0].mxu0
        %v3536 = vadd.f32 0.0, %v3535
        %v3537 = vpop.f32.mrb[0].mxu0
        %v3538 = vadd.f32 0.0, %v3537
        %v3539 = vpop.f32.mrb[0].mxu0
        %v3540 = vadd.f32 0.0, %v3539
        %3541 = vdwg.mxu0
        %v3542 = vadd.f32 %v3325, %v3504
        %v3543 = vadd.f32 %v3327, %v3506
        %v3544 = vadd.f32 %v3329, %v3508
        %v3545 = vadd.f32 %v3331, %v3510
        %v3546 = vadd.f32 %v3335, %v3514
        %v3547 = vadd.f32 %v3337, %v3516
        %v3548 = vadd.f32 %v3339, %v3518
        %v3549 = vadd.f32 %v3341, %v3520
        %v3550 = vadd.f32 %v3345, %v3524
        %v3551 = vadd.f32 %v3347, %v3526
        %v3552 = vadd.f32 %v3349, %v3528
        %v3553 = vadd.f32 %v3351, %v3530
        %v3554 = vadd.f32 %v3355, %v3534
        %v3555 = vadd.f32 %v3357, %v3536
        %v3556 = vadd.f32 %v3359, %v3538
        %v3557 = vadd.f32 %v3361, %v3540
        %s3558 = scalar_lea.vmem %s2, 128
        %v3559 = vld [vmem:[%s3558] sm:$0xff]
        %v3560 = vld [vmem:[%s3558 + $0x8] sm:$0xff]
        %v3561 = vld [vmem:[%s3558 + $0x10] sm:$0xff]
        %v3562 = vld [vmem:[%s3558 + $0x18] sm:$0xff]
        %v3563 = vld [vmem:[%s3558 + $0x20] sm:$0xff]
        %v3564 = vld [vmem:[%s3558 + $0x28] sm:$0xff]
        %v3565 = vld [vmem:[%s3558 + $0x30] sm:$0xff]
        %v3566 = vld [vmem:[%s3558 + $0x38] sm:$0xff]
        %3568 = vset.pattern.permute.xlu0 0
        %3569 = vperm.xlu0 %3568, %v3559
        %v3570 = vpop.permute.xlu0 %3569
        %3573 = vset.pattern.permute.xlu0 0
        %3574 = vperm.xlu0 %3573, %v3560
        %v3575 = vpop.permute.xlu0 %3574
        %3578 = vset.pattern.permute.xlu0 0
        %3579 = vperm.xlu0 %3578, %v3561
        %v3580 = vpop.permute.xlu0 %3579
        %3583 = vset.pattern.permute.xlu0 0
        %3584 = vperm.xlu0 %3583, %v3562
        %v3585 = vpop.permute.xlu0 %3584
        %3588 = vset.pattern.permute.xlu0 0
        %3589 = vperm.xlu0 %3588, %v3563
        %v3590 = vpop.permute.xlu0 %3589
        %3593 = vset.pattern.permute.xlu0 0
        %3594 = vperm.xlu0 %3593, %v3564
        %v3595 = vpop.permute.xlu0 %3594
        %3598 = vset.pattern.permute.xlu0 0
        %3599 = vperm.xlu0 %3598, %v3565
        %v3600 = vpop.permute.xlu0 %3599
        %3603 = vset.pattern.permute.xlu0 0
        %3604 = vperm.xlu0 %3603, %v3566
        %v3605 = vpop.permute.xlu0 %3604
        %v3607 = vadd.f32 %v3542, %v3570
        %v3608 = vadd.f32 %v3543, %v3570
        %v3609 = vadd.f32 %v3544, %v3575
        %v3610 = vadd.f32 %v3545, %v3575
        %v3611 = vadd.f32 %v3546, %v3580
        %v3612 = vadd.f32 %v3547, %v3580
        %v3613 = vadd.f32 %v3548, %v3585
        %v3614 = vadd.f32 %v3549, %v3585
        %v3615 = vadd.f32 %v3550, %v3590
        %v3616 = vadd.f32 %v3551, %v3590
        %v3617 = vadd.f32 %v3552, %v3595
        %v3618 = vadd.f32 %v3553, %v3595
        %v3619 = vadd.f32 %v3554, %v3600
        %v3620 = vadd.f32 %v3555, %v3600
        %v3621 = vadd.f32 %v3556, %v3605
        %v3622 = vadd.f32 %v3557, %v3605
        %vm3623 = vcmp.gt.f32.partialorder %v3607, 0.0
        %vm3624 = vcmp.gt.f32.partialorder %v3608, 0.0
        %vm3625 = vcmp.gt.f32.partialorder %v3609, 0.0
        %vm3626 = vcmp.gt.f32.partialorder %v3610, 0.0
        %vm3627 = vcmp.gt.f32.partialorder %v3611, 0.0
        %vm3628 = vcmp.gt.f32.partialorder %v3612, 0.0
        %vm3629 = vcmp.gt.f32.partialorder %v3613, 0.0
        %vm3630 = vcmp.gt.f32.partialorder %v3614, 0.0
        %vm3631 = vcmp.gt.f32.partialorder %v3615, 0.0
        %vm3632 = vcmp.gt.f32.partialorder %v3616, 0.0
        %vm3633 = vcmp.gt.f32.partialorder %v3617, 0.0
        %vm3634 = vcmp.gt.f32.partialorder %v3618, 0.0
        %vm3635 = vcmp.gt.f32.partialorder %v3619, 0.0
        %vm3636 = vcmp.gt.f32.partialorder %v3620, 0.0
        %vm3637 = vcmp.gt.f32.partialorder %v3621, 0.0
        %vm3638 = vcmp.gt.f32.partialorder %v3622, 0.0
        %v3639 = vmul.f32 %v3607, 0.1
        %v3640 = vmul.f32 %v3608, 0.1
        %v3641 = vmul.f32 %v3609, 0.1
        %v3642 = vmul.f32 %v3610, 0.1
        %v3643 = vmul.f32 %v3611, 0.1
        %v3644 = vmul.f32 %v3612, 0.1
        %v3645 = vmul.f32 %v3613, 0.1
        %v3646 = vmul.f32 %v3614, 0.1
        %v3647 = vmul.f32 %v3615, 0.1
        %v3648 = vmul.f32 %v3616, 0.1
        %v3649 = vmul.f32 %v3617, 0.1
        %v3650 = vmul.f32 %v3618, 0.1
        %v3651 = vmul.f32 %v3619, 0.1
        %v3652 = vmul.f32 %v3620, 0.1
        %v3653 = vmul.f32 %v3621, 0.1
        %v3654 = vmul.f32 %v3622, 0.1
        %v3655 = vsel %vm3623, %v3607, %v3639
        %v3656 = vsel %vm3624, %v3608, %v3640
        %v3657 = vsel %vm3625, %v3609, %v3641
        %v3658 = vsel %vm3626, %v3610, %v3642
        %v3659 = vsel %vm3627, %v3611, %v3643
        %v3660 = vsel %vm3628, %v3612, %v3644
        %v3661 = vsel %vm3629, %v3613, %v3645
        %v3662 = vsel %vm3630, %v3614, %v3646
        %v3663 = vsel %vm3631, %v3615, %v3647
        %v3664 = vsel %vm3632, %v3616, %v3648
        %v3665 = vsel %vm3633, %v3617, %v3649
        %v3666 = vsel %vm3634, %v3618, %v3650
        %v3667 = vsel %vm3635, %v3619, %v3651
        %v3668 = vsel %vm3636, %v3620, %v3652
        %v3669 = vsel %vm3637, %v3621, %v3653
        %v3670 = vsel %vm3638, %v3622, %v3654
        %v3671 = vpack.c.bf16 %v3657, %v3655
        %v3672 = vpack.c.bf16 %v3658, %v3656
        %v3673 = vpack.c.bf16 %v3661, %v3659
        %v3674 = vpack.c.bf16 %v3662, %v3660
        %v3675 = vpack.c.bf16 %v3665, %v3663
        %v3676 = vpack.c.bf16 %v3666, %v3664
        %v3677 = vpack.c.bf16 %v3669, %v3667
        %v3678 = vpack.c.bf16 %v3670, %v3668
        %3679 = vst [vmem:[#allocation2 + $0x8] sm:$0xff] %v3671
        %3680 = vst [vmem:[#allocation2 + $0x10] sm:$0xff] %v3672
        %3681 = vst [vmem:[#allocation2 + $0x28] sm:$0xff] %v3673
        %3682 = vst [vmem:[#allocation2 + $0x30] sm:$0xff] %v3674
        %3683 = vst [vmem:[#allocation2 + $0x48] sm:$0xff] %v3675
        %3684 = vst [vmem:[#allocation2 + $0x50] sm:$0xff] %v3676
        %3685 = vst [vmem:[#allocation2 + $0x68] sm:$0xff] %v3677
        %3686 = vst [vmem:[#allocation2 + $0x70] sm:$0xff] %v3678
        // Predicated region
        $region89: #{tpu_custom_call.1} parent=39 // pred_check
          %p3687 = pneg %p399
        $region90: #{tpu_custom_call.1} parent=39 // pred_check_branch
          %3689 = sbr.rel (%p3687) target = $region92
        $region91: #{tpu_custom_call.1} parent=39 // pred_region
          %vm3690 = vcmask 97280
          %3691 = vst.msk [vmem:[#allocation2 + $0x8] sm:$0xff] %vm3690, 0
          %3692 = vst.msk [vmem:[#allocation2 + $0x28] sm:$0xff] %vm3690, 0
          %3693 = vst.msk [vmem:[#allocation2 + $0x48] sm:$0xff] %vm3690, 0
          %3694 = vst.msk [vmem:[#allocation2 + $0x68] sm:$0xff] %vm3690, 0
        $region92: #{tpu_custom_call.1} parent=39 // pred_fallthru
          _
        // Predicated region
        $region93: #{tpu_custom_call.1} parent=39 // pred_check
          %p3695 = pneg %p408
        $region94: #{tpu_custom_call.1} parent=39 // pred_check_branch
          %3697 = sbr.rel (%p3695) target = $region96
        $region95: #{tpu_custom_call.1} parent=39 // pred_region
          %vm3698 = vcmask 1047648
          %3699 = vst.msk [vmem:[#allocation2 + $0x10] sm:$0xff] %vm3698, 0
          %3700 = vst.msk [vmem:[#allocation2 + $0x30] sm:$0xff] %vm3698, 0
          %3701 = vst.msk [vmem:[#allocation2 + $0x50] sm:$0xff] %vm3698, 0
          %3702 = vst.msk [vmem:[#allocation2 + $0x70] sm:$0xff] %vm3698, 0
        $region96: #{tpu_custom_call.1} parent=39 // pred_fallthru
          _
        %v3703 = vld [vmem:[#allocation2] sm:$0xff]
        %v3704 = vld [vmem:[#allocation2 + $0x8] sm:$0xff]
        %v3705 = vld [vmem:[#allocation2 + $0x10] sm:$0xff]
        %v3706 = vld [vmem:[#allocation2 + $0x20] sm:$0xff]
        %v3707 = vld [vmem:[#allocation2 + $0x28] sm:$0xff]
        %v3708 = vld [vmem:[#allocation2 + $0x30] sm:$0xff]
        %v3709 = vld [vmem:[#allocation2 + $0x40] sm:$0xff]
        %v3710 = vld [vmem:[#allocation2 + $0x48] sm:$0xff]
        %v3711 = vld [vmem:[#allocation2 + $0x50] sm:$0xff]
        %v3712 = vld [vmem:[#allocation2 + $0x60] sm:$0xff]
        %v3713 = vld [vmem:[#allocation2 + $0x68] sm:$0xff]
        %v3714 = vld [vmem:[#allocation2 + $0x70] sm:$0xff]
        %s3715 = scalar_lea.vmem [#allocation7], 192
        %v3716 = vld [vmem:[%s3715] sm:$0xf]
        %v3717 = vld [vmem:[%s3715 + $0x4] sm:$0xf]
        %v3718 = vld [vmem:[%s3715 + $0x8] sm:$0xf]
        %v3719 = vld [vmem:[%s3715 + $0xc] sm:$0xf]
        %v3720 = vld [vmem:[%s3715 + $0x10] sm:$0xf]
        %v3721 = vld [vmem:[%s3715 + $0x14] sm:$0xf]
        %v3722 = vld [vmem:[%s3715 + $0x18] sm:$0xf]
        %v3723 = vld [vmem:[%s3715 + $0x1c] sm:$0xf]
        %s3724 = scalar_lea.vmem [#allocation7], 224
        %v3725 = vld [vmem:[%s3724] sm:$0xf]
        %v3726 = vld [vmem:[%s3724 + $0x4] sm:$0xf]
        %v3727 = vld [vmem:[%s3724 + $0x8] sm:$0xf]
        %v3728 = vld [vmem:[%s3724 + $0xc] sm:$0xf]
        %v3729 = vld [vmem:[%s3724 + $0x10] sm:$0xf]
        %v3730 = vld [vmem:[%s3724 + $0x14] sm:$0xf]
        %v3731 = vld [vmem:[%s3724 + $0x18] sm:$0xf]
        %v3732 = vld [vmem:[%s3724 + $0x1c] sm:$0xf]
        %v3741 = vunpack.c.l.b16 %v3725
        %v3742 = vunpack.c.l.b16 %v3726
        %v3743 = vunpack.c.l.b16 %v3727
        %v3744 = vunpack.c.l.b16 %v3728
        %v3745 = vunpack.c.l.b16 %v3729
        %v3746 = vunpack.c.l.b16 %v3730
        %v3747 = vunpack.c.l.b16 %v3731
        %v3748 = vunpack.c.l.b16 %v3732
        %v3749 = vpack.c.b16 %v3742, %v3741
        %v3750 = vpack.c.b16 %v3744, %v3743
        %v3751 = vpack.c.b16 %v3746, %v3745
        %v3752 = vpack.c.b16 %v3748, %v3747
        %v3754 = vsel %vm466, %v3749, 0
        %v3757 = vsel %vm466, %v3750, 0
        %v3760 = vsel %vm466, %v3751, 0
        %v3763 = vsel %vm466, %v3752, 0
        %3765 = vmatprep.subr.bf16.mxu0 %v3705
        %3766 = vmatpush1.bf16.msra.mxu0 %v3704
        %3767 = vmatprep.subr.bf16.mxu0 %v3708
        %3768 = vmatpush1.bf16.msra.mxu0 %v3707
        %3769 = vmatprep.subr.bf16.mxu0 %v3711
        %3770 = vmatpush1.bf16.msra.mxu0 %v3710
        %3771 = vmatprep.subr.bf16.mxu0 %v3714
        %3772 = vmatpush1.bf16.msra.mxu0 %v3713
        %3773 = vmatprep.subr.bf16.mxu0 0
        %3774 = vmatpush1.bf16.msra.mxu0 0
        %3775 = vmatprep.subr.bf16.mxu0 0
        %3776 = vmatpush1.bf16.msra.mxu0 0
        %3777 = vmatprep.subr.bf16.mxu0 0
        %3778 = vmatpush1.bf16.msra.mxu0 0
        %3779 = vmatprep.subr.bf16.mxu0 0
        %3780 = vmatpush1.bf16.msra.mxu0 0
        %3781 = vmatprep.subr.bf16.mxu0 0
        %3782 = vmatpush1.bf16.msra.mxu0 0
        %3783 = vmatprep.subr.bf16.mxu0 0
        %3784 = vmatpush1.bf16.msra.mxu0 0
        %3785 = vmatprep.subr.bf16.mxu0 0
        %3786 = vmatpush1.bf16.msra.mxu0 0
        %3787 = vmatprep.subr.bf16.mxu0 0
        %3788 = vmatpush1.bf16.msra.mxu0 0
        %3789 = vmatprep.subr.bf16.mxu0 0
        %3790 = vmatpush1.bf16.msra.mxu0 0
        %3791 = vmatprep.subr.bf16.mxu0 0
        %3792 = vmatpush1.bf16.msra.mxu0 0
        %3793 = vmatprep.subr.bf16.mxu0 0
        %3794 = vmatpush1.bf16.msra.mxu0 0
        %3795 = vmatprep.subr.bf16.mxu0 0
        %3796 = vmatpush1.bf16.msra.mxu0 0
        %3797 = vmatprep.mubr.bf16.mxu0 0
        %3798 = vmatmul.mubr.bf16.gmra.mrb[0].mxu0 %v3754
        %v3799 = vpop.f32.mrb[0].mxu0
        %v3800 = vadd.f32 0.0, %v3799
        %v3801 = vpop.f32.mrb[0].mxu0
        %v3802 = vadd.f32 0.0, %v3801
        %v3803 = vpop.f32.mrb[0].mxu0
        %v3804 = vadd.f32 0.0, %v3803
        %v3805 = vpop.f32.mrb[0].mxu0
        %v3806 = vadd.f32 0.0, %v3805
        %3807 = vmatprep.mubr.bf16.mxu0 0
        %3808 = vmatmul.mubr.bf16.gmra.mrb[0].mxu0 %v3757
        %v3809 = vpop.f32.mrb[0].mxu0
        %v3810 = vadd.f32 0.0, %v3809
        %v3811 = vpop.f32.mrb[0].mxu0
        %v3812 = vadd.f32 0.0, %v3811
        %v3813 = vpop.f32.mrb[0].mxu0
        %v3814 = vadd.f32 0.0, %v3813
        %v3815 = vpop.f32.mrb[0].mxu0
        %v3816 = vadd.f32 0.0, %v3815
        %3817 = vmatprep.mubr.bf16.mxu0 0
        %3818 = vmatmul.mubr.bf16.gmra.mrb[0].mxu0 %v3760
        %v3819 = vpop.f32.mrb[0].mxu0
        %v3820 = vadd.f32 0.0, %v3819
        %v3821 = vpop.f32.mrb[0].mxu0
        %v3822 = vadd.f32 0.0, %v3821
        %v3823 = vpop.f32.mrb[0].mxu0
        %v3824 = vadd.f32 0.0, %v3823
        %v3825 = vpop.f32.mrb[0].mxu0
        %v3826 = vadd.f32 0.0, %v3825
        %3827 = vmatprep.mubr.bf16.mxu0 0
        %3828 = vmatmul.mubr.bf16.gmra.mrb[0].mxu0 %v3763
        %v3829 = vpop.f32.mrb[0].mxu0
        %v3830 = vadd.f32 0.0, %v3829
        %v3831 = vpop.f32.mrb[0].mxu0
        %v3832 = vadd.f32 0.0, %v3831
        %v3833 = vpop.f32.mrb[0].mxu0
        %v3834 = vadd.f32 0.0, %v3833
        %v3835 = vpop.f32.mrb[0].mxu0
        %v3836 = vadd.f32 0.0, %v3835
        %3837 = vdwg.mxu0
        %v3846 = vunpack.c.l.b16 %v3716
        %v3847 = vunpack.c.l.b16 %v3717
        %v3848 = vunpack.c.l.b16 %v3718
        %v3849 = vunpack.c.l.b16 %v3719
        %v3850 = vunpack.c.l.b16 %v3720
        %v3851 = vunpack.c.l.b16 %v3721
        %v3852 = vunpack.c.l.b16 %v3722
        %v3853 = vunpack.c.l.b16 %v3723
        %v3854 = vpack.c.b16 %v3847, %v3846
        %v3855 = vpack.c.b16 %v3849, %v3848
        %v3856 = vpack.c.b16 %v3851, %v3850
        %v3857 = vpack.c.b16 %v3853, %v3852
        %3870 = vrot.lane.b32.xlu0 %v3703, 1
        %v3871 = vpop.permute.xlu0 %3870
        %3872 = vrot.lane.b32.xlu0 %v3704, 1
        %v3873 = vpop.permute.xlu0 %3872
        %3874 = vrot.lane.b32.xlu0 %v3705, 1
        %v3875 = vpop.permute.xlu0 %3874
        %3876 = vrot.lane.b32.xlu0 %v3706, 1
        %v3877 = vpop.permute.xlu0 %3876
        %3878 = vrot.lane.b32.xlu0 %v3707, 1
        %v3879 = vpop.permute.xlu0 %3878
        %3880 = vrot.lane.b32.xlu0 %v3708, 1
        %v3881 = vpop.permute.xlu0 %3880
        %3882 = vrot.lane.b32.xlu0 %v3709, 1
        %v3883 = vpop.permute.xlu0 %3882
        %3884 = vrot.lane.b32.xlu0 %v3710, 1
        %v3885 = vpop.permute.xlu0 %3884
        %3886 = vrot.lane.b32.xlu0 %v3711, 1
        %v3887 = vpop.permute.xlu0 %3886
        %3888 = vrot.lane.b32.xlu0 %v3712, 1
        %v3889 = vpop.permute.xlu0 %3888
        %3890 = vrot.lane.b32.xlu0 %v3713, 1
        %v3891 = vpop.permute.xlu0 %3890
        %3892 = vrot.lane.b32.xlu0 %v3714, 1
        %v3893 = vpop.permute.xlu0 %3892
        %v3894 = vsel %vm608, %v3871, %v3873
        %v3895 = vsel %vm608, %v3873, %v3875
        %v3896 = vsel %vm608, %v3877, %v3879
        %v3897 = vsel %vm608, %v3879, %v3881
        %v3898 = vsel %vm608, %v3883, %v3885
        %v3899 = vsel %vm608, %v3885, %v3887
        %v3900 = vsel %vm608, %v3889, %v3891
        %v3901 = vsel %vm608, %v3891, %v3893
        %v3911 = vsel %vm466, %v3854, 0
        %v3914 = vsel %vm466, %v3855, 0
        %v3917 = vsel %vm466, %v3856, 0
        %v3920 = vsel %vm466, %v3857, 0
        %3922 = vmatprep.subr.bf16.mxu0 %v3895
        %3923 = vmatpush1.bf16.msra.mxu0 %v3894
        %3924 = vmatprep.subr.bf16.mxu0 %v3897
        %3925 = vmatpush1.bf16.msra.mxu0 %v3896
        %3926 = vmatprep.subr.bf16.mxu0 %v3899
        %3927 = vmatpush1.bf16.msra.mxu0 %v3898
        %3928 = vmatprep.subr.bf16.mxu0 %v3901
        %3929 = vmatpush1.bf16.msra.mxu0 %v3900
        %3930 = vmatprep.subr.bf16.mxu0 0
        %3931 = vmatpush1.bf16.msra.mxu0 0
        %3932 = vmatprep.subr.bf16.mxu0 0
        %3933 = vmatpush1.bf16.msra.mxu0 0
        %3934 = vmatprep.subr.bf16.mxu0 0
        %3935 = vmatpush1.bf16.msra.mxu0 0
        %3936 = vmatprep.subr.bf16.mxu0 0
        %3937 = vmatpush1.bf16.msra.mxu0 0
        %3938 = vmatprep.subr.bf16.mxu0 0
        %3939 = vmatpush1.bf16.msra.mxu0 0
        %3940 = vmatprep.subr.bf16.mxu0 0
        %3941 = vmatpush1.bf16.msra.mxu0 0
        %3942 = vmatprep.subr.bf16.mxu0 0
        %3943 = vmatpush1.bf16.msra.mxu0 0
        %3944 = vmatprep.subr.bf16.mxu0 0
        %3945 = vmatpush1.bf16.msra.mxu0 0
        %3946 = vmatprep.subr.bf16.mxu0 0
        %3947 = vmatpush1.bf16.msra.mxu0 0
        %3948 = vmatprep.subr.bf16.mxu0 0
        %3949 = vmatpush1.bf16.msra.mxu0 0
        %3950 = vmatprep.subr.bf16.mxu0 0
        %3951 = vmatpush1.bf16.msra.mxu0 0
        %3952 = vmatprep.subr.bf16.mxu0 0
        %3953 = vmatpush1.bf16.msra.mxu0 0
        %3954 = vmatprep.mubr.bf16.mxu0 0
        %3955 = vmatmul.mubr.bf16.gmra.mrb[0].mxu0 %v3911
        %v3956 = vpop.f32.mrb[0].mxu0
        %v3957 = vadd.f32 %v3800, %v3956
        %v3958 = vpop.f32.mrb[0].mxu0
        %v3959 = vadd.f32 %v3802, %v3958
        %v3960 = vpop.f32.mrb[0].mxu0
        %v3961 = vadd.f32 %v3804, %v3960
        %v3962 = vpop.f32.mrb[0].mxu0
        %v3963 = vadd.f32 %v3806, %v3962
        %3964 = vmatprep.mubr.bf16.mxu0 0
        %3965 = vmatmul.mubr.bf16.gmra.mrb[0].mxu0 %v3914
        %v3966 = vpop.f32.mrb[0].mxu0
        %v3967 = vadd.f32 %v3810, %v3966
        %v3968 = vpop.f32.mrb[0].mxu0
        %v3969 = vadd.f32 %v3812, %v3968
        %v3970 = vpop.f32.mrb[0].mxu0
        %v3971 = vadd.f32 %v3814, %v3970
        %v3972 = vpop.f32.mrb[0].mxu0
        %v3973 = vadd.f32 %v3816, %v3972
        %3974 = vmatprep.mubr.bf16.mxu0 0
        %3975 = vmatmul.mubr.bf16.gmra.mrb[0].mxu0 %v3917
        %v3976 = vpop.f32.mrb[0].mxu0
        %v3977 = vadd.f32 %v3820, %v3976
        %v3978 = vpop.f32.mrb[0].mxu0
        %v3979 = vadd.f32 %v3822, %v3978
        %v3980 = vpop.f32.mrb[0].mxu0
        %v3981 = vadd.f32 %v3824, %v3980
        %v3982 = vpop.f32.mrb[0].mxu0
        %v3983 = vadd.f32 %v3826, %v3982
        %3984 = vmatprep.mubr.bf16.mxu0 0
        %3985 = vmatmul.mubr.bf16.gmra.mrb[0].mxu0 %v3920
        %v3986 = vpop.f32.mrb[0].mxu0
        %v3987 = vadd.f32 %v3830, %v3986
        %v3988 = vpop.f32.mrb[0].mxu0
        %v3989 = vadd.f32 %v3832, %v3988
        %v3990 = vpop.f32.mrb[0].mxu0
        %v3991 = vadd.f32 %v3834, %v3990
        %v3992 = vpop.f32.mrb[0].mxu0
        %v3993 = vadd.f32 %v3836, %v3992
        %3994 = vdwg.mxu0
        %v3995 = vld [vmem:[#allocation2 + $0x8] sm:$0xff]
        %v3996 = vld [vmem:[#allocation2 + $0x10] sm:$0xff]
        %v3997 = vld [vmem:[#allocation2 + $0x18] sm:$0xff]
        %v3998 = vld [vmem:[#allocation2 + $0x28] sm:$0xff]
        %v3999 = vld [vmem:[#allocation2 + $0x30] sm:$0xff]
        %v4000 = vld [vmem:[#allocation2 + $0x38] sm:$0xff]
        %v4001 = vld [vmem:[#allocation2 + $0x48] sm:$0xff]
        %v4002 = vld [vmem:[#allocation2 + $0x50] sm:$0xff]
        %v4003 = vld [vmem:[#allocation2 + $0x58] sm:$0xff]
        %v4004 = vld [vmem:[#allocation2 + $0x68] sm:$0xff]
        %v4005 = vld [vmem:[#allocation2 + $0x70] sm:$0xff]
        %v4006 = vld [vmem:[#allocation2 + $0x78] sm:$0xff]
        %s4007 = scalar_lea.vmem [#allocation7], 256
        %v4008 = vld [vmem:[%s4007] sm:$0xf]
        %v4009 = vld [vmem:[%s4007 + $0x4] sm:$0xf]
        %v4010 = vld [vmem:[%s4007 + $0x8] sm:$0xf]
        %v4011 = vld [vmem:[%s4007 + $0xc] sm:$0xf]
        %v4012 = vld [vmem:[%s4007 + $0x10] sm:$0xf]
        %v4013 = vld [vmem:[%s4007 + $0x14] sm:$0xf]
        %v4014 = vld [vmem:[%s4007 + $0x18] sm:$0xf]
        %v4015 = vld [vmem:[%s4007 + $0x1c] sm:$0xf]
        %v4024 = vunpack.c.l.b16 %v4008
        %v4025 = vunpack.c.l.b16 %v4009
        %v4026 = vunpack.c.l.b16 %v4010
        %v4027 = vunpack.c.l.b16 %v4011
        %v4028 = vunpack.c.l.b16 %v4012
        %v4029 = vunpack.c.l.b16 %v4013
        %v4030 = vunpack.c.l.b16 %v4014
        %v4031 = vunpack.c.l.b16 %v4015
        %v4032 = vpack.c.b16 %v4025, %v4024
        %v4033 = vpack.c.b16 %v4027, %v4026
        %v4034 = vpack.c.b16 %v4029, %v4028
        %v4035 = vpack.c.b16 %v4031, %v4030
        %4048 = vrot.lane.b32.xlu0 %v3995, 127
        %v4049 = vpop.permute.xlu0 %4048
        %4050 = vrot.lane.b32.xlu0 %v3996, 127
        %v4051 = vpop.permute.xlu0 %4050
        %4052 = vrot.lane.b32.xlu0 %v3997, 127
        %v4053 = vpop.permute.xlu0 %4052
        %4054 = vrot.lane.b32.xlu0 %v3998, 127
        %v4055 = vpop.permute.xlu0 %4054
        %4056 = vrot.lane.b32.xlu0 %v3999, 127
        %v4057 = vpop.permute.xlu0 %4056
        %4058 = vrot.lane.b32.xlu0 %v4000, 127
        %v4059 = vpop.permute.xlu0 %4058
        %4060 = vrot.lane.b32.xlu0 %v4001, 127
        %v4061 = vpop.permute.xlu0 %4060
        %4062 = vrot.lane.b32.xlu0 %v4002, 127
        %v4063 = vpop.permute.xlu0 %4062
        %4064 = vrot.lane.b32.xlu0 %v4003, 127
        %v4065 = vpop.permute.xlu0 %4064
        %4066 = vrot.lane.b32.xlu0 %v4004, 127
        %v4067 = vpop.permute.xlu0 %4066
        %4068 = vrot.lane.b32.xlu0 %v4005, 127
        %v4069 = vpop.permute.xlu0 %4068
        %4070 = vrot.lane.b32.xlu0 %v4006, 127
        %v4071 = vpop.permute.xlu0 %4070
        %v4072 = vsel %vm787, %v4049, %v4051
        %v4073 = vsel %vm787, %v4051, %v4053
        %v4074 = vsel %vm787, %v4055, %v4057
        %v4075 = vsel %vm787, %v4057, %v4059
        %v4076 = vsel %vm787, %v4061, %v4063
        %v4077 = vsel %vm787, %v4063, %v4065
        %v4078 = vsel %vm787, %v4067, %v4069
        %v4079 = vsel %vm787, %v4069, %v4071
        %v4089 = vsel %vm466, %v4032, 0
        %v4092 = vsel %vm466, %v4033, 0
        %v4095 = vsel %vm466, %v4034, 0
        %v4098 = vsel %vm466, %v4035, 0
        %4100 = vmatprep.subr.bf16.mxu0 %v4073
        %4101 = vmatpush1.bf16.msra.mxu0 %v4072
        %4102 = vmatprep.subr.bf16.mxu0 %v4075
        %4103 = vmatpush1.bf16.msra.mxu0 %v4074
        %4104 = vmatprep.subr.bf16.mxu0 %v4077
        %4105 = vmatpush1.bf16.msra.mxu0 %v4076
        %4106 = vmatprep.subr.bf16.mxu0 %v4079
        %4107 = vmatpush1.bf16.msra.mxu0 %v4078
        %4108 = vmatprep.subr.bf16.mxu0 0
        %4109 = vmatpush1.bf16.msra.mxu0 0
        %4110 = vmatprep.subr.bf16.mxu0 0
        %4111 = vmatpush1.bf16.msra.mxu0 0
        %4112 = vmatprep.subr.bf16.mxu0 0
        %4113 = vmatpush1.bf16.msra.mxu0 0
        %4114 = vmatprep.subr.bf16.mxu0 0
        %4115 = vmatpush1.bf16.msra.mxu0 0
        %4116 = vmatprep.subr.bf16.mxu0 0
        %4117 = vmatpush1.bf16.msra.mxu0 0
        %4118 = vmatprep.subr.bf16.mxu0 0
        %4119 = vmatpush1.bf16.msra.mxu0 0
        %4120 = vmatprep.subr.bf16.mxu0 0
        %4121 = vmatpush1.bf16.msra.mxu0 0
        %4122 = vmatprep.subr.bf16.mxu0 0
        %4123 = vmatpush1.bf16.msra.mxu0 0
        %4124 = vmatprep.subr.bf16.mxu0 0
        %4125 = vmatpush1.bf16.msra.mxu0 0
        %4126 = vmatprep.subr.bf16.mxu0 0
        %4127 = vmatpush1.bf16.msra.mxu0 0
        %4128 = vmatprep.subr.bf16.mxu0 0
        %4129 = vmatpush1.bf16.msra.mxu0 0
        %4130 = vmatprep.subr.bf16.mxu0 0
        %4131 = vmatpush1.bf16.msra.mxu0 0
        %4132 = vmatprep.mubr.bf16.mxu0 0
        %4133 = vmatmul.mubr.bf16.gmra.mrb[0].mxu0 %v4089
        %v4134 = vpop.f32.mrb[0].mxu0
        %v4135 = vadd.f32 0.0, %v4134
        %v4136 = vpop.f32.mrb[0].mxu0
        %v4137 = vadd.f32 0.0, %v4136
        %v4138 = vpop.f32.mrb[0].mxu0
        %v4139 = vadd.f32 0.0, %v4138
        %v4140 = vpop.f32.mrb[0].mxu0
        %v4141 = vadd.f32 0.0, %v4140
        %4142 = vmatprep.mubr.bf16.mxu0 0
        %4143 = vmatmul.mubr.bf16.gmra.mrb[0].mxu0 %v4092
        %v4144 = vpop.f32.mrb[0].mxu0
        %v4145 = vadd.f32 0.0, %v4144
        %v4146 = vpop.f32.mrb[0].mxu0
        %v4147 = vadd.f32 0.0, %v4146
        %v4148 = vpop.f32.mrb[0].mxu0
        %v4149 = vadd.f32 0.0, %v4148
        %v4150 = vpop.f32.mrb[0].mxu0
        %v4151 = vadd.f32 0.0, %v4150
        %4152 = vmatprep.mubr.bf16.mxu0 0
        %4153 = vmatmul.mubr.bf16.gmra.mrb[0].mxu0 %v4095
        %v4154 = vpop.f32.mrb[0].mxu0
        %v4155 = vadd.f32 0.0, %v4154
        %v4156 = vpop.f32.mrb[0].mxu0
        %v4157 = vadd.f32 0.0, %v4156
        %v4158 = vpop.f32.mrb[0].mxu0
        %v4159 = vadd.f32 0.0, %v4158
        %v4160 = vpop.f32.mrb[0].mxu0
        %v4161 = vadd.f32 0.0, %v4160
        %4162 = vmatprep.mubr.bf16.mxu0 0
        %4163 = vmatmul.mubr.bf16.gmra.mrb[0].mxu0 %v4098
        %v4164 = vpop.f32.mrb[0].mxu0
        %v4165 = vadd.f32 0.0, %v4164
        %v4166 = vpop.f32.mrb[0].mxu0
        %v4167 = vadd.f32 0.0, %v4166
        %v4168 = vpop.f32.mrb[0].mxu0
        %v4169 = vadd.f32 0.0, %v4168
        %v4170 = vpop.f32.mrb[0].mxu0
        %v4171 = vadd.f32 0.0, %v4170
        %4172 = vdwg.mxu0
        %v4173 = vadd.f32 %v3957, %v4135
        %v4174 = vadd.f32 %v3959, %v4137
        %v4175 = vadd.f32 %v3961, %v4139
        %v4176 = vadd.f32 %v3963, %v4141
        %v4177 = vadd.f32 %v3967, %v4145
        %v4178 = vadd.f32 %v3969, %v4147
        %v4179 = vadd.f32 %v3971, %v4149
        %v4180 = vadd.f32 %v3973, %v4151
        %v4181 = vadd.f32 %v3977, %v4155
        %v4182 = vadd.f32 %v3979, %v4157
        %v4183 = vadd.f32 %v3981, %v4159
        %v4184 = vadd.f32 %v3983, %v4161
        %v4185 = vadd.f32 %v3987, %v4165
        %v4186 = vadd.f32 %v3989, %v4167
        %v4187 = vadd.f32 %v3991, %v4169
        %v4188 = vadd.f32 %v3993, %v4171
        %s4189 = scalar_lea.vmem %s4, 128
        %v4190 = vld [vmem:[%s4189] sm:$0xff]
        %v4191 = vld [vmem:[%s4189 + $0x8] sm:$0xff]
        %v4192 = vld [vmem:[%s4189 + $0x10] sm:$0xff]
        %v4193 = vld [vmem:[%s4189 + $0x18] sm:$0xff]
        %v4194 = vld [vmem:[%s4189 + $0x20] sm:$0xff]
        %v4195 = vld [vmem:[%s4189 + $0x28] sm:$0xff]
        %v4196 = vld [vmem:[%s4189 + $0x30] sm:$0xff]
        %v4197 = vld [vmem:[%s4189 + $0x38] sm:$0xff]
        %4199 = vset.pattern.permute.xlu0 0
        %4200 = vperm.xlu0 %4199, %v4190
        %v4201 = vpop.permute.xlu0 %4200
        %4204 = vset.pattern.permute.xlu0 0
        %4205 = vperm.xlu0 %4204, %v4191
        %v4206 = vpop.permute.xlu0 %4205
        %4209 = vset.pattern.permute.xlu0 0
        %4210 = vperm.xlu0 %4209, %v4192
        %v4211 = vpop.permute.xlu0 %4210
        %4214 = vset.pattern.permute.xlu0 0
        %4215 = vperm.xlu0 %4214, %v4193
        %v4216 = vpop.permute.xlu0 %4215
        %4219 = vset.pattern.permute.xlu0 0
        %4220 = vperm.xlu0 %4219, %v4194
        %v4221 = vpop.permute.xlu0 %4220
        %4224 = vset.pattern.permute.xlu0 0
        %4225 = vperm.xlu0 %4224, %v4195
        %v4226 = vpop.permute.xlu0 %4225
        %4229 = vset.pattern.permute.xlu0 0
        %4230 = vperm.xlu0 %4229, %v4196
        %v4231 = vpop.permute.xlu0 %4230
        %4234 = vset.pattern.permute.xlu0 0
        %4235 = vperm.xlu0 %4234, %v4197
        %v4236 = vpop.permute.xlu0 %4235
        %v4238 = vadd.f32 %v4173, %v4201
        %v4239 = vadd.f32 %v4174, %v4201
        %v4240 = vadd.f32 %v4175, %v4206
        %v4241 = vadd.f32 %v4176, %v4206
        %v4242 = vadd.f32 %v4177, %v4211
        %v4243 = vadd.f32 %v4178, %v4211
        %v4244 = vadd.f32 %v4179, %v4216
        %v4245 = vadd.f32 %v4180, %v4216
        %v4246 = vadd.f32 %v4181, %v4221
        %v4247 = vadd.f32 %v4182, %v4221
        %v4248 = vadd.f32 %v4183, %v4226
        %v4249 = vadd.f32 %v4184, %v4226
        %v4250 = vadd.f32 %v4185, %v4231
        %v4251 = vadd.f32 %v4186, %v4231
        %v4252 = vadd.f32 %v4187, %v4236
        %v4253 = vadd.f32 %v4188, %v4236
        %v4254 = vld [vmem:[#allocation3] sm:$0xff]
        %v4255 = vld [vmem:[#allocation3 + $0x8] sm:$0xff]
        %v4256 = vld [vmem:[#allocation3 + $0x10] sm:$0xff]
        %v4257 = vld [vmem:[#allocation3 + $0x18] sm:$0xff]
        %v4258 = vld [vmem:[#allocation3 + $0x20] sm:$0xff]
        %v4259 = vld [vmem:[#allocation3 + $0x28] sm:$0xff]
        %v4260 = vld [vmem:[#allocation3 + $0x30] sm:$0xff]
        %v4261 = vld [vmem:[#allocation3 + $0x38] sm:$0xff]
        %v4262 = vld [vmem:[#allocation3 + $0x40] sm:$0xff]
        %v4263 = vld [vmem:[#allocation3 + $0x48] sm:$0xff]
        %v4264 = vld [vmem:[#allocation3 + $0x50] sm:$0xff]
        %v4265 = vld [vmem:[#allocation3 + $0x58] sm:$0xff]
        %v4266 = vld [vmem:[#allocation3 + $0x60] sm:$0xff]
        %v4267 = vld [vmem:[#allocation3 + $0x68] sm:$0xff]
        %v4268 = vld [vmem:[#allocation3 + $0x70] sm:$0xff]
        %v4269 = vld [vmem:[#allocation3 + $0x78] sm:$0xff]
        %v4270 = vadd.f32 %v4238, %v4254
        %v4271 = vadd.f32 %v4239, %v4255
        %v4272 = vadd.f32 %v4240, %v4256
        %v4273 = vadd.f32 %v4241, %v4257
        %v4274 = vadd.f32 %v4242, %v4258
        %v4275 = vadd.f32 %v4243, %v4259
        %v4276 = vadd.f32 %v4244, %v4260
        %v4277 = vadd.f32 %v4245, %v4261
        %v4278 = vadd.f32 %v4246, %v4262
        %v4279 = vadd.f32 %v4247, %v4263
        %v4280 = vadd.f32 %v4248, %v4264
        %v4281 = vadd.f32 %v4249, %v4265
        %v4282 = vadd.f32 %v4250, %v4266
        %v4283 = vadd.f32 %v4251, %v4267
        %v4284 = vadd.f32 %v4252, %v4268
        %v4285 = vadd.f32 %v4253, %v4269
        %4286 = vst [vmem:[#allocation3] sm:$0xff] %v4270
        %4287 = vst [vmem:[#allocation3 + $0x8] sm:$0xff] %v4271
        %4288 = vst [vmem:[#allocation3 + $0x10] sm:$0xff] %v4272
        %4289 = vst [vmem:[#allocation3 + $0x18] sm:$0xff] %v4273
        %4290 = vst [vmem:[#allocation3 + $0x20] sm:$0xff] %v4274
        %4291 = vst [vmem:[#allocation3 + $0x28] sm:$0xff] %v4275
        %4292 = vst [vmem:[#allocation3 + $0x30] sm:$0xff] %v4276
        %4293 = vst [vmem:[#allocation3 + $0x38] sm:$0xff] %v4277
        %4294 = vst [vmem:[#allocation3 + $0x40] sm:$0xff] %v4278
        %4295 = vst [vmem:[#allocation3 + $0x48] sm:$0xff] %v4279
        %4296 = vst [vmem:[#allocation3 + $0x50] sm:$0xff] %v4280
        %4297 = vst [vmem:[#allocation3 + $0x58] sm:$0xff] %v4281
        %4298 = vst [vmem:[#allocation3 + $0x60] sm:$0xff] %v4282
        %4299 = vst [vmem:[#allocation3 + $0x68] sm:$0xff] %v4283
        %4300 = vst [vmem:[#allocation3 + $0x70] sm:$0xff] %v4284
        %4301 = vst [vmem:[#allocation3 + $0x78] sm:$0xff] %v4285
        %v4302 = vld [vmem:[#allocation3] sm:$0xff]
        %v4303 = vld [vmem:[#allocation3 + $0x8] sm:$0xff]
        %v4304 = vld [vmem:[#allocation3 + $0x10] sm:$0xff]
        %v4305 = vld [vmem:[#allocation3 + $0x18] sm:$0xff]
        %v4306 = vld [vmem:[#allocation3 + $0x20] sm:$0xff]
        %v4307 = vld [vmem:[#allocation3 + $0x28] sm:$0xff]
        %v4308 = vld [vmem:[#allocation3 + $0x30] sm:$0xff]
        %v4309 = vld [vmem:[#allocation3 + $0x38] sm:$0xff]
        %v4310 = vld [vmem:[#allocation3 + $0x40] sm:$0xff]
        %v4311 = vld [vmem:[#allocation3 + $0x48] sm:$0xff]
        %v4312 = vld [vmem:[#allocation3 + $0x50] sm:$0xff]
        %v4313 = vld [vmem:[#allocation3 + $0x58] sm:$0xff]
        %v4314 = vld [vmem:[#allocation3 + $0x60] sm:$0xff]
        %v4315 = vld [vmem:[#allocation3 + $0x68] sm:$0xff]
        %v4316 = vld [vmem:[#allocation3 + $0x70] sm:$0xff]
        %v4317 = vld [vmem:[#allocation3 + $0x78] sm:$0xff]
        %4334 = vrot.lane.b32.xlu0 %v4302, 116
        %v4335 = vpop.permute.xlu0 %4334
        %4336 = vrot.lane.b32.xlu0 %v4303, 116
        %v4337 = vpop.permute.xlu0 %4336
        %4338 = vrot.lane.b32.xlu0 %v4304, 116
        %v4339 = vpop.permute.xlu0 %4338
        %4340 = vrot.lane.b32.xlu0 %v4305, 116
        %v4341 = vpop.permute.xlu0 %4340
        %4342 = vrot.lane.b32.xlu0 %v4306, 116
        %v4343 = vpop.permute.xlu0 %4342
        %4344 = vrot.lane.b32.xlu0 %v4307, 116
        %v4345 = vpop.permute.xlu0 %4344
        %4346 = vrot.lane.b32.xlu0 %v4308, 116
        %v4347 = vpop.permute.xlu0 %4346
        %4348 = vrot.lane.b32.xlu0 %v4309, 116
        %v4349 = vpop.permute.xlu0 %4348
        %4350 = vrot.lane.b32.xlu0 %v4310, 116
        %v4351 = vpop.permute.xlu0 %4350
        %4352 = vrot.lane.b32.xlu0 %v4311, 116
        %v4353 = vpop.permute.xlu0 %4352
        %4354 = vrot.lane.b32.xlu0 %v4312, 116
        %v4355 = vpop.permute.xlu0 %4354
        %4356 = vrot.lane.b32.xlu0 %v4313, 116
        %v4357 = vpop.permute.xlu0 %4356
        %4358 = vrot.lane.b32.xlu0 %v4314, 116
        %v4359 = vpop.permute.xlu0 %4358
        %4360 = vrot.lane.b32.xlu0 %v4315, 116
        %v4361 = vpop.permute.xlu0 %4360
        %4362 = vrot.lane.b32.xlu0 %v4316, 116
        %v4363 = vpop.permute.xlu0 %4362
        %4364 = vrot.lane.b32.xlu0 %v4317, 116
        %v4365 = vpop.permute.xlu0 %4364
        %vm4366 = vcmask 949248
        %v4367 = vsel %vm4366, %v4335, %v4337
        %v4368 = vsel %vm4366, %v4339, %v4341
        %v4369 = vsel %vm4366, %v4343, %v4345
        %v4370 = vsel %vm4366, %v4347, %v4349
        %v4371 = vsel %vm4366, %v4351, %v4353
        %v4372 = vsel %vm4366, %v4355, %v4357
        %v4373 = vsel %vm4366, %v4359, %v4361
        %v4374 = vsel %vm4366, %v4363, %v4365
        %4383 = vst [vmem:[%s275] sm:$0xff] %v4367
        %4384 = vst [vmem:[%s275 + $0x8] sm:$0xff] %v4368
        %4385 = vst [vmem:[%s275 + $0x10] sm:$0xff] %v4369
        %4386 = vst [vmem:[%s275 + $0x18] sm:$0xff] %v4370
        %4387 = vst [vmem:[%s275 + $0x20] sm:$0xff] %v4371
        %4388 = vst [vmem:[%s275 + $0x28] sm:$0xff] %v4372
        %4389 = vst [vmem:[%s275 + $0x30] sm:$0xff] %v4373
        %4390 = vst [vmem:[%s275 + $0x38] sm:$0xff] %v4374
        %s4391 = sand.u32 %s157, 1
        %s4392 = scalar_lea.sflag [#allocation6], %s4391
        %s4393 = sand.u32 %s157, 1
        %s4394 = smul.addr %s4393, 64
        %s4395 = scalar_lea.vmem [#allocation9], %s4394
        // Predicated region
        $region97: #{tpu_custom_call.1} parent=39 // pred_check
          %p4396 = pneg %p167
        $region98: #{tpu_custom_call.1} parent=39 // pred_check_branch
          %4398 = sbr.rel (%p4396) target = $region100
        $region99: #{tpu_custom_call.1} parent=39 // pred_region
          %s4400 = ssub.s32 1024, 1024
          %4401 = vsyncadd %s4392, %s4400
          %s4402 = smul.addr %s27, 24
          %s4403 = sadd.s32 %s28, %s4402
          %s4404 = smul.addr %s4403, 128
          %s4405 = scalar_lea.hbm %s5, %s4404
          %s4406 = sshll.u32 %s4395, 4
          %s4407 = int_to_ptr.vmem [resolvable:$true] %s4406
          %4412 = dma.vmem_to_hbm [thread:$0]  %s4407, 1024, %s4405, %s4392, 128, 384, 8
        $region100: #{tpu_custom_call.1} parent=39 // pred_fallthru
          _
      $region40: #{tpu_custom_call.1} parent=5 // pred_fallthru
        _
      %p4413 = scmp.le.s32.totalorder 2, %s18
      // Predicated region
      $region101: #{tpu_custom_call.1} parent=5 // pred_check
        %p4414 = pneg %p4413
      $region102: #{tpu_custom_call.1} parent=5 // pred_check_branch
        %4416 = sbr.rel (%p4414) target = $region104
      $region103: #{tpu_custom_call.1} parent=5 // pred_region
        %s4417 = ssub.s32 %s18, 2
        // Predicated region
        $region105: #{tpu_custom_call.1} parent=103 // pred_check
          %p4418 = pneg %p173
        $region106: #{tpu_custom_call.1} parent=103 // pred_check_branch
          %4420 = sbr.rel (%p4418) target = $region108
        $region107: #{tpu_custom_call.1} parent=103 // pred_region
          %s4421 = sand.u32 %s158, 1
          %s4422 = scalar_lea.sflag [#allocation6], %s4421
          %s4423 = sand.u32 %s158, 1
          %s4424 = smul.addr %s4423, 64
          %s4425 = scalar_lea.vmem [#allocation9], %s4424
          %4426 = dma.done %s4422, 1024
        $region108: #{tpu_custom_call.1} parent=103 // pred_fallthru
          _
      $region104: #{tpu_custom_call.1} parent=5 // pred_fallthru
        _
    $region6: #{tpu_custom_call.1} parent=1 // loop_footer
      %s22 = sadd.s32 1, %s18
    $region7: #{tpu_custom_call.1} parent=1 // loop_footer_branch
      %17 = sbr.rel target = $region3
    $region8: #{tpu_custom_call.1} parent=1 // loop_exit
      _
    %4427 = vsyncpa [#allocation5], 1
    %s4428 = scalar_lea.sflag [#allocation5], 1
    %4429 = vsyncpa %s4428, 1
    %4430 = vsyncpa [#allocation8], 1
    %4431 = vsyncpa [#allocation6], 1
    %s4432 = scalar_lea.sflag [#allocation6], 1
    %4433 = vsyncpa %s4432, 1

// kernel: tpu_custom_call.1
$region0: #{tpu_custom_call.1}
  #allocation0 [shape = 'u32[]', space=smem, size = 0x4, offset = 0x4, fixed_abs, tag = 'smem constant byte address 0x4 - core index']
  #allocation1 [shape = 'u32[144,128]{1,0:T(1,128)}', space=vmem, size = 0x12000, scoped, tag = 'internal scratch']
  #allocation2 [shape = 'bf16[64,512]{1,0:T(16,128)(2,1)}', space=vmem, size = 0x10000, scoped, tag = 'scratch operand']
  #allocation3 [shape = 'f32[64,256]{1,0:T(8,128)}', space=vmem, size = 0x10000, scoped, tag = 'scratch operand']
  %s0 = inlined_call_operand.hbm [shape: f32[2,3,64,256], index: 0, kind: input, shape index: {}]
  %s1 = inlined_call_operand.vmem [shape: bf16[3,3,64,64], index: 1, kind: input, shape index: {}]
  %s2 = inlined_call_operand.vmem [shape: f32[3,64,1], index: 2, kind: input, shape index: {}]
  %s3 = inlined_call_operand.hbm [shape: bf16[3,3,64,64], index: 3, kind: input, shape index: {}]
  %s4 = inlined_call_operand.vmem [shape: f32[3,64,1], index: 4, kind: input, shape index: {}]
  %s5 = inlined_call_operand.hbm [shape: f32[2,64,384], index: 5, kind: output, shape index: {}]
  %s6 = sld [smem:[#allocation0]]
  $region109: #{tpu_custom_call.1} parent=0
    _
  %s8 = ssub.s32 1, %s6
  %s9 = scalar_select 0, %s8, %s6
  $region1: #{tpu_custom_call.1} parent=0
    #allocation4 [shape = 'u8[131072]{0}', space=vmem, size = 0x20000, scoped, tag = 'input window, operand 0']
    #allocation5 [shape = 's32[2]{0}', space=sflag, size = 0x8, scoped, tag = 'scoped memory for tpu_custom_call.1']
    #allocation6 [shape = 's32[2]{0}', space=sflag, size = 0x8, scoped, tag = 'scoped memory for tpu_custom_call.1']
    #allocation7 [shape = 'u8[147456]{0}', space=vmem, size = 0x24000, scoped, tag = 'input window, operand 3, single buffered']
    #allocation8 [shape = 's32[1]{0}', space=sflag, size = 0x4, scoped, tag = 'scoped memory for tpu_custom_call.1']
    #allocation9 [shape = 'u8[65536]{0}', space=vmem, size = 0x10000, scoped, tag = 'output window, operand 0']
    %10 = vsyncpa [#allocation5], 0
    %s11 = scalar_lea.sflag [#allocation5], 1
    %12 = vsyncpa %s11, 0
    %13 = vsyncpa [#allocation8], 0
    %14 = vsyncpa [#allocation6], 0
    %s15 = scalar_lea.sflag [#allocation6], 1
    %16 = vsyncpa %s15, 0
    loop: start=0, step=1, limit=8
    $region2: #{tpu_custom_call.1} parent=1 // loop_pre_header
      _
    $region3: #{tpu_custom_call.1} parent=1 // loop_header
      %s18 = sphi 0, %s22
      %p19 = scmp.ge.s32.totalorder %s18, 8
      %s25 = sphi 0, %s37
      %s26 = sphi 0, %s33
      %s27 = sphi 0, %s25
      %s28 = sphi 0, %s26
      %s29 = sphi 0, %s27
      %s30 = sphi 0, %s28
      %s42 = sphi 0, %s44
      %s45 = sphi 0, %s42
      %s46 = sphi 0, %s45
      %s62 = sphi 0, %s46
      %s66 = sphi 0, %s66
      %s68 = sphi 0, %s66
      %s69 = sphi 0, %s68
      %s83 = sphi 0, %s69
      %s87 = sphi 0, %s87
      %s89 = sphi 0, %s87
      %s90 = sphi 0, %s89
      %s104 = sphi 0, %s90
      %s108 = sphi 0, %s108
      %s110 = sphi 0, %s108
      %s111 = sphi 0, %s110
      %s125 = sphi 0, %s111
      %s129 = sphi 0, %s129
      %s131 = sphi 0, %s129
      %s132 = sphi 0, %s131
      %s146 = sphi 0, %s132
      %s154 = sphi 0, %s156
      %s157 = sphi 0, %s154
      %s158 = sphi 0, %s157
      %s174 = sphi 0, %s158
    $region4: #{tpu_custom_call.1} parent=1 // loop_header_branch
      %21 = sbr.rel (%p19) target = $region8
    $region5: #{tpu_custom_call.1} parent=1 // loop_body
      %s23 = ssub.s32 %s18, 1
      %s24 = ssub.s32 %s18, 2
      %s31 = sadd.s32 1, %s26
      %p32 = scmp.ge.s32.totalorder %s31, 3
      %s33 = scalar_select %p32, 0, %s31
      %s34 = sadd.s32 1, %s25
      %s35 = scalar_select %p32, %s34, %s25
      %p36 = scmp.ge.s32.totalorder %s35, 2
      %s37 = scalar_select %p36, 0, %s35
      %s38 = ssub.s32 %s25, %s37
      %s39 = ssub.s32 %s26, %s33
      %s40 = sor.u32 %s38, %s39
      %p41 = scmp.eq.s32.totalorder %s40, 0
      %s43 = sadd.s32 %s42, 1
      %s44 = scalar_select %p41, %s42, %s43
      %p47 = pneg %p41
      %p48 = scmp.eq.s32.totalorder %s18, 5
      %p49 = por %p47, %p48
      %p50 = scmp.ne.s32.totalorder %s42, %s45
      %p51 = scmp.eq.s32.totalorder %s18, 0
      %p52 = por %p50, %p51
      %p53 = scmp.ne.s32.totalorder %s42, %s45
      %p54 = scmp.eq.s32.totalorder %s23, 5
      %p55 = por %p53, %p54
      %p56 = scmp.ne.s32.totalorder %s45, %s46
      %p57 = scmp.eq.s32.totalorder %s23, 0
      %p58 = por %p56, %p57
      %p59 = scmp.ne.s32.totalorder %s45, %s46
      %p60 = scmp.eq.s32.totalorder %s24, 5
      %p61 = por %p59, %p60
      %p63 = scmp.ne.s32.totalorder %s46, %s62
      %p64 = scmp.eq.s32.totalorder %s24, 0
      %p65 = por %p63, %p64
      %s67 = sadd.s32 %s66, 1
      %p70 = scmp.eq.s32.totalorder %s18, 5
      %p71 = scmp.ne.s32.totalorder %s66, %s68
      %p72 = scmp.eq.s32.totalorder %s18, 0
      %p73 = por %p71, %p72
      %p74 = scmp.ne.s32.totalorder %s66, %s68
      %p75 = scmp.eq.s32.totalorder %s23, 5
      %p76 = por %p74, %p75
      %p77 = scmp.ne.s32.totalorder %s68, %s69
      %p78 = scmp.eq.s32.totalorder %s23, 0
      %p79 = por %p77, %p78
      %p80 = scmp.ne.s32.totalorder %s68, %s69
      %p81 = scmp.eq.s32.totalorder %s24, 5
      %p82 = por %p80, %p81
      %p84 = scmp.ne.s32.totalorder %s69, %s83
      %p85 = scmp.eq.s32.totalorder %s24, 0
      %p86 = por %p84, %p85
      %s88 = sadd.s32 %s87, 1
      %p91 = scmp.eq.s32.totalorder %s18, 5
      %p92 = scmp.ne.s32.totalorder %s87, %s89
      %p93 = scmp.eq.s32.totalorder %s18, 0
      %p94 = por %p92, %p93
      %p95 = scmp.ne.s32.totalorder %s87, %s89
      %p96 = scmp.eq.s32.totalorder %s23, 5
      %p97 = por %p95, %p96
      %p98 = scmp.ne.s32.totalorder %s89, %s90
      %p99 = scmp.eq.s32.totalorder %s23, 0
      %p100 = por %p98, %p99
      %p101 = scmp.ne.s32.totalorder %s89, %s90
      %p102 = scmp.eq.s32.totalorder %s24, 5
      %p103 = por %p101, %p102
      %p105 = scmp.ne.s32.totalorder %s90, %s104
      %p106 = scmp.eq.s32.totalorder %s24, 0
      %p107 = por %p105, %p106
      %s109 = sadd.s32 %s108, 1
      %p112 = scmp.eq.s32.totalorder %s18, 5
      %p113 = scmp.ne.s32.totalorder %s108, %s110
      %p114 = scmp.eq.s32.totalorder %s18, 0
      %p115 = por %p113, %p114
      %p116 = scmp.ne.s32.totalorder %s108, %s110
      %p117 = scmp.eq.s32.totalorder %s23, 5
      %p118 = por %p116, %p117
      %p119 = scmp.ne.s32.totalorder %s110, %s111
      %p120 = scmp.eq.s32.totalorder %s23, 0
      %p121 = por %p119, %p120
      %p122 = scmp.ne.s32.totalorder %s110, %s111
      %p123 = scmp.eq.s32.totalorder %s24, 5
      %p124 = por %p122, %p123
      %p126 = scmp.ne.s32.totalorder %s111, %s125
      %p127 = scmp.eq.s32.totalorder %s24, 0
      %p128 = por %p126, %p127
      %s130 = sadd.s32 %s129, 1
      %p133 = scmp.eq.s32.totalorder %s18, 5
      %p134 = scmp.ne.s32.totalorder %s129, %s131
      %p135 = scmp.eq.s32.totalorder %s18, 0
      %p136 = por %p134, %p135
      %p137 = scmp.ne.s32.totalorder %s129, %s131
      %p138 = scmp.eq.s32.totalorder %s23, 5
      %p139 = por %p137, %p138
      %p140 = scmp.ne.s32.totalorder %s131, %s132
      %p141 = scmp.eq.s32.totalorder %s23, 0
      %p142 = por %p140, %p141
      %p143 = scmp.ne.s32.totalorder %s131, %s132
      %p144 = scmp.eq.s32.totalorder %s24, 5
      %p145 = por %p143, %p144
      %p147 = scmp.ne.s32.totalorder %s132, %s146
      %p148 = scmp.eq.s32.totalorder %s24, 0
      %p149 = por %p147, %p148
      %s150 = ssub.s32 %s25, %s37
      %s151 = ssub.s32 %s26, %s33
      %s152 = sor.u32 %s150, %s151
      %p153 = scmp.eq.s32.totalorder %s152, 0
      %s155 = sadd.s32 %s154, 1
      %s156 = scalar_select %p153, %s154, %s155
      %p159 = pneg %p153
      %p160 = scmp.eq.s32.totalorder %s18, 5
      %p161 = por %p159, %p160
      %p162 = scmp.ne.s32.totalorder %s154, %s157
      %p163 = scmp.eq.s32.totalorder %s18, 0
      %p164 = por %p162, %p163
      %p165 = scmp.ne.s32.totalorder %s154, %s157
      %p166 = scmp.eq.s32.totalorder %s23, 5
      %p167 = por %p165, %p166
      %p168 = scmp.ne.s32.totalorder %s157, %s158
      %p169 = scmp.eq.s32.totalorder %s23, 0
      %p170 = por %p168, %p169
      %p171 = scmp.ne.s32.totalorder %s157, %s158
      %p172 = scmp.eq.s32.totalorder %s24, 5
      %p173 = por %p171, %p172
      %p175 = scmp.ne.s32.totalorder %s158, %s174
      %p176 = scmp.eq.s32.totalorder %s24, 0
      %p177 = por %p175, %p176
      %p178 = scmp.le.s32.totalorder 1, %s18
      %p179 = scmp.lt.s32.totalorder %s18, 7
      %p180 = pnand %p178, %p179
      %p181 = pneg %p180
      // Predicated region
      $region9: #{tpu_custom_call.1} parent=5 // pred_check
        _
      $region10: #{tpu_custom_call.1} parent=5 // pred_check_branch
        %183 = sbr.rel (%p180) target = $region12
      $region11: #{tpu_custom_call.1} parent=5 // pred_region
        %s184 = ssub.s32 %s18, 1
        // Predicated region
        $region13: #{tpu_custom_call.1} parent=11 // pred_check
          %p185 = pneg %p79
        $region14: #{tpu_custom_call.1} parent=11 // pred_check_branch
          %187 = sbr.rel (%p185) target = $region16
        $region15: #{tpu_custom_call.1} parent=11 // pred_region
          _
        $region16: #{tpu_custom_call.1} parent=11 // pred_fallthru
          _
        // Predicated region
        $region17: #{tpu_custom_call.1} parent=11 // pred_check
          %p188 = pneg %p100
        $region18: #{tpu_custom_call.1} parent=11 // pred_check_branch
          %190 = sbr.rel (%p188) target = $region20
        $region19: #{tpu_custom_call.1} parent=11 // pred_region
          _
        $region20: #{tpu_custom_call.1} parent=11 // pred_fallthru
          _
        // Predicated region
        $region21: #{tpu_custom_call.1} parent=11 // pred_check
          %p191 = pneg %p121
        $region22: #{tpu_custom_call.1} parent=11 // pred_check_branch
          %193 = sbr.rel (%p191) target = $region24
        $region23: #{tpu_custom_call.1} parent=11 // pred_region
          %s195 = ssub.s32 4608, 4608
          %196 = vsyncadd [#allocation8], %s195
          %s197 = sshll.u32 [#allocation7], 4
          %s198 = int_to_ptr.vmem [resolvable:$true] %s197
          %203 = dma.hbm_to_vmem [thread:$0]  %s3, 4608, %s198, [#allocation8], 64, 64, 4
        $region24: #{tpu_custom_call.1} parent=11 // pred_fallthru
          _
        // Predicated region
        $region25: #{tpu_custom_call.1} parent=11 // pred_check
          %p204 = pneg %p142
        $region26: #{tpu_custom_call.1} parent=11 // pred_check_branch
          %206 = sbr.rel (%p204) target = $region28
        $region27: #{tpu_custom_call.1} parent=11 // pred_region
          _
        $region28: #{tpu_custom_call.1} parent=11 // pred_fallthru
          _
      $region12: #{tpu_custom_call.1} parent=5 // pred_fallthru
        _
      %p207 = scmp.lt.s32.totalorder %s18, 6
      // Predicated region
      $region29: #{tpu_custom_call.1} parent=5 // pred_check
        %p208 = pneg %p207
      $region30: #{tpu_custom_call.1} parent=5 // pred_check_branch
        %210 = sbr.rel (%p208) target = $region32
      $region31: #{tpu_custom_call.1} parent=5 // pred_region
        // Predicated region
        $region33: #{tpu_custom_call.1} parent=31 // pred_check
          %p211 = pneg %p52
        $region34: #{tpu_custom_call.1} parent=31 // pred_check_branch
          %213 = sbr.rel (%p211) target = $region36
        $region35: #{tpu_custom_call.1} parent=31 // pred_region
          %s214 = sand.u32 %s42, 1
          %s215 = scalar_lea.sflag [#allocation5], %s214
          %s216 = sand.u32 %s42, 1
          %s217 = smul.addr %s216, 128
          %s218 = scalar_lea.vmem [#allocation4], %s217
          %s220 = ssub.s32 2048, 2048
          %221 = vsyncadd %s215, %s220
          %s222 = smul.addr %s26, 16
          %s223 = smul.addr %s25, 48
          %s224 = sadd.s32 %s222, %s223
          %s225 = smul.addr %s224, 128
          %s226 = scalar_lea.hbm %s0, %s225
          %s227 = sshll.u32 %s218, 4
          %s228 = int_to_ptr.vmem [resolvable:$true] %s227
          %233 = dma.hbm_to_vmem [thread:$0]  %s226, 2048, %s228, %s215, 256, 256, 16
        $region36: #{tpu_custom_call.1} parent=31 // pred_fallthru
          _
      $region32: #{tpu_custom_call.1} parent=5 // pred_fallthru
        _
      %p234 = scmp.le.s32.totalorder 1, %s18
      %p235 = scmp.lt.s32.totalorder %s18, 7
      %p236 = pnand %p234, %p235
      %p237 = pneg %p236
      // Predicated region
      $region37: #{tpu_custom_call.1} parent=5 // pred_check
        _
      $region38: #{tpu_custom_call.1} parent=5 // pred_check_branch
        %239 = sbr.rel (%p236) target = $region40
      $region39: #{tpu_custom_call.1} parent=5 // pred_region
        %s240 = ssub.s32 %s18, 1
        %s241 = sand.u32 %s45, 1
        %s242 = scalar_lea.sflag [#allocation5], %s241
        %s243 = sand.u32 %s45, 1
        %s244 = smul.addr %s243, 128
        %s245 = scalar_lea.vmem [#allocation4], %s244
        // Predicated region
        $region41: #{tpu_custom_call.1} parent=39 // pred_check
          %p246 = pneg %p58
        $region42: #{tpu_custom_call.1} parent=39 // pred_check_branch
          %248 = sbr.rel (%p246) target = $region44
        $region43: #{tpu_custom_call.1} parent=39 // pred_region
          %249 = dma.done %s242, 2048
        $region44: #{tpu_custom_call.1} parent=39 // pred_fallthru
          _
        // Predicated region
        $region45: #{tpu_custom_call.1} parent=39 // pred_check
          %p250 = pneg %p121
        $region46: #{tpu_custom_call.1} parent=39 // pred_check_branch
          %252 = sbr.rel (%p250) target = $region48
        $region47: #{tpu_custom_call.1} parent=39 // pred_region
          %253 = dma.done [#allocation8], 4608
        $region48: #{tpu_custom_call.1} parent=39 // pred_fallthru
          _
        %s254 = sand.u32 %s45, 1
        %s255 = scalar_lea.sflag [#allocation5], %s254
        %s256 = sand.u32 %s45, 1
        %s257 = smul.addr %s256, 128
        %s258 = scalar_lea.vmem [#allocation4], %s257
        %p259 = pneg %p58
        %p260 = pneg %p55
        %p261 = pneg %p79
        %p262 = pneg %p76
        %p263 = pneg %p100
        %p264 = pneg %p97
        %p265 = pneg %p121
        %p266 = pneg %p118
        %p267 = pneg %p142
        %p268 = pneg %p139
        %p269 = pneg %p170
        %p270 = pneg %p167
        %s271 = sand.u32 %s157, 1
        %s272 = scalar_lea.sflag [#allocation6], %s271
        %s273 = sand.u32 %s157, 1
        %s274 = smul.addr %s273, 64
        %s275 = scalar_lea.vmem [#allocation9], %s274
        %vm277 = vcmask 1048536
        %278 = vst.msk [vmem:[#allocation2] sm:$0xff] %vm277, 0
        %279 = vst.msk [vmem:[#allocation2 + $0x20] sm:$0xff] %vm277, 0
        %280 = vst.msk [vmem:[#allocation2 + $0x40] sm:$0xff] %vm277, 0
        %281 = vst.msk [vmem:[#allocation2 + $0x60] sm:$0xff] %vm277, 0
        %vm282 = vcmask 39936
        %283 = vst.msk [vmem:[#allocation2 + $0x18] sm:$0xff] %vm282, 0
        %284 = vst.msk [vmem:[#allocation2 + $0x38] sm:$0xff] %vm282, 0
        %285 = vst.msk [vmem:[#allocation2 + $0x58] sm:$0xff] %vm282, 0
        %286 = vst.msk [vmem:[#allocation2 + $0x78] sm:$0xff] %vm282, 0
        %v287 = vld [vmem:[%s245] sm:$0xff]
        %v288 = vld [vmem:[%s245 + $0x8] sm:$0xff]
        %v289 = vld [vmem:[%s245 + $0x10] sm:$0xff]
        %v290 = vld [vmem:[%s245 + $0x18] sm:$0xff]
        %v291 = vld [vmem:[%s245 + $0x20] sm:$0xff]
        %v292 = vld [vmem:[%s245 + $0x28] sm:$0xff]
        %v293 = vld [vmem:[%s245 + $0x30] sm:$0xff]
        %v294 = vld [vmem:[%s245 + $0x38] sm:$0xff]
        %v295 = vld [vmem:[%s245 + $0x40] sm:$0xff]
        %v296 = vld [vmem:[%s245 + $0x48] sm:$0xff]
        %v297 = vld [vmem:[%s245 + $0x50] sm:$0xff]
        %v298 = vld [vmem:[%s245 + $0x58] sm:$0xff]
        %v299 = vld [vmem:[%s245 + $0x60] sm:$0xff]
        %v300 = vld [vmem:[%s245 + $0x68] sm:$0xff]
        %v301 = vld [vmem:[%s245 + $0x70] sm:$0xff]
        %v302 = vld [vmem:[%s245 + $0x78] sm:$0xff]
        %303 = vst [vmem:[#allocation3] sm:$0xff] %v287
        %304 = vst [vmem:[#allocation3 + $0x8] sm:$0xff] %v288
        %305 = vst [vmem:[#allocation3 + $0x10] sm:$0xff] %v289
        %306 = vst [vmem:[#allocation3 + $0x18] sm:$0xff] %v290
        %307 = vst [vmem:[#allocation3 + $0x20] sm:$0xff] %v291
        %308 = vst [vmem:[#allocation3 + $0x28] sm:$0xff] %v292
        %309 = vst [vmem:[#allocation3 + $0x30] sm:$0xff] %v293
        %310 = vst [vmem:[#allocation3 + $0x38] sm:$0xff] %v294
        %311 = vst [vmem:[#allocation3 + $0x40] sm:$0xff] %v295
        %312 = vst [vmem:[#allocation3 + $0x48] sm:$0xff] %v296
        %313 = vst [vmem:[#allocation3 + $0x50] sm:$0xff] %v297
        %314 = vst [vmem:[#allocation3 + $0x58] sm:$0xff] %v298
        %315 = vst [vmem:[#allocation3 + $0x60] sm:$0xff] %v299
        %316 = vst [vmem:[#allocation3 + $0x68] sm:$0xff] %v300
        %317 = vst [vmem:[#allocation3 + $0x70] sm:$0xff] %v301
        %318 = vst [vmem:[#allocation3 + $0x78] sm:$0xff] %v302
        %v319 = vld [vmem:[#allocation3] sm:$0xff]
        %v320 = vld [vmem:[#allocation3 + $0x8] sm:$0xff]
        %v321 = vld [vmem:[#allocation3 + $0x10] sm:$0xff]
        %v322 = vld [vmem:[#allocation3 + $0x18] sm:$0xff]
        %v323 = vld [vmem:[#allocation3 + $0x20] sm:$0xff]
        %v324 = vld [vmem:[#allocation3 + $0x28] sm:$0xff]
        %v325 = vld [vmem:[#allocation3 + $0x30] sm:$0xff]
        %v326 = vld [vmem:[#allocation3 + $0x38] sm:$0xff]
        %v327 = vld [vmem:[#allocation3 + $0x40] sm:$0xff]
        %v328 = vld [vmem:[#allocation3 + $0x48] sm:$0xff]
        %v329 = vld [vmem:[#allocation3 + $0x50] sm:$0xff]
        %v330 = vld [vmem:[#allocation3 + $0x58] sm:$0xff]
        %v331 = vld [vmem:[#allocation3 + $0x60] sm:$0xff]
        %v332 = vld [vmem:[#allocation3 + $0x68] sm:$0xff]
        %v333 = vld [vmem:[#allocation3 + $0x70] sm:$0xff]
        %v334 = vld [vmem:[#allocation3 + $0x78] sm:$0xff]
        %vm335 = vcmp.gt.f32.partialorder %v319, 0.0
        %vm336 = vcmp.gt.f32.partialorder %v320, 0.0
        %vm337 = vcmp.gt.f32.partialorder %v321, 0.0
        %vm338 = vcmp.gt.f32.partialorder %v322, 0.0
        %vm339 = vcmp.gt.f32.partialorder %v323, 0.0
        %vm340 = vcmp.gt.f32.partialorder %v324, 0.0
        %vm341 = vcmp.gt.f32.partialorder %v325, 0.0
        %vm342 = vcmp.gt.f32.partialorder %v326, 0.0
        %vm343 = vcmp.gt.f32.partialorder %v327, 0.0
        %vm344 = vcmp.gt.f32.partialorder %v328, 0.0
        %vm345 = vcmp.gt.f32.partialorder %v329, 0.0
        %vm346 = vcmp.gt.f32.partialorder %v330, 0.0
        %vm347 = vcmp.gt.f32.partialorder %v331, 0.0
        %vm348 = vcmp.gt.f32.partialorder %v332, 0.0
        %vm349 = vcmp.gt.f32.partialorder %v333, 0.0
        %vm350 = vcmp.gt.f32.partialorder %v334, 0.0
        %v351 = vmul.f32 %v319, 0.1
        %v352 = vmul.f32 %v320, 0.1
        %v353 = vmul.f32 %v321, 0.1
        %v354 = vmul.f32 %v322, 0.1
        %v355 = vmul.f32 %v323, 0.1
        %v356 = vmul.f32 %v324, 0.1
        %v357 = vmul.f32 %v325, 0.1
        %v358 = vmul.f32 %v326, 0.1
        %v359 = vmul.f32 %v327, 0.1
        %v360 = vmul.f32 %v328, 0.1
        %v361 = vmul.f32 %v329, 0.1
        %v362 = vmul.f32 %v330, 0.1
        %v363 = vmul.f32 %v331, 0.1
        %v364 = vmul.f32 %v332, 0.1
        %v365 = vmul.f32 %v333, 0.1
        %v366 = vmul.f32 %v334, 0.1
        %v367 = vsel %vm335, %v319, %v351
        %v368 = vsel %vm336, %v320, %v352
        %v369 = vsel %vm337, %v321, %v353
        %v370 = vsel %vm338, %v322, %v354
        %v371 = vsel %vm339, %v323, %v355
        %v372 = vsel %vm340, %v324, %v356
        %v373 = vsel %vm341, %v325, %v357
        %v374 = vsel %vm342, %v326, %v358
        %v375 = vsel %vm343, %v327, %v359
        %v376 = vsel %vm344, %v328, %v360
        %v377 = vsel %vm345, %v329, %v361
        %v378 = vsel %vm346, %v330, %v362
        %v379 = vsel %vm347, %v331, %v363
        %v380 = vsel %vm348, %v332, %v364
        %v381 = vsel %vm349, %v333, %v365
        %v382 = vsel %vm350, %v334, %v366
        %v383 = vpack.c.bf16 %v369, %v367
        %v384 = vpack.c.bf16 %v370, %v368
        %v385 = vpack.c.bf16 %v373, %v371
        %v386 = vpack.c.bf16 %v374, %v372
        %v387 = vpack.c.bf16 %v377, %v375
        %v388 = vpack.c.bf16 %v378, %v376
        %v389 = vpack.c.bf16 %v381, %v379
        %v390 = vpack.c.bf16 %v382, %v380
        %391 = vst [vmem:[#allocation2 + $0x8] sm:$0xff] %v383
        %392 = vst [vmem:[#allocation2 + $0x10] sm:$0xff] %v384
        %393 = vst [vmem:[#allocation2 + $0x28] sm:$0xff] %v385
        %394 = vst [vmem:[#allocation2 + $0x30] sm:$0xff] %v386
        %395 = vst [vmem:[#allocation2 + $0x48] sm:$0xff] %v387
        %396 = vst [vmem:[#allocation2 + $0x50] sm:$0xff] %v388
        %397 = vst [vmem:[#allocation2 + $0x68] sm:$0xff] %v389
        %398 = vst [vmem:[#allocation2 + $0x70] sm:$0xff] %v390
        %p399 = scmp.eq.s32.totalorder %s28, 0
        // Predicated region
        $region49: #{tpu_custom_call.1} parent=39 // pred_check
          %p400 = pneg %p399
        $region50: #{tpu_custom_call.1} parent=39 // pred_check_branch
          %402 = sbr.rel (%p400) target = $region52
        $region51: #{tpu_custom_call.1} parent=39 // pred_region
          %vm403 = vcmask 97280
          %404 = vst.msk [vmem:[#allocation2 + $0x8] sm:$0xff] %vm403, 0
          %405 = vst.msk [vmem:[#allocation2 + $0x28] sm:$0xff] %vm403, 0
          %406 = vst.msk [vmem:[#allocation2 + $0x48] sm:$0xff] %vm403, 0
          %407 = vst.msk [vmem:[#allocation2 + $0x68] sm:$0xff] %vm403, 0
        $region52: #{tpu_custom_call.1} parent=39 // pred_fallthru
          _
        %p408 = scmp.eq.s32.totalorder %s28, 2
        // Predicated region
        $region53: #{tpu_custom_call.1} parent=39 // pred_check
          %p409 = pneg %p408
        $region54: #{tpu_custom_call.1} parent=39 // pred_check_branch
          %411 = sbr.rel (%p409) target = $region56
        $region55: #{tpu_custom_call.1} parent=39 // pred_region
          %vm412 = vcmask 1047648
          %413 = vst.msk [vmem:[#allocation2 + $0x10] sm:$0xff] %vm412, 0
          %414 = vst.msk [vmem:[#allocation2 + $0x30] sm:$0xff] %vm412, 0
          %415 = vst.msk [vmem:[#allocation2 + $0x50] sm:$0xff] %vm412, 0
          %416 = vst.msk [vmem:[#allocation2 + $0x70] sm:$0xff] %vm412, 0
        $region56: #{tpu_custom_call.1} parent=39 // pred_fallthru
          _
        %v417 = vld [vmem:[#allocation2] sm:$0xff]
        %v418 = vld [vmem:[#allocation2 + $0x8] sm:$0xff]
        %v419 = vld [vmem:[#allocation2 + $0x10] sm:$0xff]
        %v420 = vld [vmem:[#allocation2 + $0x20] sm:$0xff]
        %v421 = vld [vmem:[#allocation2 + $0x28] sm:$0xff]
        %v422 = vld [vmem:[#allocation2 + $0x30] sm:$0xff]
        %v423 = vld [vmem:[#allocation2 + $0x40] sm:$0xff]
        %v424 = vld [vmem:[#allocation2 + $0x48] sm:$0xff]
        %v425 = vld [vmem:[#allocation2 + $0x50] sm:$0xff]
        %v426 = vld [vmem:[#allocation2 + $0x60] sm:$0xff]
        %v427 = vld [vmem:[#allocation2 + $0x68] sm:$0xff]
        %v428 = vld [vmem:[#allocation2 + $0x70] sm:$0xff]
        %v429 = vld [vmem:[%s1] sm:$0xf]
        %v430 = vld [vmem:[%s1 + $0x4] sm:$0xf]
        %v431 = vld [vmem:[%s1 + $0x8] sm:$0xf]
        %v432 = vld [vmem:[%s1 + $0xc] sm:$0xf]
        %v433 = vld [vmem:[%s1 + $0x10] sm:$0xf]
        %v434 = vld [vmem:[%s1 + $0x14] sm:$0xf]
        %v435 = vld [vmem:[%s1 + $0x18] sm:$0xf]
        %v436 = vld [vmem:[%s1 + $0x1c] sm:$0xf]
        %s437 = scalar_lea.vmem %s1, 32
        %v438 = vld [vmem:[%s437] sm:$0xf]
        %v439 = vld [vmem:[%s437 + $0x4] sm:$0xf]
        %v440 = vld [vmem:[%s437 + $0x8] sm:$0xf]
        %v441 = vld [vmem:[%s437 + $0xc] sm:$0xf]
        %v442 = vld [vmem:[%s437 + $0x10] sm:$0xf]
        %v443 = vld [vmem:[%s437 + $0x14] sm:$0xf]
        %v444 = vld [vmem:[%s437 + $0x18] sm:$0xf]
        %v445 = vld [vmem:[%s437 + $0x1c] sm:$0xf]
        %v454 = vunpack.c.l.b16 %v438
        %v455 = vunpack.c.l.b16 %v439
        %v456 = vunpack.c.l.b16 %v440
        %v457 = vunpack.c.l.b16 %v441
        %v458 = vunpack.c.l.b16 %v442
        %v459 = vunpack.c.l.b16 %v443
        %v460 = vunpack.c.l.b16 %v444
        %v461 = vunpack.c.l.b16 %v445
        %v462 = vpack.c.b16 %v455, %v454
        %v463 = vpack.c.b16 %v457, %v456
        %v464 = vpack.c.b16 %v459, %v458
        %v465 = vpack.c.b16 %v461, %v460
        %vm466 = vcmask 523264
        %v468 = vsel %vm466, %v462, 0
        %v471 = vsel %vm466, %v463, 0
        %v474 = vsel %vm466, %v464, 0
        %v477 = vsel %vm466, %v465, 0
        %479 = vmatprep.subr.bf16.mxu0 %v419
        %480 = vmatpush1.bf16.msra.mxu0 %v418
        %481 = vmatprep.subr.bf16.mxu0 %v422
        %482 = vmatpush1.bf16.msra.mxu0 %v421
        %483 = vmatprep.subr.bf16.mxu0 %v425
        %484 = vmatpush1.bf16.msra.mxu0 %v424
        %485 = vmatprep.subr.bf16.mxu0 %v428
        %486 = vmatpush1.bf16.msra.mxu0 %v427
        %487 = vmatprep.subr.bf16.mxu0 0
        %488 = vmatpush1.bf16.msra.mxu0 0
        %489 = vmatprep.subr.bf16.mxu0 0
        %490 = vmatpush1.bf16.msra.mxu0 0
        %491 = vmatprep.subr.bf16.mxu0 0
        %492 = vmatpush1.bf16.msra.mxu0 0
        %493 = vmatprep.subr.bf16.mxu0 0
        %494 = vmatpush1.bf16.msra.mxu0 0
        %495 = vmatprep.subr.bf16.mxu0 0
        %496 = vmatpush1.bf16.msra.mxu0 0
        %497 = vmatprep.subr.bf16.mxu0 0
        %498 = vmatpush1.bf16.msra.mxu0 0
        %499 = vmatprep.subr.bf16.mxu0 0
        %500 = vmatpush1.bf16.msra.mxu0 0
        %501 = vmatprep.subr.bf16.mxu0 0
        %502 = vmatpush1.bf16.msra.mxu0 0
        %503 = vmatprep.subr.bf16.mxu0 0
        %504 = vmatpush1.bf16.msra.mxu0 0
        %505 = vmatprep.subr.bf16.mxu0 0
        %506 = vmatpush1.bf16.msra.mxu0 0
        %507 = vmatprep.subr.bf16.mxu0 0
        %508 = vmatpush1.bf16.msra.mxu0 0
        %509 = vmatprep.subr.bf16.mxu0 0
        %510 = vmatpush1.bf16.msra.mxu0 0
        %511 = vmatprep.mubr.bf16.mxu0 0
        %512 = vmatmul.mubr.bf16.gmra.mrb[0].mxu0 %v468
        %v513 = vpop.f32.mrb[0].mxu0
        %v514 = vadd.f32 0.0, %v513
        %v515 = vpop.f32.mrb[0].mxu0
        %v516 = vadd.f32 0.0, %v515
        %v517 = vpop.f32.mrb[0].mxu0
        %v518 = vadd.f32 0.0, %v517
        %v519 = vpop.f32.mrb[0].mxu0
        %v520 = vadd.f32 0.0, %v519
        %521 = vmatprep.mubr.bf16.mxu0 0
        %522 = vmatmul.mubr.bf16.gmra.mrb[0].mxu0 %v471
        %v523 = vpop.f32.mrb[0].mxu0
        %v524 = vadd.f32 0.0, %v523
        %v525 = vpop.f32.mrb[0].mxu0
        %v526 = vadd.f32 0.0, %v525
        %v527 = vpop.f32.mrb[0].mxu0
        %v528 = vadd.f32 0.0, %v527
        %v529 = vpop.f32.mrb[0].mxu0
        %v530 = vadd.f32 0.0, %v529
        %531 = vmatprep.mubr.bf16.mxu0 0
        %532 = vmatmul.mubr.bf16.gmra.mrb[0].mxu0 %v474
        %v533 = vpop.f32.mrb[0].mxu0
        %v534 = vadd.f32 0.0, %v533
        %v535 = vpop.f32.mrb[0].mxu0
        %v536 = vadd.f32 0.0, %v535
        %v537 = vpop.f32.mrb[0].mxu0
        %v538 = vadd.f32 0.0, %v537
        %v539 = vpop.f32.mrb[0].mxu0
        %v540 = vadd.f32 0.0, %v539
        %541 = vmatprep.mubr.bf16.mxu0 0
        %542 = vmatmul.mubr.bf16.gmra.mrb[0].mxu0 %v477
        %v543 = vpop.f32.mrb[0].mxu0
        %v544 = vadd.f32 0.0, %v543
        %v545 = vpop.f32.mrb[0].mxu0
        %v546 = vadd.f32 0.0, %v545
        %v547 = vpop.f32.mrb[0].mxu0
        %v548 = vadd.f32 0.0, %v547
        %v549 = vpop.f32.mrb[0].mxu0
        %v550 = vadd.f32 0.0, %v549
        %551 = vdwg.mxu0
        %v560 = vunpack.c.l.b16 %v429
        %v561 = vunpack.c.l.b16 %v430
        %v562 = vunpack.c.l.b16 %v431
        %v563 = vunpack.c.l.b16 %v432
        %v564 = vunpack.c.l.b16 %v433
        %v565 = vunpack.c.l.b16 %v434
        %v566 = vunpack.c.l.b16 %v435
        %v567 = vunpack.c.l.b16 %v436
        %v568 = vpack.c.b16 %v561, %v560
        %v569 = vpack.c.b16 %v563, %v562
        %v570 = vpack.c.b16 %v565, %v564
        %v571 = vpack.c.b16 %v567, %v566
        %584 = vrot.lane.b32.xlu0 %v417, 1
        %v585 = vpop.permute.xlu0 %584
        %586 = vrot.lane.b32.xlu0 %v418, 1
        %v587 = vpop.permute.xlu0 %586
        %588 = vrot.lane.b32.xlu0 %v419, 1
        %v589 = vpop.permute.xlu0 %588
        %590 = vrot.lane.b32.xlu0 %v420, 1
        %v591 = vpop.permute.xlu0 %590
        %592 = vrot.lane.b32.xlu0 %v421, 1
        %v593 = vpop.permute.xlu0 %592
        %594 = vrot.lane.b32.xlu0 %v422, 1
        %v595 = vpop.permute.xlu0 %594
        %596 = vrot.lane.b32.xlu0 %v423, 1
        %v597 = vpop.permute.xlu0 %596
        %598 = vrot.lane.b32.xlu0 %v424, 1
        %v599 = vpop.permute.xlu0 %598
        %600 = vrot.lane.b32.xlu0 %v425, 1
        %v601 = vpop.permute.xlu0 %600
        %602 = vrot.lane.b32.xlu0 %v426, 1
        %v603 = vpop.permute.xlu0 %602
        %604 = vrot.lane.b32.xlu0 %v427, 1
        %v605 = vpop.permute.xlu0 %604
        %606 = vrot.lane.b32.xlu0 %v428, 1
        %v607 = vpop.permute.xlu0 %606
        %vm608 = vcmask 7168
        %v609 = vsel %vm608, %v585, %v587
        %v610 = vsel %vm608, %v587, %v589
        %v611 = vsel %vm608, %v591, %v593
        %v612 = vsel %vm608, %v593, %v595
        %v613 = vsel %vm608, %v597, %v599
        %v614 = vsel %vm608, %v599, %v601
        %v615 = vsel %vm608, %v603, %v605
        %v616 = vsel %vm608, %v605, %v607
        %v626 = vsel %vm466, %v568, 0
        %v629 = vsel %vm466, %v569, 0
        %v632 = vsel %vm466, %v570, 0
        %v635 = vsel %vm466, %v571, 0
        %637 = vmatprep.subr.bf16.mxu0 %v610
        %638 = vmatpush1.bf16.msra.mxu0 %v609
        %639 = vmatprep.subr.bf16.mxu0 %v612
        %640 = vmatpush1.bf16.msra.mxu0 %v611
        %641 = vmatprep.subr.bf16.mxu0 %v614
        %642 = vmatpush1.bf16.msra.mxu0 %v613
        %643 = vmatprep.subr.bf16.mxu0 %v616
        %644 = vmatpush1.bf16.msra.mxu0 %v615
        %645 = vmatprep.subr.bf16.mxu0 0
        %646 = vmatpush1.bf16.msra.mxu0 0
        %647 = vmatprep.subr.bf16.mxu0 0
        %648 = vmatpush1.bf16.msra.mxu0 0
        %649 = vmatprep.subr.bf16.mxu0 0
        %650 = vmatpush1.bf16.msra.mxu0 0
        %651 = vmatprep.subr.bf16.mxu0 0
        %652 = vmatpush1.bf16.msra.mxu0 0
        %653 = vmatprep.subr.bf16.mxu0 0
        %654 = vmatpush1.bf16.msra.mxu0 0
        %655 = vmatprep.subr.bf16.mxu0 0
        %656 = vmatpush1.bf16.msra.mxu0 0
        %657 = vmatprep.subr.bf16.mxu0 0
        %658 = vmatpush1.bf16.msra.mxu0 0
        %659 = vmatprep.subr.bf16.mxu0 0
        %660 = vmatpush1.bf16.msra.mxu0 0
        %661 = vmatprep.subr.bf16.mxu0 0
        %662 = vmatpush1.bf16.msra.mxu0 0
        %663 = vmatprep.subr.bf16.mxu0 0
        %664 = vmatpush1.bf16.msra.mxu0 0
        %665 = vmatprep.subr.bf16.mxu0 0
        %666 = vmatpush1.bf16.msra.mxu0 0
        %667 = vmatprep.subr.bf16.mxu0 0
        %668 = vmatpush1.bf16.msra.mxu0 0
        %669 = vmatprep.mubr.bf16.mxu0 0
        %670 = vmatmul.mubr.bf16.gmra.mrb[0].mxu0 %v626
        %v671 = vpop.f32.mrb[0].mxu0
        %v672 = vadd.f32 %v514, %v671
        %v673 = vpop.f32.mrb[0].mxu0
        %v674 = vadd.f32 %v516, %v673
        %v675 = vpop.f32.mrb[0].mxu0
        %v676 = vadd.f32 %v518, %v675
        %v677 = vpop.f32.mrb[0].mxu0
        %v678 = vadd.f32 %v520, %v677
        %679 = vmatprep.mubr.bf16.mxu0 0
        %680 = vmatmul.mubr.bf16.gmra.mrb[0].mxu0 %v629
        %v681 = vpop.f32.mrb[0].mxu0
        %v682 = vadd.f32 %v524, %v681
        %v683 = vpop.f32.mrb[0].mxu0
        %v684 = vadd.f32 %v526, %v683
        %v685 = vpop.f32.mrb[0].mxu0
        %v686 = vadd.f32 %v528, %v685
        %v687 = vpop.f32.mrb[0].mxu0
        %v688 = vadd.f32 %v530, %v687
        %689 = vmatprep.mubr.bf16.mxu0 0
        %690 = vmatmul.mubr.bf16.gmra.mrb[0].mxu0 %v632
        %v691 = vpop.f32.mrb[0].mxu0
        %v692 = vadd.f32 %v534, %v691
        %v693 = vpop.f32.mrb[0].mxu0
        %v694 = vadd.f32 %v536, %v693
        %v695 = vpop.f32.mrb[0].mxu0
        %v696 = vadd.f32 %v538, %v695
        %v697 = vpop.f32.mrb[0].mxu0
        %v698 = vadd.f32 %v540, %v697
        %699 = vmatprep.mubr.bf16.mxu0 0
        %700 = vmatmul.mubr.bf16.gmra.mrb[0].mxu0 %v635
        %v701 = vpop.f32.mrb[0].mxu0
        %v702 = vadd.f32 %v544, %v701
        %v703 = vpop.f32.mrb[0].mxu0
        %v704 = vadd.f32 %v546, %v703
        %v705 = vpop.f32.mrb[0].mxu0
        %v706 = vadd.f32 %v548, %v705
        %v707 = vpop.f32.mrb[0].mxu0
        %v708 = vadd.f32 %v550, %v707
        %709 = vdwg.mxu0
        %v710 = vld [vmem:[#allocation2 + $0x8] sm:$0xff]
        %v711 = vld [vmem:[#allocation2 + $0x10] sm:$0xff]
        %v712 = vld [vmem:[#allocation2 + $0x18] sm:$0xff]
        %v713 = vld [vmem:[#allocation2 + $0x28] sm:$0xff]
        %v714 = vld [vmem:[#allocation2 + $0x30] sm:$0xff]
        %v715 = vld [vmem:[#allocation2 + $0x38] sm:$0xff]
        %v716 = vld [vmem:[#allocation2 + $0x48] sm:$0xff]
        %v717 = vld [vmem:[#allocation2 + $0x50] sm:$0xff]
        %v718 = vld [vmem:[#allocation2 + $0x58] sm:$0xff]
        %v719 = vld [vmem:[#allocation2 + $0x68] sm:$0xff]
        %v720 = vld [vmem:[#allocation2 + $0x70] sm:$0xff]
        %v721 = vld [vmem:[#allocation2 + $0x78] sm:$0xff]
        %s722 = scalar_lea.vmem %s1, 64
        %v723 = vld [vmem:[%s722] sm:$0xf]
        %v724 = vld [vmem:[%s722 + $0x4] sm:$0xf]
        %v725 = vld [vmem:[%s722 + $0x8] sm:$0xf]
        %v726 = vld [vmem:[%s722 + $0xc] sm:$0xf]
        %v727 = vld [vmem:[%s722 + $0x10] sm:$0xf]
        %v728 = vld [vmem:[%s722 + $0x14] sm:$0xf]
        %v729 = vld [vmem:[%s722 + $0x18] sm:$0xf]
        %v730 = vld [vmem:[%s722 + $0x1c] sm:$0xf]
        %v739 = vunpack.c.l.b16 %v723
        %v740 = vunpack.c.l.b16 %v724
        %v741 = vunpack.c.l.b16 %v725
        %v742 = vunpack.c.l.b16 %v726
        %v743 = vunpack.c.l.b16 %v727
        %v744 = vunpack.c.l.b16 %v728
        %v745 = vunpack.c.l.b16 %v729
        %v746 = vunpack.c.l.b16 %v730
        %v747 = vpack.c.b16 %v740, %v739
        %v748 = vpack.c.b16 %v742, %v741
        %v749 = vpack.c.b16 %v744, %v743
        %v750 = vpack.c.b16 %v746, %v745
        %763 = vrot.lane.b32.xlu0 %v710, 127
        %v764 = vpop.permute.xlu0 %763
        %765 = vrot.lane.b32.xlu0 %v711, 127
        %v766 = vpop.permute.xlu0 %765
        %767 = vrot.lane.b32.xlu0 %v712, 127
        %v768 = vpop.permute.xlu0 %767
        %769 = vrot.lane.b32.xlu0 %v713, 127
        %v770 = vpop.permute.xlu0 %769
        %771 = vrot.lane.b32.xlu0 %v714, 127
        %v772 = vpop.permute.xlu0 %771
        %773 = vrot.lane.b32.xlu0 %v715, 127
        %v774 = vpop.permute.xlu0 %773
        %775 = vrot.lane.b32.xlu0 %v716, 127
        %v776 = vpop.permute.xlu0 %775
        %777 = vrot.lane.b32.xlu0 %v717, 127
        %v778 = vpop.permute.xlu0 %777
        %779 = vrot.lane.b32.xlu0 %v718, 127
        %v780 = vpop.permute.xlu0 %779
        %781 = vrot.lane.b32.xlu0 %v719, 127
        %v782 = vpop.permute.xlu0 %781
        %783 = vrot.lane.b32.xlu0 %v720, 127
        %v784 = vpop.permute.xlu0 %783
        %785 = vrot.lane.b32.xlu0 %v721, 127
        %v786 = vpop.permute.xlu0 %785
        %vm787 = vcmask 1039360
        %v788 = vsel %vm787, %v764, %v766
        %v789 = vsel %vm787, %v766, %v768
        %v790 = vsel %vm787, %v770, %v772
        %v791 = vsel %vm787, %v772, %v774
        %v792 = vsel %vm787, %v776, %v778
        %v793 = vsel %vm787, %v778, %v780
        %v794 = vsel %vm787, %v782, %v784
        %v795 = vsel %vm787, %v784, %v786
        %v805 = vsel %vm466, %v747, 0
        %v808 = vsel %vm466, %v748, 0
        %v811 = vsel %vm466, %v749, 0
        %v814 = vsel %vm466, %v750, 0
        %816 = vmatprep.subr.bf16.mxu0 %v789
        %817 = vmatpush1.bf16.msra.mxu0 %v788
        %818 = vmatprep.subr.bf16.mxu0 %v791
        %819 = vmatpush1.bf16.msra.mxu0 %v790
        %820 = vmatprep.subr.bf16.mxu0 %v793
        %821 = vmatpush1.bf16.msra.mxu0 %v792
        %822 = vmatprep.subr.bf16.mxu0 %v795
        %823 = vmatpush1.bf16.msra.mxu0 %v794
        %824 = vmatprep.subr.bf16.mxu0 0
        %825 = vmatpush1.bf16.msra.mxu0 0
        %826 = vmatprep.subr.bf16.mxu0 0
        %827 = vmatpush1.bf16.msra.mxu0 0
        %828 = vmatprep.subr.bf16.mxu0 0
        %829 = vmatpush1.bf16.msra.mxu0 0
        %830 = vmatprep.subr.bf16.mxu0 0
        %831 = vmatpush1.bf16.msra.mxu0 0
        %832 = vmatprep.subr.bf16.mxu0 0
        %833 = vmatpush1.bf16.msra.mxu0 0
        %834 = vmatprep.subr.bf16.mxu0 0
        %835 = vmatpush1.bf16.msra.mxu0 0
        %836 = vmatprep.subr.bf16.mxu0 0
        %837 = vmatpush1.bf16.msra.mxu0 0
        %838 = vmatprep.subr.bf16.mxu0 0
        %839 = vmatpush1.bf16.msra.mxu0 0
        %840 = vmatprep.subr.bf16.mxu0 0
        %841 = vmatpush1.bf16.msra.mxu0 0
        %842 = vmatprep.subr.bf16.mxu0 0
        %843 = vmatpush1.bf16.msra.mxu0 0
        %844 = vmatprep.subr.bf16.mxu0 0
        %845 = vmatpush1.bf16.msra.mxu0 0
        %846 = vmatprep.subr.bf16.mxu0 0
        %847 = vmatpush1.bf16.msra.mxu0 0
        %848 = vmatprep.mubr.bf16.mxu0 0
        %849 = vmatmul.mubr.bf16.gmra.mrb[0].mxu0 %v805
        %v850 = vpop.f32.mrb[0].mxu0
        %v851 = vadd.f32 0.0, %v850
        %v852 = vpop.f32.mrb[0].mxu0
        %v853 = vadd.f32 0.0, %v852
        %v854 = vpop.f32.mrb[0].mxu0
        %v855 = vadd.f32 0.0, %v854
        %v856 = vpop.f32.mrb[0].mxu0
        %v857 = vadd.f32 0.0, %v856
        %858 = vmatprep.mubr.bf16.mxu0 0
        %859 = vmatmul.mubr.bf16.gmra.mrb[0].mxu0 %v808
        %v860 = vpop.f32.mrb[0].mxu0
        %v861 = vadd.f32 0.0, %v860
        %v862 = vpop.f32.mrb[0].mxu0
        %v863 = vadd.f32 0.0, %v862
        %v864 = vpop.f32.mrb[0].mxu0
        %v865 = vadd.f32 0.0, %v864
        %v866 = vpop.f32.mrb[0].mxu0
        %v867 = vadd.f32 0.0, %v866
        %868 = vmatprep.mubr.bf16.mxu0 0
        %869 = vmatmul.mubr.bf16.gmra.mrb[0].mxu0 %v811
        %v870 = vpop.f32.mrb[0].mxu0
        %v871 = vadd.f32 0.0, %v870
        %v872 = vpop.f32.mrb[0].mxu0
        %v873 = vadd.f32 0.0, %v872
        %v874 = vpop.f32.mrb[0].mxu0
        %v875 = vadd.f32 0.0, %v874
        %v876 = vpop.f32.mrb[0].mxu0
        %v877 = vadd.f32 0.0, %v876
        %878 = vmatprep.mubr.bf16.mxu0 0
        %879 = vmatmul.mubr.bf16.gmra.mrb[0].mxu0 %v814
        %v880 = vpop.f32.mrb[0].mxu0
        %v881 = vadd.f32 0.0, %v880
        %v882 = vpop.f32.mrb[0].mxu0
        %v883 = vadd.f32 0.0, %v882
        %v884 = vpop.f32.mrb[0].mxu0
        %v885 = vadd.f32 0.0, %v884
        %v886 = vpop.f32.mrb[0].mxu0
        %v887 = vadd.f32 0.0, %v886
        %888 = vdwg.mxu0
        %v889 = vadd.f32 %v672, %v851
        %v890 = vadd.f32 %v674, %v853
        %v891 = vadd.f32 %v676, %v855
        %v892 = vadd.f32 %v678, %v857
        %v893 = vadd.f32 %v682, %v861
        %v894 = vadd.f32 %v684, %v863
        %v895 = vadd.f32 %v686, %v865
        %v896 = vadd.f32 %v688, %v867
        %v897 = vadd.f32 %v692, %v871
        %v898 = vadd.f32 %v694, %v873
        %v899 = vadd.f32 %v696, %v875
        %v900 = vadd.f32 %v698, %v877
        %v901 = vadd.f32 %v702, %v881
        %v902 = vadd.f32 %v704, %v883
        %v903 = vadd.f32 %v706, %v885
        %v904 = vadd.f32 %v708, %v887
        %v905 = vld [vmem:[%s2] sm:$0xff]
        %v906 = vld [vmem:[%s2 + $0x8] sm:$0xff]
        %v907 = vld [vmem:[%s2 + $0x10] sm:$0xff]
        %v908 = vld [vmem:[%s2 + $0x18] sm:$0xff]
        %v909 = vld [vmem:[%s2 + $0x20] sm:$0xff]
        %v910 = vld [vmem:[%s2 + $0x28] sm:$0xff]
        %v911 = vld [vmem:[%s2 + $0x30] sm:$0xff]
        %v912 = vld [vmem:[%s2 + $0x38] sm:$0xff]
        %914 = vset.pattern.permute.xlu0 0
        %915 = vperm.xlu0 %914, %v905
        %v916 = vpop.permute.xlu0 %915
        %919 = vset.pattern.permute.xlu0 0
        %920 = vperm.xlu0 %919, %v906
        %v921 = vpop.permute.xlu0 %920
        %924 = vset.pattern.permute.xlu0 0
        %925 = vperm.xlu0 %924, %v907
        %v926 = vpop.permute.xlu0 %925
        %929 = vset.pattern.permute.xlu0 0
        %930 = vperm.xlu0 %929, %v908
        %v931 = vpop.permute.xlu0 %930
        %934 = vset.pattern.permute.xlu0 0
        %935 = vperm.xlu0 %934, %v909
        %v936 = vpop.permute.xlu0 %935
        %939 = vset.pattern.permute.xlu0 0
        %940 = vperm.xlu0 %939, %v910
        %v941 = vpop.permute.xlu0 %940
        %944 = vset.pattern.permute.xlu0 0
        %945 = vperm.xlu0 %944, %v911
        %v946 = vpop.permute.xlu0 %945
        %949 = vset.pattern.permute.xlu0 0
        %950 = vperm.xlu0 %949, %v912
        %v951 = vpop.permute.xlu0 %950
        %v953 = vadd.f32 %v889, %v916
        %v954 = vadd.f32 %v890, %v916
        %v955 = vadd.f32 %v891, %v921
        %v956 = vadd.f32 %v892, %v921
        %v957 = vadd.f32 %v893, %v926
        %v958 = vadd.f32 %v894, %v926
        %v959 = vadd.f32 %v895, %v931
        %v960 = vadd.f32 %v896, %v931
        %v961 = vadd.f32 %v897, %v936
        %v962 = vadd.f32 %v898, %v936
        %v963 = vadd.f32 %v899, %v941
        %v964 = vadd.f32 %v900, %v941
        %v965 = vadd.f32 %v901, %v946
        %v966 = vadd.f32 %v902, %v946
        %v967 = vadd.f32 %v903, %v951
        %v968 = vadd.f32 %v904, %v951
        %vm969 = vcmp.gt.f32.partialorder %v953, 0.0
        %vm970 = vcmp.gt.f32.partialorder %v954, 0.0
        %vm971 = vcmp.gt.f32.partialorder %v955, 0.0
        %vm972 = vcmp.gt.f32.partialorder %v956, 0.0
        %vm973 = vcmp.gt.f32.partialorder %v957, 0.0
        %vm974 = vcmp.gt.f32.partialorder %v958, 0.0
        %vm975 = vcmp.gt.f32.partialorder %v959, 0.0
        %vm976 = vcmp.gt.f32.partialorder %v960, 0.0
        %vm977 = vcmp.gt.f32.partialorder %v961, 0.0
        %vm978 = vcmp.gt.f32.partialorder %v962, 0.0
        %vm979 = vcmp.gt.f32.partialorder %v963, 0.0
        %vm980 = vcmp.gt.f32.partialorder %v964, 0.0
        %vm981 = vcmp.gt.f32.partialorder %v965, 0.0
        %vm982 = vcmp.gt.f32.partialorder %v966, 0.0
        %vm983 = vcmp.gt.f32.partialorder %v967, 0.0
        %vm984 = vcmp.gt.f32.partialorder %v968, 0.0
        %v985 = vmul.f32 %v953, 0.1
        %v986 = vmul.f32 %v954, 0.1
        %v987 = vmul.f32 %v955, 0.1
        %v988 = vmul.f32 %v956, 0.1
        %v989 = vmul.f32 %v957, 0.1
        %v990 = vmul.f32 %v958, 0.1
        %v991 = vmul.f32 %v959, 0.1
        %v992 = vmul.f32 %v960, 0.1
        %v993 = vmul.f32 %v961, 0.1
        %v994 = vmul.f32 %v962, 0.1
        %v995 = vmul.f32 %v963, 0.1
        %v996 = vmul.f32 %v964, 0.1
        %v997 = vmul.f32 %v965, 0.1
        %v998 = vmul.f32 %v966, 0.1
        %v999 = vmul.f32 %v967, 0.1
        %v1000 = vmul.f32 %v968, 0.1
        %v1001 = vsel %vm969, %v953, %v985
        %v1002 = vsel %vm970, %v954, %v986
        %v1003 = vsel %vm971, %v955, %v987
        %v1004 = vsel %vm972, %v956, %v988
        %v1005 = vsel %vm973, %v957, %v989
        %v1006 = vsel %vm974, %v958, %v990
        %v1007 = vsel %vm975, %v959, %v991
        %v1008 = vsel %vm976, %v960, %v992
        %v1009 = vsel %vm977, %v961, %v993
        %v1010 = vsel %vm978, %v962, %v994
        %v1011 = vsel %vm979, %v963, %v995
        %v1012 = vsel %vm980, %v964, %v996
        %v1013 = vsel %vm981, %v965, %v997
        %v1014 = vsel %vm982, %v966, %v998
        %v1015 = vsel %vm983, %v967, %v999
        %v1016 = vsel %vm984, %v968, %v1000
        %v1017 = vpack.c.bf16 %v1003, %v1001
        %v1018 = vpack.c.bf16 %v1004, %v1002
        %v1019 = vpack.c.bf16 %v1007, %v1005
        %v1020 = vpack.c.bf16 %v1008, %v1006
        %v1021 = vpack.c.bf16 %v1011, %v1009
        %v1022 = vpack.c.bf16 %v1012, %v1010
        %v1023 = vpack.c.bf16 %v1015, %v1013
        %v1024 = vpack.c.bf16 %v1016, %v1014
        %1025 = vst [vmem:[#allocation2 + $0x8] sm:$0xff] %v1017
        %1026 = vst [vmem:[#allocation2 + $0x10] sm:$0xff] %v1018
        %1027 = vst [vmem:[#allocation2 + $0x28] sm:$0xff] %v1019
        %1028 = vst [vmem:[#allocation2 + $0x30] sm:$0xff] %v1020
        %1029 = vst [vmem:[#allocation2 + $0x48] sm:$0xff] %v1021
        %1030 = vst [vmem:[#allocation2 + $0x50] sm:$0xff] %v1022
        %1031 = vst [vmem:[#allocation2 + $0x68] sm:$0xff] %v1023
        %1032 = vst [vmem:[#allocation2 + $0x70] sm:$0xff] %v1024
        // Predicated region
        $region57: #{tpu_custom_call.1} parent=39 // pred_check
          %p1033 = pneg %p399
        $region58: #{tpu_custom_call.1} parent=39 // pred_check_branch
          %1035 = sbr.rel (%p1033) target = $region60
        $region59: #{tpu_custom_call.1} parent=39 // pred_region
          %vm1036 = vcmask 97280
          %1037 = vst.msk [vmem:[#allocation2 + $0x8] sm:$0xff] %vm1036, 0
          %1038 = vst.msk [vmem:[#allocation2 + $0x28] sm:$0xff] %vm1036, 0
          %1039 = vst.msk [vmem:[#allocation2 + $0x48] sm:$0xff] %vm1036, 0
          %1040 = vst.msk [vmem:[#allocation2 + $0x68] sm:$0xff] %vm1036, 0
        $region60: #{tpu_custom_call.1} parent=39 // pred_fallthru
          _
        // Predicated region
        $region61: #{tpu_custom_call.1} parent=39 // pred_check
          %p1041 = pneg %p408
        $region62: #{tpu_custom_call.1} parent=39 // pred_check_branch
          %1043 = sbr.rel (%p1041) target = $region64
        $region63: #{tpu_custom_call.1} parent=39 // pred_region
          %vm1044 = vcmask 1047648
          %1045 = vst.msk [vmem:[#allocation2 + $0x10] sm:$0xff] %vm1044, 0
          %1046 = vst.msk [vmem:[#allocation2 + $0x30] sm:$0xff] %vm1044, 0
          %1047 = vst.msk [vmem:[#allocation2 + $0x50] sm:$0xff] %vm1044, 0
          %1048 = vst.msk [vmem:[#allocation2 + $0x70] sm:$0xff] %vm1044, 0
        $region64: #{tpu_custom_call.1} parent=39 // pred_fallthru
          _
        %v1049 = vld [vmem:[#allocation2] sm:$0xff]
        %v1050 = vld [vmem:[#allocation2 + $0x8] sm:$0xff]
        %v1051 = vld [vmem:[#allocation2 + $0x10] sm:$0xff]
        %v1052 = vld [vmem:[#allocation2 + $0x20] sm:$0xff]
        %v1053 = vld [vmem:[#allocation2 + $0x28] sm:$0xff]
        %v1054 = vld [vmem:[#allocation2 + $0x30] sm:$0xff]
        %v1055 = vld [vmem:[#allocation2 + $0x40] sm:$0xff]
        %v1056 = vld [vmem:[#allocation2 + $0x48] sm:$0xff]
        %v1057 = vld [vmem:[#allocation2 + $0x50] sm:$0xff]
        %v1058 = vld [vmem:[#allocation2 + $0x60] sm:$0xff]
        %v1059 = vld [vmem:[#allocation2 + $0x68] sm:$0xff]
        %v1060 = vld [vmem:[#allocation2 + $0x70] sm:$0xff]
        %v1061 = vld [vmem:[#allocation7] sm:$0xf]
        %v1062 = vld [vmem:[#allocation7 + $0x4] sm:$0xf]
        %v1063 = vld [vmem:[#allocation7 + $0x8] sm:$0xf]
        %v1064 = vld [vmem:[#allocation7 + $0xc] sm:$0xf]
        %v1065 = vld [vmem:[#allocation7 + $0x10] sm:$0xf]
        %v1066 = vld [vmem:[#allocation7 + $0x14] sm:$0xf]
        %v1067 = vld [vmem:[#allocation7 + $0x18] sm:$0xf]
        %v1068 = vld [vmem:[#allocation7 + $0x1c] sm:$0xf]
        %s1069 = scalar_lea.vmem [#allocation7], 32
        %v1070 = vld [vmem:[%s1069] sm:$0xf]
        %v1071 = vld [vmem:[%s1069 + $0x4] sm:$0xf]
        %v1072 = vld [vmem:[%s1069 + $0x8] sm:$0xf]
        %v1073 = vld [vmem:[%s1069 + $0xc] sm:$0xf]
        %v1074 = vld [vmem:[%s1069 + $0x10] sm:$0xf]
        %v1075 = vld [vmem:[%s1069 + $0x14] sm:$0xf]
        %v1076 = vld [vmem:[%s1069 + $0x18] sm:$0xf]
        %v1077 = vld [vmem:[%s1069 + $0x1c] sm:$0xf]
        %v1086 = vunpack.c.l.b16 %v1070
        %v1087 = vunpack.c.l.b16 %v1071
        %v1088 = vunpack.c.l.b16 %v1072
        %v1089 = vunpack.c.l.b16 %v1073
        %v1090 = vunpack.c.l.b16 %v1074
        %v1091 = vunpack.c.l.b16 %v1075
        %v1092 = vunpack.c.l.b16 %v1076
        %v1093 = vunpack.c.l.b16 %v1077
        %v1094 = vpack.c.b16 %v1087, %v1086
        %v1095 = vpack.c.b16 %v1089, %v1088
        %v1096 = vpack.c.b16 %v1091, %v1090
        %v1097 = vpack.c.b16 %v1093, %v1092
        %v1099 = vsel %vm466, %v1094, 0
        %v1102 = vsel %vm466, %v1095, 0
        %v1105 = vsel %vm466, %v1096, 0
        %v1108 = vsel %vm466, %v1097, 0
        %1110 = vmatprep.subr.bf16.mxu0 %v1051
        %1111 = vmatpush1.bf16.msra.mxu0 %v1050
        %1112 = vmatprep.subr.bf16.mxu0 %v1054
        %1113 = vmatpush1.bf16.msra.mxu0 %v1053
        %1114 = vmatprep.subr.bf16.mxu0 %v1057
        %1115 = vmatpush1.bf16.msra.mxu0 %v1056
        %1116 = vmatprep.subr.bf16.mxu0 %v1060
        %1117 = vmatpush1.bf16.msra.mxu0 %v1059
        %1118 = vmatprep.subr.bf16.mxu0 0
        %1119 = vmatpush1.bf16.msra.mxu0 0
        %1120 = vmatprep.subr.bf16.mxu0 0
        %1121 = vmatpush1.bf16.msra.mxu0 0
        %1122 = vmatprep.subr.bf16.mxu0 0
        %1123 = vmatpush1.bf16.msra.mxu0 0
        %1124 = vmatprep.subr.bf16.mxu0 0
        %1125 = vmatpush1.bf16.msra.mxu0 0
        %1126 = vmatprep.subr.bf16.mxu0 0
        %1127 = vmatpush1.bf16.msra.mxu0 0
        %1128 = vmatprep.subr.bf16.mxu0 0
        %1129 = vmatpush1.bf16.msra.mxu0 0
        %1130 = vmatprep.subr.bf16.mxu0 0
        %1131 = vmatpush1.bf16.msra.mxu0 0
        %1132 = vmatprep.subr.bf16.mxu0 0
        %1133 = vmatpush1.bf16.msra.mxu0 0
        %1134 = vmatprep.subr.bf16.mxu0 0
        %1135 = vmatpush1.bf16.msra.mxu0 0
        %1136 = vmatprep.subr.bf16.mxu0 0
        %1137 = vmatpush1.bf16.msra.mxu0 0
        %1138 = vmatprep.subr.bf16.mxu0 0
        %1139 = vmatpush1.bf16.msra.mxu0 0
        %1140 = vmatprep.subr.bf16.mxu0 0
        %1141 = vmatpush1.bf16.msra.mxu0 0
        %1142 = vmatprep.mubr.bf16.mxu0 0
        %1143 = vmatmul.mubr.bf16.gmra.mrb[0].mxu0 %v1099
        %v1144 = vpop.f32.mrb[0].mxu0
        %v1145 = vadd.f32 0.0, %v1144
        %v1146 = vpop.f32.mrb[0].mxu0
        %v1147 = vadd.f32 0.0, %v1146
        %v1148 = vpop.f32.mrb[0].mxu0
        %v1149 = vadd.f32 0.0, %v1148
        %v1150 = vpop.f32.mrb[0].mxu0
        %v1151 = vadd.f32 0.0, %v1150
        %1152 = vmatprep.mubr.bf16.mxu0 0
        %1153 = vmatmul.mubr.bf16.gmra.mrb[0].mxu0 %v1102
        %v1154 = vpop.f32.mrb[0].mxu0
        %v1155 = vadd.f32 0.0, %v1154
        %v1156 = vpop.f32.mrb[0].mxu0
        %v1157 = vadd.f32 0.0, %v1156
        %v1158 = vpop.f32.mrb[0].mxu0
        %v1159 = vadd.f32 0.0, %v1158
        %v1160 = vpop.f32.mrb[0].mxu0
        %v1161 = vadd.f32 0.0, %v1160
        %1162 = vmatprep.mubr.bf16.mxu0 0
        %1163 = vmatmul.mubr.bf16.gmra.mrb[0].mxu0 %v1105
        %v1164 = vpop.f32.mrb[0].mxu0
        %v1165 = vadd.f32 0.0, %v1164
        %v1166 = vpop.f32.mrb[0].mxu0
        %v1167 = vadd.f32 0.0, %v1166
        %v1168 = vpop.f32.mrb[0].mxu0
        %v1169 = vadd.f32 0.0, %v1168
        %v1170 = vpop.f32.mrb[0].mxu0
        %v1171 = vadd.f32 0.0, %v1170
        %1172 = vmatprep.mubr.bf16.mxu0 0
        %1173 = vmatmul.mubr.bf16.gmra.mrb[0].mxu0 %v1108
        %v1174 = vpop.f32.mrb[0].mxu0
        %v1175 = vadd.f32 0.0, %v1174
        %v1176 = vpop.f32.mrb[0].mxu0
        %v1177 = vadd.f32 0.0, %v1176
        %v1178 = vpop.f32.mrb[0].mxu0
        %v1179 = vadd.f32 0.0, %v1178
        %v1180 = vpop.f32.mrb[0].mxu0
        %v1181 = vadd.f32 0.0, %v1180
        %1182 = vdwg.mxu0
        %v1191 = vunpack.c.l.b16 %v1061
        %v1192 = vunpack.c.l.b16 %v1062
        %v1193 = vunpack.c.l.b16 %v1063
        %v1194 = vunpack.c.l.b16 %v1064
        %v1195 = vunpack.c.l.b16 %v1065
        %v1196 = vunpack.c.l.b16 %v1066
        %v1197 = vunpack.c.l.b16 %v1067
        %v1198 = vunpack.c.l.b16 %v1068
        %v1199 = vpack.c.b16 %v1192, %v1191
        %v1200 = vpack.c.b16 %v1194, %v1193
        %v1201 = vpack.c.b16 %v1196, %v1195
        %v1202 = vpack.c.b16 %v1198, %v1197
        %1215 = vrot.lane.b32.xlu0 %v1049, 1
        %v1216 = vpop.permute.xlu0 %1215
        %1217 = vrot.lane.b32.xlu0 %v1050, 1
        %v1218 = vpop.permute.xlu0 %1217
        %1219 = vrot.lane.b32.xlu0 %v1051, 1
        %v1220 = vpop.permute.xlu0 %1219
        %1221 = vrot.lane.b32.xlu0 %v1052, 1
        %v1222 = vpop.permute.xlu0 %1221
        %1223 = vrot.lane.b32.xlu0 %v1053, 1
        %v1224 = vpop.permute.xlu0 %1223
        %1225 = vrot.lane.b32.xlu0 %v1054, 1
        %v1226 = vpop.permute.xlu0 %1225
        %1227 = vrot.lane.b32.xlu0 %v1055, 1
        %v1228 = vpop.permute.xlu0 %1227
        %1229 = vrot.lane.b32.xlu0 %v1056, 1
        %v1230 = vpop.permute.xlu0 %1229
        %1231 = vrot.lane.b32.xlu0 %v1057, 1
        %v1232 = vpop.permute.xlu0 %1231
        %1233 = vrot.lane.b32.xlu0 %v1058, 1
        %v1234 = vpop.permute.xlu0 %1233
        %1235 = vrot.lane.b32.xlu0 %v1059, 1
        %v1236 = vpop.permute.xlu0 %1235
        %1237 = vrot.lane.b32.xlu0 %v1060, 1
        %v1238 = vpop.permute.xlu0 %1237
        %v1239 = vsel %vm608, %v1216, %v1218
        %v1240 = vsel %vm608, %v1218, %v1220
        %v1241 = vsel %vm608, %v1222, %v1224
        %v1242 = vsel %vm608, %v1224, %v1226
        %v1243 = vsel %vm608, %v1228, %v1230
        %v1244 = vsel %vm608, %v1230, %v1232
        %v1245 = vsel %vm608, %v1234, %v1236
        %v1246 = vsel %vm608, %v1236, %v1238
        %v1256 = vsel %vm466, %v1199, 0
        %v1259 = vsel %vm466, %v1200, 0
        %v1262 = vsel %vm466, %v1201, 0
        %v1265 = vsel %vm466, %v1202, 0
        %1267 = vmatprep.subr.bf16.mxu0 %v1240
        %1268 = vmatpush1.bf16.msra.mxu0 %v1239
        %1269 = vmatprep.subr.bf16.mxu0 %v1242
        %1270 = vmatpush1.bf16.msra.mxu0 %v1241
        %1271 = vmatprep.subr.bf16.mxu0 %v1244
        %1272 = vmatpush1.bf16.msra.mxu0 %v1243
        %1273 = vmatprep.subr.bf16.mxu0 %v1246
        %1274 = vmatpush1.bf16.msra.mxu0 %v1245
        %1275 = vmatprep.subr.bf16.mxu0 0
        %1276 = vmatpush1.bf16.msra.mxu0 0
        %1277 = vmatprep.subr.bf16.mxu0 0
        %1278 = vmatpush1.bf16.msra.mxu0 0
        %1279 = vmatprep.subr.bf16.mxu0 0
        %1280 = vmatpush1.bf16.msra.mxu0 0
        %1281 = vmatprep.subr.bf16.mxu0 0
        %1282 = vmatpush1.bf16.msra.mxu0 0
        %1283 = vmatprep.subr.bf16.mxu0 0
        %1284 = vmatpush1.bf16.msra.mxu0 0
        %1285 = vmatprep.subr.bf16.mxu0 0
        %1286 = vmatpush1.bf16.msra.mxu0 0
        %1287 = vmatprep.subr.bf16.mxu0 0
        %1288 = vmatpush1.bf16.msra.mxu0 0
        %1289 = vmatprep.subr.bf16.mxu0 0
        %1290 = vmatpush1.bf16.msra.mxu0 0
        %1291 = vmatprep.subr.bf16.mxu0 0
        %1292 = vmatpush1.bf16.msra.mxu0 0
        %1293 = vmatprep.subr.bf16.mxu0 0
        %1294 = vmatpush1.bf16.msra.mxu0 0
        %1295 = vmatprep.subr.bf16.mxu0 0
        %1296 = vmatpush1.bf16.msra.mxu0 0
        %1297 = vmatprep.subr.bf16.mxu0 0
        %1298 = vmatpush1.bf16.msra.mxu0 0
        %1299 = vmatprep.mubr.bf16.mxu0 0
        %1300 = vmatmul.mubr.bf16.gmra.mrb[0].mxu0 %v1256
        %v1301 = vpop.f32.mrb[0].mxu0
        %v1302 = vadd.f32 %v1145, %v1301
        %v1303 = vpop.f32.mrb[0].mxu0
        %v1304 = vadd.f32 %v1147, %v1303
        %v1305 = vpop.f32.mrb[0].mxu0
        %v1306 = vadd.f32 %v1149, %v1305
        %v1307 = vpop.f32.mrb[0].mxu0
        %v1308 = vadd.f32 %v1151, %v1307
        %1309 = vmatprep.mubr.bf16.mxu0 0
        %1310 = vmatmul.mubr.bf16.gmra.mrb[0].mxu0 %v1259
        %v1311 = vpop.f32.mrb[0].mxu0
        %v1312 = vadd.f32 %v1155, %v1311
        %v1313 = vpop.f32.mrb[0].mxu0
        %v1314 = vadd.f32 %v1157, %v1313
        %v1315 = vpop.f32.mrb[0].mxu0
        %v1316 = vadd.f32 %v1159, %v1315
        %v1317 = vpop.f32.mrb[0].mxu0
        %v1318 = vadd.f32 %v1161, %v1317
        %1319 = vmatprep.mubr.bf16.mxu0 0
        %1320 = vmatmul.mubr.bf16.gmra.mrb[0].mxu0 %v1262
        %v1321 = vpop.f32.mrb[0].mxu0
        %v1322 = vadd.f32 %v1165, %v1321
        %v1323 = vpop.f32.mrb[0].mxu0
        %v1324 = vadd.f32 %v1167, %v1323
        %v1325 = vpop.f32.mrb[0].mxu0
        %v1326 = vadd.f32 %v1169, %v1325
        %v1327 = vpop.f32.mrb[0].mxu0
        %v1328 = vadd.f32 %v1171, %v1327
        %1329 = vmatprep.mubr.bf16.mxu0 0
        %1330 = vmatmul.mubr.bf16.gmra.mrb[0].mxu0 %v1265
        %v1331 = vpop.f32.mrb[0].mxu0
        %v1332 = vadd.f32 %v1175, %v1331
        %v1333 = vpop.f32.mrb[0].mxu0
        %v1334 = vadd.f32 %v1177, %v1333
        %v1335 = vpop.f32.mrb[0].mxu0
        %v1336 = vadd.f32 %v1179, %v1335
        %v1337 = vpop.f32.mrb[0].mxu0
        %v1338 = vadd.f32 %v1181, %v1337
        %1339 = vdwg.mxu0
        %v1340 = vld [vmem:[#allocation2 + $0x8] sm:$0xff]
        %v1341 = vld [vmem:[#allocation2 + $0x10] sm:$0xff]
        %v1342 = vld [vmem:[#allocation2 + $0x18] sm:$0xff]
        %v1343 = vld [vmem:[#allocation2 + $0x28] sm:$0xff]
        %v1344 = vld [vmem:[#allocation2 + $0x30] sm:$0xff]
        %v1345 = vld [vmem:[#allocation2 + $0x38] sm:$0xff]
        %v1346 = vld [vmem:[#allocation2 + $0x48] sm:$0xff]
        %v1347 = vld [vmem:[#allocation2 + $0x50] sm:$0xff]
        %v1348 = vld [vmem:[#allocation2 + $0x58] sm:$0xff]
        %v1349 = vld [vmem:[#allocation2 + $0x68] sm:$0xff]
        %v1350 = vld [vmem:[#allocation2 + $0x70] sm:$0xff]
        %v1351 = vld [vmem:[#allocation2 + $0x78] sm:$0xff]
        %s1352 = scalar_lea.vmem [#allocation7], 64
        %v1353 = vld [vmem:[%s1352] sm:$0xf]
        %v1354 = vld [vmem:[%s1352 + $0x4] sm:$0xf]
        %v1355 = vld [vmem:[%s1352 + $0x8] sm:$0xf]
        %v1356 = vld [vmem:[%s1352 + $0xc] sm:$0xf]
        %v1357 = vld [vmem:[%s1352 + $0x10] sm:$0xf]
        %v1358 = vld [vmem:[%s1352 + $0x14] sm:$0xf]
        %v1359 = vld [vmem:[%s1352 + $0x18] sm:$0xf]
        %v1360 = vld [vmem:[%s1352 + $0x1c] sm:$0xf]
        %v1369 = vunpack.c.l.b16 %v1353
        %v1370 = vunpack.c.l.b16 %v1354
        %v1371 = vunpack.c.l.b16 %v1355
        %v1372 = vunpack.c.l.b16 %v1356
        %v1373 = vunpack.c.l.b16 %v1357
        %v1374 = vunpack.c.l.b16 %v1358
        %v1375 = vunpack.c.l.b16 %v1359
        %v1376 = vunpack.c.l.b16 %v1360
        %v1377 = vpack.c.b16 %v1370, %v1369
        %v1378 = vpack.c.b16 %v1372, %v1371
        %v1379 = vpack.c.b16 %v1374, %v1373
        %v1380 = vpack.c.b16 %v1376, %v1375
        %1393 = vrot.lane.b32.xlu0 %v1340, 127
        %v1394 = vpop.permute.xlu0 %1393
        %1395 = vrot.lane.b32.xlu0 %v1341, 127
        %v1396 = vpop.permute.xlu0 %1395
        %1397 = vrot.lane.b32.xlu0 %v1342, 127
        %v1398 = vpop.permute.xlu0 %1397
        %1399 = vrot.lane.b32.xlu0 %v1343, 127
        %v1400 = vpop.permute.xlu0 %1399
        %1401 = vrot.lane.b32.xlu0 %v1344, 127
        %v1402 = vpop.permute.xlu0 %1401
        %1403 = vrot.lane.b32.xlu0 %v1345, 127
        %v1404 = vpop.permute.xlu0 %1403
        %1405 = vrot.lane.b32.xlu0 %v1346, 127
        %v1406 = vpop.permute.xlu0 %1405
        %1407 = vrot.lane.b32.xlu0 %v1347, 127
        %v1408 = vpop.permute.xlu0 %1407
        %1409 = vrot.lane.b32.xlu0 %v1348, 127
        %v1410 = vpop.permute.xlu0 %1409
        %1411 = vrot.lane.b32.xlu0 %v1349, 127
        %v1412 = vpop.permute.xlu0 %1411
        %1413 = vrot.lane.b32.xlu0 %v1350, 127
        %v1414 = vpop.permute.xlu0 %1413
        %1415 = vrot.lane.b32.xlu0 %v1351, 127
        %v1416 = vpop.permute.xlu0 %1415
        %v1417 = vsel %vm787, %v1394, %v1396
        %v1418 = vsel %vm787, %v1396, %v1398
        %v1419 = vsel %vm787, %v1400, %v1402
        %v1420 = vsel %vm787, %v1402, %v1404
        %v1421 = vsel %vm787, %v1406, %v1408
        %v1422 = vsel %vm787, %v1408, %v1410
        %v1423 = vsel %vm787, %v1412, %v1414
        %v1424 = vsel %vm787, %v1414, %v1416
        %v1434 = vsel %vm466, %v1377, 0
        %v1437 = vsel %vm466, %v1378, 0
        %v1440 = vsel %vm466, %v1379, 0
        %v1443 = vsel %vm466, %v1380, 0
        %1445 = vmatprep.subr.bf16.mxu0 %v1418
        %1446 = vmatpush1.bf16.msra.mxu0 %v1417
        %1447 = vmatprep.subr.bf16.mxu0 %v1420
        %1448 = vmatpush1.bf16.msra.mxu0 %v1419
        %1449 = vmatprep.subr.bf16.mxu0 %v1422
        %1450 = vmatpush1.bf16.msra.mxu0 %v1421
        %1451 = vmatprep.subr.bf16.mxu0 %v1424
        %1452 = vmatpush1.bf16.msra.mxu0 %v1423
        %1453 = vmatprep.subr.bf16.mxu0 0
        %1454 = vmatpush1.bf16.msra.mxu0 0
        %1455 = vmatprep.subr.bf16.mxu0 0
        %1456 = vmatpush1.bf16.msra.mxu0 0
        %1457 = vmatprep.subr.bf16.mxu0 0
        %1458 = vmatpush1.bf16.msra.mxu0 0
        %1459 = vmatprep.subr.bf16.mxu0 0
        %1460 = vmatpush1.bf16.msra.mxu0 0
        %1461 = vmatprep.subr.bf16.mxu0 0
        %1462 = vmatpush1.bf16.msra.mxu0 0
        %1463 = vmatprep.subr.bf16.mxu0 0
        %1464 = vmatpush1.bf16.msra.mxu0 0
        %1465 = vmatprep.subr.bf16.mxu0 0
        %1466 = vmatpush1.bf16.msra.mxu0 0
        %1467 = vmatprep.subr.bf16.mxu0 0
        %1468 = vmatpush1.bf16.msra.mxu0 0
        %1469 = vmatprep.subr.bf16.mxu0 0
        %1470 = vmatpush1.bf16.msra.mxu0 0
        %1471 = vmatprep.subr.bf16.mxu0 0
        %1472 = vmatpush1.bf16.msra.mxu0 0
        %1473 = vmatprep.subr.bf16.mxu0 0
        %1474 = vmatpush1.bf16.msra.mxu0 0
        %1475 = vmatprep.subr.bf16.mxu0 0
        %1476 = vmatpush1.bf16.msra.mxu0 0
        %1477 = vmatprep.mubr.bf16.mxu0 0
        %1478 = vmatmul.mubr.bf16.gmra.mrb[0].mxu0 %v1434
        %v1479 = vpop.f32.mrb[0].mxu0
        %v1480 = vadd.f32 0.0, %v1479
        %v1481 = vpop.f32.mrb[0].mxu0
        %v1482 = vadd.f32 0.0, %v1481
        %v1483 = vpop.f32.mrb[0].mxu0
        %v1484 = vadd.f32 0.0, %v1483
        %v1485 = vpop.f32.mrb[0].mxu0
        %v1486 = vadd.f32 0.0, %v1485
        %1487 = vmatprep.mubr.bf16.mxu0 0
        %1488 = vmatmul.mubr.bf16.gmra.mrb[0].mxu0 %v1437
        %v1489 = vpop.f32.mrb[0].mxu0
        %v1490 = vadd.f32 0.0, %v1489
        %v1491 = vpop.f32.mrb[0].mxu0
        %v1492 = vadd.f32 0.0, %v1491
        %v1493 = vpop.f32.mrb[0].mxu0
        %v1494 = vadd.f32 0.0, %v1493
        %v1495 = vpop.f32.mrb[0].mxu0
        %v1496 = vadd.f32 0.0, %v1495
        %1497 = vmatprep.mubr.bf16.mxu0 0
        %1498 = vmatmul.mubr.bf16.gmra.mrb[0].mxu0 %v1440
        %v1499 = vpop.f32.mrb[0].mxu0
        %v1500 = vadd.f32 0.0, %v1499
        %v1501 = vpop.f32.mrb[0].mxu0
        %v1502 = vadd.f32 0.0, %v1501
        %v1503 = vpop.f32.mrb[0].mxu0
        %v1504 = vadd.f32 0.0, %v1503
        %v1505 = vpop.f32.mrb[0].mxu0
        %v1506 = vadd.f32 0.0, %v1505
        %1507 = vmatprep.mubr.bf16.mxu0 0
        %1508 = vmatmul.mubr.bf16.gmra.mrb[0].mxu0 %v1443
        %v1509 = vpop.f32.mrb[0].mxu0
        %v1510 = vadd.f32 0.0, %v1509
        %v1511 = vpop.f32.mrb[0].mxu0
        %v1512 = vadd.f32 0.0, %v1511
        %v1513 = vpop.f32.mrb[0].mxu0
        %v1514 = vadd.f32 0.0, %v1513
        %v1515 = vpop.f32.mrb[0].mxu0
        %v1516 = vadd.f32 0.0, %v1515
        %1517 = vdwg.mxu0
        %v1518 = vadd.f32 %v1302, %v1480
        %v1519 = vadd.f32 %v1304, %v1482
        %v1520 = vadd.f32 %v1306, %v1484
        %v1521 = vadd.f32 %v1308, %v1486
        %v1522 = vadd.f32 %v1312, %v1490
        %v1523 = vadd.f32 %v1314, %v1492
        %v1524 = vadd.f32 %v1316, %v1494
        %v1525 = vadd.f32 %v1318, %v1496
        %v1526 = vadd.f32 %v1322, %v1500
        %v1527 = vadd.f32 %v1324, %v1502
        %v1528 = vadd.f32 %v1326, %v1504
        %v1529 = vadd.f32 %v1328, %v1506
        %v1530 = vadd.f32 %v1332, %v1510
        %v1531 = vadd.f32 %v1334, %v1512
        %v1532 = vadd.f32 %v1336, %v1514
        %v1533 = vadd.f32 %v1338, %v1516
        %v1534 = vld [vmem:[%s4] sm:$0xff]
        %v1535 = vld [vmem:[%s4 + $0x8] sm:$0xff]
        %v1536 = vld [vmem:[%s4 + $0x10] sm:$0xff]
        %v1537 = vld [vmem:[%s4 + $0x18] sm:$0xff]
        %v1538 = vld [vmem:[%s4 + $0x20] sm:$0xff]
        %v1539 = vld [vmem:[%s4 + $0x28] sm:$0xff]
        %v1540 = vld [vmem:[%s4 + $0x30] sm:$0xff]
        %v1541 = vld [vmem:[%s4 + $0x38] sm:$0xff]
        %1543 = vset.pattern.permute.xlu0 0
        %1544 = vperm.xlu0 %1543, %v1534
        %v1545 = vpop.permute.xlu0 %1544
        %1548 = vset.pattern.permute.xlu0 0
        %1549 = vperm.xlu0 %1548, %v1535
        %v1550 = vpop.permute.xlu0 %1549
        %1553 = vset.pattern.permute.xlu0 0
        %1554 = vperm.xlu0 %1553, %v1536
        %v1555 = vpop.permute.xlu0 %1554
        %1558 = vset.pattern.permute.xlu0 0
        %1559 = vperm.xlu0 %1558, %v1537
        %v1560 = vpop.permute.xlu0 %1559
        %1563 = vset.pattern.permute.xlu0 0
        %1564 = vperm.xlu0 %1563, %v1538
        %v1565 = vpop.permute.xlu0 %1564
        %1568 = vset.pattern.permute.xlu0 0
        %1569 = vperm.xlu0 %1568, %v1539
        %v1570 = vpop.permute.xlu0 %1569
        %1573 = vset.pattern.permute.xlu0 0
        %1574 = vperm.xlu0 %1573, %v1540
        %v1575 = vpop.permute.xlu0 %1574
        %1578 = vset.pattern.permute.xlu0 0
        %1579 = vperm.xlu0 %1578, %v1541
        %v1580 = vpop.permute.xlu0 %1579
        %v1582 = vadd.f32 %v1518, %v1545
        %v1583 = vadd.f32 %v1519, %v1545
        %v1584 = vadd.f32 %v1520, %v1550
        %v1585 = vadd.f32 %v1521, %v1550
        %v1586 = vadd.f32 %v1522, %v1555
        %v1587 = vadd.f32 %v1523, %v1555
        %v1588 = vadd.f32 %v1524, %v1560
        %v1589 = vadd.f32 %v1525, %v1560
        %v1590 = vadd.f32 %v1526, %v1565
        %v1591 = vadd.f32 %v1527, %v1565
        %v1592 = vadd.f32 %v1528, %v1570
        %v1593 = vadd.f32 %v1529, %v1570
        %v1594 = vadd.f32 %v1530, %v1575
        %v1595 = vadd.f32 %v1531, %v1575
        %v1596 = vadd.f32 %v1532, %v1580
        %v1597 = vadd.f32 %v1533, %v1580
        %v1598 = vld [vmem:[#allocation3] sm:$0xff]
        %v1599 = vld [vmem:[#allocation3 + $0x8] sm:$0xff]
        %v1600 = vld [vmem:[#allocation3 + $0x10] sm:$0xff]
        %v1601 = vld [vmem:[#allocation3 + $0x18] sm:$0xff]
        %v1602 = vld [vmem:[#allocation3 + $0x20] sm:$0xff]
        %v1603 = vld [vmem:[#allocation3 + $0x28] sm:$0xff]
        %v1604 = vld [vmem:[#allocation3 + $0x30] sm:$0xff]
        %v1605 = vld [vmem:[#allocation3 + $0x38] sm:$0xff]
        %v1606 = vld [vmem:[#allocation3 + $0x40] sm:$0xff]
        %v1607 = vld [vmem:[#allocation3 + $0x48] sm:$0xff]
        %v1608 = vld [vmem:[#allocation3 + $0x50] sm:$0xff]
        %v1609 = vld [vmem:[#allocation3 + $0x58] sm:$0xff]
        %v1610 = vld [vmem:[#allocation3 + $0x60] sm:$0xff]
        %v1611 = vld [vmem:[#allocation3 + $0x68] sm:$0xff]
        %v1612 = vld [vmem:[#allocation3 + $0x70] sm:$0xff]
        %v1613 = vld [vmem:[#allocation3 + $0x78] sm:$0xff]
        %v1614 = vadd.f32 %v1582, %v1598
        %v1615 = vadd.f32 %v1583, %v1599
        %v1616 = vadd.f32 %v1584, %v1600
        %v1617 = vadd.f32 %v1585, %v1601
        %v1618 = vadd.f32 %v1586, %v1602
        %v1619 = vadd.f32 %v1587, %v1603
        %v1620 = vadd.f32 %v1588, %v1604
        %v1621 = vadd.f32 %v1589, %v1605
        %v1622 = vadd.f32 %v1590, %v1606
        %v1623 = vadd.f32 %v1591, %v1607
        %v1624 = vadd.f32 %v1592, %v1608
        %v1625 = vadd.f32 %v1593, %v1609
        %v1626 = vadd.f32 %v1594, %v1610
        %v1627 = vadd.f32 %v1595, %v1611
        %v1628 = vadd.f32 %v1596, %v1612
        %v1629 = vadd.f32 %v1597, %v1613
        %1630 = vst [vmem:[#allocation3] sm:$0xff] %v1614
        %1631 = vst [vmem:[#allocation3 + $0x8] sm:$0xff] %v1615
        %1632 = vst [vmem:[#allocation3 + $0x10] sm:$0xff] %v1616
        %1633 = vst [vmem:[#allocation3 + $0x18] sm:$0xff] %v1617
        %1634 = vst [vmem:[#allocation3 + $0x20] sm:$0xff] %v1618
        %1635 = vst [vmem:[#allocation3 + $0x28] sm:$0xff] %v1619
        %1636 = vst [vmem:[#allocation3 + $0x30] sm:$0xff] %v1620
        %1637 = vst [vmem:[#allocation3 + $0x38] sm:$0xff] %v1621
        %1638 = vst [vmem:[#allocation3 + $0x40] sm:$0xff] %v1622
        %1639 = vst [vmem:[#allocation3 + $0x48] sm:$0xff] %v1623
        %1640 = vst [vmem:[#allocation3 + $0x50] sm:$0xff] %v1624
        %1641 = vst [vmem:[#allocation3 + $0x58] sm:$0xff] %v1625
        %1642 = vst [vmem:[#allocation3 + $0x60] sm:$0xff] %v1626
        %1643 = vst [vmem:[#allocation3 + $0x68] sm:$0xff] %v1627
        %1644 = vst [vmem:[#allocation3 + $0x70] sm:$0xff] %v1628
        %1645 = vst [vmem:[#allocation3 + $0x78] sm:$0xff] %v1629
        %v1646 = vld [vmem:[#allocation3] sm:$0xff]
        %v1647 = vld [vmem:[#allocation3 + $0x8] sm:$0xff]
        %v1648 = vld [vmem:[#allocation3 + $0x10] sm:$0xff]
        %v1649 = vld [vmem:[#allocation3 + $0x18] sm:$0xff]
        %v1650 = vld [vmem:[#allocation3 + $0x20] sm:$0xff]
        %v1651 = vld [vmem:[#allocation3 + $0x28] sm:$0xff]
        %v1652 = vld [vmem:[#allocation3 + $0x30] sm:$0xff]
        %v1653 = vld [vmem:[#allocation3 + $0x38] sm:$0xff]
        %v1654 = vld [vmem:[#allocation3 + $0x40] sm:$0xff]
        %v1655 = vld [vmem:[#allocation3 + $0x48] sm:$0xff]
        %v1656 = vld [vmem:[#allocation3 + $0x50] sm:$0xff]
        %v1657 = vld [vmem:[#allocation3 + $0x58] sm:$0xff]
        %v1658 = vld [vmem:[#allocation3 + $0x60] sm:$0xff]
        %v1659 = vld [vmem:[#allocation3 + $0x68] sm:$0xff]
        %v1660 = vld [vmem:[#allocation3 + $0x70] sm:$0xff]
        %v1661 = vld [vmem:[#allocation3 + $0x78] sm:$0xff]
        %vm1662 = vcmp.gt.f32.partialorder %v1646, 0.0
        %vm1663 = vcmp.gt.f32.partialorder %v1647, 0.0
        %vm1664 = vcmp.gt.f32.partialorder %v1648, 0.0
        %vm1665 = vcmp.gt.f32.partialorder %v1649, 0.0
        %vm1666 = vcmp.gt.f32.partialorder %v1650, 0.0
        %vm1667 = vcmp.gt.f32.partialorder %v1651, 0.0
        %vm1668 = vcmp.gt.f32.partialorder %v1652, 0.0
        %vm1669 = vcmp.gt.f32.partialorder %v1653, 0.0
        %vm1670 = vcmp.gt.f32.partialorder %v1654, 0.0
        %vm1671 = vcmp.gt.f32.partialorder %v1655, 0.0
        %vm1672 = vcmp.gt.f32.partialorder %v1656, 0.0
        %vm1673 = vcmp.gt.f32.partialorder %v1657, 0.0
        %vm1674 = vcmp.gt.f32.partialorder %v1658, 0.0
        %vm1675 = vcmp.gt.f32.partialorder %v1659, 0.0
        %vm1676 = vcmp.gt.f32.partialorder %v1660, 0.0
        %vm1677 = vcmp.gt.f32.partialorder %v1661, 0.0
        %v1678 = vmul.f32 %v1646, 0.1
        %v1679 = vmul.f32 %v1647, 0.1
        %v1680 = vmul.f32 %v1648, 0.1
        %v1681 = vmul.f32 %v1649, 0.1
        %v1682 = vmul.f32 %v1650, 0.1
        %v1683 = vmul.f32 %v1651, 0.1
        %v1684 = vmul.f32 %v1652, 0.1
        %v1685 = vmul.f32 %v1653, 0.1
        %v1686 = vmul.f32 %v1654, 0.1
        %v1687 = vmul.f32 %v1655, 0.1
        %v1688 = vmul.f32 %v1656, 0.1
        %v1689 = vmul.f32 %v1657, 0.1
        %v1690 = vmul.f32 %v1658, 0.1
        %v1691 = vmul.f32 %v1659, 0.1
        %v1692 = vmul.f32 %v1660, 0.1
        %v1693 = vmul.f32 %v1661, 0.1
        %v1694 = vsel %vm1662, %v1646, %v1678
        %v1695 = vsel %vm1663, %v1647, %v1679
        %v1696 = vsel %vm1664, %v1648, %v1680
        %v1697 = vsel %vm1665, %v1649, %v1681
        %v1698 = vsel %vm1666, %v1650, %v1682
        %v1699 = vsel %vm1667, %v1651, %v1683
        %v1700 = vsel %vm1668, %v1652, %v1684
        %v1701 = vsel %vm1669, %v1653, %v1685
        %v1702 = vsel %vm1670, %v1654, %v1686
        %v1703 = vsel %vm1671, %v1655, %v1687
        %v1704 = vsel %vm1672, %v1656, %v1688
        %v1705 = vsel %vm1673, %v1657, %v1689
        %v1706 = vsel %vm1674, %v1658, %v1690
        %v1707 = vsel %vm1675, %v1659, %v1691
        %v1708 = vsel %vm1676, %v1660, %v1692
        %v1709 = vsel %vm1677, %v1661, %v1693
        %v1710 = vpack.c.bf16 %v1696, %v1694
        %v1711 = vpack.c.bf16 %v1697, %v1695
        %v1712 = vpack.c.bf16 %v1700, %v1698
        %v1713 = vpack.c.bf16 %v1701, %v1699
        %v1714 = vpack.c.bf16 %v1704, %v1702
        %v1715 = vpack.c.bf16 %v1705, %v1703
        %v1716 = vpack.c.bf16 %v1708, %v1706
        %v1717 = vpack.c.bf16 %v1709, %v1707
        %1718 = vst [vmem:[#allocation2 + $0x8] sm:$0xff] %v1710
        %1719 = vst [vmem:[#allocation2 + $0x10] sm:$0xff] %v1711
        %1720 = vst [vmem:[#allocation2 + $0x28] sm:$0xff] %v1712
        %1721 = vst [vmem:[#allocation2 + $0x30] sm:$0xff] %v1713
        %1722 = vst [vmem:[#allocation2 + $0x48] sm:$0xff] %v1714
        %1723 = vst [vmem:[#allocation2 + $0x50] sm:$0xff] %v1715
        %1724 = vst [vmem:[#allocation2 + $0x68] sm:$0xff] %v1716
        %1725 = vst [vmem:[#allocation2 + $0x70] sm:$0xff] %v1717
        // Predicated region
        $region65: #{tpu_custom_call.1} parent=39 // pred_check
          %p1726 = pneg %p399
        $region66: #{tpu_custom_call.1} parent=39 // pred_check_branch
          %1728 = sbr.rel (%p1726) target = $region68
        $region67: #{tpu_custom_call.1} parent=39 // pred_region
          %vm1729 = vcmask 97280
          %1730 = vst.msk [vmem:[#allocation2 + $0x8] sm:$0xff] %vm1729, 0
          %1731 = vst.msk [vmem:[#allocation2 + $0x28] sm:$0xff] %vm1729, 0
          %1732 = vst.msk [vmem:[#allocation2 + $0x48] sm:$0xff] %vm1729, 0
          %1733 = vst.msk [vmem:[#allocation2 + $0x68] sm:$0xff] %vm1729, 0
        $region68: #{tpu_custom_call.1} parent=39 // pred_fallthru
          _
        // Predicated region
        $region69: #{tpu_custom_call.1} parent=39 // pred_check
          %p1734 = pneg %p408
        $region70: #{tpu_custom_call.1} parent=39 // pred_check_branch
          %1736 = sbr.rel (%p1734) target = $region72
        $region71: #{tpu_custom_call.1} parent=39 // pred_region
          %vm1737 = vcmask 1047648
          %1738 = vst.msk [vmem:[#allocation2 + $0x10] sm:$0xff] %vm1737, 0
          %1739 = vst.msk [vmem:[#allocation2 + $0x30] sm:$0xff] %vm1737, 0
          %1740 = vst.msk [vmem:[#allocation2 + $0x50] sm:$0xff] %vm1737, 0
          %1741 = vst.msk [vmem:[#allocation2 + $0x70] sm:$0xff] %vm1737, 0
        $region72: #{tpu_custom_call.1} parent=39 // pred_fallthru
          _
        %v1742 = vld [vmem:[#allocation2] sm:$0xff]
        %v1743 = vld [vmem:[#allocation2 + $0x8] sm:$0xff]
        %v1744 = vld [vmem:[#allocation2 + $0x10] sm:$0xff]
        %v1745 = vld [vmem:[#allocation2 + $0x20] sm:$0xff]
        %v1746 = vld [vmem:[#allocation2 + $0x28] sm:$0xff]
        %v1747 = vld [vmem:[#allocation2 + $0x30] sm:$0xff]
        %v1748 = vld [vmem:[#allocation2 + $0x40] sm:$0xff]
        %v1749 = vld [vmem:[#allocation2 + $0x48] sm:$0xff]
        %v1750 = vld [vmem:[#allocation2 + $0x50] sm:$0xff]
        %v1751 = vld [vmem:[#allocation2 + $0x60] sm:$0xff]
        %v1752 = vld [vmem:[#allocation2 + $0x68] sm:$0xff]
        %v1753 = vld [vmem:[#allocation2 + $0x70] sm:$0xff]
        %s1754 = scalar_lea.vmem %s1, 96
        %v1755 = vld [vmem:[%s1754] sm:$0xf]
        %v1756 = vld [vmem:[%s1754 + $0x4] sm:$0xf]
        %v1757 = vld [vmem:[%s1754 + $0x8] sm:$0xf]
        %v1758 = vld [vmem:[%s1754 + $0xc] sm:$0xf]
        %v1759 = vld [vmem:[%s1754 + $0x10] sm:$0xf]
        %v1760 = vld [vmem:[%s1754 + $0x14] sm:$0xf]
        %v1761 = vld [vmem:[%s1754 + $0x18] sm:$0xf]
        %v1762 = vld [vmem:[%s1754 + $0x1c] sm:$0xf]
        %s1763 = scalar_lea.vmem %s1, 128
        %v1764 = vld [vmem:[%s1763] sm:$0xf]
        %v1765 = vld [vmem:[%s1763 + $0x4] sm:$0xf]
        %v1766 = vld [vmem:[%s1763 + $0x8] sm:$0xf]
        %v1767 = vld [vmem:[%s1763 + $0xc] sm:$0xf]
        %v1768 = vld [vmem:[%s1763 + $0x10] sm:$0xf]
        %v1769 = vld [vmem:[%s1763 + $0x14] sm:$0xf]
        %v1770 = vld [vmem:[%s1763 + $0x18] sm:$0xf]
        %v1771 = vld [vmem:[%s1763 + $0x1c] sm:$0xf]
        %v1780 = vunpack.c.l.b16 %v1764
        %v1781 = vunpack.c.l.b16 %v1765
        %v1782 = vunpack.c.l.b16 %v1766
        %v1783 = vunpack.c.l.b16 %v1767
        %v1784 = vunpack.c.l.b16 %v1768
        %v1785 = vunpack.c.l.b16 %v1769
        %v1786 = vunpack.c.l.b16 %v1770
        %v1787 = vunpack.c.l.b16 %v1771
        %v1788 = vpack.c.b16 %v1781, %v1780
        %v1789 = vpack.c.b16 %v1783, %v1782
        %v1790 = vpack.c.b16 %v1785, %v1784
        %v1791 = vpack.c.b16 %v1787, %v1786
        %v1793 = vsel %vm466, %v1788, 0
        %v1796 = vsel %vm466, %v1789, 0
        %v1799 = vsel %vm466, %v1790, 0
        %v1802 = vsel %vm466, %v1791, 0
        %1804 = vmatprep.subr.bf16.mxu0 %v1744
        %1805 = vmatpush1.bf16.msra.mxu0 %v1743
        %1806 = vmatprep.subr.bf16.mxu0 %v1747
        %1807 = vmatpush1.bf16.msra.mxu0 %v1746
        %1808 = vmatprep.subr.bf16.mxu0 %v1750
        %1809 = vmatpush1.bf16.msra.mxu0 %v1749
        %1810 = vmatprep.subr.bf16.mxu0 %v1753
        %1811 = vmatpush1.bf16.msra.mxu0 %v1752
        %1812 = vmatprep.subr.bf16.mxu0 0
        %1813 = vmatpush1.bf16.msra.mxu0 0
        %1814 = vmatprep.subr.bf16.mxu0 0
        %1815 = vmatpush1.bf16.msra.mxu0 0
        %1816 = vmatprep.subr.bf16.mxu0 0
        %1817 = vmatpush1.bf16.msra.mxu0 0
        %1818 = vmatprep.subr.bf16.mxu0 0
        %1819 = vmatpush1.bf16.msra.mxu0 0
        %1820 = vmatprep.subr.bf16.mxu0 0
        %1821 = vmatpush1.bf16.msra.mxu0 0
        %1822 = vmatprep.subr.bf16.mxu0 0
        %1823 = vmatpush1.bf16.msra.mxu0 0
        %1824 = vmatprep.subr.bf16.mxu0 0
        %1825 = vmatpush1.bf16.msra.mxu0 0
        %1826 = vmatprep.subr.bf16.mxu0 0
        %1827 = vmatpush1.bf16.msra.mxu0 0
        %1828 = vmatprep.subr.bf16.mxu0 0
        %1829 = vmatpush1.bf16.msra.mxu0 0
        %1830 = vmatprep.subr.bf16.mxu0 0
        %1831 = vmatpush1.bf16.msra.mxu0 0
        %1832 = vmatprep.subr.bf16.mxu0 0
        %1833 = vmatpush1.bf16.msra.mxu0 0
        %1834 = vmatprep.subr.bf16.mxu0 0
        %1835 = vmatpush1.bf16.msra.mxu0 0
        %1836 = vmatprep.mubr.bf16.mxu0 0
        %1837 = vmatmul.mubr.bf16.gmra.mrb[0].mxu0 %v1793
        %v1838 = vpop.f32.mrb[0].mxu0
        %v1839 = vadd.f32 0.0, %v1838
        %v1840 = vpop.f32.mrb[0].mxu0
        %v1841 = vadd.f32 0.0, %v1840
        %v1842 = vpop.f32.mrb[0].mxu0
        %v1843 = vadd.f32 0.0, %v1842
        %v1844 = vpop.f32.mrb[0].mxu0
        %v1845 = vadd.f32 0.0, %v1844
        %1846 = vmatprep.mubr.bf16.mxu0 0
        %1847 = vmatmul.mubr.bf16.gmra.mrb[0].mxu0 %v1796
        %v1848 = vpop.f32.mrb[0].mxu0
        %v1849 = vadd.f32 0.0, %v1848
        %v1850 = vpop.f32.mrb[0].mxu0
        %v1851 = vadd.f32 0.0, %v1850
        %v1852 = vpop.f32.mrb[0].mxu0
        %v1853 = vadd.f32 0.0, %v1852
        %v1854 = vpop.f32.mrb[0].mxu0
        %v1855 = vadd.f32 0.0, %v1854
        %1856 = vmatprep.mubr.bf16.mxu0 0
        %1857 = vmatmul.mubr.bf16.gmra.mrb[0].mxu0 %v1799
        %v1858 = vpop.f32.mrb[0].mxu0
        %v1859 = vadd.f32 0.0, %v1858
        %v1860 = vpop.f32.mrb[0].mxu0
        %v1861 = vadd.f32 0.0, %v1860
        %v1862 = vpop.f32.mrb[0].mxu0
        %v1863 = vadd.f32 0.0, %v1862
        %v1864 = vpop.f32.mrb[0].mxu0
        %v1865 = vadd.f32 0.0, %v1864
        %1866 = vmatprep.mubr.bf16.mxu0 0
        %1867 = vmatmul.mubr.bf16.gmra.mrb[0].mxu0 %v1802
        %v1868 = vpop.f32.mrb[0].mxu0
        %v1869 = vadd.f32 0.0, %v1868
        %v1870 = vpop.f32.mrb[0].mxu0
        %v1871 = vadd.f32 0.0, %v1870
        %v1872 = vpop.f32.mrb[0].mxu0
        %v1873 = vadd.f32 0.0, %v1872
        %v1874 = vpop.f32.mrb[0].mxu0
        %v1875 = vadd.f32 0.0, %v1874
        %1876 = vdwg.mxu0
        %v1885 = vunpack.c.l.b16 %v1755
        %v1886 = vunpack.c.l.b16 %v1756
        %v1887 = vunpack.c.l.b16 %v1757
        %v1888 = vunpack.c.l.b16 %v1758
        %v1889 = vunpack.c.l.b16 %v1759
        %v1890 = vunpack.c.l.b16 %v1760
        %v1891 = vunpack.c.l.b16 %v1761
        %v1892 = vunpack.c.l.b16 %v1762
        %v1893 = vpack.c.b16 %v1886, %v1885
        %v1894 = vpack.c.b16 %v1888, %v1887
        %v1895 = vpack.c.b16 %v1890, %v1889
        %v1896 = vpack.c.b16 %v1892, %v1891
        %1909 = vrot.lane.b32.xlu0 %v1742, 3
        %v1910 = vpop.permute.xlu0 %1909
        %1911 = vrot.lane.b32.xlu0 %v1743, 3
        %v1912 = vpop.permute.xlu0 %1911
        %1913 = vrot.lane.b32.xlu0 %v1744, 3
        %v1914 = vpop.permute.xlu0 %1913
        %1915 = vrot.lane.b32.xlu0 %v1745, 3
        %v1916 = vpop.permute.xlu0 %1915
        %1917 = vrot.lane.b32.xlu0 %v1746, 3
        %v1918 = vpop.permute.xlu0 %1917
        %1919 = vrot.lane.b32.xlu0 %v1747, 3
        %v1920 = vpop.permute.xlu0 %1919
        %1921 = vrot.lane.b32.xlu0 %v1748, 3
        %v1922 = vpop.permute.xlu0 %1921
        %1923 = vrot.lane.b32.xlu0 %v1749, 3
        %v1924 = vpop.permute.xlu0 %1923
        %1925 = vrot.lane.b32.xlu0 %v1750, 3
        %v1926 = vpop.permute.xlu0 %1925
        %1927 = vrot.lane.b32.xlu0 %v1751, 3
        %v1928 = vpop.permute.xlu0 %1927
        %1929 = vrot.lane.b32.xlu0 %v1752, 3
        %v1930 = vpop.permute.xlu0 %1929
        %1931 = vrot.lane.b32.xlu0 %v1753, 3
        %v1932 = vpop.permute.xlu0 %1931
        %vm1933 = vcmask 23552
        %v1934 = vsel %vm1933, %v1910, %v1912
        %v1935 = vsel %vm1933, %v1912, %v1914
        %v1936 = vsel %vm1933, %v1916, %v1918
        %v1937 = vsel %vm1933, %v1918, %v1920
        %v1938 = vsel %vm1933, %v1922, %v1924
        %v1939 = vsel %vm1933, %v1924, %v1926
        %v1940 = vsel %vm1933, %v1928, %v1930
        %v1941 = vsel %vm1933, %v1930, %v1932
        %v1951 = vsel %vm466, %v1893, 0
        %v1954 = vsel %vm466, %v1894, 0
        %v1957 = vsel %vm466, %v1895, 0
        %v1960 = vsel %vm466, %v1896, 0
        %1962 = vmatprep.subr.bf16.mxu0 %v1935
        %1963 = vmatpush1.bf16.msra.mxu0 %v1934
        %1964 = vmatprep.subr.bf16.mxu0 %v1937
        %1965 = vmatpush1.bf16.msra.mxu0 %v1936
        %1966 = vmatprep.subr.bf16.mxu0 %v1939
        %1967 = vmatpush1.bf16.msra.mxu0 %v1938
        %1968 = vmatprep.subr.bf16.mxu0 %v1941
        %1969 = vmatpush1.bf16.msra.mxu0 %v1940
        %1970 = vmatprep.subr.bf16.mxu0 0
        %1971 = vmatpush1.bf16.msra.mxu0 0
        %1972 = vmatprep.subr.bf16.mxu0 0
        %1973 = vmatpush1.bf16.msra.mxu0 0
        %1974 = vmatprep.subr.bf16.mxu0 0
        %1975 = vmatpush1.bf16.msra.mxu0 0
        %1976 = vmatprep.subr.bf16.mxu0 0
        %1977 = vmatpush1.bf16.msra.mxu0 0
        %1978 = vmatprep.subr.bf16.mxu0 0
        %1979 = vmatpush1.bf16.msra.mxu0 0
        %1980 = vmatprep.subr.bf16.mxu0 0
        %1981 = vmatpush1.bf16.msra.mxu0 0
        %1982 = vmatprep.subr.bf16.mxu0 0
        %1983 = vmatpush1.bf16.msra.mxu0 0
        %1984 = vmatprep.subr.bf16.mxu0 0
        %1985 = vmatpush1.bf16.msra.mxu0 0
        %1986 = vmatprep.subr.bf16.mxu0 0
        %1987 = vmatpush1.bf16.msra.mxu0 0
        %1988 = vmatprep.subr.bf16.mxu0 0
        %1989 = vmatpush1.bf16.msra.mxu0 0
        %1990 = vmatprep.subr.bf16.mxu0 0
        %1991 = vmatpush1.bf16.msra.mxu0 0
        %1992 = vmatprep.subr.bf16.mxu0 0
        %1993 = vmatpush1.bf16.msra.mxu0 0
        %1994 = vmatprep.mubr.bf16.mxu0 0
        %1995 = vmatmul.mubr.bf16.gmra.mrb[0].mxu0 %v1951
        %v1996 = vpop.f32.mrb[0].mxu0
        %v1997 = vadd.f32 %v1839, %v1996
        %v1998 = vpop.f32.mrb[0].mxu0
        %v1999 = vadd.f32 %v1841, %v1998
        %v2000 = vpop.f32.mrb[0].mxu0
        %v2001 = vadd.f32 %v1843, %v2000
        %v2002 = vpop.f32.mrb[0].mxu0
        %v2003 = vadd.f32 %v1845, %v2002
        %2004 = vmatprep.mubr.bf16.mxu0 0
        %2005 = vmatmul.mubr.bf16.gmra.mrb[0].mxu0 %v1954
        %v2006 = vpop.f32.mrb[0].mxu0
        %v2007 = vadd.f32 %v1849, %v2006
        %v2008 = vpop.f32.mrb[0].mxu0
        %v2009 = vadd.f32 %v1851, %v2008
        %v2010 = vpop.f32.mrb[0].mxu0
        %v2011 = vadd.f32 %v1853, %v2010
        %v2012 = vpop.f32.mrb[0].mxu0
        %v2013 = vadd.f32 %v1855, %v2012
        %2014 = vmatprep.mubr.bf16.mxu0 0
        %2015 = vmatmul.mubr.bf16.gmra.mrb[0].mxu0 %v1957
        %v2016 = vpop.f32.mrb[0].mxu0
        %v2017 = vadd.f32 %v1859, %v2016
        %v2018 = vpop.f32.mrb[0].mxu0
        %v2019 = vadd.f32 %v1861, %v2018
        %v2020 = vpop.f32.mrb[0].mxu0
        %v2021 = vadd.f32 %v1863, %v2020
        %v2022 = vpop.f32.mrb[0].mxu0
        %v2023 = vadd.f32 %v1865, %v2022
        %2024 = vmatprep.mubr.bf16.mxu0 0
        %2025 = vmatmul.mubr.bf16.gmra.mrb[0].mxu0 %v1960
        %v2026 = vpop.f32.mrb[0].mxu0
        %v2027 = vadd.f32 %v1869, %v2026
        %v2028 = vpop.f32.mrb[0].mxu0
        %v2029 = vadd.f32 %v1871, %v2028
        %v2030 = vpop.f32.mrb[0].mxu0
        %v2031 = vadd.f32 %v1873, %v2030
        %v2032 = vpop.f32.mrb[0].mxu0
        %v2033 = vadd.f32 %v1875, %v2032
        %2034 = vdwg.mxu0
        %v2035 = vld [vmem:[#allocation2 + $0x8] sm:$0xff]
        %v2036 = vld [vmem:[#allocation2 + $0x10] sm:$0xff]
        %v2037 = vld [vmem:[#allocation2 + $0x18] sm:$0xff]
        %v2038 = vld [vmem:[#allocation2 + $0x28] sm:$0xff]
        %v2039 = vld [vmem:[#allocation2 + $0x30] sm:$0xff]
        %v2040 = vld [vmem:[#allocation2 + $0x38] sm:$0xff]
        %v2041 = vld [vmem:[#allocation2 + $0x48] sm:$0xff]
        %v2042 = vld [vmem:[#allocation2 + $0x50] sm:$0xff]
        %v2043 = vld [vmem:[#allocation2 + $0x58] sm:$0xff]
        %v2044 = vld [vmem:[#allocation2 + $0x68] sm:$0xff]
        %v2045 = vld [vmem:[#allocation2 + $0x70] sm:$0xff]
        %v2046 = vld [vmem:[#allocation2 + $0x78] sm:$0xff]
        %s2047 = scalar_lea.vmem %s1, 160
        %v2048 = vld [vmem:[%s2047] sm:$0xf]
        %v2049 = vld [vmem:[%s2047 + $0x4] sm:$0xf]
        %v2050 = vld [vmem:[%s2047 + $0x8] sm:$0xf]
        %v2051 = vld [vmem:[%s2047 + $0xc] sm:$0xf]
        %v2052 = vld [vmem:[%s2047 + $0x10] sm:$0xf]
        %v2053 = vld [vmem:[%s2047 + $0x14] sm:$0xf]
        %v2054 = vld [vmem:[%s2047 + $0x18] sm:$0xf]
        %v2055 = vld [vmem:[%s2047 + $0x1c] sm:$0xf]
        %v2064 = vunpack.c.l.b16 %v2048
        %v2065 = vunpack.c.l.b16 %v2049
        %v2066 = vunpack.c.l.b16 %v2050
        %v2067 = vunpack.c.l.b16 %v2051
        %v2068 = vunpack.c.l.b16 %v2052
        %v2069 = vunpack.c.l.b16 %v2053
        %v2070 = vunpack.c.l.b16 %v2054
        %v2071 = vunpack.c.l.b16 %v2055
        %v2072 = vpack.c.b16 %v2065, %v2064
        %v2073 = vpack.c.b16 %v2067, %v2066
        %v2074 = vpack.c.b16 %v2069, %v2068
        %v2075 = vpack.c.b16 %v2071, %v2070
        %2088 = vrot.lane.b32.xlu0 %v2035, 125
        %v2089 = vpop.permute.xlu0 %2088
        %2090 = vrot.lane.b32.xlu0 %v2036, 125
        %v2091 = vpop.permute.xlu0 %2090
        %2092 = vrot.lane.b32.xlu0 %v2037, 125
        %v2093 = vpop.permute.xlu0 %2092
        %2094 = vrot.lane.b32.xlu0 %v2038, 125
        %v2095 = vpop.permute.xlu0 %2094
        %2096 = vrot.lane.b32.xlu0 %v2039, 125
        %v2097 = vpop.permute.xlu0 %2096
        %2098 = vrot.lane.b32.xlu0 %v2040, 125
        %v2099 = vpop.permute.xlu0 %2098
        %2100 = vrot.lane.b32.xlu0 %v2041, 125
        %v2101 = vpop.permute.xlu0 %2100
        %2102 = vrot.lane.b32.xlu0 %v2042, 125
        %v2103 = vpop.permute.xlu0 %2102
        %2104 = vrot.lane.b32.xlu0 %v2043, 125
        %v2105 = vpop.permute.xlu0 %2104
        %2106 = vrot.lane.b32.xlu0 %v2044, 125
        %v2107 = vpop.permute.xlu0 %2106
        %2108 = vrot.lane.b32.xlu0 %v2045, 125
        %v2109 = vpop.permute.xlu0 %2108
        %2110 = vrot.lane.b32.xlu0 %v2046, 125
        %v2111 = vpop.permute.xlu0 %2110
        %vm2112 = vcmask 1022976
        %v2113 = vsel %vm2112, %v2089, %v2091
        %v2114 = vsel %vm2112, %v2091, %v2093
        %v2115 = vsel %vm2112, %v2095, %v2097
        %v2116 = vsel %vm2112, %v2097, %v2099
        %v2117 = vsel %vm2112, %v2101, %v2103
        %v2118 = vsel %vm2112, %v2103, %v2105
        %v2119 = vsel %vm2112, %v2107, %v2109
        %v2120 = vsel %vm2112, %v2109, %v2111
        %v2130 = vsel %vm466, %v2072, 0
        %v2133 = vsel %vm466, %v2073, 0
        %v2136 = vsel %vm466, %v2074, 0
        %v2139 = vsel %vm466, %v2075, 0
        %2141 = vmatprep.subr.bf16.mxu0 %v2114
        %2142 = vmatpush1.bf16.msra.mxu0 %v2113
        %2143 = vmatprep.subr.bf16.mxu0 %v2116
        %2144 = vmatpush1.bf16.msra.mxu0 %v2115
        %2145 = vmatprep.subr.bf16.mxu0 %v2118
        %2146 = vmatpush1.bf16.msra.mxu0 %v2117
        %2147 = vmatprep.subr.bf16.mxu0 %v2120
        %2148 = vmatpush1.bf16.msra.mxu0 %v2119
        %2149 = vmatprep.subr.bf16.mxu0 0
        %2150 = vmatpush1.bf16.msra.mxu0 0
        %2151 = vmatprep.subr.bf16.mxu0 0
        %2152 = vmatpush1.bf16.msra.mxu0 0
        %2153 = vmatprep.subr.bf16.mxu0 0
        %2154 = vmatpush1.bf16.msra.mxu0 0
        %2155 = vmatprep.subr.bf16.mxu0 0
        %2156 = vmatpush1.bf16.msra.mxu0 0
        %2157 = vmatprep.subr.bf16.mxu0 0
        %2158 = vmatpush1.bf16.msra.mxu0 0
        %2159 = vmatprep.subr.bf16.mxu0 0
        %2160 = vmatpush1.bf16.msra.mxu0 0
        %2161 = vmatprep.subr.bf16.mxu0 0
        %2162 = vmatpush1.bf16.msra.mxu0 0
        %2163 = vmatprep.subr.bf16.mxu0 0
        %2164 = vmatpush1.bf16.msra.mxu0 0
        %2165 = vmatprep.subr.bf16.mxu0 0
        %2166 = vmatpush1.bf16.msra.mxu0 0
        %2167 = vmatprep.subr.bf16.mxu0 0
        %2168 = vmatpush1.bf16.msra.mxu0 0
        %2169 = vmatprep.subr.bf16.mxu0 0
        %2170 = vmatpush1.bf16.msra.mxu0 0
        %2171 = vmatprep.subr.bf16.mxu0 0
        %2172 = vmatpush1.bf16.msra.mxu0 0
        %2173 = vmatprep.mubr.bf16.mxu0 0
        %2174 = vmatmul.mubr.bf16.gmra.mrb[0].mxu0 %v2130
        %v2175 = vpop.f32.mrb[0].mxu0
        %v2176 = vadd.f32 0.0, %v2175
        %v2177 = vpop.f32.mrb[0].mxu0
        %v2178 = vadd.f32 0.0, %v2177
        %v2179 = vpop.f32.mrb[0].mxu0
        %v2180 = vadd.f32 0.0, %v2179
        %v2181 = vpop.f32.mrb[0].mxu0
        %v2182 = vadd.f32 0.0, %v2181
        %2183 = vmatprep.mubr.bf16.mxu0 0
        %2184 = vmatmul.mubr.bf16.gmra.mrb[0].mxu0 %v2133
        %v2185 = vpop.f32.mrb[0].mxu0
        %v2186 = vadd.f32 0.0, %v2185
        %v2187 = vpop.f32.mrb[0].mxu0
        %v2188 = vadd.f32 0.0, %v2187
        %v2189 = vpop.f32.mrb[0].mxu0
        %v2190 = vadd.f32 0.0, %v2189
        %v2191 = vpop.f32.mrb[0].mxu0
        %v2192 = vadd.f32 0.0, %v2191
        %2193 = vmatprep.mubr.bf16.mxu0 0
        %2194 = vmatmul.mubr.bf16.gmra.mrb[0].mxu0 %v2136
        %v2195 = vpop.f32.mrb[0].mxu0
        %v2196 = vadd.f32 0.0, %v2195
        %v2197 = vpop.f32.mrb[0].mxu0
        %v2198 = vadd.f32 0.0, %v2197
        %v2199 = vpop.f32.mrb[0].mxu0
        %v2200 = vadd.f32 0.0, %v2199
        %v2201 = vpop.f32.mrb[0].mxu0
        %v2202 = vadd.f32 0.0, %v2201
        %2203 = vmatprep.mubr.bf16.mxu0 0
        %2204 = vmatmul.mubr.bf16.gmra.mrb[0].mxu0 %v2139
        %v2205 = vpop.f32.mrb[0].mxu0
        %v2206 = vadd.f32 0.0, %v2205
        %v2207 = vpop.f32.mrb[0].mxu0
        %v2208 = vadd.f32 0.0, %v2207
        %v2209 = vpop.f32.mrb[0].mxu0
        %v2210 = vadd.f32 0.0, %v2209
        %v2211 = vpop.f32.mrb[0].mxu0
        %v2212 = vadd.f32 0.0, %v2211
        %2213 = vdwg.mxu0
        %v2214 = vadd.f32 %v1997, %v2176
        %v2215 = vadd.f32 %v1999, %v2178
        %v2216 = vadd.f32 %v2001, %v2180
        %v2217 = vadd.f32 %v2003, %v2182
        %v2218 = vadd.f32 %v2007, %v2186
        %v2219 = vadd.f32 %v2009, %v2188
        %v2220 = vadd.f32 %v2011, %v2190
        %v2221 = vadd.f32 %v2013, %v2192
        %v2222 = vadd.f32 %v2017, %v2196
        %v2223 = vadd.f32 %v2019, %v2198
        %v2224 = vadd.f32 %v2021, %v2200
        %v2225 = vadd.f32 %v2023, %v2202
        %v2226 = vadd.f32 %v2027, %v2206
        %v2227 = vadd.f32 %v2029, %v2208
        %v2228 = vadd.f32 %v2031, %v2210
        %v2229 = vadd.f32 %v2033, %v2212
        %s2230 = scalar_lea.vmem %s2, 64
        %v2231 = vld [vmem:[%s2230] sm:$0xff]
        %v2232 = vld [vmem:[%s2230 + $0x8] sm:$0xff]
        %v2233 = vld [vmem:[%s2230 + $0x10] sm:$0xff]
        %v2234 = vld [vmem:[%s2230 + $0x18] sm:$0xff]
        %v2235 = vld [vmem:[%s2230 + $0x20] sm:$0xff]
        %v2236 = vld [vmem:[%s2230 + $0x28] sm:$0xff]
        %v2237 = vld [vmem:[%s2230 + $0x30] sm:$0xff]
        %v2238 = vld [vmem:[%s2230 + $0x38] sm:$0xff]
        %2240 = vset.pattern.permute.xlu0 0
        %2241 = vperm.xlu0 %2240, %v2231
        %v2242 = vpop.permute.xlu0 %2241
        %2245 = vset.pattern.permute.xlu0 0
        %2246 = vperm.xlu0 %2245, %v2232
        %v2247 = vpop.permute.xlu0 %2246
        %2250 = vset.pattern.permute.xlu0 0
        %2251 = vperm.xlu0 %2250, %v2233
        %v2252 = vpop.permute.xlu0 %2251
        %2255 = vset.pattern.permute.xlu0 0
        %2256 = vperm.xlu0 %2255, %v2234
        %v2257 = vpop.permute.xlu0 %2256
        %2260 = vset.pattern.permute.xlu0 0
        %2261 = vperm.xlu0 %2260, %v2235
        %v2262 = vpop.permute.xlu0 %2261
        %2265 = vset.pattern.permute.xlu0 0
        %2266 = vperm.xlu0 %2265, %v2236
        %v2267 = vpop.permute.xlu0 %2266
        %2270 = vset.pattern.permute.xlu0 0
        %2271 = vperm.xlu0 %2270, %v2237
        %v2272 = vpop.permute.xlu0 %2271
        %2275 = vset.pattern.permute.xlu0 0
        %2276 = vperm.xlu0 %2275, %v2238
        %v2277 = vpop.permute.xlu0 %2276
        %v2279 = vadd.f32 %v2214, %v2242
        %v2280 = vadd.f32 %v2215, %v2242
        %v2281 = vadd.f32 %v2216, %v2247
        %v2282 = vadd.f32 %v2217, %v2247
        %v2283 = vadd.f32 %v2218, %v2252
        %v2284 = vadd.f32 %v2219, %v2252
        %v2285 = vadd.f32 %v2220, %v2257
        %v2286 = vadd.f32 %v2221, %v2257
        %v2287 = vadd.f32 %v2222, %v2262
        %v2288 = vadd.f32 %v2223, %v2262
        %v2289 = vadd.f32 %v2224, %v2267
        %v2290 = vadd.f32 %v2225, %v2267
        %v2291 = vadd.f32 %v2226, %v2272
        %v2292 = vadd.f32 %v2227, %v2272
        %v2293 = vadd.f32 %v2228, %v2277
        %v2294 = vadd.f32 %v2229, %v2277
        %vm2295 = vcmp.gt.f32.partialorder %v2279, 0.0
        %vm2296 = vcmp.gt.f32.partialorder %v2280, 0.0
        %vm2297 = vcmp.gt.f32.partialorder %v2281, 0.0
        %vm2298 = vcmp.gt.f32.partialorder %v2282, 0.0
        %vm2299 = vcmp.gt.f32.partialorder %v2283, 0.0
        %vm2300 = vcmp.gt.f32.partialorder %v2284, 0.0
        %vm2301 = vcmp.gt.f32.partialorder %v2285, 0.0
        %vm2302 = vcmp.gt.f32.partialorder %v2286, 0.0
        %vm2303 = vcmp.gt.f32.partialorder %v2287, 0.0
        %vm2304 = vcmp.gt.f32.partialorder %v2288, 0.0
        %vm2305 = vcmp.gt.f32.partialorder %v2289, 0.0
        %vm2306 = vcmp.gt.f32.partialorder %v2290, 0.0
        %vm2307 = vcmp.gt.f32.partialorder %v2291, 0.0
        %vm2308 = vcmp.gt.f32.partialorder %v2292, 0.0
        %vm2309 = vcmp.gt.f32.partialorder %v2293, 0.0
        %vm2310 = vcmp.gt.f32.partialorder %v2294, 0.0
        %v2311 = vmul.f32 %v2279, 0.1
        %v2312 = vmul.f32 %v2280, 0.1
        %v2313 = vmul.f32 %v2281, 0.1
        %v2314 = vmul.f32 %v2282, 0.1
        %v2315 = vmul.f32 %v2283, 0.1
        %v2316 = vmul.f32 %v2284, 0.1
        %v2317 = vmul.f32 %v2285, 0.1
        %v2318 = vmul.f32 %v2286, 0.1
        %v2319 = vmul.f32 %v2287, 0.1
        %v2320 = vmul.f32 %v2288, 0.1
        %v2321 = vmul.f32 %v2289, 0.1
        %v2322 = vmul.f32 %v2290, 0.1
        %v2323 = vmul.f32 %v2291, 0.1
        %v2324 = vmul.f32 %v2292, 0.1
        %v2325 = vmul.f32 %v2293, 0.1
        %v2326 = vmul.f32 %v2294, 0.1
        %v2327 = vsel %vm2295, %v2279, %v2311
        %v2328 = vsel %vm2296, %v2280, %v2312
        %v2329 = vsel %vm2297, %v2281, %v2313
        %v2330 = vsel %vm2298, %v2282, %v2314
        %v2331 = vsel %vm2299, %v2283, %v2315
        %v2332 = vsel %vm2300, %v2284, %v2316
        %v2333 = vsel %vm2301, %v2285, %v2317
        %v2334 = vsel %vm2302, %v2286, %v2318
        %v2335 = vsel %vm2303, %v2287, %v2319
        %v2336 = vsel %vm2304, %v2288, %v2320
        %v2337 = vsel %vm2305, %v2289, %v2321
        %v2338 = vsel %vm2306, %v2290, %v2322
        %v2339 = vsel %vm2307, %v2291, %v2323
        %v2340 = vsel %vm2308, %v2292, %v2324
        %v2341 = vsel %vm2309, %v2293, %v2325
        %v2342 = vsel %vm2310, %v2294, %v2326
        %v2343 = vpack.c.bf16 %v2329, %v2327
        %v2344 = vpack.c.bf16 %v2330, %v2328
        %v2345 = vpack.c.bf16 %v2333, %v2331
        %v2346 = vpack.c.bf16 %v2334, %v2332
        %v2347 = vpack.c.bf16 %v2337, %v2335
        %v2348 = vpack.c.bf16 %v2338, %v2336
        %v2349 = vpack.c.bf16 %v2341, %v2339
        %v2350 = vpack.c.bf16 %v2342, %v2340
        %2351 = vst [vmem:[#allocation2 + $0x8] sm:$0xff] %v2343
        %2352 = vst [vmem:[#allocation2 + $0x10] sm:$0xff] %v2344
        %2353 = vst [vmem:[#allocation2 + $0x28] sm:$0xff] %v2345
        %2354 = vst [vmem:[#allocation2 + $0x30] sm:$0xff] %v2346
        %2355 = vst [vmem:[#allocation2 + $0x48] sm:$0xff] %v2347
        %2356 = vst [vmem:[#allocation2 + $0x50] sm:$0xff] %v2348
        %2357 = vst [vmem:[#allocation2 + $0x68] sm:$0xff] %v2349
        %2358 = vst [vmem:[#allocation2 + $0x70] sm:$0xff] %v2350
        // Predicated region
        $region73: #{tpu_custom_call.1} parent=39 // pred_check
          %p2359 = pneg %p399
        $region74: #{tpu_custom_call.1} parent=39 // pred_check_branch
          %2361 = sbr.rel (%p2359) target = $region76
        $region75: #{tpu_custom_call.1} parent=39 // pred_region
          %vm2362 = vcmask 97280
          %2363 = vst.msk [vmem:[#allocation2 + $0x8] sm:$0xff] %vm2362, 0
          %2364 = vst.msk [vmem:[#allocation2 + $0x28] sm:$0xff] %vm2362, 0
          %2365 = vst.msk [vmem:[#allocation2 + $0x48] sm:$0xff] %vm2362, 0
          %2366 = vst.msk [vmem:[#allocation2 + $0x68] sm:$0xff] %vm2362, 0
        $region76: #{tpu_custom_call.1} parent=39 // pred_fallthru
          _
        // Predicated region
        $region77: #{tpu_custom_call.1} parent=39 // pred_check
          %p2367 = pneg %p408
        $region78: #{tpu_custom_call.1} parent=39 // pred_check_branch
          %2369 = sbr.rel (%p2367) target = $region80
        $region79: #{tpu_custom_call.1} parent=39 // pred_region
          %vm2370 = vcmask 1047648
          %2371 = vst.msk [vmem:[#allocation2 + $0x10] sm:$0xff] %vm2370, 0
          %2372 = vst.msk [vmem:[#allocation2 + $0x30] sm:$0xff] %vm2370, 0
          %2373 = vst.msk [vmem:[#allocation2 + $0x50] sm:$0xff] %vm2370, 0
          %2374 = vst.msk [vmem:[#allocation2 + $0x70] sm:$0xff] %vm2370, 0
        $region80: #{tpu_custom_call.1} parent=39 // pred_fallthru
          _
        %v2375 = vld [vmem:[#allocation2] sm:$0xff]
        %v2376 = vld [vmem:[#allocation2 + $0x8] sm:$0xff]
        %v2377 = vld [vmem:[#allocation2 + $0x10] sm:$0xff]
        %v2378 = vld [vmem:[#allocation2 + $0x20] sm:$0xff]
        %v2379 = vld [vmem:[#allocation2 + $0x28] sm:$0xff]
        %v2380 = vld [vmem:[#allocation2 + $0x30] sm:$0xff]
        %v2381 = vld [vmem:[#allocation2 + $0x40] sm:$0xff]
        %v2382 = vld [vmem:[#allocation2 + $0x48] sm:$0xff]
        %v2383 = vld [vmem:[#allocation2 + $0x50] sm:$0xff]
        %v2384 = vld [vmem:[#allocation2 + $0x60] sm:$0xff]
        %v2385 = vld [vmem:[#allocation2 + $0x68] sm:$0xff]
        %v2386 = vld [vmem:[#allocation2 + $0x70] sm:$0xff]
        %s2387 = scalar_lea.vmem [#allocation7], 96
        %v2388 = vld [vmem:[%s2387] sm:$0xf]
        %v2389 = vld [vmem:[%s2387 + $0x4] sm:$0xf]
        %v2390 = vld [vmem:[%s2387 + $0x8] sm:$0xf]
        %v2391 = vld [vmem:[%s2387 + $0xc] sm:$0xf]
        %v2392 = vld [vmem:[%s2387 + $0x10] sm:$0xf]
        %v2393 = vld [vmem:[%s2387 + $0x14] sm:$0xf]
        %v2394 = vld [vmem:[%s2387 + $0x18] sm:$0xf]
        %v2395 = vld [vmem:[%s2387 + $0x1c] sm:$0xf]
        %s2396 = scalar_lea.vmem [#allocation7], 128
        %v2397 = vld [vmem:[%s2396] sm:$0xf]
        %v2398 = vld [vmem:[%s2396 + $0x4] sm:$0xf]
        %v2399 = vld [vmem:[%s2396 + $0x8] sm:$0xf]
        %v2400 = vld [vmem:[%s2396 + $0xc] sm:$0xf]
        %v2401 = vld [vmem:[%s2396 + $0x10] sm:$0xf]
        %v2402 = vld [vmem:[%s2396 + $0x14] sm:$0xf]
        %v2403 = vld [vmem:[%s2396 + $0x18] sm:$0xf]
        %v2404 = vld [vmem:[%s2396 + $0x1c] sm:$0xf]
        %v2413 = vunpack.c.l.b16 %v2397
        %v2414 = vunpack.c.l.b16 %v2398
        %v2415 = vunpack.c.l.b16 %v2399
        %v2416 = vunpack.c.l.b16 %v2400
        %v2417 = vunpack.c.l.b16 %v2401
        %v2418 = vunpack.c.l.b16 %v2402
        %v2419 = vunpack.c.l.b16 %v2403
        %v2420 = vunpack.c.l.b16 %v2404
        %v2421 = vpack.c.b16 %v2414, %v2413
        %v2422 = vpack.c.b16 %v2416, %v2415
        %v2423 = vpack.c.b16 %v2418, %v2417
        %v2424 = vpack.c.b16 %v2420, %v2419
        %v2426 = vsel %vm466, %v2421, 0
        %v2429 = vsel %vm466, %v2422, 0
        %v2432 = vsel %vm466, %v2423, 0
        %v2435 = vsel %vm466, %v2424, 0
        %2437 = vmatprep.subr.bf16.mxu0 %v2377
        %2438 = vmatpush1.bf16.msra.mxu0 %v2376
        %2439 = vmatprep.subr.bf16.mxu0 %v2380
        %2440 = vmatpush1.bf16.msra.mxu0 %v2379
        %2441 = vmatprep.subr.bf16.mxu0 %v2383
        %2442 = vmatpush1.bf16.msra.mxu0 %v2382
        %2443 = vmatprep.subr.bf16.mxu0 %v2386
        %2444 = vmatpush1.bf16.msra.mxu0 %v2385
        %2445 = vmatprep.subr.bf16.mxu0 0
        %2446 = vmatpush1.bf16.msra.mxu0 0
        %2447 = vmatprep.subr.bf16.mxu0 0
        %2448 = vmatpush1.bf16.msra.mxu0 0
        %2449 = vmatprep.subr.bf16.mxu0 0
        %2450 = vmatpush1.bf16.msra.mxu0 0
        %2451 = vmatprep.subr.bf16.mxu0 0
        %2452 = vmatpush1.bf16.msra.mxu0 0
        %2453 = vmatprep.subr.bf16.mxu0 0
        %2454 = vmatpush1.bf16.msra.mxu0 0
        %2455 = vmatprep.subr.bf16.mxu0 0
        %2456 = vmatpush1.bf16.msra.mxu0 0
        %2457 = vmatprep.subr.bf16.mxu0 0
        %2458 = vmatpush1.bf16.msra.mxu0 0
        %2459 = vmatprep.subr.bf16.mxu0 0
        %2460 = vmatpush1.bf16.msra.mxu0 0
        %2461 = vmatprep.subr.bf16.mxu0 0
        %2462 = vmatpush1.bf16.msra.mxu0 0
        %2463 = vmatprep.subr.bf16.mxu0 0
        %2464 = vmatpush1.bf16.msra.mxu0 0
        %2465 = vmatprep.subr.bf16.mxu0 0
        %2466 = vmatpush1.bf16.msra.mxu0 0
        %2467 = vmatprep.subr.bf16.mxu0 0
        %2468 = vmatpush1.bf16.msra.mxu0 0
        %2469 = vmatprep.mubr.bf16.mxu0 0
        %2470 = vmatmul.mubr.bf16.gmra.mrb[0].mxu0 %v2426
        %v2471 = vpop.f32.mrb[0].mxu0
        %v2472 = vadd.f32 0.0, %v2471
        %v2473 = vpop.f32.mrb[0].mxu0
        %v2474 = vadd.f32 0.0, %v2473
        %v2475 = vpop.f32.mrb[0].mxu0
        %v2476 = vadd.f32 0.0, %v2475
        %v2477 = vpop.f32.mrb[0].mxu0
        %v2478 = vadd.f32 0.0, %v2477
        %2479 = vmatprep.mubr.bf16.mxu0 0
        %2480 = vmatmul.mubr.bf16.gmra.mrb[0].mxu0 %v2429
        %v2481 = vpop.f32.mrb[0].mxu0
        %v2482 = vadd.f32 0.0, %v2481
        %v2483 = vpop.f32.mrb[0].mxu0
        %v2484 = vadd.f32 0.0, %v2483
        %v2485 = vpop.f32.mrb[0].mxu0
        %v2486 = vadd.f32 0.0, %v2485
        %v2487 = vpop.f32.mrb[0].mxu0
        %v2488 = vadd.f32 0.0, %v2487
        %2489 = vmatprep.mubr.bf16.mxu0 0
        %2490 = vmatmul.mubr.bf16.gmra.mrb[0].mxu0 %v2432
        %v2491 = vpop.f32.mrb[0].mxu0
        %v2492 = vadd.f32 0.0, %v2491
        %v2493 = vpop.f32.mrb[0].mxu0
        %v2494 = vadd.f32 0.0, %v2493
        %v2495 = vpop.f32.mrb[0].mxu0
        %v2496 = vadd.f32 0.0, %v2495
        %v2497 = vpop.f32.mrb[0].mxu0
        %v2498 = vadd.f32 0.0, %v2497
        %2499 = vmatprep.mubr.bf16.mxu0 0
        %2500 = vmatmul.mubr.bf16.gmra.mrb[0].mxu0 %v2435
        %v2501 = vpop.f32.mrb[0].mxu0
        %v2502 = vadd.f32 0.0, %v2501
        %v2503 = vpop.f32.mrb[0].mxu0
        %v2504 = vadd.f32 0.0, %v2503
        %v2505 = vpop.f32.mrb[0].mxu0
        %v2506 = vadd.f32 0.0, %v2505
        %v2507 = vpop.f32.mrb[0].mxu0
        %v2508 = vadd.f32 0.0, %v2507
        %2509 = vdwg.mxu0
        %v2518 = vunpack.c.l.b16 %v2388
        %v2519 = vunpack.c.l.b16 %v2389
        %v2520 = vunpack.c.l.b16 %v2390
        %v2521 = vunpack.c.l.b16 %v2391
        %v2522 = vunpack.c.l.b16 %v2392
        %v2523 = vunpack.c.l.b16 %v2393
        %v2524 = vunpack.c.l.b16 %v2394
        %v2525 = vunpack.c.l.b16 %v2395
        %v2526 = vpack.c.b16 %v2519, %v2518
        %v2527 = vpack.c.b16 %v2521, %v2520
        %v2528 = vpack.c.b16 %v2523, %v2522
        %v2529 = vpack.c.b16 %v2525, %v2524
        %2542 = vrot.lane.b32.xlu0 %v2375, 1
        %v2543 = vpop.permute.xlu0 %2542
        %2544 = vrot.lane.b32.xlu0 %v2376, 1
        %v2545 = vpop.permute.xlu0 %2544
        %2546 = vrot.lane.b32.xlu0 %v2377, 1
        %v2547 = vpop.permute.xlu0 %2546
        %2548 = vrot.lane.b32.xlu0 %v2378, 1
        %v2549 = vpop.permute.xlu0 %2548
        %2550 = vrot.lane.b32.xlu0 %v2379, 1
        %v2551 = vpop.permute.xlu0 %2550
        %2552 = vrot.lane.b32.xlu0 %v2380, 1
        %v2553 = vpop.permute.xlu0 %2552
        %2554 = vrot.lane.b32.xlu0 %v2381, 1
        %v2555 = vpop.permute.xlu0 %2554
        %2556 = vrot.lane.b32.xlu0 %v2382, 1
        %v2557 = vpop.permute.xlu0 %2556
        %2558 = vrot.lane.b32.xlu0 %v2383, 1
        %v2559 = vpop.permute.xlu0 %2558
        %2560 = vrot.lane.b32.xlu0 %v2384, 1
        %v2561 = vpop.permute.xlu0 %2560
        %2562 = vrot.lane.b32.xlu0 %v2385, 1
        %v2563 = vpop.permute.xlu0 %2562
        %2564 = vrot.lane.b32.xlu0 %v2386, 1
        %v2565 = vpop.permute.xlu0 %2564
        %v2566 = vsel %vm608, %v2543, %v2545
        %v2567 = vsel %vm608, %v2545, %v2547
        %v2568 = vsel %vm608, %v2549, %v2551
        %v2569 = vsel %vm608, %v2551, %v2553
        %v2570 = vsel %vm608, %v2555, %v2557
        %v2571 = vsel %vm608, %v2557, %v2559
        %v2572 = vsel %vm608, %v2561, %v2563
        %v2573 = vsel %vm608, %v2563, %v2565
        %v2583 = vsel %vm466, %v2526, 0
        %v2586 = vsel %vm466, %v2527, 0
        %v2589 = vsel %vm466, %v2528, 0
        %v2592 = vsel %vm466, %v2529, 0
        %2594 = vmatprep.subr.bf16.mxu0 %v2567
        %2595 = vmatpush1.bf16.msra.mxu0 %v2566
        %2596 = vmatprep.subr.bf16.mxu0 %v2569
        %2597 = vmatpush1.bf16.msra.mxu0 %v2568
        %2598 = vmatprep.subr.bf16.mxu0 %v2571
        %2599 = vmatpush1.bf16.msra.mxu0 %v2570
        %2600 = vmatprep.subr.bf16.mxu0 %v2573
        %2601 = vmatpush1.bf16.msra.mxu0 %v2572
        %2602 = vmatprep.subr.bf16.mxu0 0
        %2603 = vmatpush1.bf16.msra.mxu0 0
        %2604 = vmatprep.subr.bf16.mxu0 0
        %2605 = vmatpush1.bf16.msra.mxu0 0
        %2606 = vmatprep.subr.bf16.mxu0 0
        %2607 = vmatpush1.bf16.msra.mxu0 0
        %2608 = vmatprep.subr.bf16.mxu0 0
        %2609 = vmatpush1.bf16.msra.mxu0 0
        %2610 = vmatprep.subr.bf16.mxu0 0
        %2611 = vmatpush1.bf16.msra.mxu0 0
        %2612 = vmatprep.subr.bf16.mxu0 0
        %2613 = vmatpush1.bf16.msra.mxu0 0
        %2614 = vmatprep.subr.bf16.mxu0 0
        %2615 = vmatpush1.bf16.msra.mxu0 0
        %2616 = vmatprep.subr.bf16.mxu0 0
        %2617 = vmatpush1.bf16.msra.mxu0 0
        %2618 = vmatprep.subr.bf16.mxu0 0
        %2619 = vmatpush1.bf16.msra.mxu0 0
        %2620 = vmatprep.subr.bf16.mxu0 0
        %2621 = vmatpush1.bf16.msra.mxu0 0
        %2622 = vmatprep.subr.bf16.mxu0 0
        %2623 = vmatpush1.bf16.msra.mxu0 0
        %2624 = vmatprep.subr.bf16.mxu0 0
        %2625 = vmatpush1.bf16.msra.mxu0 0
        %2626 = vmatprep.mubr.bf16.mxu0 0
        %2627 = vmatmul.mubr.bf16.gmra.mrb[0].mxu0 %v2583
        %v2628 = vpop.f32.mrb[0].mxu0
        %v2629 = vadd.f32 %v2472, %v2628
        %v2630 = vpop.f32.mrb[0].mxu0
        %v2631 = vadd.f32 %v2474, %v2630
        %v2632 = vpop.f32.mrb[0].mxu0
        %v2633 = vadd.f32 %v2476, %v2632
        %v2634 = vpop.f32.mrb[0].mxu0
        %v2635 = vadd.f32 %v2478, %v2634
        %2636 = vmatprep.mubr.bf16.mxu0 0
        %2637 = vmatmul.mubr.bf16.gmra.mrb[0].mxu0 %v2586
        %v2638 = vpop.f32.mrb[0].mxu0
        %v2639 = vadd.f32 %v2482, %v2638
        %v2640 = vpop.f32.mrb[0].mxu0
        %v2641 = vadd.f32 %v2484, %v2640
        %v2642 = vpop.f32.mrb[0].mxu0
        %v2643 = vadd.f32 %v2486, %v2642
        %v2644 = vpop.f32.mrb[0].mxu0
        %v2645 = vadd.f32 %v2488, %v2644
        %2646 = vmatprep.mubr.bf16.mxu0 0
        %2647 = vmatmul.mubr.bf16.gmra.mrb[0].mxu0 %v2589
        %v2648 = vpop.f32.mrb[0].mxu0
        %v2649 = vadd.f32 %v2492, %v2648
        %v2650 = vpop.f32.mrb[0].mxu0
        %v2651 = vadd.f32 %v2494, %v2650
        %v2652 = vpop.f32.mrb[0].mxu0
        %v2653 = vadd.f32 %v2496, %v2652
        %v2654 = vpop.f32.mrb[0].mxu0
        %v2655 = vadd.f32 %v2498, %v2654
        %2656 = vmatprep.mubr.bf16.mxu0 0
        %2657 = vmatmul.mubr.bf16.gmra.mrb[0].mxu0 %v2592
        %v2658 = vpop.f32.mrb[0].mxu0
        %v2659 = vadd.f32 %v2502, %v2658
        %v2660 = vpop.f32.mrb[0].mxu0
        %v2661 = vadd.f32 %v2504, %v2660
        %v2662 = vpop.f32.mrb[0].mxu0
        %v2663 = vadd.f32 %v2506, %v2662
        %v2664 = vpop.f32.mrb[0].mxu0
        %v2665 = vadd.f32 %v2508, %v2664
        %2666 = vdwg.mxu0
        %v2667 = vld [vmem:[#allocation2 + $0x8] sm:$0xff]
        %v2668 = vld [vmem:[#allocation2 + $0x10] sm:$0xff]
        %v2669 = vld [vmem:[#allocation2 + $0x18] sm:$0xff]
        %v2670 = vld [vmem:[#allocation2 + $0x28] sm:$0xff]
        %v2671 = vld [vmem:[#allocation2 + $0x30] sm:$0xff]
        %v2672 = vld [vmem:[#allocation2 + $0x38] sm:$0xff]
        %v2673 = vld [vmem:[#allocation2 + $0x48] sm:$0xff]
        %v2674 = vld [vmem:[#allocation2 + $0x50] sm:$0xff]
        %v2675 = vld [vmem:[#allocation2 + $0x58] sm:$0xff]
        %v2676 = vld [vmem:[#allocation2 + $0x68] sm:$0xff]
        %v2677 = vld [vmem:[#allocation2 + $0x70] sm:$0xff]
        %v2678 = vld [vmem:[#allocation2 + $0x78] sm:$0xff]
        %s2679 = scalar_lea.vmem [#allocation7], 160
        %v2680 = vld [vmem:[%s2679] sm:$0xf]
        %v2681 = vld [vmem:[%s2679 + $0x4] sm:$0xf]
        %v2682 = vld [vmem:[%s2679 + $0x8] sm:$0xf]
        %v2683 = vld [vmem:[%s2679 + $0xc] sm:$0xf]
        %v2684 = vld [vmem:[%s2679 + $0x10] sm:$0xf]
        %v2685 = vld [vmem:[%s2679 + $0x14] sm:$0xf]
        %v2686 = vld [vmem:[%s2679 + $0x18] sm:$0xf]
        %v2687 = vld [vmem:[%s2679 + $0x1c] sm:$0xf]
        %v2696 = vunpack.c.l.b16 %v2680
        %v2697 = vunpack.c.l.b16 %v2681
        %v2698 = vunpack.c.l.b16 %v2682
        %v2699 = vunpack.c.l.b16 %v2683
        %v2700 = vunpack.c.l.b16 %v2684
        %v2701 = vunpack.c.l.b16 %v2685
        %v2702 = vunpack.c.l.b16 %v2686
        %v2703 = vunpack.c.l.b16 %v2687
        %v2704 = vpack.c.b16 %v2697, %v2696
        %v2705 = vpack.c.b16 %v2699, %v2698
        %v2706 = vpack.c.b16 %v2701, %v2700
        %v2707 = vpack.c.b16 %v2703, %v2702
        %2720 = vrot.lane.b32.xlu0 %v2667, 127
        %v2721 = vpop.permute.xlu0 %2720
        %2722 = vrot.lane.b32.xlu0 %v2668, 127
        %v2723 = vpop.permute.xlu0 %2722
        %2724 = vrot.lane.b32.xlu0 %v2669, 127
        %v2725 = vpop.permute.xlu0 %2724
        %2726 = vrot.lane.b32.xlu0 %v2670, 127
        %v2727 = vpop.permute.xlu0 %2726
        %2728 = vrot.lane.b32.xlu0 %v2671, 127
        %v2729 = vpop.permute.xlu0 %2728
        %2730 = vrot.lane.b32.xlu0 %v2672, 127
        %v2731 = vpop.permute.xlu0 %2730
        %2732 = vrot.lane.b32.xlu0 %v2673, 127
        %v2733 = vpop.permute.xlu0 %2732
        %2734 = vrot.lane.b32.xlu0 %v2674, 127
        %v2735 = vpop.permute.xlu0 %2734
        %2736 = vrot.lane.b32.xlu0 %v2675, 127
        %v2737 = vpop.permute.xlu0 %2736
        %2738 = vrot.lane.b32.xlu0 %v2676, 127
        %v2739 = vpop.permute.xlu0 %2738
        %2740 = vrot.lane.b32.xlu0 %v2677, 127
        %v2741 = vpop.permute.xlu0 %2740
        %2742 = vrot.lane.b32.xlu0 %v2678, 127
        %v2743 = vpop.permute.xlu0 %2742
        %v2744 = vsel %vm787, %v2721, %v2723
        %v2745 = vsel %vm787, %v2723, %v2725
        %v2746 = vsel %vm787, %v2727, %v2729
        %v2747 = vsel %vm787, %v2729, %v2731
        %v2748 = vsel %vm787, %v2733, %v2735
        %v2749 = vsel %vm787, %v2735, %v2737
        %v2750 = vsel %vm787, %v2739, %v2741
        %v2751 = vsel %vm787, %v2741, %v2743
        %v2761 = vsel %vm466, %v2704, 0
        %v2764 = vsel %vm466, %v2705, 0
        %v2767 = vsel %vm466, %v2706, 0
        %v2770 = vsel %vm466, %v2707, 0
        %2772 = vmatprep.subr.bf16.mxu0 %v2745
        %2773 = vmatpush1.bf16.msra.mxu0 %v2744
        %2774 = vmatprep.subr.bf16.mxu0 %v2747
        %2775 = vmatpush1.bf16.msra.mxu0 %v2746
        %2776 = vmatprep.subr.bf16.mxu0 %v2749
        %2777 = vmatpush1.bf16.msra.mxu0 %v2748
        %2778 = vmatprep.subr.bf16.mxu0 %v2751
        %2779 = vmatpush1.bf16.msra.mxu0 %v2750
        %2780 = vmatprep.subr.bf16.mxu0 0
        %2781 = vmatpush1.bf16.msra.mxu0 0
        %2782 = vmatprep.subr.bf16.mxu0 0
        %2783 = vmatpush1.bf16.msra.mxu0 0
        %2784 = vmatprep.subr.bf16.mxu0 0
        %2785 = vmatpush1.bf16.msra.mxu0 0
        %2786 = vmatprep.subr.bf16.mxu0 0
        %2787 = vmatpush1.bf16.msra.mxu0 0
        %2788 = vmatprep.subr.bf16.mxu0 0
        %2789 = vmatpush1.bf16.msra.mxu0 0
        %2790 = vmatprep.subr.bf16.mxu0 0
        %2791 = vmatpush1.bf16.msra.mxu0 0
        %2792 = vmatprep.subr.bf16.mxu0 0
        %2793 = vmatpush1.bf16.msra.mxu0 0
        %2794 = vmatprep.subr.bf16.mxu0 0
        %2795 = vmatpush1.bf16.msra.mxu0 0
        %2796 = vmatprep.subr.bf16.mxu0 0
        %2797 = vmatpush1.bf16.msra.mxu0 0
        %2798 = vmatprep.subr.bf16.mxu0 0
        %2799 = vmatpush1.bf16.msra.mxu0 0
        %2800 = vmatprep.subr.bf16.mxu0 0
        %2801 = vmatpush1.bf16.msra.mxu0 0
        %2802 = vmatprep.subr.bf16.mxu0 0
        %2803 = vmatpush1.bf16.msra.mxu0 0
        %2804 = vmatprep.mubr.bf16.mxu0 0
        %2805 = vmatmul.mubr.bf16.gmra.mrb[0].mxu0 %v2761
        %v2806 = vpop.f32.mrb[0].mxu0
        %v2807 = vadd.f32 0.0, %v2806
        %v2808 = vpop.f32.mrb[0].mxu0
        %v2809 = vadd.f32 0.0, %v2808
        %v2810 = vpop.f32.mrb[0].mxu0
        %v2811 = vadd.f32 0.0, %v2810
        %v2812 = vpop.f32.mrb[0].mxu0
        %v2813 = vadd.f32 0.0, %v2812
        %2814 = vmatprep.mubr.bf16.mxu0 0
        %2815 = vmatmul.mubr.bf16.gmra.mrb[0].mxu0 %v2764
        %v2816 = vpop.f32.mrb[0].mxu0
        %v2817 = vadd.f32 0.0, %v2816
        %v2818 = vpop.f32.mrb[0].mxu0
        %v2819 = vadd.f32 0.0, %v2818
        %v2820 = vpop.f32.mrb[0].mxu0
        %v2821 = vadd.f32 0.0, %v2820
        %v2822 = vpop.f32.mrb[0].mxu0
        %v2823 = vadd.f32 0.0, %v2822
        %2824 = vmatprep.mubr.bf16.mxu0 0
        %2825 = vmatmul.mubr.bf16.gmra.mrb[0].mxu0 %v2767
        %v2826 = vpop.f32.mrb[0].mxu0
        %v2827 = vadd.f32 0.0, %v2826
        %v2828 = vpop.f32.mrb[0].mxu0
        %v2829 = vadd.f32 0.0, %v2828
        %v2830 = vpop.f32.mrb[0].mxu0
        %v2831 = vadd.f32 0.0, %v2830
        %v2832 = vpop.f32.mrb[0].mxu0
        %v2833 = vadd.f32 0.0, %v2832
        %2834 = vmatprep.mubr.bf16.mxu0 0
        %2835 = vmatmul.mubr.bf16.gmra.mrb[0].mxu0 %v2770
        %v2836 = vpop.f32.mrb[0].mxu0
        %v2837 = vadd.f32 0.0, %v2836
        %v2838 = vpop.f32.mrb[0].mxu0
        %v2839 = vadd.f32 0.0, %v2838
        %v2840 = vpop.f32.mrb[0].mxu0
        %v2841 = vadd.f32 0.0, %v2840
        %v2842 = vpop.f32.mrb[0].mxu0
        %v2843 = vadd.f32 0.0, %v2842
        %2844 = vdwg.mxu0
        %v2845 = vadd.f32 %v2629, %v2807
        %v2846 = vadd.f32 %v2631, %v2809
        %v2847 = vadd.f32 %v2633, %v2811
        %v2848 = vadd.f32 %v2635, %v2813
        %v2849 = vadd.f32 %v2639, %v2817
        %v2850 = vadd.f32 %v2641, %v2819
        %v2851 = vadd.f32 %v2643, %v2821
        %v2852 = vadd.f32 %v2645, %v2823
        %v2853 = vadd.f32 %v2649, %v2827
        %v2854 = vadd.f32 %v2651, %v2829
        %v2855 = vadd.f32 %v2653, %v2831
        %v2856 = vadd.f32 %v2655, %v2833
        %v2857 = vadd.f32 %v2659, %v2837
        %v2858 = vadd.f32 %v2661, %v2839
        %v2859 = vadd.f32 %v2663, %v2841
        %v2860 = vadd.f32 %v2665, %v2843
        %s2861 = scalar_lea.vmem %s4, 64
        %v2862 = vld [vmem:[%s2861] sm:$0xff]
        %v2863 = vld [vmem:[%s2861 + $0x8] sm:$0xff]
        %v2864 = vld [vmem:[%s2861 + $0x10] sm:$0xff]
        %v2865 = vld [vmem:[%s2861 + $0x18] sm:$0xff]
        %v2866 = vld [vmem:[%s2861 + $0x20] sm:$0xff]
        %v2867 = vld [vmem:[%s2861 + $0x28] sm:$0xff]
        %v2868 = vld [vmem:[%s2861 + $0x30] sm:$0xff]
        %v2869 = vld [vmem:[%s2861 + $0x38] sm:$0xff]
        %2871 = vset.pattern.permute.xlu0 0
        %2872 = vperm.xlu0 %2871, %v2862
        %v2873 = vpop.permute.xlu0 %2872
        %2876 = vset.pattern.permute.xlu0 0
        %2877 = vperm.xlu0 %2876, %v2863
        %v2878 = vpop.permute.xlu0 %2877
        %2881 = vset.pattern.permute.xlu0 0
        %2882 = vperm.xlu0 %2881, %v2864
        %v2883 = vpop.permute.xlu0 %2882
        %2886 = vset.pattern.permute.xlu0 0
        %2887 = vperm.xlu0 %2886, %v2865
        %v2888 = vpop.permute.xlu0 %2887
        %2891 = vset.pattern.permute.xlu0 0
        %2892 = vperm.xlu0 %2891, %v2866
        %v2893 = vpop.permute.xlu0 %2892
        %2896 = vset.pattern.permute.xlu0 0
        %2897 = vperm.xlu0 %2896, %v2867
        %v2898 = vpop.permute.xlu0 %2897
        %2901 = vset.pattern.permute.xlu0 0
        %2902 = vperm.xlu0 %2901, %v2868
        %v2903 = vpop.permute.xlu0 %2902
        %2906 = vset.pattern.permute.xlu0 0
        %2907 = vperm.xlu0 %2906, %v2869
        %v2908 = vpop.permute.xlu0 %2907
        %v2910 = vadd.f32 %v2845, %v2873
        %v2911 = vadd.f32 %v2846, %v2873
        %v2912 = vadd.f32 %v2847, %v2878
        %v2913 = vadd.f32 %v2848, %v2878
        %v2914 = vadd.f32 %v2849, %v2883
        %v2915 = vadd.f32 %v2850, %v2883
        %v2916 = vadd.f32 %v2851, %v2888
        %v2917 = vadd.f32 %v2852, %v2888
        %v2918 = vadd.f32 %v2853, %v2893
        %v2919 = vadd.f32 %v2854, %v2893
        %v2920 = vadd.f32 %v2855, %v2898
        %v2921 = vadd.f32 %v2856, %v2898
        %v2922 = vadd.f32 %v2857, %v2903
        %v2923 = vadd.f32 %v2858, %v2903
        %v2924 = vadd.f32 %v2859, %v2908
        %v2925 = vadd.f32 %v2860, %v2908
        %v2926 = vld [vmem:[#allocation3] sm:$0xff]
        %v2927 = vld [vmem:[#allocation3 + $0x8] sm:$0xff]
        %v2928 = vld [vmem:[#allocation3 + $0x10] sm:$0xff]
        %v2929 = vld [vmem:[#allocation3 + $0x18] sm:$0xff]
        %v2930 = vld [vmem:[#allocation3 + $0x20] sm:$0xff]
        %v2931 = vld [vmem:[#allocation3 + $0x28] sm:$0xff]
        %v2932 = vld [vmem:[#allocation3 + $0x30] sm:$0xff]
        %v2933 = vld [vmem:[#allocation3 + $0x38] sm:$0xff]
        %v2934 = vld [vmem:[#allocation3 + $0x40] sm:$0xff]
        %v2935 = vld [vmem:[#allocation3 + $0x48] sm:$0xff]
        %v2936 = vld [vmem:[#allocation3 + $0x50] sm:$0xff]
        %v2937 = vld [vmem:[#allocation3 + $0x58] sm:$0xff]
        %v2938 = vld [vmem:[#allocation3 + $0x60] sm:$0xff]
        %v2939 = vld [vmem:[#allocation3 + $0x68] sm:$0xff]
        %v2940 = vld [vmem:[#allocation3 + $0x70] sm:$0xff]
        %v2941 = vld [vmem:[#allocation3 + $0x78] sm:$0xff]
        %v2942 = vadd.f32 %v2910, %v2926
        %v2943 = vadd.f32 %v2911, %v2927
        %v2944 = vadd.f32 %v2912, %v2928
        %v2945 = vadd.f32 %v2913, %v2929
        %v2946 = vadd.f32 %v2914, %v2930
        %v2947 = vadd.f32 %v2915, %v2931
        %v2948 = vadd.f32 %v2916, %v2932
        %v2949 = vadd.f32 %v2917, %v2933
        %v2950 = vadd.f32 %v2918, %v2934
        %v2951 = vadd.f32 %v2919, %v2935
        %v2952 = vadd.f32 %v2920, %v2936
        %v2953 = vadd.f32 %v2921, %v2937
        %v2954 = vadd.f32 %v2922, %v2938
        %v2955 = vadd.f32 %v2923, %v2939
        %v2956 = vadd.f32 %v2924, %v2940
        %v2957 = vadd.f32 %v2925, %v2941
        %2958 = vst [vmem:[#allocation3] sm:$0xff] %v2942
        %2959 = vst [vmem:[#allocation3 + $0x8] sm:$0xff] %v2943
        %2960 = vst [vmem:[#allocation3 + $0x10] sm:$0xff] %v2944
        %2961 = vst [vmem:[#allocation3 + $0x18] sm:$0xff] %v2945
        %2962 = vst [vmem:[#allocation3 + $0x20] sm:$0xff] %v2946
        %2963 = vst [vmem:[#allocation3 + $0x28] sm:$0xff] %v2947
        %2964 = vst [vmem:[#allocation3 + $0x30] sm:$0xff] %v2948
        %2965 = vst [vmem:[#allocation3 + $0x38] sm:$0xff] %v2949
        %2966 = vst [vmem:[#allocation3 + $0x40] sm:$0xff] %v2950
        %2967 = vst [vmem:[#allocation3 + $0x48] sm:$0xff] %v2951
        %2968 = vst [vmem:[#allocation3 + $0x50] sm:$0xff] %v2952
        %2969 = vst [vmem:[#allocation3 + $0x58] sm:$0xff] %v2953
        %2970 = vst [vmem:[#allocation3 + $0x60] sm:$0xff] %v2954
        %2971 = vst [vmem:[#allocation3 + $0x68] sm:$0xff] %v2955
        %2972 = vst [vmem:[#allocation3 + $0x70] sm:$0xff] %v2956
        %2973 = vst [vmem:[#allocation3 + $0x78] sm:$0xff] %v2957
        %v2974 = vld [vmem:[#allocation3] sm:$0xff]
        %v2975 = vld [vmem:[#allocation3 + $0x8] sm:$0xff]
        %v2976 = vld [vmem:[#allocation3 + $0x10] sm:$0xff]
        %v2977 = vld [vmem:[#allocation3 + $0x18] sm:$0xff]
        %v2978 = vld [vmem:[#allocation3 + $0x20] sm:$0xff]
        %v2979 = vld [vmem:[#allocation3 + $0x28] sm:$0xff]
        %v2980 = vld [vmem:[#allocation3 + $0x30] sm:$0xff]
        %v2981 = vld [vmem:[#allocation3 + $0x38] sm:$0xff]
        %v2982 = vld [vmem:[#allocation3 + $0x40] sm:$0xff]
        %v2983 = vld [vmem:[#allocation3 + $0x48] sm:$0xff]
        %v2984 = vld [vmem:[#allocation3 + $0x50] sm:$0xff]
        %v2985 = vld [vmem:[#allocation3 + $0x58] sm:$0xff]
        %v2986 = vld [vmem:[#allocation3 + $0x60] sm:$0xff]
        %v2987 = vld [vmem:[#allocation3 + $0x68] sm:$0xff]
        %v2988 = vld [vmem:[#allocation3 + $0x70] sm:$0xff]
        %v2989 = vld [vmem:[#allocation3 + $0x78] sm:$0xff]
        %vm2990 = vcmp.gt.f32.partialorder %v2974, 0.0
        %vm2991 = vcmp.gt.f32.partialorder %v2975, 0.0
        %vm2992 = vcmp.gt.f32.partialorder %v2976, 0.0
        %vm2993 = vcmp.gt.f32.partialorder %v2977, 0.0
        %vm2994 = vcmp.gt.f32.partialorder %v2978, 0.0
        %vm2995 = vcmp.gt.f32.partialorder %v2979, 0.0
        %vm2996 = vcmp.gt.f32.partialorder %v2980, 0.0
        %vm2997 = vcmp.gt.f32.partialorder %v2981, 0.0
        %vm2998 = vcmp.gt.f32.partialorder %v2982, 0.0
        %vm2999 = vcmp.gt.f32.partialorder %v2983, 0.0
        %vm3000 = vcmp.gt.f32.partialorder %v2984, 0.0
        %vm3001 = vcmp.gt.f32.partialorder %v2985, 0.0
        %vm3002 = vcmp.gt.f32.partialorder %v2986, 0.0
        %vm3003 = vcmp.gt.f32.partialorder %v2987, 0.0
        %vm3004 = vcmp.gt.f32.partialorder %v2988, 0.0
        %vm3005 = vcmp.gt.f32.partialorder %v2989, 0.0
        %v3006 = vmul.f32 %v2974, 0.1
        %v3007 = vmul.f32 %v2975, 0.1
        %v3008 = vmul.f32 %v2976, 0.1
        %v3009 = vmul.f32 %v2977, 0.1
        %v3010 = vmul.f32 %v2978, 0.1
        %v3011 = vmul.f32 %v2979, 0.1
        %v3012 = vmul.f32 %v2980, 0.1
        %v3013 = vmul.f32 %v2981, 0.1
        %v3014 = vmul.f32 %v2982, 0.1
        %v3015 = vmul.f32 %v2983, 0.1
        %v3016 = vmul.f32 %v2984, 0.1
        %v3017 = vmul.f32 %v2985, 0.1
        %v3018 = vmul.f32 %v2986, 0.1
        %v3019 = vmul.f32 %v2987, 0.1
        %v3020 = vmul.f32 %v2988, 0.1
        %v3021 = vmul.f32 %v2989, 0.1
        %v3022 = vsel %vm2990, %v2974, %v3006
        %v3023 = vsel %vm2991, %v2975, %v3007
        %v3024 = vsel %vm2992, %v2976, %v3008
        %v3025 = vsel %vm2993, %v2977, %v3009
        %v3026 = vsel %vm2994, %v2978, %v3010
        %v3027 = vsel %vm2995, %v2979, %v3011
        %v3028 = vsel %vm2996, %v2980, %v3012
        %v3029 = vsel %vm2997, %v2981, %v3013
        %v3030 = vsel %vm2998, %v2982, %v3014
        %v3031 = vsel %vm2999, %v2983, %v3015
        %v3032 = vsel %vm3000, %v2984, %v3016
        %v3033 = vsel %vm3001, %v2985, %v3017
        %v3034 = vsel %vm3002, %v2986, %v3018
        %v3035 = vsel %vm3003, %v2987, %v3019
        %v3036 = vsel %vm3004, %v2988, %v3020
        %v3037 = vsel %vm3005, %v2989, %v3021
        %v3038 = vpack.c.bf16 %v3024, %v3022
        %v3039 = vpack.c.bf16 %v3025, %v3023
        %v3040 = vpack.c.bf16 %v3028, %v3026
        %v3041 = vpack.c.bf16 %v3029, %v3027
        %v3042 = vpack.c.bf16 %v3032, %v3030
        %v3043 = vpack.c.bf16 %v3033, %v3031
        %v3044 = vpack.c.bf16 %v3036, %v3034
        %v3045 = vpack.c.bf16 %v3037, %v3035
        %3046 = vst [vmem:[#allocation2 + $0x8] sm:$0xff] %v3038
        %3047 = vst [vmem:[#allocation2 + $0x10] sm:$0xff] %v3039
        %3048 = vst [vmem:[#allocation2 + $0x28] sm:$0xff] %v3040
        %3049 = vst [vmem:[#allocation2 + $0x30] sm:$0xff] %v3041
        %3050 = vst [vmem:[#allocation2 + $0x48] sm:$0xff] %v3042
        %3051 = vst [vmem:[#allocation2 + $0x50] sm:$0xff] %v3043
        %3052 = vst [vmem:[#allocation2 + $0x68] sm:$0xff] %v3044
        %3053 = vst [vmem:[#allocation2 + $0x70] sm:$0xff] %v3045
        // Predicated region
        $region81: #{tpu_custom_call.1} parent=39 // pred_check
          %p3054 = pneg %p399
        $region82: #{tpu_custom_call.1} parent=39 // pred_check_branch
          %3056 = sbr.rel (%p3054) target = $region84
        $region83: #{tpu_custom_call.1} parent=39 // pred_region
          %vm3057 = vcmask 97280
          %3058 = vst.msk [vmem:[#allocation2 + $0x8] sm:$0xff] %vm3057, 0
          %3059 = vst.msk [vmem:[#allocation2 + $0x28] sm:$0xff] %vm3057, 0
          %3060 = vst.msk [vmem:[#allocation2 + $0x48] sm:$0xff] %vm3057, 0
          %3061 = vst.msk [vmem:[#allocation2 + $0x68] sm:$0xff] %vm3057, 0
        $region84: #{tpu_custom_call.1} parent=39 // pred_fallthru
          _
        // Predicated region
        $region85: #{tpu_custom_call.1} parent=39 // pred_check
          %p3062 = pneg %p408
        $region86: #{tpu_custom_call.1} parent=39 // pred_check_branch
          %3064 = sbr.rel (%p3062) target = $region88
        $region87: #{tpu_custom_call.1} parent=39 // pred_region
          %vm3065 = vcmask 1047648
          %3066 = vst.msk [vmem:[#allocation2 + $0x10] sm:$0xff] %vm3065, 0
          %3067 = vst.msk [vmem:[#allocation2 + $0x30] sm:$0xff] %vm3065, 0
          %3068 = vst.msk [vmem:[#allocation2 + $0x50] sm:$0xff] %vm3065, 0
          %3069 = vst.msk [vmem:[#allocation2 + $0x70] sm:$0xff] %vm3065, 0
        $region88: #{tpu_custom_call.1} parent=39 // pred_fallthru
          _
        %v3070 = vld [vmem:[#allocation2] sm:$0xff]
        %v3071 = vld [vmem:[#allocation2 + $0x8] sm:$0xff]
        %v3072 = vld [vmem:[#allocation2 + $0x10] sm:$0xff]
        %v3073 = vld [vmem:[#allocation2 + $0x20] sm:$0xff]
        %v3074 = vld [vmem:[#allocation2 + $0x28] sm:$0xff]
        %v3075 = vld [vmem:[#allocation2 + $0x30] sm:$0xff]
        %v3076 = vld [vmem:[#allocation2 + $0x40] sm:$0xff]
        %v3077 = vld [vmem:[#allocation2 + $0x48] sm:$0xff]
        %v3078 = vld [vmem:[#allocation2 + $0x50] sm:$0xff]
        %v3079 = vld [vmem:[#allocation2 + $0x60] sm:$0xff]
        %v3080 = vld [vmem:[#allocation2 + $0x68] sm:$0xff]
        %v3081 = vld [vmem:[#allocation2 + $0x70] sm:$0xff]
        %s3082 = scalar_lea.vmem %s1, 192
        %v3083 = vld [vmem:[%s3082] sm:$0xf]
        %v3084 = vld [vmem:[%s3082 + $0x4] sm:$0xf]
        %v3085 = vld [vmem:[%s3082 + $0x8] sm:$0xf]
        %v3086 = vld [vmem:[%s3082 + $0xc] sm:$0xf]
        %v3087 = vld [vmem:[%s3082 + $0x10] sm:$0xf]
        %v3088 = vld [vmem:[%s3082 + $0x14] sm:$0xf]
        %v3089 = vld [vmem:[%s3082 + $0x18] sm:$0xf]
        %v3090 = vld [vmem:[%s3082 + $0x1c] sm:$0xf]
        %s3091 = scalar_lea.vmem %s1, 224
        %v3092 = vld [vmem:[%s3091] sm:$0xf]
        %v3093 = vld [vmem:[%s3091 + $0x4] sm:$0xf]
        %v3094 = vld [vmem:[%s3091 + $0x8] sm:$0xf]
        %v3095 = vld [vmem:[%s3091 + $0xc] sm:$0xf]
        %v3096 = vld [vmem:[%s3091 + $0x10] sm:$0xf]
        %v3097 = vld [vmem:[%s3091 + $0x14] sm:$0xf]
        %v3098 = vld [vmem:[%s3091 + $0x18] sm:$0xf]
        %v3099 = vld [vmem:[%s3091 + $0x1c] sm:$0xf]
        %v3108 = vunpack.c.l.b16 %v3092
        %v3109 = vunpack.c.l.b16 %v3093
        %v3110 = vunpack.c.l.b16 %v3094
        %v3111 = vunpack.c.l.b16 %v3095
        %v3112 = vunpack.c.l.b16 %v3096
        %v3113 = vunpack.c.l.b16 %v3097
        %v3114 = vunpack.c.l.b16 %v3098
        %v3115 = vunpack.c.l.b16 %v3099
        %v3116 = vpack.c.b16 %v3109, %v3108
        %v3117 = vpack.c.b16 %v3111, %v3110
        %v3118 = vpack.c.b16 %v3113, %v3112
        %v3119 = vpack.c.b16 %v3115, %v3114
        %v3121 = vsel %vm466, %v3116, 0
        %v3124 = vsel %vm466, %v3117, 0
        %v3127 = vsel %vm466, %v3118, 0
        %v3130 = vsel %vm466, %v3119, 0
        %3132 = vmatprep.subr.bf16.mxu0 %v3072
        %3133 = vmatpush1.bf16.msra.mxu0 %v3071
        %3134 = vmatprep.subr.bf16.mxu0 %v3075
        %3135 = vmatpush1.bf16.msra.mxu0 %v3074
        %3136 = vmatprep.subr.bf16.mxu0 %v3078
        %3137 = vmatpush1.bf16.msra.mxu0 %v3077
        %3138 = vmatprep.subr.bf16.mxu0 %v3081
        %3139 = vmatpush1.bf16.msra.mxu0 %v3080
        %3140 = vmatprep.subr.bf16.mxu0 0
        %3141 = vmatpush1.bf16.msra.mxu0 0
        %3142 = vmatprep.subr.bf16.mxu0 0
        %3143 = vmatpush1.bf16.msra.mxu0 0
        %3144 = vmatprep.subr.bf16.mxu0 0
        %3145 = vmatpush1.bf16.msra.mxu0 0
        %3146 = vmatprep.subr.bf16.mxu0 0
        %3147 = vmatpush1.bf16.msra.mxu0 0
        %3148 = vmatprep.subr.bf16.mxu0 0
        %3149 = vmatpush1.bf16.msra.mxu0 0
        %3150 = vmatprep.subr.bf16.mxu0 0
        %3151 = vmatpush1.bf16.msra.mxu0 0
        %3152 = vmatprep.subr.bf16.mxu0 0
        %3153 = vmatpush1.bf16.msra.mxu0 0
        %3154 = vmatprep.subr.bf16.mxu0 0
        %3155 = vmatpush1.bf16.msra.mxu0 0
        %3156 = vmatprep.subr.bf16.mxu0 0
        %3157 = vmatpush1.bf16.msra.mxu0 0
        %3158 = vmatprep.subr.bf16.mxu0 0
        %3159 = vmatpush1.bf16.msra.mxu0 0
        %3160 = vmatprep.subr.bf16.mxu0 0
        %3161 = vmatpush1.bf16.msra.mxu0 0
        %3162 = vmatprep.subr.bf16.mxu0 0
        %3163 = vmatpush1.bf16.msra.mxu0 0
        %3164 = vmatprep.mubr.bf16.mxu0 0
        %3165 = vmatmul.mubr.bf16.gmra.mrb[0].mxu0 %v3121
        %v3166 = vpop.f32.mrb[0].mxu0
        %v3167 = vadd.f32 0.0, %v3166
        %v3168 = vpop.f32.mrb[0].mxu0
        %v3169 = vadd.f32 0.0, %v3168
        %v3170 = vpop.f32.mrb[0].mxu0
        %v3171 = vadd.f32 0.0, %v3170
        %v3172 = vpop.f32.mrb[0].mxu0
        %v3173 = vadd.f32 0.0, %v3172
        %3174 = vmatprep.mubr.bf16.mxu0 0
        %3175 = vmatmul.mubr.bf16.gmra.mrb[0].mxu0 %v3124
        %v3176 = vpop.f32.mrb[0].mxu0
        %v3177 = vadd.f32 0.0, %v3176
        %v3178 = vpop.f32.mrb[0].mxu0
        %v3179 = vadd.f32 0.0, %v3178
        %v3180 = vpop.f32.mrb[0].mxu0
        %v3181 = vadd.f32 0.0, %v3180
        %v3182 = vpop.f32.mrb[0].mxu0
        %v3183 = vadd.f32 0.0, %v3182
        %3184 = vmatprep.mubr.bf16.mxu0 0
        %3185 = vmatmul.mubr.bf16.gmra.mrb[0].mxu0 %v3127
        %v3186 = vpop.f32.mrb[0].mxu0
        %v3187 = vadd.f32 0.0, %v3186
        %v3188 = vpop.f32.mrb[0].mxu0
        %v3189 = vadd.f32 0.0, %v3188
        %v3190 = vpop.f32.mrb[0].mxu0
        %v3191 = vadd.f32 0.0, %v3190
        %v3192 = vpop.f32.mrb[0].mxu0
        %v3193 = vadd.f32 0.0, %v3192
        %3194 = vmatprep.mubr.bf16.mxu0 0
        %3195 = vmatmul.mubr.bf16.gmra.mrb[0].mxu0 %v3130
        %v3196 = vpop.f32.mrb[0].mxu0
        %v3197 = vadd.f32 0.0, %v3196
        %v3198 = vpop.f32.mrb[0].mxu0
        %v3199 = vadd.f32 0.0, %v3198
        %v3200 = vpop.f32.mrb[0].mxu0
        %v3201 = vadd.f32 0.0, %v3200
        %v3202 = vpop.f32.mrb[0].mxu0
        %v3203 = vadd.f32 0.0, %v3202
        %3204 = vdwg.mxu0
        %v3213 = vunpack.c.l.b16 %v3083
        %v3214 = vunpack.c.l.b16 %v3084
        %v3215 = vunpack.c.l.b16 %v3085
        %v3216 = vunpack.c.l.b16 %v3086
        %v3217 = vunpack.c.l.b16 %v3087
        %v3218 = vunpack.c.l.b16 %v3088
        %v3219 = vunpack.c.l.b16 %v3089
        %v3220 = vunpack.c.l.b16 %v3090
        %v3221 = vpack.c.b16 %v3214, %v3213
        %v3222 = vpack.c.b16 %v3216, %v3215
        %v3223 = vpack.c.b16 %v3218, %v3217
        %v3224 = vpack.c.b16 %v3220, %v3219
        %3237 = vrot.lane.b32.xlu0 %v3070, 5
        %v3238 = vpop.permute.xlu0 %3237
        %3239 = vrot.lane.b32.xlu0 %v3071, 5
        %v3240 = vpop.permute.xlu0 %3239
        %3241 = vrot.lane.b32.xlu0 %v3072, 5
        %v3242 = vpop.permute.xlu0 %3241
        %3243 = vrot.lane.b32.xlu0 %v3073, 5
        %v3244 = vpop.permute.xlu0 %3243
        %3245 = vrot.lane.b32.xlu0 %v3074, 5
        %v3246 = vpop.permute.xlu0 %3245
        %3247 = vrot.lane.b32.xlu0 %v3075, 5
        %v3248 = vpop.permute.xlu0 %3247
        %3249 = vrot.lane.b32.xlu0 %v3076, 5
        %v3250 = vpop.permute.xlu0 %3249
        %3251 = vrot.lane.b32.xlu0 %v3077, 5
        %v3252 = vpop.permute.xlu0 %3251
        %3253 = vrot.lane.b32.xlu0 %v3078, 5
        %v3254 = vpop.permute.xlu0 %3253
        %3255 = vrot.lane.b32.xlu0 %v3079, 5
        %v3256 = vpop.permute.xlu0 %3255
        %3257 = vrot.lane.b32.xlu0 %v3080, 5
        %v3258 = vpop.permute.xlu0 %3257
        %3259 = vrot.lane.b32.xlu0 %v3081, 5
        %v3260 = vpop.permute.xlu0 %3259
        %vm3261 = vcmask 39936
        %v3262 = vsel %vm3261, %v3238, %v3240
        %v3263 = vsel %vm3261, %v3240, %v3242
        %v3264 = vsel %vm3261, %v3244, %v3246
        %v3265 = vsel %vm3261, %v3246, %v3248
        %v3266 = vsel %vm3261, %v3250, %v3252
        %v3267 = vsel %vm3261, %v3252, %v3254
        %v3268 = vsel %vm3261, %v3256, %v3258
        %v3269 = vsel %vm3261, %v3258, %v3260
        %v3279 = vsel %vm466, %v3221, 0
        %v3282 = vsel %vm466, %v3222, 0
        %v3285 = vsel %vm466, %v3223, 0
        %v3288 = vsel %vm466, %v3224, 0
        %3290 = vmatprep.subr.bf16.mxu0 %v3263
        %3291 = vmatpush1.bf16.msra.mxu0 %v3262
        %3292 = vmatprep.subr.bf16.mxu0 %v3265
        %3293 = vmatpush1.bf16.msra.mxu0 %v3264
        %3294 = vmatprep.subr.bf16.mxu0 %v3267
        %3295 = vmatpush1.bf16.msra.mxu0 %v3266
        %3296 = vmatprep.subr.bf16.mxu0 %v3269
        %3297 = vmatpush1.bf16.msra.mxu0 %v3268
        %3298 = vmatprep.subr.bf16.mxu0 0
        %3299 = vmatpush1.bf16.msra.mxu0 0
        %3300 = vmatprep.subr.bf16.mxu0 0
        %3301 = vmatpush1.bf16.msra.mxu0 0
        %3302 = vmatprep.subr.bf16.mxu0 0
        %3303 = vmatpush1.bf16.msra.mxu0 0
        %3304 = vmatprep.subr.bf16.mxu0 0
        %3305 = vmatpush1.bf16.msra.mxu0 0
        %3306 = vmatprep.subr.bf16.mxu0 0
        %3307 = vmatpush1.bf16.msra.mxu0 0
        %3308 = vmatprep.subr.bf16.mxu0 0
        %3309 = vmatpush1.bf16.msra.mxu0 0
        %3310 = vmatprep.subr.bf16.mxu0 0
        %3311 = vmatpush1.bf16.msra.mxu0 0
        %3312 = vmatprep.subr.bf16.mxu0 0
        %3313 = vmatpush1.bf16.msra.mxu0 0
        %3314 = vmatprep.subr.bf16.mxu0 0
        %3315 = vmatpush1.bf16.msra.mxu0 0
        %3316 = vmatprep.subr.bf16.mxu0 0
        %3317 = vmatpush1.bf16.msra.mxu0 0
        %3318 = vmatprep.subr.bf16.mxu0 0
        %3319 = vmatpush1.bf16.msra.mxu0 0
        %3320 = vmatprep.subr.bf16.mxu0 0
        %3321 = vmatpush1.bf16.msra.mxu0 0
        %3322 = vmatprep.mubr.bf16.mxu0 0
        %3323 = vmatmul.mubr.bf16.gmra.mrb[0].mxu0 %v3279
        %v3324 = vpop.f32.mrb[0].mxu0
        %v3325 = vadd.f32 %v3167, %v3324
        %v3326 = vpop.f32.mrb[0].mxu0
        %v3327 = vadd.f32 %v3169, %v3326
        %v3328 = vpop.f32.mrb[0].mxu0
        %v3329 = vadd.f32 %v3171, %v3328
        %v3330 = vpop.f32.mrb[0].mxu0
        %v3331 = vadd.f32 %v3173, %v3330
        %3332 = vmatprep.mubr.bf16.mxu0 0
        %3333 = vmatmul.mubr.bf16.gmra.mrb[0].mxu0 %v3282
        %v3334 = vpop.f32.mrb[0].mxu0
        %v3335 = vadd.f32 %v3177, %v3334
        %v3336 = vpop.f32.mrb[0].mxu0
        %v3337 = vadd.f32 %v3179, %v3336
        %v3338 = vpop.f32.mrb[0].mxu0
        %v3339 = vadd.f32 %v3181, %v3338
        %v3340 = vpop.f32.mrb[0].mxu0
        %v3341 = vadd.f32 %v3183, %v3340
        %3342 = vmatprep.mubr.bf16.mxu0 0
        %3343 = vmatmul.mubr.bf16.gmra.mrb[0].mxu0 %v3285
        %v3344 = vpop.f32.mrb[0].mxu0
        %v3345 = vadd.f32 %v3187, %v3344
        %v3346 = vpop.f32.mrb[0].mxu0
        %v3347 = vadd.f32 %v3189, %v3346
        %v3348 = vpop.f32.mrb[0].mxu0
        %v3349 = vadd.f32 %v3191, %v3348
        %v3350 = vpop.f32.mrb[0].mxu0
        %v3351 = vadd.f32 %v3193, %v3350
        %3352 = vmatprep.mubr.bf16.mxu0 0
        %3353 = vmatmul.mubr.bf16.gmra.mrb[0].mxu0 %v3288
        %v3354 = vpop.f32.mrb[0].mxu0
        %v3355 = vadd.f32 %v3197, %v3354
        %v3356 = vpop.f32.mrb[0].mxu0
        %v3357 = vadd.f32 %v3199, %v3356
        %v3358 = vpop.f32.mrb[0].mxu0
        %v3359 = vadd.f32 %v3201, %v3358
        %v3360 = vpop.f32.mrb[0].mxu0
        %v3361 = vadd.f32 %v3203, %v3360
        %3362 = vdwg.mxu0
        %v3363 = vld [vmem:[#allocation2 + $0x8] sm:$0xff]
        %v3364 = vld [vmem:[#allocation2 + $0x10] sm:$0xff]
        %v3365 = vld [vmem:[#allocation2 + $0x18] sm:$0xff]
        %v3366 = vld [vmem:[#allocation2 + $0x28] sm:$0xff]
        %v3367 = vld [vmem:[#allocation2 + $0x30] sm:$0xff]
        %v3368 = vld [vmem:[#allocation2 + $0x38] sm:$0xff]
        %v3369 = vld [vmem:[#allocation2 + $0x48] sm:$0xff]
        %v3370 = vld [vmem:[#allocation2 + $0x50] sm:$0xff]
        %v3371 = vld [vmem:[#allocation2 + $0x58] sm:$0xff]
        %v3372 = vld [vmem:[#allocation2 + $0x68] sm:$0xff]
        %v3373 = vld [vmem:[#allocation2 + $0x70] sm:$0xff]
        %v3374 = vld [vmem:[#allocation2 + $0x78] sm:$0xff]
        %s3375 = scalar_lea.vmem %s1, 256
        %v3376 = vld [vmem:[%s3375] sm:$0xf]
        %v3377 = vld [vmem:[%s3375 + $0x4] sm:$0xf]
        %v3378 = vld [vmem:[%s3375 + $0x8] sm:$0xf]
        %v3379 = vld [vmem:[%s3375 + $0xc] sm:$0xf]
        %v3380 = vld [vmem:[%s3375 + $0x10] sm:$0xf]
        %v3381 = vld [vmem:[%s3375 + $0x14] sm:$0xf]
        %v3382 = vld [vmem:[%s3375 + $0x18] sm:$0xf]
        %v3383 = vld [vmem:[%s3375 + $0x1c] sm:$0xf]
        %v3392 = vunpack.c.l.b16 %v3376
        %v3393 = vunpack.c.l.b16 %v3377
        %v3394 = vunpack.c.l.b16 %v3378
        %v3395 = vunpack.c.l.b16 %v3379
        %v3396 = vunpack.c.l.b16 %v3380
        %v3397 = vunpack.c.l.b16 %v3381
        %v3398 = vunpack.c.l.b16 %v3382
        %v3399 = vunpack.c.l.b16 %v3383
        %v3400 = vpack.c.b16 %v3393, %v3392
        %v3401 = vpack.c.b16 %v3395, %v3394
        %v3402 = vpack.c.b16 %v3397, %v3396
        %v3403 = vpack.c.b16 %v3399, %v3398
        %3416 = vrot.lane.b32.xlu0 %v3363, 123
        %v3417 = vpop.permute.xlu0 %3416
        %3418 = vrot.lane.b32.xlu0 %v3364, 123
        %v3419 = vpop.permute.xlu0 %3418
        %3420 = vrot.lane.b32.xlu0 %v3365, 123
        %v3421 = vpop.permute.xlu0 %3420
        %3422 = vrot.lane.b32.xlu0 %v3366, 123
        %v3423 = vpop.permute.xlu0 %3422
        %3424 = vrot.lane.b32.xlu0 %v3367, 123
        %v3425 = vpop.permute.xlu0 %3424
        %3426 = vrot.lane.b32.xlu0 %v3368, 123
        %v3427 = vpop.permute.xlu0 %3426
        %3428 = vrot.lane.b32.xlu0 %v3369, 123
        %v3429 = vpop.permute.xlu0 %3428
        %3430 = vrot.lane.b32.xlu0 %v3370, 123
        %v3431 = vpop.permute.xlu0 %3430
        %3432 = vrot.lane.b32.xlu0 %v3371, 123
        %v3433 = vpop.permute.xlu0 %3432
        %3434 = vrot.lane.b32.xlu0 %v3372, 123
        %v3435 = vpop.permute.xlu0 %3434
        %3436 = vrot.lane.b32.xlu0 %v3373, 123
        %v3437 = vpop.permute.xlu0 %3436
        %3438 = vrot.lane.b32.xlu0 %v3374, 123
        %v3439 = vpop.permute.xlu0 %3438
        %vm3440 = vcmask 1006592
        %v3441 = vsel %vm3440, %v3417, %v3419
        %v3442 = vsel %vm3440, %v3419, %v3421
        %v3443 = vsel %vm3440, %v3423, %v3425
        %v3444 = vsel %vm3440, %v3425, %v3427
        %v3445 = vsel %vm3440, %v3429, %v3431
        %v3446 = vsel %vm3440, %v3431, %v3433
        %v3447 = vsel %vm3440, %v3435, %v3437
        %v3448 = vsel %vm3440, %v3437, %v3439
        %v3458 = vsel %vm466, %v3400, 0
        %v3461 = vsel %vm466, %v3401, 0
        %v3464 = vsel %vm466, %v3402, 0
        %v3467 = vsel %vm466, %v3403, 0
        %3469 = vmatprep.subr.bf16.mxu0 %v3442
        %3470 = vmatpush1.bf16.msra.mxu0 %v3441
        %3471 = vmatprep.subr.bf16.mxu0 %v3444
        %3472 = vmatpush1.bf16.msra.mxu0 %v3443
        %3473 = vmatprep.subr.bf16.mxu0 %v3446
        %3474 = vmatpush1.bf16.msra.mxu0 %v3445
        %3475 = vmatprep.subr.bf16.mxu0 %v3448
        %3476 = vmatpush1.bf16.msra.mxu0 %v3447
        %3477 = vmatprep.subr.bf16.mxu0 0
        %3478 = vmatpush1.bf16.msra.mxu0 0
        %3479 = vmatprep.subr.bf16.mxu0 0
        %3480 = vmatpush1.bf16.msra.mxu0 0
        %3481 = vmatprep.subr.bf16.mxu0 0
        %3482 = vmatpush1.bf16.msra.mxu0 0
        %3483 = vmatprep.subr.bf16.mxu0 0
        %3484 = vmatpush1.bf16.msra.mxu0 0
        %3485 = vmatprep.subr.bf16.mxu0 0
        %3486 = vmatpush1.bf16.msra.mxu0 0
        %3487 = vmatprep.subr.bf16.mxu0 0
        %3488 = vmatpush1.bf16.msra.mxu0 0
        %3489 = vmatprep.subr.bf16.mxu0 0
        %3490 = vmatpush1.bf16.msra.mxu0 0
        %3491 = vmatprep.subr.bf16.mxu0 0
        %3492 = vmatpush1.bf16.msra.mxu0 0
        %3493 = vmatprep.subr.bf16.mxu0 0
        %3494 = vmatpush1.bf16.msra.mxu0 0
        %3495 = vmatprep.subr.bf16.mxu0 0
        %3496 = vmatpush1.bf16.msra.mxu0 0
        %3497 = vmatprep.subr.bf16.mxu0 0
        %3498 = vmatpush1.bf16.msra.mxu0 0
        %3499 = vmatprep.subr.bf16.mxu0 0
        %3500 = vmatpush1.bf16.msra.mxu0 0
        %3501 = vmatprep.mubr.bf16.mxu0 0
        %3502 = vmatmul.mubr.bf16.gmra.mrb[0].mxu0 %v3458
        %v3503 = vpop.f32.mrb[0].mxu0
        %v3504 = vadd.f32 0.0, %v3503
        %v3505 = vpop.f32.mrb[0].mxu0
        %v3506 = vadd.f32 0.0, %v3505
        %v3507 = vpop.f32.mrb[0].mxu0
        %v3508 = vadd.f32 0.0, %v3507
        %v3509 = vpop.f32.mrb[0].mxu0
        %v3510 = vadd.f32 0.0, %v3509
        %3511 = vmatprep.mubr.bf16.mxu0 0
        %3512 = vmatmul.mubr.bf16.gmra.mrb[0].mxu0 %v3461
        %v3513 = vpop.f32.mrb[0].mxu0
        %v3514 = vadd.f32 0.0, %v3513
        %v3515 = vpop.f32.mrb[0].mxu0
        %v3516 = vadd.f32 0.0, %v3515
        %v3517 = vpop.f32.mrb[0].mxu0
        %v3518 = vadd.f32 0.0, %v3517
        %v3519 = vpop.f32.mrb[0].mxu0
        %v3520 = vadd.f32 0.0, %v3519
        %3521 = vmatprep.mubr.bf16.mxu0 0
        %3522 = vmatmul.mubr.bf16.gmra.mrb[0].mxu0 %v3464
        %v3523 = vpop.f32.mrb[0].mxu0
        %v3524 = vadd.f32 0.0, %v3523
        %v3525 = vpop.f32.mrb[0].mxu0
        %v3526 = vadd.f32 0.0, %v3525
        %v3527 = vpop.f32.mrb[0].mxu0
        %v3528 = vadd.f32 0.0, %v3527
        %v3529 = vpop.f32.mrb[0].mxu0
        %v3530 = vadd.f32 0.0, %v3529
        %3531 = vmatprep.mubr.bf16.mxu0 0
        %3532 = vmatmul.mubr.bf16.gmra.mrb[0].mxu0 %v3467
        %v3533 = vpop.f32.mrb[0].mxu0
        %v3534 = vadd.f32 0.0, %v3533
        %v3535 = vpop.f32.mrb[0].mxu0
        %v3536 = vadd.f32 0.0, %v3535
        %v3537 = vpop.f32.mrb[0].mxu0
        %v3538 = vadd.f32 0.0, %v3537
        %v3539 = vpop.f32.mrb[0].mxu0
        %v3540 = vadd.f32 0.0, %v3539
        %3541 = vdwg.mxu0
        %v3542 = vadd.f32 %v3325, %v3504
        %v3543 = vadd.f32 %v3327, %v3506
        %v3544 = vadd.f32 %v3329, %v3508
        %v3545 = vadd.f32 %v3331, %v3510
        %v3546 = vadd.f32 %v3335, %v3514
        %v3547 = vadd.f32 %v3337, %v3516
        %v3548 = vadd.f32 %v3339, %v3518
        %v3549 = vadd.f32 %v3341, %v3520
        %v3550 = vadd.f32 %v3345, %v3524
        %v3551 = vadd.f32 %v3347, %v3526
        %v3552 = vadd.f32 %v3349, %v3528
        %v3553 = vadd.f32 %v3351, %v3530
        %v3554 = vadd.f32 %v3355, %v3534
        %v3555 = vadd.f32 %v3357, %v3536
        %v3556 = vadd.f32 %v3359, %v3538
        %v3557 = vadd.f32 %v3361, %v3540
        %s3558 = scalar_lea.vmem %s2, 128
        %v3559 = vld [vmem:[%s3558] sm:$0xff]
        %v3560 = vld [vmem:[%s3558 + $0x8] sm:$0xff]
        %v3561 = vld [vmem:[%s3558 + $0x10] sm:$0xff]
        %v3562 = vld [vmem:[%s3558 + $0x18] sm:$0xff]
        %v3563 = vld [vmem:[%s3558 + $0x20] sm:$0xff]
        %v3564 = vld [vmem:[%s3558 + $0x28] sm:$0xff]
        %v3565 = vld [vmem:[%s3558 + $0x30] sm:$0xff]
        %v3566 = vld [vmem:[%s3558 + $0x38] sm:$0xff]
        %3568 = vset.pattern.permute.xlu0 0
        %3569 = vperm.xlu0 %3568, %v3559
        %v3570 = vpop.permute.xlu0 %3569
        %3573 = vset.pattern.permute.xlu0 0
        %3574 = vperm.xlu0 %3573, %v3560
        %v3575 = vpop.permute.xlu0 %3574
        %3578 = vset.pattern.permute.xlu0 0
        %3579 = vperm.xlu0 %3578, %v3561
        %v3580 = vpop.permute.xlu0 %3579
        %3583 = vset.pattern.permute.xlu0 0
        %3584 = vperm.xlu0 %3583, %v3562
        %v3585 = vpop.permute.xlu0 %3584
        %3588 = vset.pattern.permute.xlu0 0
        %3589 = vperm.xlu0 %3588, %v3563
        %v3590 = vpop.permute.xlu0 %3589
        %3593 = vset.pattern.permute.xlu0 0
        %3594 = vperm.xlu0 %3593, %v3564
        %v3595 = vpop.permute.xlu0 %3594
        %3598 = vset.pattern.permute.xlu0 0
        %3599 = vperm.xlu0 %3598, %v3565
        %v3600 = vpop.permute.xlu0 %3599
        %3603 = vset.pattern.permute.xlu0 0
        %3604 = vperm.xlu0 %3603, %v3566
        %v3605 = vpop.permute.xlu0 %3604
        %v3607 = vadd.f32 %v3542, %v3570
        %v3608 = vadd.f32 %v3543, %v3570
        %v3609 = vadd.f32 %v3544, %v3575
        %v3610 = vadd.f32 %v3545, %v3575
        %v3611 = vadd.f32 %v3546, %v3580
        %v3612 = vadd.f32 %v3547, %v3580
        %v3613 = vadd.f32 %v3548, %v3585
        %v3614 = vadd.f32 %v3549, %v3585
        %v3615 = vadd.f32 %v3550, %v3590
        %v3616 = vadd.f32 %v3551, %v3590
        %v3617 = vadd.f32 %v3552, %v3595
        %v3618 = vadd.f32 %v3553, %v3595
        %v3619 = vadd.f32 %v3554, %v3600
        %v3620 = vadd.f32 %v3555, %v3600
        %v3621 = vadd.f32 %v3556, %v3605
        %v3622 = vadd.f32 %v3557, %v3605
        %vm3623 = vcmp.gt.f32.partialorder %v3607, 0.0
        %vm3624 = vcmp.gt.f32.partialorder %v3608, 0.0
        %vm3625 = vcmp.gt.f32.partialorder %v3609, 0.0
        %vm3626 = vcmp.gt.f32.partialorder %v3610, 0.0
        %vm3627 = vcmp.gt.f32.partialorder %v3611, 0.0
        %vm3628 = vcmp.gt.f32.partialorder %v3612, 0.0
        %vm3629 = vcmp.gt.f32.partialorder %v3613, 0.0
        %vm3630 = vcmp.gt.f32.partialorder %v3614, 0.0
        %vm3631 = vcmp.gt.f32.partialorder %v3615, 0.0
        %vm3632 = vcmp.gt.f32.partialorder %v3616, 0.0
        %vm3633 = vcmp.gt.f32.partialorder %v3617, 0.0
        %vm3634 = vcmp.gt.f32.partialorder %v3618, 0.0
        %vm3635 = vcmp.gt.f32.partialorder %v3619, 0.0
        %vm3636 = vcmp.gt.f32.partialorder %v3620, 0.0
        %vm3637 = vcmp.gt.f32.partialorder %v3621, 0.0
        %vm3638 = vcmp.gt.f32.partialorder %v3622, 0.0
        %v3639 = vmul.f32 %v3607, 0.1
        %v3640 = vmul.f32 %v3608, 0.1
        %v3641 = vmul.f32 %v3609, 0.1
        %v3642 = vmul.f32 %v3610, 0.1
        %v3643 = vmul.f32 %v3611, 0.1
        %v3644 = vmul.f32 %v3612, 0.1
        %v3645 = vmul.f32 %v3613, 0.1
        %v3646 = vmul.f32 %v3614, 0.1
        %v3647 = vmul.f32 %v3615, 0.1
        %v3648 = vmul.f32 %v3616, 0.1
        %v3649 = vmul.f32 %v3617, 0.1
        %v3650 = vmul.f32 %v3618, 0.1
        %v3651 = vmul.f32 %v3619, 0.1
        %v3652 = vmul.f32 %v3620, 0.1
        %v3653 = vmul.f32 %v3621, 0.1
        %v3654 = vmul.f32 %v3622, 0.1
        %v3655 = vsel %vm3623, %v3607, %v3639
        %v3656 = vsel %vm3624, %v3608, %v3640
        %v3657 = vsel %vm3625, %v3609, %v3641
        %v3658 = vsel %vm3626, %v3610, %v3642
        %v3659 = vsel %vm3627, %v3611, %v3643
        %v3660 = vsel %vm3628, %v3612, %v3644
        %v3661 = vsel %vm3629, %v3613, %v3645
        %v3662 = vsel %vm3630, %v3614, %v3646
        %v3663 = vsel %vm3631, %v3615, %v3647
        %v3664 = vsel %vm3632, %v3616, %v3648
        %v3665 = vsel %vm3633, %v3617, %v3649
        %v3666 = vsel %vm3634, %v3618, %v3650
        %v3667 = vsel %vm3635, %v3619, %v3651
        %v3668 = vsel %vm3636, %v3620, %v3652
        %v3669 = vsel %vm3637, %v3621, %v3653
        %v3670 = vsel %vm3638, %v3622, %v3654
        %v3671 = vpack.c.bf16 %v3657, %v3655
        %v3672 = vpack.c.bf16 %v3658, %v3656
        %v3673 = vpack.c.bf16 %v3661, %v3659
        %v3674 = vpack.c.bf16 %v3662, %v3660
        %v3675 = vpack.c.bf16 %v3665, %v3663
        %v3676 = vpack.c.bf16 %v3666, %v3664
        %v3677 = vpack.c.bf16 %v3669, %v3667
        %v3678 = vpack.c.bf16 %v3670, %v3668
        %3679 = vst [vmem:[#allocation2 + $0x8] sm:$0xff] %v3671
        %3680 = vst [vmem:[#allocation2 + $0x10] sm:$0xff] %v3672
        %3681 = vst [vmem:[#allocation2 + $0x28] sm:$0xff] %v3673
        %3682 = vst [vmem:[#allocation2 + $0x30] sm:$0xff] %v3674
        %3683 = vst [vmem:[#allocation2 + $0x48] sm:$0xff] %v3675
        %3684 = vst [vmem:[#allocation2 + $0x50] sm:$0xff] %v3676
        %3685 = vst [vmem:[#allocation2 + $0x68] sm:$0xff] %v3677
        %3686 = vst [vmem:[#allocation2 + $0x70] sm:$0xff] %v3678
        // Predicated region
        $region89: #{tpu_custom_call.1} parent=39 // pred_check
          %p3687 = pneg %p399
        $region90: #{tpu_custom_call.1} parent=39 // pred_check_branch
          %3689 = sbr.rel (%p3687) target = $region92
        $region91: #{tpu_custom_call.1} parent=39 // pred_region
          %vm3690 = vcmask 97280
          %3691 = vst.msk [vmem:[#allocation2 + $0x8] sm:$0xff] %vm3690, 0
          %3692 = vst.msk [vmem:[#allocation2 + $0x28] sm:$0xff] %vm3690, 0
          %3693 = vst.msk [vmem:[#allocation2 + $0x48] sm:$0xff] %vm3690, 0
          %3694 = vst.msk [vmem:[#allocation2 + $0x68] sm:$0xff] %vm3690, 0
        $region92: #{tpu_custom_call.1} parent=39 // pred_fallthru
          _
        // Predicated region
        $region93: #{tpu_custom_call.1} parent=39 // pred_check
          %p3695 = pneg %p408
        $region94: #{tpu_custom_call.1} parent=39 // pred_check_branch
          %3697 = sbr.rel (%p3695) target = $region96
        $region95: #{tpu_custom_call.1} parent=39 // pred_region
          %vm3698 = vcmask 1047648
          %3699 = vst.msk [vmem:[#allocation2 + $0x10] sm:$0xff] %vm3698, 0
          %3700 = vst.msk [vmem:[#allocation2 + $0x30] sm:$0xff] %vm3698, 0
          %3701 = vst.msk [vmem:[#allocation2 + $0x50] sm:$0xff] %vm3698, 0
          %3702 = vst.msk [vmem:[#allocation2 + $0x70] sm:$0xff] %vm3698, 0
        $region96: #{tpu_custom_call.1} parent=39 // pred_fallthru
          _
        %v3703 = vld [vmem:[#allocation2] sm:$0xff]
        %v3704 = vld [vmem:[#allocation2 + $0x8] sm:$0xff]
        %v3705 = vld [vmem:[#allocation2 + $0x10] sm:$0xff]
        %v3706 = vld [vmem:[#allocation2 + $0x20] sm:$0xff]
        %v3707 = vld [vmem:[#allocation2 + $0x28] sm:$0xff]
        %v3708 = vld [vmem:[#allocation2 + $0x30] sm:$0xff]
        %v3709 = vld [vmem:[#allocation2 + $0x40] sm:$0xff]
        %v3710 = vld [vmem:[#allocation2 + $0x48] sm:$0xff]
        %v3711 = vld [vmem:[#allocation2 + $0x50] sm:$0xff]
        %v3712 = vld [vmem:[#allocation2 + $0x60] sm:$0xff]
        %v3713 = vld [vmem:[#allocation2 + $0x68] sm:$0xff]
        %v3714 = vld [vmem:[#allocation2 + $0x70] sm:$0xff]
        %s3715 = scalar_lea.vmem [#allocation7], 192
        %v3716 = vld [vmem:[%s3715] sm:$0xf]
        %v3717 = vld [vmem:[%s3715 + $0x4] sm:$0xf]
        %v3718 = vld [vmem:[%s3715 + $0x8] sm:$0xf]
        %v3719 = vld [vmem:[%s3715 + $0xc] sm:$0xf]
        %v3720 = vld [vmem:[%s3715 + $0x10] sm:$0xf]
        %v3721 = vld [vmem:[%s3715 + $0x14] sm:$0xf]
        %v3722 = vld [vmem:[%s3715 + $0x18] sm:$0xf]
        %v3723 = vld [vmem:[%s3715 + $0x1c] sm:$0xf]
        %s3724 = scalar_lea.vmem [#allocation7], 224
        %v3725 = vld [vmem:[%s3724] sm:$0xf]
        %v3726 = vld [vmem:[%s3724 + $0x4] sm:$0xf]
        %v3727 = vld [vmem:[%s3724 + $0x8] sm:$0xf]
        %v3728 = vld [vmem:[%s3724 + $0xc] sm:$0xf]
        %v3729 = vld [vmem:[%s3724 + $0x10] sm:$0xf]
        %v3730 = vld [vmem:[%s3724 + $0x14] sm:$0xf]
        %v3731 = vld [vmem:[%s3724 + $0x18] sm:$0xf]
        %v3732 = vld [vmem:[%s3724 + $0x1c] sm:$0xf]
        %v3741 = vunpack.c.l.b16 %v3725
        %v3742 = vunpack.c.l.b16 %v3726
        %v3743 = vunpack.c.l.b16 %v3727
        %v3744 = vunpack.c.l.b16 %v3728
        %v3745 = vunpack.c.l.b16 %v3729
        %v3746 = vunpack.c.l.b16 %v3730
        %v3747 = vunpack.c.l.b16 %v3731
        %v3748 = vunpack.c.l.b16 %v3732
        %v3749 = vpack.c.b16 %v3742, %v3741
        %v3750 = vpack.c.b16 %v3744, %v3743
        %v3751 = vpack.c.b16 %v3746, %v3745
        %v3752 = vpack.c.b16 %v3748, %v3747
        %v3754 = vsel %vm466, %v3749, 0
        %v3757 = vsel %vm466, %v3750, 0
        %v3760 = vsel %vm466, %v3751, 0
        %v3763 = vsel %vm466, %v3752, 0
        %3765 = vmatprep.subr.bf16.mxu0 %v3705
        %3766 = vmatpush1.bf16.msra.mxu0 %v3704
        %3767 = vmatprep.subr.bf16.mxu0 %v3708
        %3768 = vmatpush1.bf16.msra.mxu0 %v3707
        %3769 = vmatprep.subr.bf16.mxu0 %v3711
        %3770 = vmatpush1.bf16.msra.mxu0 %v3710
        %3771 = vmatprep.subr.bf16.mxu0 %v3714
        %3772 = vmatpush1.bf16.msra.mxu0 %v3713
        %3773 = vmatprep.subr.bf16.mxu0 0
        %3774 = vmatpush1.bf16.msra.mxu0 0
        %3775 = vmatprep.subr.bf16.mxu0 0
        %3776 = vmatpush1.bf16.msra.mxu0 0
        %3777 = vmatprep.subr.bf16.mxu0 0
        %3778 = vmatpush1.bf16.msra.mxu0 0
        %3779 = vmatprep.subr.bf16.mxu0 0
        %3780 = vmatpush1.bf16.msra.mxu0 0
        %3781 = vmatprep.subr.bf16.mxu0 0
        %3782 = vmatpush1.bf16.msra.mxu0 0
        %3783 = vmatprep.subr.bf16.mxu0 0
        %3784 = vmatpush1.bf16.msra.mxu0 0
        %3785 = vmatprep.subr.bf16.mxu0 0
        %3786 = vmatpush1.bf16.msra.mxu0 0
        %3787 = vmatprep.subr.bf16.mxu0 0
        %3788 = vmatpush1.bf16.msra.mxu0 0
        %3789 = vmatprep.subr.bf16.mxu0 0
        %3790 = vmatpush1.bf16.msra.mxu0 0
        %3791 = vmatprep.subr.bf16.mxu0 0
        %3792 = vmatpush1.bf16.msra.mxu0 0
        %3793 = vmatprep.subr.bf16.mxu0 0
        %3794 = vmatpush1.bf16.msra.mxu0 0
        %3795 = vmatprep.subr.bf16.mxu0 0
        %3796 = vmatpush1.bf16.msra.mxu0 0
        %3797 = vmatprep.mubr.bf16.mxu0 0
        %3798 = vmatmul.mubr.bf16.gmra.mrb[0].mxu0 %v3754
        %v3799 = vpop.f32.mrb[0].mxu0
        %v3800 = vadd.f32 0.0, %v3799
        %v3801 = vpop.f32.mrb[0].mxu0
        %v3802 = vadd.f32 0.0, %v3801
        %v3803 = vpop.f32.mrb[0].mxu0
        %v3804 = vadd.f32 0.0, %v3803
        %v3805 = vpop.f32.mrb[0].mxu0
        %v3806 = vadd.f32 0.0, %v3805
        %3807 = vmatprep.mubr.bf16.mxu0 0
        %3808 = vmatmul.mubr.bf16.gmra.mrb[0].mxu0 %v3757
        %v3809 = vpop.f32.mrb[0].mxu0
        %v3810 = vadd.f32 0.0, %v3809
        %v3811 = vpop.f32.mrb[0].mxu0
        %v3812 = vadd.f32 0.0, %v3811
        %v3813 = vpop.f32.mrb[0].mxu0
        %v3814 = vadd.f32 0.0, %v3813
        %v3815 = vpop.f32.mrb[0].mxu0
        %v3816 = vadd.f32 0.0, %v3815
        %3817 = vmatprep.mubr.bf16.mxu0 0
        %3818 = vmatmul.mubr.bf16.gmra.mrb[0].mxu0 %v3760
        %v3819 = vpop.f32.mrb[0].mxu0
        %v3820 = vadd.f32 0.0, %v3819
        %v3821 = vpop.f32.mrb[0].mxu0
        %v3822 = vadd.f32 0.0, %v3821
        %v3823 = vpop.f32.mrb[0].mxu0
        %v3824 = vadd.f32 0.0, %v3823
        %v3825 = vpop.f32.mrb[0].mxu0
        %v3826 = vadd.f32 0.0, %v3825
        %3827 = vmatprep.mubr.bf16.mxu0 0
        %3828 = vmatmul.mubr.bf16.gmra.mrb[0].mxu0 %v3763
        %v3829 = vpop.f32.mrb[0].mxu0
        %v3830 = vadd.f32 0.0, %v3829
        %v3831 = vpop.f32.mrb[0].mxu0
        %v3832 = vadd.f32 0.0, %v3831
        %v3833 = vpop.f32.mrb[0].mxu0
        %v3834 = vadd.f32 0.0, %v3833
        %v3835 = vpop.f32.mrb[0].mxu0
        %v3836 = vadd.f32 0.0, %v3835
        %3837 = vdwg.mxu0
        %v3846 = vunpack.c.l.b16 %v3716
        %v3847 = vunpack.c.l.b16 %v3717
        %v3848 = vunpack.c.l.b16 %v3718
        %v3849 = vunpack.c.l.b16 %v3719
        %v3850 = vunpack.c.l.b16 %v3720
        %v3851 = vunpack.c.l.b16 %v3721
        %v3852 = vunpack.c.l.b16 %v3722
        %v3853 = vunpack.c.l.b16 %v3723
        %v3854 = vpack.c.b16 %v3847, %v3846
        %v3855 = vpack.c.b16 %v3849, %v3848
        %v3856 = vpack.c.b16 %v3851, %v3850
        %v3857 = vpack.c.b16 %v3853, %v3852
        %3870 = vrot.lane.b32.xlu0 %v3703, 1
        %v3871 = vpop.permute.xlu0 %3870
        %3872 = vrot.lane.b32.xlu0 %v3704, 1
        %v3873 = vpop.permute.xlu0 %3872
        %3874 = vrot.lane.b32.xlu0 %v3705, 1
        %v3875 = vpop.permute.xlu0 %3874
        %3876 = vrot.lane.b32.xlu0 %v3706, 1
        %v3877 = vpop.permute.xlu0 %3876
        %3878 = vrot.lane.b32.xlu0 %v3707, 1
        %v3879 = vpop.permute.xlu0 %3878
        %3880 = vrot.lane.b32.xlu0 %v3708, 1
        %v3881 = vpop.permute.xlu0 %3880
        %3882 = vrot.lane.b32.xlu0 %v3709, 1
        %v3883 = vpop.permute.xlu0 %3882
        %3884 = vrot.lane.b32.xlu0 %v3710, 1
        %v3885 = vpop.permute.xlu0 %3884
        %3886 = vrot.lane.b32.xlu0 %v3711, 1
        %v3887 = vpop.permute.xlu0 %3886
        %3888 = vrot.lane.b32.xlu0 %v3712, 1
        %v3889 = vpop.permute.xlu0 %3888
        %3890 = vrot.lane.b32.xlu0 %v3713, 1
        %v3891 = vpop.permute.xlu0 %3890
        %3892 = vrot.lane.b32.xlu0 %v3714, 1
        %v3893 = vpop.permute.xlu0 %3892
        %v3894 = vsel %vm608, %v3871, %v3873
        %v3895 = vsel %vm608, %v3873, %v3875
        %v3896 = vsel %vm608, %v3877, %v3879
        %v3897 = vsel %vm608, %v3879, %v3881
        %v3898 = vsel %vm608, %v3883, %v3885
        %v3899 = vsel %vm608, %v3885, %v3887
        %v3900 = vsel %vm608, %v3889, %v3891
        %v3901 = vsel %vm608, %v3891, %v3893
        %v3911 = vsel %vm466, %v3854, 0
        %v3914 = vsel %vm466, %v3855, 0
        %v3917 = vsel %vm466, %v3856, 0
        %v3920 = vsel %vm466, %v3857, 0
        %3922 = vmatprep.subr.bf16.mxu0 %v3895
        %3923 = vmatpush1.bf16.msra.mxu0 %v3894
        %3924 = vmatprep.subr.bf16.mxu0 %v3897
        %3925 = vmatpush1.bf16.msra.mxu0 %v3896
        %3926 = vmatprep.subr.bf16.mxu0 %v3899
        %3927 = vmatpush1.bf16.msra.mxu0 %v3898
        %3928 = vmatprep.subr.bf16.mxu0 %v3901
        %3929 = vmatpush1.bf16.msra.mxu0 %v3900
        %3930 = vmatprep.subr.bf16.mxu0 0
        %3931 = vmatpush1.bf16.msra.mxu0 0
        %3932 = vmatprep.subr.bf16.mxu0 0
        %3933 = vmatpush1.bf16.msra.mxu0 0
        %3934 = vmatprep.subr.bf16.mxu0 0
        %3935 = vmatpush1.bf16.msra.mxu0 0
        %3936 = vmatprep.subr.bf16.mxu0 0
        %3937 = vmatpush1.bf16.msra.mxu0 0
        %3938 = vmatprep.subr.bf16.mxu0 0
        %3939 = vmatpush1.bf16.msra.mxu0 0
        %3940 = vmatprep.subr.bf16.mxu0 0
        %3941 = vmatpush1.bf16.msra.mxu0 0
        %3942 = vmatprep.subr.bf16.mxu0 0
        %3943 = vmatpush1.bf16.msra.mxu0 0
        %3944 = vmatprep.subr.bf16.mxu0 0
        %3945 = vmatpush1.bf16.msra.mxu0 0
        %3946 = vmatprep.subr.bf16.mxu0 0
        %3947 = vmatpush1.bf16.msra.mxu0 0
        %3948 = vmatprep.subr.bf16.mxu0 0
        %3949 = vmatpush1.bf16.msra.mxu0 0
        %3950 = vmatprep.subr.bf16.mxu0 0
        %3951 = vmatpush1.bf16.msra.mxu0 0
        %3952 = vmatprep.subr.bf16.mxu0 0
        %3953 = vmatpush1.bf16.msra.mxu0 0
        %3954 = vmatprep.mubr.bf16.mxu0 0
        %3955 = vmatmul.mubr.bf16.gmra.mrb[0].mxu0 %v3911
        %v3956 = vpop.f32.mrb[0].mxu0
        %v3957 = vadd.f32 %v3800, %v3956
        %v3958 = vpop.f32.mrb[0].mxu0
        %v3959 = vadd.f32 %v3802, %v3958
        %v3960 = vpop.f32.mrb[0].mxu0
        %v3961 = vadd.f32 %v3804, %v3960
        %v3962 = vpop.f32.mrb[0].mxu0
        %v3963 = vadd.f32 %v3806, %v3962
        %3964 = vmatprep.mubr.bf16.mxu0 0
        %3965 = vmatmul.mubr.bf16.gmra.mrb[0].mxu0 %v3914
        %v3966 = vpop.f32.mrb[0].mxu0
        %v3967 = vadd.f32 %v3810, %v3966
        %v3968 = vpop.f32.mrb[0].mxu0
        %v3969 = vadd.f32 %v3812, %v3968
        %v3970 = vpop.f32.mrb[0].mxu0
        %v3971 = vadd.f32 %v3814, %v3970
        %v3972 = vpop.f32.mrb[0].mxu0
        %v3973 = vadd.f32 %v3816, %v3972
        %3974 = vmatprep.mubr.bf16.mxu0 0
        %3975 = vmatmul.mubr.bf16.gmra.mrb[0].mxu0 %v3917
        %v3976 = vpop.f32.mrb[0].mxu0
        %v3977 = vadd.f32 %v3820, %v3976
        %v3978 = vpop.f32.mrb[0].mxu0
        %v3979 = vadd.f32 %v3822, %v3978
        %v3980 = vpop.f32.mrb[0].mxu0
        %v3981 = vadd.f32 %v3824, %v3980
        %v3982 = vpop.f32.mrb[0].mxu0
        %v3983 = vadd.f32 %v3826, %v3982
        %3984 = vmatprep.mubr.bf16.mxu0 0
        %3985 = vmatmul.mubr.bf16.gmra.mrb[0].mxu0 %v3920
        %v3986 = vpop.f32.mrb[0].mxu0
        %v3987 = vadd.f32 %v3830, %v3986
        %v3988 = vpop.f32.mrb[0].mxu0
        %v3989 = vadd.f32 %v3832, %v3988
        %v3990 = vpop.f32.mrb[0].mxu0
        %v3991 = vadd.f32 %v3834, %v3990
        %v3992 = vpop.f32.mrb[0].mxu0
        %v3993 = vadd.f32 %v3836, %v3992
        %3994 = vdwg.mxu0
        %v3995 = vld [vmem:[#allocation2 + $0x8] sm:$0xff]
        %v3996 = vld [vmem:[#allocation2 + $0x10] sm:$0xff]
        %v3997 = vld [vmem:[#allocation2 + $0x18] sm:$0xff]
        %v3998 = vld [vmem:[#allocation2 + $0x28] sm:$0xff]
        %v3999 = vld [vmem:[#allocation2 + $0x30] sm:$0xff]
        %v4000 = vld [vmem:[#allocation2 + $0x38] sm:$0xff]
        %v4001 = vld [vmem:[#allocation2 + $0x48] sm:$0xff]
        %v4002 = vld [vmem:[#allocation2 + $0x50] sm:$0xff]
        %v4003 = vld [vmem:[#allocation2 + $0x58] sm:$0xff]
        %v4004 = vld [vmem:[#allocation2 + $0x68] sm:$0xff]
        %v4005 = vld [vmem:[#allocation2 + $0x70] sm:$0xff]
        %v4006 = vld [vmem:[#allocation2 + $0x78] sm:$0xff]
        %s4007 = scalar_lea.vmem [#allocation7], 256
        %v4008 = vld [vmem:[%s4007] sm:$0xf]
        %v4009 = vld [vmem:[%s4007 + $0x4] sm:$0xf]
        %v4010 = vld [vmem:[%s4007 + $0x8] sm:$0xf]
        %v4011 = vld [vmem:[%s4007 + $0xc] sm:$0xf]
        %v4012 = vld [vmem:[%s4007 + $0x10] sm:$0xf]
        %v4013 = vld [vmem:[%s4007 + $0x14] sm:$0xf]
        %v4014 = vld [vmem:[%s4007 + $0x18] sm:$0xf]
        %v4015 = vld [vmem:[%s4007 + $0x1c] sm:$0xf]
        %v4024 = vunpack.c.l.b16 %v4008
        %v4025 = vunpack.c.l.b16 %v4009
        %v4026 = vunpack.c.l.b16 %v4010
        %v4027 = vunpack.c.l.b16 %v4011
        %v4028 = vunpack.c.l.b16 %v4012
        %v4029 = vunpack.c.l.b16 %v4013
        %v4030 = vunpack.c.l.b16 %v4014
        %v4031 = vunpack.c.l.b16 %v4015
        %v4032 = vpack.c.b16 %v4025, %v4024
        %v4033 = vpack.c.b16 %v4027, %v4026
        %v4034 = vpack.c.b16 %v4029, %v4028
        %v4035 = vpack.c.b16 %v4031, %v4030
        %4048 = vrot.lane.b32.xlu0 %v3995, 127
        %v4049 = vpop.permute.xlu0 %4048
        %4050 = vrot.lane.b32.xlu0 %v3996, 127
        %v4051 = vpop.permute.xlu0 %4050
        %4052 = vrot.lane.b32.xlu0 %v3997, 127
        %v4053 = vpop.permute.xlu0 %4052
        %4054 = vrot.lane.b32.xlu0 %v3998, 127
        %v4055 = vpop.permute.xlu0 %4054
        %4056 = vrot.lane.b32.xlu0 %v3999, 127
        %v4057 = vpop.permute.xlu0 %4056
        %4058 = vrot.lane.b32.xlu0 %v4000, 127
        %v4059 = vpop.permute.xlu0 %4058
        %4060 = vrot.lane.b32.xlu0 %v4001, 127
        %v4061 = vpop.permute.xlu0 %4060
        %4062 = vrot.lane.b32.xlu0 %v4002, 127
        %v4063 = vpop.permute.xlu0 %4062
        %4064 = vrot.lane.b32.xlu0 %v4003, 127
        %v4065 = vpop.permute.xlu0 %4064
        %4066 = vrot.lane.b32.xlu0 %v4004, 127
        %v4067 = vpop.permute.xlu0 %4066
        %4068 = vrot.lane.b32.xlu0 %v4005, 127
        %v4069 = vpop.permute.xlu0 %4068
        %4070 = vrot.lane.b32.xlu0 %v4006, 127
        %v4071 = vpop.permute.xlu0 %4070
        %v4072 = vsel %vm787, %v4049, %v4051
        %v4073 = vsel %vm787, %v4051, %v4053
        %v4074 = vsel %vm787, %v4055, %v4057
        %v4075 = vsel %vm787, %v4057, %v4059
        %v4076 = vsel %vm787, %v4061, %v4063
        %v4077 = vsel %vm787, %v4063, %v4065
        %v4078 = vsel %vm787, %v4067, %v4069
        %v4079 = vsel %vm787, %v4069, %v4071
        %v4089 = vsel %vm466, %v4032, 0
        %v4092 = vsel %vm466, %v4033, 0
        %v4095 = vsel %vm466, %v4034, 0
        %v4098 = vsel %vm466, %v4035, 0
        %4100 = vmatprep.subr.bf16.mxu0 %v4073
        %4101 = vmatpush1.bf16.msra.mxu0 %v4072
        %4102 = vmatprep.subr.bf16.mxu0 %v4075
        %4103 = vmatpush1.bf16.msra.mxu0 %v4074
        %4104 = vmatprep.subr.bf16.mxu0 %v4077
        %4105 = vmatpush1.bf16.msra.mxu0 %v4076
        %4106 = vmatprep.subr.bf16.mxu0 %v4079
        %4107 = vmatpush1.bf16.msra.mxu0 %v4078
        %4108 = vmatprep.subr.bf16.mxu0 0
        %4109 = vmatpush1.bf16.msra.mxu0 0
        %4110 = vmatprep.subr.bf16.mxu0 0
        %4111 = vmatpush1.bf16.msra.mxu0 0
        %4112 = vmatprep.subr.bf16.mxu0 0
        %4113 = vmatpush1.bf16.msra.mxu0 0
        %4114 = vmatprep.subr.bf16.mxu0 0
        %4115 = vmatpush1.bf16.msra.mxu0 0
        %4116 = vmatprep.subr.bf16.mxu0 0
        %4117 = vmatpush1.bf16.msra.mxu0 0
        %4118 = vmatprep.subr.bf16.mxu0 0
        %4119 = vmatpush1.bf16.msra.mxu0 0
        %4120 = vmatprep.subr.bf16.mxu0 0
        %4121 = vmatpush1.bf16.msra.mxu0 0
        %4122 = vmatprep.subr.bf16.mxu0 0
        %4123 = vmatpush1.bf16.msra.mxu0 0
        %4124 = vmatprep.subr.bf16.mxu0 0
        %4125 = vmatpush1.bf16.msra.mxu0 0
        %4126 = vmatprep.subr.bf16.mxu0 0
        %4127 = vmatpush1.bf16.msra.mxu0 0
        %4128 = vmatprep.subr.bf16.mxu0 0
        %4129 = vmatpush1.bf16.msra.mxu0 0
        %4130 = vmatprep.subr.bf16.mxu0 0
        %4131 = vmatpush1.bf16.msra.mxu0 0
        %4132 = vmatprep.mubr.bf16.mxu0 0
        %4133 = vmatmul.mubr.bf16.gmra.mrb[0].mxu0 %v4089
        %v4134 = vpop.f32.mrb[0].mxu0
        %v4135 = vadd.f32 0.0, %v4134
        %v4136 = vpop.f32.mrb[0].mxu0
        %v4137 = vadd.f32 0.0, %v4136
        %v4138 = vpop.f32.mrb[0].mxu0
        %v4139 = vadd.f32 0.0, %v4138
        %v4140 = vpop.f32.mrb[0].mxu0
        %v4141 = vadd.f32 0.0, %v4140
        %4142 = vmatprep.mubr.bf16.mxu0 0
        %4143 = vmatmul.mubr.bf16.gmra.mrb[0].mxu0 %v4092
        %v4144 = vpop.f32.mrb[0].mxu0
        %v4145 = vadd.f32 0.0, %v4144
        %v4146 = vpop.f32.mrb[0].mxu0
        %v4147 = vadd.f32 0.0, %v4146
        %v4148 = vpop.f32.mrb[0].mxu0
        %v4149 = vadd.f32 0.0, %v4148
        %v4150 = vpop.f32.mrb[0].mxu0
        %v4151 = vadd.f32 0.0, %v4150
        %4152 = vmatprep.mubr.bf16.mxu0 0
        %4153 = vmatmul.mubr.bf16.gmra.mrb[0].mxu0 %v4095
        %v4154 = vpop.f32.mrb[0].mxu0
        %v4155 = vadd.f32 0.0, %v4154
        %v4156 = vpop.f32.mrb[0].mxu0
        %v4157 = vadd.f32 0.0, %v4156
        %v4158 = vpop.f32.mrb[0].mxu0
        %v4159 = vadd.f32 0.0, %v4158
        %v4160 = vpop.f32.mrb[0].mxu0
        %v4161 = vadd.f32 0.0, %v4160
        %4162 = vmatprep.mubr.bf16.mxu0 0
        %4163 = vmatmul.mubr.bf16.gmra.mrb[0].mxu0 %v4098
        %v4164 = vpop.f32.mrb[0].mxu0
        %v4165 = vadd.f32 0.0, %v4164
        %v4166 = vpop.f32.mrb[0].mxu0
        %v4167 = vadd.f32 0.0, %v4166
        %v4168 = vpop.f32.mrb[0].mxu0
        %v4169 = vadd.f32 0.0, %v4168
        %v4170 = vpop.f32.mrb[0].mxu0
        %v4171 = vadd.f32 0.0, %v4170
        %4172 = vdwg.mxu0
        %v4173 = vadd.f32 %v3957, %v4135
        %v4174 = vadd.f32 %v3959, %v4137
        %v4175 = vadd.f32 %v3961, %v4139
        %v4176 = vadd.f32 %v3963, %v4141
        %v4177 = vadd.f32 %v3967, %v4145
        %v4178 = vadd.f32 %v3969, %v4147
        %v4179 = vadd.f32 %v3971, %v4149
        %v4180 = vadd.f32 %v3973, %v4151
        %v4181 = vadd.f32 %v3977, %v4155
        %v4182 = vadd.f32 %v3979, %v4157
        %v4183 = vadd.f32 %v3981, %v4159
        %v4184 = vadd.f32 %v3983, %v4161
        %v4185 = vadd.f32 %v3987, %v4165
        %v4186 = vadd.f32 %v3989, %v4167
        %v4187 = vadd.f32 %v3991, %v4169
        %v4188 = vadd.f32 %v3993, %v4171
        %s4189 = scalar_lea.vmem %s4, 128
        %v4190 = vld [vmem:[%s4189] sm:$0xff]
        %v4191 = vld [vmem:[%s4189 + $0x8] sm:$0xff]
        %v4192 = vld [vmem:[%s4189 + $0x10] sm:$0xff]
        %v4193 = vld [vmem:[%s4189 + $0x18] sm:$0xff]
        %v4194 = vld [vmem:[%s4189 + $0x20] sm:$0xff]
        %v4195 = vld [vmem:[%s4189 + $0x28] sm:$0xff]
        %v4196 = vld [vmem:[%s4189 + $0x30] sm:$0xff]
        %v4197 = vld [vmem:[%s4189 + $0x38] sm:$0xff]
        %4199 = vset.pattern.permute.xlu0 0
        %4200 = vperm.xlu0 %4199, %v4190
        %v4201 = vpop.permute.xlu0 %4200
        %4204 = vset.pattern.permute.xlu0 0
        %4205 = vperm.xlu0 %4204, %v4191
        %v4206 = vpop.permute.xlu0 %4205
        %4209 = vset.pattern.permute.xlu0 0
        %4210 = vperm.xlu0 %4209, %v4192
        %v4211 = vpop.permute.xlu0 %4210
        %4214 = vset.pattern.permute.xlu0 0
        %4215 = vperm.xlu0 %4214, %v4193
        %v4216 = vpop.permute.xlu0 %4215
        %4219 = vset.pattern.permute.xlu0 0
        %4220 = vperm.xlu0 %4219, %v4194
        %v4221 = vpop.permute.xlu0 %4220
        %4224 = vset.pattern.permute.xlu0 0
        %4225 = vperm.xlu0 %4224, %v4195
        %v4226 = vpop.permute.xlu0 %4225
        %4229 = vset.pattern.permute.xlu0 0
        %4230 = vperm.xlu0 %4229, %v4196
        %v4231 = vpop.permute.xlu0 %4230
        %4234 = vset.pattern.permute.xlu0 0
        %4235 = vperm.xlu0 %4234, %v4197
        %v4236 = vpop.permute.xlu0 %4235
        %v4238 = vadd.f32 %v4173, %v4201
        %v4239 = vadd.f32 %v4174, %v4201
        %v4240 = vadd.f32 %v4175, %v4206
        %v4241 = vadd.f32 %v4176, %v4206
        %v4242 = vadd.f32 %v4177, %v4211
        %v4243 = vadd.f32 %v4178, %v4211
        %v4244 = vadd.f32 %v4179, %v4216
        %v4245 = vadd.f32 %v4180, %v4216
        %v4246 = vadd.f32 %v4181, %v4221
        %v4247 = vadd.f32 %v4182, %v4221
        %v4248 = vadd.f32 %v4183, %v4226
        %v4249 = vadd.f32 %v4184, %v4226
        %v4250 = vadd.f32 %v4185, %v4231
        %v4251 = vadd.f32 %v4186, %v4231
        %v4252 = vadd.f32 %v4187, %v4236
        %v4253 = vadd.f32 %v4188, %v4236
        %v4254 = vld [vmem:[#allocation3] sm:$0xff]
        %v4255 = vld [vmem:[#allocation3 + $0x8] sm:$0xff]
        %v4256 = vld [vmem:[#allocation3 + $0x10] sm:$0xff]
        %v4257 = vld [vmem:[#allocation3 + $0x18] sm:$0xff]
        %v4258 = vld [vmem:[#allocation3 + $0x20] sm:$0xff]
        %v4259 = vld [vmem:[#allocation3 + $0x28] sm:$0xff]
        %v4260 = vld [vmem:[#allocation3 + $0x30] sm:$0xff]
        %v4261 = vld [vmem:[#allocation3 + $0x38] sm:$0xff]
        %v4262 = vld [vmem:[#allocation3 + $0x40] sm:$0xff]
        %v4263 = vld [vmem:[#allocation3 + $0x48] sm:$0xff]
        %v4264 = vld [vmem:[#allocation3 + $0x50] sm:$0xff]
        %v4265 = vld [vmem:[#allocation3 + $0x58] sm:$0xff]
        %v4266 = vld [vmem:[#allocation3 + $0x60] sm:$0xff]
        %v4267 = vld [vmem:[#allocation3 + $0x68] sm:$0xff]
        %v4268 = vld [vmem:[#allocation3 + $0x70] sm:$0xff]
        %v4269 = vld [vmem:[#allocation3 + $0x78] sm:$0xff]
        %v4270 = vadd.f32 %v4238, %v4254
        %v4271 = vadd.f32 %v4239, %v4255
        %v4272 = vadd.f32 %v4240, %v4256
        %v4273 = vadd.f32 %v4241, %v4257
        %v4274 = vadd.f32 %v4242, %v4258
        %v4275 = vadd.f32 %v4243, %v4259
        %v4276 = vadd.f32 %v4244, %v4260
        %v4277 = vadd.f32 %v4245, %v4261
        %v4278 = vadd.f32 %v4246, %v4262
        %v4279 = vadd.f32 %v4247, %v4263
        %v4280 = vadd.f32 %v4248, %v4264
        %v4281 = vadd.f32 %v4249, %v4265
        %v4282 = vadd.f32 %v4250, %v4266
        %v4283 = vadd.f32 %v4251, %v4267
        %v4284 = vadd.f32 %v4252, %v4268
        %v4285 = vadd.f32 %v4253, %v4269
        %4286 = vst [vmem:[#allocation3] sm:$0xff] %v4270
        %4287 = vst [vmem:[#allocation3 + $0x8] sm:$0xff] %v4271
        %4288 = vst [vmem:[#allocation3 + $0x10] sm:$0xff] %v4272
        %4289 = vst [vmem:[#allocation3 + $0x18] sm:$0xff] %v4273
        %4290 = vst [vmem:[#allocation3 + $0x20] sm:$0xff] %v4274
        %4291 = vst [vmem:[#allocation3 + $0x28] sm:$0xff] %v4275
        %4292 = vst [vmem:[#allocation3 + $0x30] sm:$0xff] %v4276
        %4293 = vst [vmem:[#allocation3 + $0x38] sm:$0xff] %v4277
        %4294 = vst [vmem:[#allocation3 + $0x40] sm:$0xff] %v4278
        %4295 = vst [vmem:[#allocation3 + $0x48] sm:$0xff] %v4279
        %4296 = vst [vmem:[#allocation3 + $0x50] sm:$0xff] %v4280
        %4297 = vst [vmem:[#allocation3 + $0x58] sm:$0xff] %v4281
        %4298 = vst [vmem:[#allocation3 + $0x60] sm:$0xff] %v4282
        %4299 = vst [vmem:[#allocation3 + $0x68] sm:$0xff] %v4283
        %4300 = vst [vmem:[#allocation3 + $0x70] sm:$0xff] %v4284
        %4301 = vst [vmem:[#allocation3 + $0x78] sm:$0xff] %v4285
        %v4302 = vld [vmem:[#allocation3] sm:$0xff]
        %v4303 = vld [vmem:[#allocation3 + $0x8] sm:$0xff]
        %v4304 = vld [vmem:[#allocation3 + $0x10] sm:$0xff]
        %v4305 = vld [vmem:[#allocation3 + $0x18] sm:$0xff]
        %v4306 = vld [vmem:[#allocation3 + $0x20] sm:$0xff]
        %v4307 = vld [vmem:[#allocation3 + $0x28] sm:$0xff]
        %v4308 = vld [vmem:[#allocation3 + $0x30] sm:$0xff]
        %v4309 = vld [vmem:[#allocation3 + $0x38] sm:$0xff]
        %v4310 = vld [vmem:[#allocation3 + $0x40] sm:$0xff]
        %v4311 = vld [vmem:[#allocation3 + $0x48] sm:$0xff]
        %v4312 = vld [vmem:[#allocation3 + $0x50] sm:$0xff]
        %v4313 = vld [vmem:[#allocation3 + $0x58] sm:$0xff]
        %v4314 = vld [vmem:[#allocation3 + $0x60] sm:$0xff]
        %v4315 = vld [vmem:[#allocation3 + $0x68] sm:$0xff]
        %v4316 = vld [vmem:[#allocation3 + $0x70] sm:$0xff]
        %v4317 = vld [vmem:[#allocation3 + $0x78] sm:$0xff]
        %4334 = vrot.lane.b32.xlu0 %v4302, 116
        %v4335 = vpop.permute.xlu0 %4334
        %4336 = vrot.lane.b32.xlu0 %v4303, 116
        %v4337 = vpop.permute.xlu0 %4336
        %4338 = vrot.lane.b32.xlu0 %v4304, 116
        %v4339 = vpop.permute.xlu0 %4338
        %4340 = vrot.lane.b32.xlu0 %v4305, 116
        %v4341 = vpop.permute.xlu0 %4340
        %4342 = vrot.lane.b32.xlu0 %v4306, 116
        %v4343 = vpop.permute.xlu0 %4342
        %4344 = vrot.lane.b32.xlu0 %v4307, 116
        %v4345 = vpop.permute.xlu0 %4344
        %4346 = vrot.lane.b32.xlu0 %v4308, 116
        %v4347 = vpop.permute.xlu0 %4346
        %4348 = vrot.lane.b32.xlu0 %v4309, 116
        %v4349 = vpop.permute.xlu0 %4348
        %4350 = vrot.lane.b32.xlu0 %v4310, 116
        %v4351 = vpop.permute.xlu0 %4350
        %4352 = vrot.lane.b32.xlu0 %v4311, 116
        %v4353 = vpop.permute.xlu0 %4352
        %4354 = vrot.lane.b32.xlu0 %v4312, 116
        %v4355 = vpop.permute.xlu0 %4354
        %4356 = vrot.lane.b32.xlu0 %v4313, 116
        %v4357 = vpop.permute.xlu0 %4356
        %4358 = vrot.lane.b32.xlu0 %v4314, 116
        %v4359 = vpop.permute.xlu0 %4358
        %4360 = vrot.lane.b32.xlu0 %v4315, 116
        %v4361 = vpop.permute.xlu0 %4360
        %4362 = vrot.lane.b32.xlu0 %v4316, 116
        %v4363 = vpop.permute.xlu0 %4362
        %4364 = vrot.lane.b32.xlu0 %v4317, 116
        %v4365 = vpop.permute.xlu0 %4364
        %vm4366 = vcmask 949248
        %v4367 = vsel %vm4366, %v4335, %v4337
        %v4368 = vsel %vm4366, %v4339, %v4341
        %v4369 = vsel %vm4366, %v4343, %v4345
        %v4370 = vsel %vm4366, %v4347, %v4349
        %v4371 = vsel %vm4366, %v4351, %v4353
        %v4372 = vsel %vm4366, %v4355, %v4357
        %v4373 = vsel %vm4366, %v4359, %v4361
        %v4374 = vsel %vm4366, %v4363, %v4365
        %4383 = vst [vmem:[%s275] sm:$0xff] %v4367
        %4384 = vst [vmem:[%s275 + $0x8] sm:$0xff] %v4368
        %4385 = vst [vmem:[%s275 + $0x10] sm:$0xff] %v4369
        %4386 = vst [vmem:[%s275 + $0x18] sm:$0xff] %v4370
        %4387 = vst [vmem:[%s275 + $0x20] sm:$0xff] %v4371
        %4388 = vst [vmem:[%s275 + $0x28] sm:$0xff] %v4372
        %4389 = vst [vmem:[%s275 + $0x30] sm:$0xff] %v4373
        %4390 = vst [vmem:[%s275 + $0x38] sm:$0xff] %v4374
        %s4391 = sand.u32 %s157, 1
        %s4392 = scalar_lea.sflag [#allocation6], %s4391
        %s4393 = sand.u32 %s157, 1
        %s4394 = smul.addr %s4393, 64
        %s4395 = scalar_lea.vmem [#allocation9], %s4394
        // Predicated region
        $region97: #{tpu_custom_call.1} parent=39 // pred_check
          %p4396 = pneg %p167
        $region98: #{tpu_custom_call.1} parent=39 // pred_check_branch
          %4398 = sbr.rel (%p4396) target = $region100
        $region99: #{tpu_custom_call.1} parent=39 // pred_region
          %s4400 = ssub.s32 1024, 1024
          %4401 = vsyncadd %s4392, %s4400
          %s4402 = smul.addr %s27, 24
          %s4403 = sadd.s32 %s28, %s4402
          %s4404 = smul.addr %s4403, 128
          %s4405 = scalar_lea.hbm %s5, %s4404
          %s4406 = sshll.u32 %s4395, 4
          %s4407 = int_to_ptr.vmem [resolvable:$true] %s4406
          %4412 = dma.vmem_to_hbm [thread:$0]  %s4407, 1024, %s4405, %s4392, 128, 384, 8
        $region100: #{tpu_custom_call.1} parent=39 // pred_fallthru
          _
      $region40: #{tpu_custom_call.1} parent=5 // pred_fallthru
        _
      %p4413 = scmp.le.s32.totalorder 2, %s18
      // Predicated region
      $region101: #{tpu_custom_call.1} parent=5 // pred_check
        %p4414 = pneg %p4413
      $region102: #{tpu_custom_call.1} parent=5 // pred_check_branch
        %4416 = sbr.rel (%p4414) target = $region104
      $region103: #{tpu_custom_call.1} parent=5 // pred_region
        %s4417 = ssub.s32 %s18, 2
        // Predicated region
        $region105: #{tpu_custom_call.1} parent=103 // pred_check
          %p4418 = pneg %p173
        $region106: #{tpu_custom_call.1} parent=103 // pred_check_branch
          %4420 = sbr.rel (%p4418) target = $region108
        $region107: #{tpu_custom_call.1} parent=103 // pred_region
          %s4421 = sand.u32 %s158, 1
          %s4422 = scalar_lea.sflag [#allocation6], %s4421
          %s4423 = sand.u32 %s158, 1
          %s4424 = smul.addr %s4423, 64
          %s4425 = scalar_lea.vmem [#allocation9], %s4424
          %4426 = dma.done %s4422, 1024
        $region108: #{tpu_custom_call.1} parent=103 // pred_fallthru
          _
      $region104: #{tpu_custom_call.1} parent=5 // pred_fallthru
        _
    $region6: #{tpu_custom_call.1} parent=1 // loop_footer
      %s22 = sadd.s32 1, %s18
    $region7: #{tpu_custom_call.1} parent=1 // loop_footer_branch
      %17 = sbr.rel target = $region3
    $region8: #{tpu_custom_call.1} parent=1 // loop_exit
      _
    %4427 = vsyncpa [#allocation5], 1
    %s4428 = scalar_lea.sflag [#allocation5], 1
    %4429 = vsyncpa %s4428, 1
    %4430 = vsyncpa [#allocation8], 1
    %4431 = vsyncpa [#allocation6], 1
    %s4432 = scalar_lea.sflag [#allocation6], 1
    %4433 = vsyncpa %s4432, 1

</llo_original>
